<compile_context>
chip_gen: v7x
topology: tpu7x:2x2x1
jax: 0.10.0
libtpu: 0.0.40
codegen_flags: <defaults>
</compile_context>

<pallas_src>
import functools

import jax
import jax.numpy as jnp
from jax import lax
from jax.experimental import pallas as pl
from jax.experimental.pallas import tpu as pltpu

EPS = 1e-5


# ----------------------------- Pallas kernel ---------------------------------

def _resblock_kernel(*refs, ksize, stride, padding, has_sc,
                     cin, cout, oh1, ow1, oh2, ow2, halo_lead):
    if has_sc:
        (x_ref, wc1_ref, b1_ref, wc2_ref, b2_ref,
         wsc_ref, bsc_ref, o_ref, h1pad_ref) = refs
    else:
        (x_ref, wc1_ref, b1_ref, wc2_ref, b2_ref,
         o_ref, h1pad_ref) = refs

    def _win(start, size):
        # strided spatial window (stride is a static Python int)
        return pl.ds(start, size) if stride == 1 else pl.ds(start, size, stride)

    def conv_bn(read_window, w_ref, b_ref, ho, wo, ci, relu):
        """Conv as K*K per-tap matmuls: sum_t window(t) @ w[t], then +bias."""
        co = w_ref.shape[-1]
        acc = jnp.zeros((ho * wo, co), jnp.float32)
        for kh in range(ksize):
            for kw in range(ksize):
                win = read_window(kh, kw)                      # [ho, wo, ci] f32
                a = win.reshape(ho * wo, ci).astype(jnp.bfloat16)
                acc = acc + jnp.dot(a, w_ref[kh * ksize + kw],  # [ci, co] bf16
                                    preferred_element_type=jnp.float32)
        y = acc + b_ref[...]                                    # [1, co] f32
        return jnp.maximum(y, 0.0) if relu else y

    # ---- conv1 + bn1 + relu (bn scale pre-folded into wc1, bias in b1) ----
    out1 = conv_bn(lambda kh, kw: x_ref[0, _win(kh, oh1), _win(kw, ow1), :],
                   wc1_ref, b1_ref, oh1, ow1, cin, relu=True)   # [oh1*ow1, cout]

    # ---- stage conv1 output (zero halo) in VMEM; never goes to HBM ----
    if padding > 0:
        h1pad_ref[...] = jnp.zeros_like(h1pad_ref)
        # store lands at W-offset halo_lead+padding (a multiple of 8) -> aligned
        h1pad_ref[padding:padding + oh1,
                  halo_lead + padding:halo_lead + padding + ow1, :] = (
            out1.reshape(oh1, ow1, cout))
    else:
        h1pad_ref[...] = out1.reshape(oh1, ow1, cout)

    # ---- conv2 + bn2 (relu applied after the residual add) ----
    y2 = conv_bn(
        lambda kh, kw: h1pad_ref[_win(kh, oh2), _win(halo_lead + kw, ow2), :],
        wc2_ref, b2_ref, oh2, ow2, cout, relu=False)            # [oh2*ow2, cout]

    # ---- shortcut: folded 1x1 strided conv + bn, or identity ----
    xs = x_ref[0, _win(padding, oh2), _win(padding, ow2), :].reshape(oh2 * ow2, cin)
    if has_sc:
        sc = (jnp.dot(xs.astype(jnp.bfloat16), wsc_ref[...],
                      preferred_element_type=jnp.float32) + bsc_ref[...])
    else:
        sc = xs                                                 # cin == cout here

    res = jnp.maximum(y2 + sc, 0.0)                             # [oh2*ow2, cout]
    # Lane-dense, channel-major store: last dim = oh2*ow2 (multiple of 128 here),
    # so the single HBM store is unmasked.  Output is directly NCHW-flat.
    o_ref[0] = jnp.transpose(res).astype(o_ref.dtype)           # [cout, oh2*ow2]


# ------------------------------- wrapper --------------------------------------

def fold_conv_bn(conv, bn, ksize):
    """Fold eval-mode BN into the conv -> (w [k*k, cin, cout] bf16, bias [1, cout] f32)."""
    w = conv["w"]                                      # OIHW [cout, cin, k, k]
    cout, cin = w.shape[0], w.shape[1]
    s = bn["gamma"] / jnp.sqrt(bn["var"] + EPS)        # [cout]
    w_taps = jnp.transpose(w, (2, 3, 1, 0)).reshape(ksize * ksize, cin, cout)
    w_taps = (w_taps * s[None, None, :]).astype(jnp.bfloat16)
    bias = ((conv["b"] - bn["mean"]) * s + bn["beta"]).reshape(1, cout)
    return w_taps, bias.astype(jnp.float32)


def residual_block_forward(x_nchw, params, ksize, stride, padding):
    x = jnp.transpose(x_nchw, (0, 2, 3, 1))            # NHWC f32 (layout plumbing)
    n, h, w, cin = x.shape
    cout = params["conv1"]["w"].shape[0]

    def conv_out(size):
        return (size + 2 * padding - ksize) // stride + 1

    oh1, ow1 = conv_out(h), conv_out(w)
    oh2, ow2 = conv_out(oh1), conv_out(ow1)
    sh, sw = (h - 1) // stride + 1, (w - 1) // stride + 1
    # Same constraint the PyTorch module hits implicitly at the residual add.
    assert (sh, sw) == (oh2, ow2), "main path / shortcut spatial mismatch"

    xp = jnp.pad(x, ((0, 0), (padding, padding), (padding, padding), (0, 0)))
    hp, wp = h + 2 * padding, w + 2 * padding

    wc1, b1 = fold_conv_bn(params["conv1"], params["bn1"], ksize)
    wc2, b2 = fold_conv_bn(params["conv2"], params["bn2"], ksize)
    has_sc = params["conv_sc"] is not None

    in_specs = [
        pl.BlockSpec((1, hp, wp, cin), lambda i: (i, 0, 0, 0)),
        pl.BlockSpec((ksize * ksize, cin, cout), lambda i: (0, 0, 0)),
        pl.BlockSpec((1, cout), lambda i: (0, 0)),
        pl.BlockSpec((ksize * ksize, cout, cout), lambda i: (0, 0, 0)),
        pl.BlockSpec((1, cout), lambda i: (0, 0)),
    ]
    args = [xp, wc1, b1, wc2, b2]
    if has_sc:
        wsc, bsc = fold_conv_bn(params["conv_sc"], params["bn_sc"], 1)
        wsc = wsc[0]                                    # [cin, cout] bf16
        in_specs += [pl.BlockSpec((cin, cout), lambda i: (0, 0)),
                     pl.BlockSpec((1, cout), lambda i: (0, 0))]
        args += [wsc, bsc]

    # extra left columns so the staged intermediate lands sublane-aligned
    halo_lead = (-padding) % 8
    scratch = pltpu.VMEM(
        (oh1 + 2 * padding, halo_lead + ow1 + 2 * padding, cout), jnp.float32)

    kernel = functools.partial(
        _resblock_kernel, ksize=ksize, stride=stride, padding=padding,
        has_sc=has_sc, cin=cin, cout=cout,
        oh1=oh1, ow1=ow1, oh2=oh2, ow2=ow2, halo_lead=halo_lead)

    out_flat = pl.pallas_call(
        kernel,
        out_shape=jax.ShapeDtypeStruct((n, cout, oh2 * ow2), jnp.float32),
        grid_spec=pltpu.PrefetchScalarGridSpec(
            num_scalar_prefetch=0,
            grid=(n,),
            in_specs=in_specs,
            out_specs=pl.BlockSpec((1, cout, oh2 * ow2), lambda i: (i, 0, 0)),
            scratch_shapes=[scratch],
        ),
        compiler_params=pltpu.CompilerParams(
            dimension_semantics=("parallel",),
            vmem_limit_bytes=32 * 1024 * 1024),
    )(*args)

    # Output is already channel-major (NCHW-flat); just split the spatial dim.
    return out_flat.reshape(n, cout, oh2, ow2)


# ------------------------- parameters & reference -----------------------------

def make_conv(key, cin, cout, ksize):
    k1, k2 = jax.random.split(key)
    return {"w": jax.random.normal(k1, (cout, cin, ksize, ksize), jnp.float32) * 0.1,
            "b": jax.random.normal(k2, (cout,), jnp.float32) * 0.1}


def make_bn(key, c):
    k1, k2, k3, k4 = jax.random.split(key, 4)
    return {"gamma": jax.random.uniform(k1, (c,), jnp.float32, 0.5, 1.5),
            "beta": jax.random.normal(k2, (c,), jnp.float32) * 0.1,
            "mean": jax.random.normal(k3, (c,), jnp.float32) * 0.1,
            "var": jax.random.uniform(k4, (c,), jnp.float32, 0.5, 1.5)}


def make_params(key, cin, cout, ksize, stride):
    ks = jax.random.split(key, 6)
    params = {
        "conv1": make_conv(ks[0], cin, cout, ksize), "bn1": make_bn(ks[1], cout),
        "conv2": make_conv(ks[2], cout, cout, ksize), "bn2": make_bn(ks[3], cout),
        "conv_sc": None, "bn_sc": None,
    }
    if stride != 1 or cin != cout:
        params["conv_sc"] = make_conv(ks[4], cin, cout, 1)
        params["bn_sc"] = make_bn(ks[5], cout)
    return params


def ref_forward(x_nchw, params, ksize, stride, padding):
    def conv(x, c, s, p):
        y = lax.conv_general_dilated(x, c["w"], (s, s), [(p, p), (p, p)],
                                     dimension_numbers=("NCHW", "OIHW", "NCHW"))
        return y + c["b"][None, :, None, None]

    def bn(x, b):
        return ((x - b["mean"][None, :, None, None])
                / jnp.sqrt(b["var"][None, :, None, None] + EPS)
                * b["gamma"][None, :, None, None] + b["beta"][None, :, None, None])

    out = jnp.maximum(bn(conv(x_nchw, params["conv1"], stride, padding), params["bn1"]), 0.0)
    out = bn(conv(out, params["conv2"], stride, padding), params["bn2"])
    if params["conv_sc"] is None:
        sc = x_nchw
    else:
        sc = bn(conv(x_nchw, params["conv_sc"], stride, 0), params["bn_sc"])
    return jnp.maximum(out + sc, 0.0)


# ---------------------------------- main ---------------------------------------

if __name__ == "__main__":
    key = jax.random.PRNGKey(0)
    kx, kp = jax.random.split(key)

    N, Cin, H, W = 2, 4, 16, 16
    Cout, ksize, stride, padding = 8, 3, 1, 1

    x = jax.random.normal(kx, (N, Cin, H, W), jnp.float32)
    params = make_params(kp, Cin, Cout, ksize, stride)

    out = residual_block_forward(x, params, ksize, stride, padding)
    out = jax.block_until_ready(out)
    assert out.shape == (N, Cout, H, W), out.shape

    ref = ref_forward(x, params, ksize, stride, padding)
    # Tolerance set for the single-pass bf16 MXU path (f32 accumulation);
    # the f32 reference differs by a few 1e-3 at worst.
    err = float(jnp.max(jnp.abs(out - ref)))
    assert jnp.allclose(out, ref, atol=2e-2, rtol=2e-2), f"max abs err = {err}"

    print("KERNEL_OK")
</pallas_src>

<mosaic_0001>
module attributes {stable_mosaic.version = 11 : i64} {
  func.func @_resblock_kernel(%arg0: i32, %arg1: memref<1x18x18x4xf32, #tpu.memory_space<vmem>>, %arg2: memref<9x4x8xbf16, #tpu.memory_space<vmem>>, %arg3: memref<1x8xf32, #tpu.memory_space<vmem>>, %arg4: memref<9x8x8xbf16, #tpu.memory_space<vmem>>, %arg5: memref<1x8xf32, #tpu.memory_space<vmem>>, %arg6: memref<4x8xbf16, #tpu.memory_space<vmem>>, %arg7: memref<1x8xf32, #tpu.memory_space<vmem>>, %arg8: memref<1x8x256xf32, #tpu.memory_space<vmem>>, %arg9: memref<18x25x8xf32, #tpu.memory_space<vmem>>) attributes {dimension_semantics = [#tpu.dimension_semantics<parallel>], iteration_bounds = array<i64: 2>, scalar_prefetch = 0 : i64, scratch_operands = 1 : i64, tpu.core_type = #tpu.core_type<tc>, window_params = [{transform_indices = @transform_0, window_bounds = array<i64: 1, 18, 18, 4>}, {pipeline_mode = #tpu.pipeline_mode<synchronous>, transform_indices = @transform_1, window_bounds = array<i64: 9, 4, 8>}, {pipeline_mode = #tpu.pipeline_mode<synchronous>, transform_indices = @transform_2, window_bounds = array<i64: 1, 8>}, {pipeline_mode = #tpu.pipeline_mode<synchronous>, transform_indices = @transform_3, window_bounds = array<i64: 9, 8, 8>}, {pipeline_mode = #tpu.pipeline_mode<synchronous>, transform_indices = @transform_4, window_bounds = array<i64: 1, 8>}, {pipeline_mode = #tpu.pipeline_mode<synchronous>, transform_indices = @transform_5, window_bounds = array<i64: 4, 8>}, {pipeline_mode = #tpu.pipeline_mode<synchronous>, transform_indices = @transform_6, window_bounds = array<i64: 1, 8>}, {transform_indices = @transform_7, window_bounds = array<i64: 1, 8, 256>}]} {
    %cst = arith.constant 0.000000e+00 : f32
    %0 = vector.broadcast %cst : f32 to vector<256x8xf32>
    %c0 = arith.constant 0 : index
    %c0_0 = arith.constant 0 : index
    %c0_1 = arith.constant 0 : index
    %c0_2 = arith.constant 0 : index
    %1 = vector.load %arg1[%c0, %c0_0, %c0_1, %c0_2] : memref<1x18x18x4xf32, #tpu.memory_space<vmem>>, vector<1x16x16x4xf32>
    %2 = vector.shape_cast %1 : vector<1x16x16x4xf32> to vector<16x16x4xf32>
    %3 = vector.shape_cast %2 : vector<16x16x4xf32> to vector<256x4xf32>
    %4 = arith.truncf %3 : vector<256x4xf32> to vector<256x4xbf16>
    %c0_3 = arith.constant 0 : index
    %c0_4 = arith.constant 0 : index
    %c0_5 = arith.constant 0 : index
    %5 = vector.load %arg2[%c0_3, %c0_4, %c0_5] : memref<9x4x8xbf16, #tpu.memory_space<vmem>>, vector<1x4x8xbf16>
    %6 = vector.shape_cast %5 : vector<1x4x8xbf16> to vector<4x8xbf16>
    %cst_6 = arith.constant dense<0.000000e+00> : vector<256x8xf32>
    %7 = tpu.matmul %4, %6, %cst_6 {dimension_numbers = #tpu.dot_dimension_numbers<[1], [0], [0], [1], [0, 0, 1, 1], [], []>} : vector<256x4xbf16>, vector<4x8xbf16>, vector<256x8xf32> -> vector<256x8xf32>
    %8 = arith.addf %0, %7 : vector<256x8xf32>
    %c0_7 = arith.constant 0 : index
    %c0_8 = arith.constant 0 : index
    %c1 = arith.constant 1 : index
    %c0_9 = arith.constant 0 : index
    %9 = vector.load %arg1[%c0_7, %c0_8, %c1, %c0_9] : memref<1x18x18x4xf32, #tpu.memory_space<vmem>>, vector<1x16x16x4xf32>
    %10 = vector.shape_cast %9 : vector<1x16x16x4xf32> to vector<16x16x4xf32>
    %11 = vector.shape_cast %10 : vector<16x16x4xf32> to vector<256x4xf32>
    %12 = arith.truncf %11 : vector<256x4xf32> to vector<256x4xbf16>
    %c1_10 = arith.constant 1 : index
    %c0_11 = arith.constant 0 : index
    %c0_12 = arith.constant 0 : index
    %13 = vector.load %arg2[%c1_10, %c0_11, %c0_12] : memref<9x4x8xbf16, #tpu.memory_space<vmem>>, vector<1x4x8xbf16>
    %14 = vector.shape_cast %13 : vector<1x4x8xbf16> to vector<4x8xbf16>
    %cst_13 = arith.constant dense<0.000000e+00> : vector<256x8xf32>
    %15 = tpu.matmul %12, %14, %cst_13 {dimension_numbers = #tpu.dot_dimension_numbers<[1], [0], [0], [1], [0, 0, 1, 1], [], []>} : vector<256x4xbf16>, vector<4x8xbf16>, vector<256x8xf32> -> vector<256x8xf32>
    %16 = arith.addf %8, %15 : vector<256x8xf32>
    %c0_14 = arith.constant 0 : index
    %c0_15 = arith.constant 0 : index
    %c2 = arith.constant 2 : index
    %c0_16 = arith.constant 0 : index
    %17 = vector.load %arg1[%c0_14, %c0_15, %c2, %c0_16] : memref<1x18x18x4xf32, #tpu.memory_space<vmem>>, vector<1x16x16x4xf32>
    %18 = vector.shape_cast %17 : vector<1x16x16x4xf32> to vector<16x16x4xf32>
    %19 = vector.shape_cast %18 : vector<16x16x4xf32> to vector<256x4xf32>
    %20 = arith.truncf %19 : vector<256x4xf32> to vector<256x4xbf16>
    %c2_17 = arith.constant 2 : index
    %c0_18 = arith.constant 0 : index
    %c0_19 = arith.constant 0 : index
    %21 = vector.load %arg2[%c2_17, %c0_18, %c0_19] : memref<9x4x8xbf16, #tpu.memory_space<vmem>>, vector<1x4x8xbf16>
    %22 = vector.shape_cast %21 : vector<1x4x8xbf16> to vector<4x8xbf16>
    %cst_20 = arith.constant dense<0.000000e+00> : vector<256x8xf32>
    %23 = tpu.matmul %20, %22, %cst_20 {dimension_numbers = #tpu.dot_dimension_numbers<[1], [0], [0], [1], [0, 0, 1, 1], [], []>} : vector<256x4xbf16>, vector<4x8xbf16>, vector<256x8xf32> -> vector<256x8xf32>
    %24 = arith.addf %16, %23 : vector<256x8xf32>
    %c0_21 = arith.constant 0 : index
    %c1_22 = arith.constant 1 : index
    %c0_23 = arith.constant 0 : index
    %c0_24 = arith.constant 0 : index
    %25 = vector.load %arg1[%c0_21, %c1_22, %c0_23, %c0_24] : memref<1x18x18x4xf32, #tpu.memory_space<vmem>>, vector<1x16x16x4xf32>
    %26 = vector.shape_cast %25 : vector<1x16x16x4xf32> to vector<16x16x4xf32>
    %27 = vector.shape_cast %26 : vector<16x16x4xf32> to vector<256x4xf32>
    %28 = arith.truncf %27 : vector<256x4xf32> to vector<256x4xbf16>
    %c3 = arith.constant 3 : index
    %c0_25 = arith.constant 0 : index
    %c0_26 = arith.constant 0 : index
    %29 = vector.load %arg2[%c3, %c0_25, %c0_26] : memref<9x4x8xbf16, #tpu.memory_space<vmem>>, vector<1x4x8xbf16>
    %30 = vector.shape_cast %29 : vector<1x4x8xbf16> to vector<4x8xbf16>
    %cst_27 = arith.constant dense<0.000000e+00> : vector<256x8xf32>
    %31 = tpu.matmul %28, %30, %cst_27 {dimension_numbers = #tpu.dot_dimension_numbers<[1], [0], [0], [1], [0, 0, 1, 1], [], []>} : vector<256x4xbf16>, vector<4x8xbf16>, vector<256x8xf32> -> vector<256x8xf32>
    %32 = arith.addf %24, %31 : vector<256x8xf32>
    %c0_28 = arith.constant 0 : index
    %c1_29 = arith.constant 1 : index
    %c1_30 = arith.constant 1 : index
    %c0_31 = arith.constant 0 : index
    %33 = vector.load %arg1[%c0_28, %c1_29, %c1_30, %c0_31] : memref<1x18x18x4xf32, #tpu.memory_space<vmem>>, vector<1x16x16x4xf32>
    %34 = vector.shape_cast %33 : vector<1x16x16x4xf32> to vector<16x16x4xf32>
    %35 = vector.shape_cast %34 : vector<16x16x4xf32> to vector<256x4xf32>
    %36 = arith.truncf %35 : vector<256x4xf32> to vector<256x4xbf16>
    %c4 = arith.constant 4 : index
    %c0_32 = arith.constant 0 : index
    %c0_33 = arith.constant 0 : index
    %37 = vector.load %arg2[%c4, %c0_32, %c0_33] : memref<9x4x8xbf16, #tpu.memory_space<vmem>>, vector<1x4x8xbf16>
    %38 = vector.shape_cast %37 : vector<1x4x8xbf16> to vector<4x8xbf16>
    %cst_34 = arith.constant dense<0.000000e+00> : vector<256x8xf32>
    %39 = tpu.matmul %36, %38, %cst_34 {dimension_numbers = #tpu.dot_dimension_numbers<[1], [0], [0], [1], [0, 0, 1, 1], [], []>} : vector<256x4xbf16>, vector<4x8xbf16>, vector<256x8xf32> -> vector<256x8xf32>
    %40 = arith.addf %32, %39 : vector<256x8xf32>
    %c0_35 = arith.constant 0 : index
    %c1_36 = arith.constant 1 : index
    %c2_37 = arith.constant 2 : index
    %c0_38 = arith.constant 0 : index
    %41 = vector.load %arg1[%c0_35, %c1_36, %c2_37, %c0_38] : memref<1x18x18x4xf32, #tpu.memory_space<vmem>>, vector<1x16x16x4xf32>
    %42 = vector.shape_cast %41 : vector<1x16x16x4xf32> to vector<16x16x4xf32>
    %43 = vector.shape_cast %42 : vector<16x16x4xf32> to vector<256x4xf32>
    %44 = arith.truncf %43 : vector<256x4xf32> to vector<256x4xbf16>
    %c5 = arith.constant 5 : index
    %c0_39 = arith.constant 0 : index
    %c0_40 = arith.constant 0 : index
    %45 = vector.load %arg2[%c5, %c0_39, %c0_40] : memref<9x4x8xbf16, #tpu.memory_space<vmem>>, vector<1x4x8xbf16>
    %46 = vector.shape_cast %45 : vector<1x4x8xbf16> to vector<4x8xbf16>
    %cst_41 = arith.constant dense<0.000000e+00> : vector<256x8xf32>
    %47 = tpu.matmul %44, %46, %cst_41 {dimension_numbers = #tpu.dot_dimension_numbers<[1], [0], [0], [1], [0, 0, 1, 1], [], []>} : vector<256x4xbf16>, vector<4x8xbf16>, vector<256x8xf32> -> vector<256x8xf32>
    %48 = arith.addf %40, %47 : vector<256x8xf32>
    %c0_42 = arith.constant 0 : index
    %c2_43 = arith.constant 2 : index
    %c0_44 = arith.constant 0 : index
    %c0_45 = arith.constant 0 : index
    %49 = vector.load %arg1[%c0_42, %c2_43, %c0_44, %c0_45] : memref<1x18x18x4xf32, #tpu.memory_space<vmem>>, vector<1x16x16x4xf32>
    %50 = vector.shape_cast %49 : vector<1x16x16x4xf32> to vector<16x16x4xf32>
    %51 = vector.shape_cast %50 : vector<16x16x4xf32> to vector<256x4xf32>
    %52 = arith.truncf %51 : vector<256x4xf32> to vector<256x4xbf16>
    %c6 = arith.constant 6 : index
    %c0_46 = arith.constant 0 : index
    %c0_47 = arith.constant 0 : index
    %53 = vector.load %arg2[%c6, %c0_46, %c0_47] : memref<9x4x8xbf16, #tpu.memory_space<vmem>>, vector<1x4x8xbf16>
    %54 = vector.shape_cast %53 : vector<1x4x8xbf16> to vector<4x8xbf16>
    %cst_48 = arith.constant dense<0.000000e+00> : vector<256x8xf32>
    %55 = tpu.matmul %52, %54, %cst_48 {dimension_numbers = #tpu.dot_dimension_numbers<[1], [0], [0], [1], [0, 0, 1, 1], [], []>} : vector<256x4xbf16>, vector<4x8xbf16>, vector<256x8xf32> -> vector<256x8xf32>
    %56 = arith.addf %48, %55 : vector<256x8xf32>
    %c0_49 = arith.constant 0 : index
    %c2_50 = arith.constant 2 : index
    %c1_51 = arith.constant 1 : index
    %c0_52 = arith.constant 0 : index
    %57 = vector.load %arg1[%c0_49, %c2_50, %c1_51, %c0_52] : memref<1x18x18x4xf32, #tpu.memory_space<vmem>>, vector<1x16x16x4xf32>
    %58 = vector.shape_cast %57 : vector<1x16x16x4xf32> to vector<16x16x4xf32>
    %59 = vector.shape_cast %58 : vector<16x16x4xf32> to vector<256x4xf32>
    %60 = arith.truncf %59 : vector<256x4xf32> to vector<256x4xbf16>
    %c7 = arith.constant 7 : index
    %c0_53 = arith.constant 0 : index
    %c0_54 = arith.constant 0 : index
    %61 = vector.load %arg2[%c7, %c0_53, %c0_54] : memref<9x4x8xbf16, #tpu.memory_space<vmem>>, vector<1x4x8xbf16>
    %62 = vector.shape_cast %61 : vector<1x4x8xbf16> to vector<4x8xbf16>
    %cst_55 = arith.constant dense<0.000000e+00> : vector<256x8xf32>
    %63 = tpu.matmul %60, %62, %cst_55 {dimension_numbers = #tpu.dot_dimension_numbers<[1], [0], [0], [1], [0, 0, 1, 1], [], []>} : vector<256x4xbf16>, vector<4x8xbf16>, vector<256x8xf32> -> vector<256x8xf32>
    %64 = arith.addf %56, %63 : vector<256x8xf32>
    %c0_56 = arith.constant 0 : index
    %c2_57 = arith.constant 2 : index
    %c2_58 = arith.constant 2 : index
    %c0_59 = arith.constant 0 : index
    %65 = vector.load %arg1[%c0_56, %c2_57, %c2_58, %c0_59] : memref<1x18x18x4xf32, #tpu.memory_space<vmem>>, vector<1x16x16x4xf32>
    %66 = vector.shape_cast %65 : vector<1x16x16x4xf32> to vector<16x16x4xf32>
    %67 = vector.shape_cast %66 : vector<16x16x4xf32> to vector<256x4xf32>
    %68 = arith.truncf %67 : vector<256x4xf32> to vector<256x4xbf16>
    %c8 = arith.constant 8 : index
    %c0_60 = arith.constant 0 : index
    %c0_61 = arith.constant 0 : index
    %69 = vector.load %arg2[%c8, %c0_60, %c0_61] : memref<9x4x8xbf16, #tpu.memory_space<vmem>>, vector<1x4x8xbf16>
    %70 = vector.shape_cast %69 : vector<1x4x8xbf16> to vector<4x8xbf16>
    %cst_62 = arith.constant dense<0.000000e+00> : vector<256x8xf32>
    %71 = tpu.matmul %68, %70, %cst_62 {dimension_numbers = #tpu.dot_dimension_numbers<[1], [0], [0], [1], [0, 0, 1, 1], [], []>} : vector<256x4xbf16>, vector<4x8xbf16>, vector<256x8xf32> -> vector<256x8xf32>
    %72 = arith.addf %64, %71 : vector<256x8xf32>
    %c0_63 = arith.constant 0 : index
    %c0_64 = arith.constant 0 : index
    %73 = vector.load %arg3[%c0_63, %c0_64] : memref<1x8xf32, #tpu.memory_space<vmem>>, vector<1x8xf32>
    %74 = vector.broadcast %73 : vector<1x8xf32> to vector<256x8xf32>
    %75 = arith.addf %72, %74 : vector<256x8xf32>
    %cst_65 = arith.constant 0.000000e+00 : f32
    %76 = vector.broadcast %cst_65 : f32 to vector<256x8xf32>
    %77 = arith.maximumf %75, %76 : vector<256x8xf32>
    %cst_66 = arith.constant 0.000000e+00 : f32
    %78 = vector.broadcast %cst_66 : f32 to vector<18x25x8xf32>
    %c0_67 = arith.constant 0 : index
    %c0_68 = arith.constant 0 : index
    %c0_69 = arith.constant 0 : index
    %79 = vector.load %arg9[%c0_67, %c0_68, %c0_69] : memref<18x25x8xf32, #tpu.memory_space<vmem>>, vector<18x25x8xf32>
    tpu.vector_store %arg9[%c0_67, %c0_68, %c0_69], %78 {strides = array<i32>} : memref<18x25x8xf32, #tpu.memory_space<vmem>>, vector<18x25x8xf32>,
    %80 = vector.shape_cast %77 : vector<256x8xf32> to vector<16x16x8xf32>
    %c1_70 = arith.constant 1 : index
    %c8_71 = arith.constant 8 : index
    %c0_72 = arith.constant 0 : index
    %81 = vector.load %arg9[%c1_70, %c8_71, %c0_72] : memref<18x25x8xf32, #tpu.memory_space<vmem>>, vector<16x16x8xf32>
    tpu.vector_store %arg9[%c1_70, %c8_71, %c0_72], %80 {strides = array<i32>} : memref<18x25x8xf32, #tpu.memory_space<vmem>>, vector<16x16x8xf32>,
    %cst_73 = arith.constant 0.000000e+00 : f32
    %82 = vector.broadcast %cst_73 : f32 to vector<256x8xf32>
    %c0_74 = arith.constant 0 : index
    %c7_75 = arith.constant 7 : index
    %c0_76 = arith.constant 0 : index
    %83 = vector.load %arg9[%c0_74, %c7_75, %c0_76] : memref<18x25x8xf32, #tpu.memory_space<vmem>>, vector<16x16x8xf32>
    %84 = vector.shape_cast %83 : vector<16x16x8xf32> to vector<256x8xf32>
    %85 = arith.truncf %84 : vector<256x8xf32> to vector<256x8xbf16>
    %c0_77 = arith.constant 0 : index
    %c0_78 = arith.constant 0 : index
    %c0_79 = arith.constant 0 : index
    %86 = vector.load %arg4[%c0_77, %c0_78, %c0_79] : memref<9x8x8xbf16, #tpu.memory_space<vmem>>, vector<1x8x8xbf16>
    %87 = vector.shape_cast %86 : vector<1x8x8xbf16> to vector<8x8xbf16>
    %cst_80 = arith.constant dense<0.000000e+00> : vector<256x8xf32>
    %88 = tpu.matmul %85, %87, %cst_80 {dimension_numbers = #tpu.dot_dimension_numbers<[1], [0], [0], [1], [0, 0, 1, 1], [], []>} : vector<256x8xbf16>, vector<8x8xbf16>, vector<256x8xf32> -> vector<256x8xf32>
    %89 = arith.addf %82, %88 : vector<256x8xf32>
    %c0_81 = arith.constant 0 : index
    %c8_82 = arith.constant 8 : index
    %c0_83 = arith.constant 0 : index
    %90 = vector.load %arg9[%c0_81, %c8_82, %c0_83] : memref<18x25x8xf32, #tpu.memory_space<vmem>>, vector<16x16x8xf32>
    %91 = vector.shape_cast %90 : vector<16x16x8xf32> to vector<256x8xf32>
    %92 = arith.truncf %91 : vector<256x8xf32> to vector<256x8xbf16>
    %c1_84 = arith.constant 1 : index
    %c0_85 = arith.constant 0 : index
    %c0_86 = arith.constant 0 : index
    %93 = vector.load %arg4[%c1_84, %c0_85, %c0_86] : memref<9x8x8xbf16, #tpu.memory_space<vmem>>, vector<1x8x8xbf16>
    %94 = vector.shape_cast %93 : vector<1x8x8xbf16> to vector<8x8xbf16>
    %cst_87 = arith.constant dense<0.000000e+00> : vector<256x8xf32>
    %95 = tpu.matmul %92, %94, %cst_87 {dimension_numbers = #tpu.dot_dimension_numbers<[1], [0], [0], [1], [0, 0, 1, 1], [], []>} : vector<256x8xbf16>, vector<8x8xbf16>, vector<256x8xf32> -> vector<256x8xf32>
    %96 = arith.addf %89, %95 : vector<256x8xf32>
    %c0_88 = arith.constant 0 : index
    %c9 = arith.constant 9 : index
    %c0_89 = arith.constant 0 : index
    %97 = vector.load %arg9[%c0_88, %c9, %c0_89] : memref<18x25x8xf32, #tpu.memory_space<vmem>>, vector<16x16x8xf32>
    %98 = vector.shape_cast %97 : vector<16x16x8xf32> to vector<256x8xf32>
    %99 = arith.truncf %98 : vector<256x8xf32> to vector<256x8xbf16>
    %c2_90 = arith.constant 2 : index
    %c0_91 = arith.constant 0 : index
    %c0_92 = arith.constant 0 : index
    %100 = vector.load %arg4[%c2_90, %c0_91, %c0_92] : memref<9x8x8xbf16, #tpu.memory_space<vmem>>, vector<1x8x8xbf16>
    %101 = vector.shape_cast %100 : vector<1x8x8xbf16> to vector<8x8xbf16>
    %cst_93 = arith.constant dense<0.000000e+00> : vector<256x8xf32>
    %102 = tpu.matmul %99, %101, %cst_93 {dimension_numbers = #tpu.dot_dimension_numbers<[1], [0], [0], [1], [0, 0, 1, 1], [], []>} : vector<256x8xbf16>, vector<8x8xbf16>, vector<256x8xf32> -> vector<256x8xf32>
    %103 = arith.addf %96, %102 : vector<256x8xf32>
    %c1_94 = arith.constant 1 : index
    %c7_95 = arith.constant 7 : index
    %c0_96 = arith.constant 0 : index
    %104 = vector.load %arg9[%c1_94, %c7_95, %c0_96] : memref<18x25x8xf32, #tpu.memory_space<vmem>>, vector<16x16x8xf32>
    %105 = vector.shape_cast %104 : vector<16x16x8xf32> to vector<256x8xf32>
    %106 = arith.truncf %105 : vector<256x8xf32> to vector<256x8xbf16>
    %c3_97 = arith.constant 3 : index
    %c0_98 = arith.constant 0 : index
    %c0_99 = arith.constant 0 : index
    %107 = vector.load %arg4[%c3_97, %c0_98, %c0_99] : memref<9x8x8xbf16, #tpu.memory_space<vmem>>, vector<1x8x8xbf16>
    %108 = vector.shape_cast %107 : vector<1x8x8xbf16> to vector<8x8xbf16>
    %cst_100 = arith.constant dense<0.000000e+00> : vector<256x8xf32>
    %109 = tpu.matmul %106, %108, %cst_100 {dimension_numbers = #tpu.dot_dimension_numbers<[1], [0], [0], [1], [0, 0, 1, 1], [], []>} : vector<256x8xbf16>, vector<8x8xbf16>, vector<256x8xf32> -> vector<256x8xf32>
    %110 = arith.addf %103, %109 : vector<256x8xf32>
    %c1_101 = arith.constant 1 : index
    %c8_102 = arith.constant 8 : index
    %c0_103 = arith.constant 0 : index
    %111 = vector.load %arg9[%c1_101, %c8_102, %c0_103] : memref<18x25x8xf32, #tpu.memory_space<vmem>>, vector<16x16x8xf32>
    %112 = vector.shape_cast %111 : vector<16x16x8xf32> to vector<256x8xf32>
    %113 = arith.truncf %112 : vector<256x8xf32> to vector<256x8xbf16>
    %c4_104 = arith.constant 4 : index
    %c0_105 = arith.constant 0 : index
    %c0_106 = arith.constant 0 : index
    %114 = vector.load %arg4[%c4_104, %c0_105, %c0_106] : memref<9x8x8xbf16, #tpu.memory_space<vmem>>, vector<1x8x8xbf16>
    %115 = vector.shape_cast %114 : vector<1x8x8xbf16> to vector<8x8xbf16>
    %cst_107 = arith.constant dense<0.000000e+00> : vector<256x8xf32>
    %116 = tpu.matmul %113, %115, %cst_107 {dimension_numbers = #tpu.dot_dimension_numbers<[1], [0], [0], [1], [0, 0, 1, 1], [], []>} : vector<256x8xbf16>, vector<8x8xbf16>, vector<256x8xf32> -> vector<256x8xf32>
    %117 = arith.addf %110, %116 : vector<256x8xf32>
    %c1_108 = arith.constant 1 : index
    %c9_109 = arith.constant 9 : index
    %c0_110 = arith.constant 0 : index
    %118 = vector.load %arg9[%c1_108, %c9_109, %c0_110] : memref<18x25x8xf32, #tpu.memory_space<vmem>>, vector<16x16x8xf32>
    %119 = vector.shape_cast %118 : vector<16x16x8xf32> to vector<256x8xf32>
    %120 = arith.truncf %119 : vector<256x8xf32> to vector<256x8xbf16>
    %c5_111 = arith.constant 5 : index
    %c0_112 = arith.constant 0 : index
    %c0_113 = arith.constant 0 : index
    %121 = vector.load %arg4[%c5_111, %c0_112, %c0_113] : memref<9x8x8xbf16, #tpu.memory_space<vmem>>, vector<1x8x8xbf16>
    %122 = vector.shape_cast %121 : vector<1x8x8xbf16> to vector<8x8xbf16>
    %cst_114 = arith.constant dense<0.000000e+00> : vector<256x8xf32>
    %123 = tpu.matmul %120, %122, %cst_114 {dimension_numbers = #tpu.dot_dimension_numbers<[1], [0], [0], [1], [0, 0, 1, 1], [], []>} : vector<256x8xbf16>, vector<8x8xbf16>, vector<256x8xf32> -> vector<256x8xf32>
    %124 = arith.addf %117, %123 : vector<256x8xf32>
    %c2_115 = arith.constant 2 : index
    %c7_116 = arith.constant 7 : index
    %c0_117 = arith.constant 0 : index
    %125 = vector.load %arg9[%c2_115, %c7_116, %c0_117] : memref<18x25x8xf32, #tpu.memory_space<vmem>>, vector<16x16x8xf32>
    %126 = vector.shape_cast %125 : vector<16x16x8xf32> to vector<256x8xf32>
    %127 = arith.truncf %126 : vector<256x8xf32> to vector<256x8xbf16>
    %c6_118 = arith.constant 6 : index
    %c0_119 = arith.constant 0 : index
    %c0_120 = arith.constant 0 : index
    %128 = vector.load %arg4[%c6_118, %c0_119, %c0_120] : memref<9x8x8xbf16, #tpu.memory_space<vmem>>, vector<1x8x8xbf16>
    %129 = vector.shape_cast %128 : vector<1x8x8xbf16> to vector<8x8xbf16>
    %cst_121 = arith.constant dense<0.000000e+00> : vector<256x8xf32>
    %130 = tpu.matmul %127, %129, %cst_121 {dimension_numbers = #tpu.dot_dimension_numbers<[1], [0], [0], [1], [0, 0, 1, 1], [], []>} : vector<256x8xbf16>, vector<8x8xbf16>, vector<256x8xf32> -> vector<256x8xf32>
    %131 = arith.addf %124, %130 : vector<256x8xf32>
    %c2_122 = arith.constant 2 : index
    %c8_123 = arith.constant 8 : index
    %c0_124 = arith.constant 0 : index
    %132 = vector.load %arg9[%c2_122, %c8_123, %c0_124] : memref<18x25x8xf32, #tpu.memory_space<vmem>>, vector<16x16x8xf32>
    %133 = vector.shape_cast %132 : vector<16x16x8xf32> to vector<256x8xf32>
    %134 = arith.truncf %133 : vector<256x8xf32> to vector<256x8xbf16>
    %c7_125 = arith.constant 7 : index
    %c0_126 = arith.constant 0 : index
    %c0_127 = arith.constant 0 : index
    %135 = vector.load %arg4[%c7_125, %c0_126, %c0_127] : memref<9x8x8xbf16, #tpu.memory_space<vmem>>, vector<1x8x8xbf16>
    %136 = vector.shape_cast %135 : vector<1x8x8xbf16> to vector<8x8xbf16>
    %cst_128 = arith.constant dense<0.000000e+00> : vector<256x8xf32>
    %137 = tpu.matmul %134, %136, %cst_128 {dimension_numbers = #tpu.dot_dimension_numbers<[1], [0], [0], [1], [0, 0, 1, 1], [], []>} : vector<256x8xbf16>, vector<8x8xbf16>, vector<256x8xf32> -> vector<256x8xf32>
    %138 = arith.addf %131, %137 : vector<256x8xf32>
    %c2_129 = arith.constant 2 : index
    %c9_130 = arith.constant 9 : index
    %c0_131 = arith.constant 0 : index
    %139 = vector.load %arg9[%c2_129, %c9_130, %c0_131] : memref<18x25x8xf32, #tpu.memory_space<vmem>>, vector<16x16x8xf32>
    %140 = vector.shape_cast %139 : vector<16x16x8xf32> to vector<256x8xf32>
    %141 = arith.truncf %140 : vector<256x8xf32> to vector<256x8xbf16>
    %c8_132 = arith.constant 8 : index
    %c0_133 = arith.constant 0 : index
    %c0_134 = arith.constant 0 : index
    %142 = vector.load %arg4[%c8_132, %c0_133, %c0_134] : memref<9x8x8xbf16, #tpu.memory_space<vmem>>, vector<1x8x8xbf16>
    %143 = vector.shape_cast %142 : vector<1x8x8xbf16> to vector<8x8xbf16>
    %cst_135 = arith.constant dense<0.000000e+00> : vector<256x8xf32>
    %144 = tpu.matmul %141, %143, %cst_135 {dimension_numbers = #tpu.dot_dimension_numbers<[1], [0], [0], [1], [0, 0, 1, 1], [], []>} : vector<256x8xbf16>, vector<8x8xbf16>, vector<256x8xf32> -> vector<256x8xf32>
    %145 = arith.addf %138, %144 : vector<256x8xf32>
    %c0_136 = arith.constant 0 : index
    %c0_137 = arith.constant 0 : index
    %146 = vector.load %arg5[%c0_136, %c0_137] : memref<1x8xf32, #tpu.memory_space<vmem>>, vector<1x8xf32>
    %147 = vector.broadcast %146 : vector<1x8xf32> to vector<256x8xf32>
    %148 = arith.addf %145, %147 : vector<256x8xf32>
    %c0_138 = arith.constant 0 : index
    %c1_139 = arith.constant 1 : index
    %c1_140 = arith.constant 1 : index
    %c0_141 = arith.constant 0 : index
    %149 = vector.load %arg1[%c0_138, %c1_139, %c1_140, %c0_141] : memref<1x18x18x4xf32, #tpu.memory_space<vmem>>, vector<1x16x16x4xf32>
    %150 = vector.shape_cast %149 : vector<1x16x16x4xf32> to vector<16x16x4xf32>
    %151 = vector.shape_cast %150 : vector<16x16x4xf32> to vector<256x4xf32>
    %152 = arith.truncf %151 : vector<256x4xf32> to vector<256x4xbf16>
    %c0_142 = arith.constant 0 : index
    %c0_143 = arith.constant 0 : index
    %153 = vector.load %arg6[%c0_142, %c0_143] : memref<4x8xbf16, #tpu.memory_space<vmem>>, vector<4x8xbf16>
    %cst_144 = arith.constant dense<0.000000e+00> : vector<256x8xf32>
    %154 = tpu.matmul %152, %153, %cst_144 {dimension_numbers = #tpu.dot_dimension_numbers<[1], [0], [0], [1], [0, 0, 1, 1], [], []>} : vector<256x4xbf16>, vector<4x8xbf16>, vector<256x8xf32> -> vector<256x8xf32>
    %c0_145 = arith.constant 0 : index
    %c0_146 = arith.constant 0 : index
    %155 = vector.load %arg7[%c0_145, %c0_146] : memref<1x8xf32, #tpu.memory_space<vmem>>, vector<1x8xf32>
    %156 = vector.broadcast %155 : vector<1x8xf32> to vector<256x8xf32>
    %157 = arith.addf %154, %156 : vector<256x8xf32>
    %158 = arith.addf %148, %157 : vector<256x8xf32>
    %cst_147 = arith.constant 0.000000e+00 : f32
    %159 = vector.broadcast %cst_147 : f32 to vector<256x8xf32>
    %160 = arith.maximumf %158, %159 : vector<256x8xf32>
    %161 = tpu.transpose %160, [1, 0] : vector<256x8xf32> -> vector<8x256xf32>
    %c0_148 = arith.constant 0 : index
    %c0_149 = arith.constant 0 : index
    %c0_150 = arith.constant 0 : index
    %162 = vector.load %arg8[%c0_148, %c0_149, %c0_150] : memref<1x8x256xf32, #tpu.memory_space<vmem>>, vector<1x8x256xf32>
    %163 = vector.shape_cast %162 : vector<1x8x256xf32> to vector<8x256xf32>
    %164 = vector.shape_cast %161 : vector<8x256xf32> to vector<1x8x256xf32>
    tpu.vector_store %arg8[%c0_148, %c0_149, %c0_150], %164 {strides = array<i32>} : memref<1x8x256xf32, #tpu.memory_space<vmem>>, vector<1x8x256xf32>,
    return
  }
  func.func @transform_0(%arg0: i32) -> (i32, i32, i32, i32) {
    %c0_i32 = arith.constant 0 : i32
    %c0_i32_0 = arith.constant 0 : i32
    %c0_i32_1 = arith.constant 0 : i32
    %c0_i32_2 = arith.constant 0 : i32
    return %arg0, %c0_i32, %c0_i32_0, %c0_i32_1 : i32, i32, i32, i32
  }
  func.func @transform_1(%arg0: i32) -> (i32, i32, i32) {
    %c0_i32 = arith.constant 0 : i32
    %c0_i32_0 = arith.constant 0 : i32
    %c0_i32_1 = arith.constant 0 : i32
    %c0_i32_2 = arith.constant 0 : i32
    return %c0_i32, %c0_i32_0, %c0_i32_1 : i32, i32, i32
  }
  func.func @transform_2(%arg0: i32) -> (i32, i32) {
    %c0_i32 = arith.constant 0 : i32
    %c0_i32_0 = arith.constant 0 : i32
    %c0_i32_1 = arith.constant 0 : i32
    return %c0_i32, %c0_i32_0 : i32, i32
  }
  func.func @transform_3(%arg0: i32) -> (i32, i32, i32) {
    %c0_i32 = arith.constant 0 : i32
    %c0_i32_0 = arith.constant 0 : i32
    %c0_i32_1 = arith.constant 0 : i32
    %c0_i32_2 = arith.constant 0 : i32
    return %c0_i32, %c0_i32_0, %c0_i32_1 : i32, i32, i32
  }
  func.func @transform_4(%arg0: i32) -> (i32, i32) {
    %c0_i32 = arith.constant 0 : i32
    %c0_i32_0 = arith.constant 0 : i32
    %c0_i32_1 = arith.constant 0 : i32
    return %c0_i32, %c0_i32_0 : i32, i32
  }
  func.func @transform_5(%arg0: i32) -> (i32, i32) {
    %c0_i32 = arith.constant 0 : i32
    %c0_i32_0 = arith.constant 0 : i32
    %c0_i32_1 = arith.constant 0 : i32
    return %c0_i32, %c0_i32_0 : i32, i32
  }
  func.func @transform_6(%arg0: i32) -> (i32, i32) {
    %c0_i32 = arith.constant 0 : i32
    %c0_i32_0 = arith.constant 0 : i32
    %c0_i32_1 = arith.constant 0 : i32
    return %c0_i32, %c0_i32_0 : i32, i32
  }
  func.func @transform_7(%arg0: i32) -> (i32, i32, i32) {
    %c0_i32 = arith.constant 0 : i32
    %c0_i32_0 = arith.constant 0 : i32
    %c0_i32_1 = arith.constant 0 : i32
    return %arg0, %c0_i32, %c0_i32_0 : i32, i32, i32
  }
}

</mosaic_0001>

<llo_original>
// kernel: tpu_custom_call.1
$region0: #{tpu_custom_call.1}
  #allocation0 [shape = 'u32[]', space=smem, size = 0x4, offset = 0x4, fixed_abs, tag = 'smem constant byte address 0x4 - core index']
  #allocation1 [shape = 'u32[144,128]{1,0:T(1,128)}', space=vmem, size = 0x12000, scoped, tag = 'internal scratch']
  #allocation2 [shape = 'f32[18,25,8]{2,1,0:T(8,128)}', space=vmem, size = 0x48000, scoped, tag = 'scratch operand']
  %s0 = inlined_call_operand.vmem [shape: f32[2,18,18,4], index: 0, kind: input, shape index: {}]
  %s1 = inlined_call_operand.vmem [shape: bf16[9,4,8], index: 1, kind: input, shape index: {}]
  %s2 = inlined_call_operand.vmem [shape: f32[1,8], index: 2, kind: input, shape index: {}]
  %s3 = inlined_call_operand.vmem [shape: bf16[9,8,8], index: 3, kind: input, shape index: {}]
  %s4 = inlined_call_operand.vmem [shape: f32[1,8], index: 4, kind: input, shape index: {}]
  %s5 = inlined_call_operand.vmem [shape: bf16[4,8], index: 5, kind: input, shape index: {}]
  %s6 = inlined_call_operand.vmem [shape: f32[1,8], index: 6, kind: input, shape index: {}]
  %s7 = inlined_call_operand.hbm [shape: f32[2,8,256], index: 7, kind: output, shape index: {}]
  %s8 = sld [smem:[#allocation0]]
  $region61: #{tpu_custom_call.1} parent=0
    _
  %s10 = ssub.s32 1, %s8
  %s11 = scalar_select 0, %s10, %s8
  $region1: #{tpu_custom_call.1} parent=0
    #allocation3 [shape = 'u8[16384]{0}', space=vmem, size = 0x4000, scoped, tag = 'output window, operand 0']
    #allocation4 [shape = 's32[2]{0}', space=sflag, size = 0x8, scoped, tag = 'scoped memory for tpu_custom_call.1']
    %12 = vsyncpa [#allocation4], 0
    %s13 = scalar_lea.sflag [#allocation4], 1
    %14 = vsyncpa %s13, 0
    loop: start=0, step=1, limit=4
    $region2: #{tpu_custom_call.1} parent=1 // loop_pre_header
      _
    $region3: #{tpu_custom_call.1} parent=1 // loop_header
      %s16 = sphi 0, %s20
      %p17 = scmp.ge.s32.totalorder %s16, 4
      %s26 = sphi 0, %s28
      %s29 = sphi 0, %s26
      %s30 = sphi 0, %s29
      %s46 = sphi 0, %s30
      %s50 = sphi 0, %s50
      %s52 = sphi 0, %s50
      %s53 = sphi 0, %s52
      %s67 = sphi 0, %s53
      %s71 = sphi 0, %s71
      %s73 = sphi 0, %s71
      %s74 = sphi 0, %s73
      %s88 = sphi 0, %s74
      %s92 = sphi 0, %s92
      %s94 = sphi 0, %s92
      %s95 = sphi 0, %s94
      %s109 = sphi 0, %s95
      %s113 = sphi 0, %s113
      %s115 = sphi 0, %s113
      %s116 = sphi 0, %s115
      %s130 = sphi 0, %s116
      %s134 = sphi 0, %s134
      %s136 = sphi 0, %s134
      %s137 = sphi 0, %s136
      %s151 = sphi 0, %s137
      %s155 = sphi 0, %s155
      %s157 = sphi 0, %s155
      %s158 = sphi 0, %s157
      %s172 = sphi 0, %s158
      %s178 = sphi 0, %s180
      %s181 = sphi 0, %s178
      %s182 = sphi 0, %s181
      %s198 = sphi 0, %s182
    $region4: #{tpu_custom_call.1} parent=1 // loop_header_branch
      %19 = sbr.rel (%p17) target = $region8
    $region5: #{tpu_custom_call.1} parent=1 // loop_body
      %s21 = ssub.s32 %s16, 1
      %s22 = ssub.s32 %s16, 2
      %s23 = sadd.s32 %s16, 1
      %s24 = ssub.s32 %s16, %s23
      %p25 = scmp.eq.s32.totalorder %s24, 0
      %s27 = sadd.s32 %s26, 1
      %s28 = scalar_select %p25, %s26, %s27
      %p31 = pneg %p25
      %p32 = scmp.eq.s32.totalorder %s16, 1
      %p33 = por %p31, %p32
      %p34 = scmp.ne.s32.totalorder %s26, %s29
      %p35 = scmp.eq.s32.totalorder %s16, 0
      %p36 = por %p34, %p35
      %p37 = scmp.ne.s32.totalorder %s26, %s29
      %p38 = scmp.eq.s32.totalorder %s21, 1
      %p39 = por %p37, %p38
      %p40 = scmp.ne.s32.totalorder %s29, %s30
      %p41 = scmp.eq.s32.totalorder %s21, 0
      %p42 = por %p40, %p41
      %p43 = scmp.ne.s32.totalorder %s29, %s30
      %p44 = scmp.eq.s32.totalorder %s22, 1
      %p45 = por %p43, %p44
      %p47 = scmp.ne.s32.totalorder %s30, %s46
      %p48 = scmp.eq.s32.totalorder %s22, 0
      %p49 = por %p47, %p48
      %s51 = sadd.s32 %s50, 1
      %p54 = scmp.eq.s32.totalorder %s16, 1
      %p55 = scmp.ne.s32.totalorder %s50, %s52
      %p56 = scmp.eq.s32.totalorder %s16, 0
      %p57 = por %p55, %p56
      %p58 = scmp.ne.s32.totalorder %s50, %s52
      %p59 = scmp.eq.s32.totalorder %s21, 1
      %p60 = por %p58, %p59
      %p61 = scmp.ne.s32.totalorder %s52, %s53
      %p62 = scmp.eq.s32.totalorder %s21, 0
      %p63 = por %p61, %p62
      %p64 = scmp.ne.s32.totalorder %s52, %s53
      %p65 = scmp.eq.s32.totalorder %s22, 1
      %p66 = por %p64, %p65
      %p68 = scmp.ne.s32.totalorder %s53, %s67
      %p69 = scmp.eq.s32.totalorder %s22, 0
      %p70 = por %p68, %p69
      %s72 = sadd.s32 %s71, 1
      %p75 = scmp.eq.s32.totalorder %s16, 1
      %p76 = scmp.ne.s32.totalorder %s71, %s73
      %p77 = scmp.eq.s32.totalorder %s16, 0
      %p78 = por %p76, %p77
      %p79 = scmp.ne.s32.totalorder %s71, %s73
      %p80 = scmp.eq.s32.totalorder %s21, 1
      %p81 = por %p79, %p80
      %p82 = scmp.ne.s32.totalorder %s73, %s74
      %p83 = scmp.eq.s32.totalorder %s21, 0
      %p84 = por %p82, %p83
      %p85 = scmp.ne.s32.totalorder %s73, %s74
      %p86 = scmp.eq.s32.totalorder %s22, 1
      %p87 = por %p85, %p86
      %p89 = scmp.ne.s32.totalorder %s74, %s88
      %p90 = scmp.eq.s32.totalorder %s22, 0
      %p91 = por %p89, %p90
      %s93 = sadd.s32 %s92, 1
      %p96 = scmp.eq.s32.totalorder %s16, 1
      %p97 = scmp.ne.s32.totalorder %s92, %s94
      %p98 = scmp.eq.s32.totalorder %s16, 0
      %p99 = por %p97, %p98
      %p100 = scmp.ne.s32.totalorder %s92, %s94
      %p101 = scmp.eq.s32.totalorder %s21, 1
      %p102 = por %p100, %p101
      %p103 = scmp.ne.s32.totalorder %s94, %s95
      %p104 = scmp.eq.s32.totalorder %s21, 0
      %p105 = por %p103, %p104
      %p106 = scmp.ne.s32.totalorder %s94, %s95
      %p107 = scmp.eq.s32.totalorder %s22, 1
      %p108 = por %p106, %p107
      %p110 = scmp.ne.s32.totalorder %s95, %s109
      %p111 = scmp.eq.s32.totalorder %s22, 0
      %p112 = por %p110, %p111
      %s114 = sadd.s32 %s113, 1
      %p117 = scmp.eq.s32.totalorder %s16, 1
      %p118 = scmp.ne.s32.totalorder %s113, %s115
      %p119 = scmp.eq.s32.totalorder %s16, 0
      %p120 = por %p118, %p119
      %p121 = scmp.ne.s32.totalorder %s113, %s115
      %p122 = scmp.eq.s32.totalorder %s21, 1
      %p123 = por %p121, %p122
      %p124 = scmp.ne.s32.totalorder %s115, %s116
      %p125 = scmp.eq.s32.totalorder %s21, 0
      %p126 = por %p124, %p125
      %p127 = scmp.ne.s32.totalorder %s115, %s116
      %p128 = scmp.eq.s32.totalorder %s22, 1
      %p129 = por %p127, %p128
      %p131 = scmp.ne.s32.totalorder %s116, %s130
      %p132 = scmp.eq.s32.totalorder %s22, 0
      %p133 = por %p131, %p132
      %s135 = sadd.s32 %s134, 1
      %p138 = scmp.eq.s32.totalorder %s16, 1
      %p139 = scmp.ne.s32.totalorder %s134, %s136
      %p140 = scmp.eq.s32.totalorder %s16, 0
      %p141 = por %p139, %p140
      %p142 = scmp.ne.s32.totalorder %s134, %s136
      %p143 = scmp.eq.s32.totalorder %s21, 1
      %p144 = por %p142, %p143
      %p145 = scmp.ne.s32.totalorder %s136, %s137
      %p146 = scmp.eq.s32.totalorder %s21, 0
      %p147 = por %p145, %p146
      %p148 = scmp.ne.s32.totalorder %s136, %s137
      %p149 = scmp.eq.s32.totalorder %s22, 1
      %p150 = por %p148, %p149
      %p152 = scmp.ne.s32.totalorder %s137, %s151
      %p153 = scmp.eq.s32.totalorder %s22, 0
      %p154 = por %p152, %p153
      %s156 = sadd.s32 %s155, 1
      %p159 = scmp.eq.s32.totalorder %s16, 1
      %p160 = scmp.ne.s32.totalorder %s155, %s157
      %p161 = scmp.eq.s32.totalorder %s16, 0
      %p162 = por %p160, %p161
      %p163 = scmp.ne.s32.totalorder %s155, %s157
      %p164 = scmp.eq.s32.totalorder %s21, 1
      %p165 = por %p163, %p164
      %p166 = scmp.ne.s32.totalorder %s157, %s158
      %p167 = scmp.eq.s32.totalorder %s21, 0
      %p168 = por %p166, %p167
      %p169 = scmp.ne.s32.totalorder %s157, %s158
      %p170 = scmp.eq.s32.totalorder %s22, 1
      %p171 = por %p169, %p170
      %p173 = scmp.ne.s32.totalorder %s158, %s172
      %p174 = scmp.eq.s32.totalorder %s22, 0
      %p175 = por %p173, %p174
      %s176 = ssub.s32 %s16, %s23
      %p177 = scmp.eq.s32.totalorder %s176, 0
      %s179 = sadd.s32 %s178, 1
      %s180 = scalar_select %p177, %s178, %s179
      %p183 = pneg %p177
      %p184 = scmp.eq.s32.totalorder %s16, 1
      %p185 = por %p183, %p184
      %p186 = scmp.ne.s32.totalorder %s178, %s181
      %p187 = scmp.eq.s32.totalorder %s16, 0
      %p188 = por %p186, %p187
      %p189 = scmp.ne.s32.totalorder %s178, %s181
      %p190 = scmp.eq.s32.totalorder %s21, 1
      %p191 = por %p189, %p190
      %p192 = scmp.ne.s32.totalorder %s181, %s182
      %p193 = scmp.eq.s32.totalorder %s21, 0
      %p194 = por %p192, %p193
      %p195 = scmp.ne.s32.totalorder %s181, %s182
      %p196 = scmp.eq.s32.totalorder %s22, 1
      %p197 = por %p195, %p196
      %p199 = scmp.ne.s32.totalorder %s182, %s198
      %p200 = scmp.eq.s32.totalorder %s22, 0
      %p201 = por %p199, %p200
      %p202 = scmp.le.s32.totalorder 1, %s16
      %p203 = scmp.lt.s32.totalorder %s16, 3
      %p204 = pnand %p202, %p203
      %p205 = pneg %p204
      // Predicated region
      $region9: #{tpu_custom_call.1} parent=5 // pred_check
        _
      $region10: #{tpu_custom_call.1} parent=5 // pred_check_branch
        %207 = sbr.rel (%p204) target = $region12
      $region11: #{tpu_custom_call.1} parent=5 // pred_region
        %s208 = ssub.s32 %s16, 1
        // Predicated region
        $region13: #{tpu_custom_call.1} parent=11 // pred_check
          %p209 = pneg %p63
        $region14: #{tpu_custom_call.1} parent=11 // pred_check_branch
          %211 = sbr.rel (%p209) target = $region16
        $region15: #{tpu_custom_call.1} parent=11 // pred_region
          _
        $region16: #{tpu_custom_call.1} parent=11 // pred_fallthru
          _
        // Predicated region
        $region17: #{tpu_custom_call.1} parent=11 // pred_check
          %p212 = pneg %p84
        $region18: #{tpu_custom_call.1} parent=11 // pred_check_branch
          %214 = sbr.rel (%p212) target = $region20
        $region19: #{tpu_custom_call.1} parent=11 // pred_region
          _
        $region20: #{tpu_custom_call.1} parent=11 // pred_fallthru
          _
        // Predicated region
        $region21: #{tpu_custom_call.1} parent=11 // pred_check
          %p215 = pneg %p105
        $region22: #{tpu_custom_call.1} parent=11 // pred_check_branch
          %217 = sbr.rel (%p215) target = $region24
        $region23: #{tpu_custom_call.1} parent=11 // pred_region
          _
        $region24: #{tpu_custom_call.1} parent=11 // pred_fallthru
          _
        // Predicated region
        $region25: #{tpu_custom_call.1} parent=11 // pred_check
          %p218 = pneg %p126
        $region26: #{tpu_custom_call.1} parent=11 // pred_check_branch
          %220 = sbr.rel (%p218) target = $region28
        $region27: #{tpu_custom_call.1} parent=11 // pred_region
          _
        $region28: #{tpu_custom_call.1} parent=11 // pred_fallthru
          _
        // Predicated region
        $region29: #{tpu_custom_call.1} parent=11 // pred_check
          %p221 = pneg %p147
        $region30: #{tpu_custom_call.1} parent=11 // pred_check_branch
          %223 = sbr.rel (%p221) target = $region32
        $region31: #{tpu_custom_call.1} parent=11 // pred_region
          _
        $region32: #{tpu_custom_call.1} parent=11 // pred_fallthru
          _
        // Predicated region
        $region33: #{tpu_custom_call.1} parent=11 // pred_check
          %p224 = pneg %p168
        $region34: #{tpu_custom_call.1} parent=11 // pred_check_branch
          %226 = sbr.rel (%p224) target = $region36
        $region35: #{tpu_custom_call.1} parent=11 // pred_region
          _
        $region36: #{tpu_custom_call.1} parent=11 // pred_fallthru
          _
      $region12: #{tpu_custom_call.1} parent=5 // pred_fallthru
        _
      %p227 = scmp.lt.s32.totalorder %s16, 2
      // Predicated region
      $region37: #{tpu_custom_call.1} parent=5 // pred_check
        %p228 = pneg %p227
      $region38: #{tpu_custom_call.1} parent=5 // pred_check_branch
        %230 = sbr.rel (%p228) target = $region40
      $region39: #{tpu_custom_call.1} parent=5 // pred_region
        // Predicated region
        $region41: #{tpu_custom_call.1} parent=39 // pred_check
          %p231 = pneg %p36
        $region42: #{tpu_custom_call.1} parent=39 // pred_check_branch
          %233 = sbr.rel (%p231) target = $region44
        $region43: #{tpu_custom_call.1} parent=39 // pred_region
          %p234 = scmp.lt.s32.totalorder %s16, 1
          %s235 = scalar_select %p234, %s16, 1
          %s236 = smul.addr %s235, 54
          %s237 = smul.addr %s236, 8
          %s238 = scalar_lea.vmem %s0, %s237
        $region44: #{tpu_custom_call.1} parent=39 // pred_fallthru
          _
      $region40: #{tpu_custom_call.1} parent=5 // pred_fallthru
        _
      %p239 = scmp.le.s32.totalorder 1, %s16
      %p240 = scmp.lt.s32.totalorder %s16, 3
      %p241 = pnand %p239, %p240
      %p242 = pneg %p241
      // Predicated region
      $region45: #{tpu_custom_call.1} parent=5 // pred_check
        _
      $region46: #{tpu_custom_call.1} parent=5 // pred_check_branch
        %244 = sbr.rel (%p241) target = $region48
      $region47: #{tpu_custom_call.1} parent=5 // pred_region
        %s245 = ssub.s32 %s16, 1
        %p246 = scmp.lt.s32.totalorder %s21, 1
        %s247 = scalar_select %p246, %s21, 1
        %s248 = smul.addr %s247, 54
        %s249 = smul.addr %s248, 8
        %s250 = scalar_lea.vmem %s0, %s249
        %p251 = pneg %p42
        %p252 = pneg %p39
        %p253 = pneg %p63
        %p254 = pneg %p60
        %p255 = pneg %p84
        %p256 = pneg %p81
        %p257 = pneg %p105
        %p258 = pneg %p102
        %p259 = pneg %p126
        %p260 = pneg %p123
        %p261 = pneg %p147
        %p262 = pneg %p144
        %p263 = pneg %p168
        %p264 = pneg %p165
        %p265 = pneg %p194
        %p266 = pneg %p191
        %s267 = sand.u32 %s181, 1
        %s268 = scalar_lea.sflag [#allocation4], %s267
        %s269 = sand.u32 %s181, 1
        %s270 = smul.addr %s269, 16
        %s271 = scalar_lea.vmem [#allocation3], %s270
        %p272 = scmp.lt.s32.totalorder %s21, 1
        %s273 = scalar_select %p272, %s21, 1
        %s274 = smul.addr %s273, 54
        %s275 = smul.addr %s274, 8
        %s276 = scalar_lea.vmem %s0, %s275
        %v278 = vld [vmem:[%s276] sm:$0xff]
        %v279 = vld [vmem:[%s276 + $0x8] sm:$0xff]
        %v280 = vld [vmem:[%s276 + $0x18] sm:$0xff]
        %v281 = vld [vmem:[%s276 + $0x20] sm:$0xff]
        %v282 = vld [vmem:[%s276 + $0x30] sm:$0xff]
        %v283 = vld [vmem:[%s276 + $0x38] sm:$0xff]
        %v284 = vld [vmem:[%s276 + $0x48] sm:$0xff]
        %v285 = vld [vmem:[%s276 + $0x50] sm:$0xff]
        %v286 = vld [vmem:[%s276 + $0x60] sm:$0xff]
        %v287 = vld [vmem:[%s276 + $0x68] sm:$0xff]
        %v288 = vld [vmem:[%s276 + $0x78] sm:$0xff]
        %v289 = vld [vmem:[%s276 + $0x80] sm:$0xff]
        %v290 = vld [vmem:[%s276 + $0x90] sm:$0xff]
        %v291 = vld [vmem:[%s276 + $0x98] sm:$0xff]
        %v292 = vld [vmem:[%s276 + $0xa8] sm:$0xff]
        %v293 = vld [vmem:[%s276 + $0xb0] sm:$0xff]
        %v294 = vld [vmem:[%s276 + $0xc0] sm:$0xff]
        %v295 = vld [vmem:[%s276 + $0xc8] sm:$0xff]
        %v296 = vld [vmem:[%s276 + $0xd8] sm:$0xff]
        %v297 = vld [vmem:[%s276 + $0xe0] sm:$0xff]
        %v298 = vld [vmem:[%s276 + $0xf0] sm:$0xff]
        %v299 = vld [vmem:[%s276 + $0xf8] sm:$0xff]
        %v300 = vld [vmem:[%s276 + $0x108] sm:$0xff]
        %v301 = vld [vmem:[%s276 + $0x110] sm:$0xff]
        %v302 = vld [vmem:[%s276 + $0x120] sm:$0xff]
        %v303 = vld [vmem:[%s276 + $0x128] sm:$0xff]
        %v304 = vld [vmem:[%s276 + $0x138] sm:$0xff]
        %v305 = vld [vmem:[%s276 + $0x140] sm:$0xff]
        %v306 = vld [vmem:[%s276 + $0x150] sm:$0xff]
        %v307 = vld [vmem:[%s276 + $0x158] sm:$0xff]
        %v308 = vld [vmem:[%s276 + $0x168] sm:$0xff]
        %v309 = vld [vmem:[%s276 + $0x170] sm:$0xff]
        %v310 = vpack.c.bf16 %v279, %v278
        %v311 = vpack.c.bf16 %v281, %v280
        %v312 = vpack.c.bf16 %v283, %v282
        %v313 = vpack.c.bf16 %v285, %v284
        %v314 = vpack.c.bf16 %v287, %v286
        %v315 = vpack.c.bf16 %v289, %v288
        %v316 = vpack.c.bf16 %v291, %v290
        %v317 = vpack.c.bf16 %v293, %v292
        %v318 = vpack.c.bf16 %v295, %v294
        %v319 = vpack.c.bf16 %v297, %v296
        %v320 = vpack.c.bf16 %v299, %v298
        %v321 = vpack.c.bf16 %v301, %v300
        %v322 = vpack.c.bf16 %v303, %v302
        %v323 = vpack.c.bf16 %v305, %v304
        %v324 = vpack.c.bf16 %v307, %v306
        %v325 = vpack.c.bf16 %v309, %v308
        %v326 = vld [vmem:[%s1] sm:$0x3]
        %v327 = vld [vmem:[%s276 + $0x1] sm:$0xff]
        %v328 = vld [vmem:[%s276 + $0x9] sm:$0xff]
        %v329 = vld [vmem:[%s276 + $0x19] sm:$0xff]
        %v330 = vld [vmem:[%s276 + $0x21] sm:$0xff]
        %v331 = vld [vmem:[%s276 + $0x31] sm:$0xff]
        %v332 = vld [vmem:[%s276 + $0x39] sm:$0xff]
        %v333 = vld [vmem:[%s276 + $0x49] sm:$0xff]
        %v334 = vld [vmem:[%s276 + $0x51] sm:$0xff]
        %v335 = vld [vmem:[%s276 + $0x61] sm:$0xff]
        %v336 = vld [vmem:[%s276 + $0x69] sm:$0xff]
        %v337 = vld [vmem:[%s276 + $0x79] sm:$0xff]
        %v338 = vld [vmem:[%s276 + $0x81] sm:$0xff]
        %v339 = vld [vmem:[%s276 + $0x91] sm:$0xff]
        %v340 = vld [vmem:[%s276 + $0x99] sm:$0xff]
        %v341 = vld [vmem:[%s276 + $0xa9] sm:$0xff]
        %v342 = vld [vmem:[%s276 + $0xb1] sm:$0xff]
        %v343 = vld [vmem:[%s276 + $0xc1] sm:$0xff]
        %v344 = vld [vmem:[%s276 + $0xc9] sm:$0xff]
        %v345 = vld [vmem:[%s276 + $0xd9] sm:$0xff]
        %v346 = vld [vmem:[%s276 + $0xe1] sm:$0xff]
        %v347 = vld [vmem:[%s276 + $0xf1] sm:$0xff]
        %v348 = vld [vmem:[%s276 + $0xf9] sm:$0xff]
        %v349 = vld [vmem:[%s276 + $0x109] sm:$0xff]
        %v350 = vld [vmem:[%s276 + $0x111] sm:$0xff]
        %v351 = vld [vmem:[%s276 + $0x121] sm:$0xff]
        %v352 = vld [vmem:[%s276 + $0x129] sm:$0xff]
        %v353 = vld [vmem:[%s276 + $0x139] sm:$0xff]
        %v354 = vld [vmem:[%s276 + $0x141] sm:$0xff]
        %v355 = vld [vmem:[%s276 + $0x151] sm:$0xff]
        %v356 = vld [vmem:[%s276 + $0x159] sm:$0xff]
        %v357 = vld [vmem:[%s276 + $0x169] sm:$0xff]
        %v358 = vld [vmem:[%s276 + $0x171] sm:$0xff]
        %v359 = vpack.c.bf16 %v328, %v327
        %v360 = vpack.c.bf16 %v330, %v329
        %v361 = vpack.c.bf16 %v332, %v331
        %v362 = vpack.c.bf16 %v334, %v333
        %v363 = vpack.c.bf16 %v336, %v335
        %v364 = vpack.c.bf16 %v338, %v337
        %v365 = vpack.c.bf16 %v340, %v339
        %v366 = vpack.c.bf16 %v342, %v341
        %v367 = vpack.c.bf16 %v344, %v343
        %v368 = vpack.c.bf16 %v346, %v345
        %v369 = vpack.c.bf16 %v348, %v347
        %v370 = vpack.c.bf16 %v350, %v349
        %v371 = vpack.c.bf16 %v352, %v351
        %v372 = vpack.c.bf16 %v354, %v353
        %v373 = vpack.c.bf16 %v356, %v355
        %v374 = vpack.c.bf16 %v358, %v357
        %s375 = scalar_lea.vmem %s1, 2
        %v376 = vld [vmem:[%s375] sm:$0x3]
        %vm377 = vcmask 31744
        %v379 = vsel %vm377, %v359, 0
        %v382 = vsel %vm377, %v360, 0
        %v385 = vsel %vm377, %v361, 0
        %v388 = vsel %vm377, %v362, 0
        %v391 = vsel %vm377, %v363, 0
        %v394 = vsel %vm377, %v364, 0
        %v397 = vsel %vm377, %v365, 0
        %v400 = vsel %vm377, %v366, 0
        %v403 = vsel %vm377, %v367, 0
        %v406 = vsel %vm377, %v368, 0
        %v409 = vsel %vm377, %v369, 0
        %v412 = vsel %vm377, %v370, 0
        %v415 = vsel %vm377, %v371, 0
        %v418 = vsel %vm377, %v372, 0
        %v421 = vsel %vm377, %v373, 0
        %v424 = vsel %vm377, %v374, 0
        %vm426 = vcmask 1041408
        %v428 = vsel %vm426, %v376, 0
        %430 = vmatprep.subr.bf16.mxu0 0
        %431 = vmatpush1.bf16.msra.mxu0 %v428
        %432 = vmatprep.subr.bf16.mxu0 0
        %433 = vmatpush1.bf16.msra.mxu0 0
        %434 = vmatprep.subr.bf16.mxu0 0
        %435 = vmatpush1.bf16.msra.mxu0 0
        %436 = vmatprep.subr.bf16.mxu0 0
        %437 = vmatpush1.bf16.msra.mxu0 0
        %438 = vmatprep.subr.bf16.mxu0 0
        %439 = vmatpush1.bf16.msra.mxu0 0
        %440 = vmatprep.subr.bf16.mxu0 0
        %441 = vmatpush1.bf16.msra.mxu0 0
        %442 = vmatprep.subr.bf16.mxu0 0
        %443 = vmatpush1.bf16.msra.mxu0 0
        %444 = vmatprep.subr.bf16.mxu0 0
        %445 = vmatpush1.bf16.msra.mxu0 0
        %446 = vmatprep.subr.bf16.mxu0 0
        %447 = vmatpush1.bf16.msra.mxu0 0
        %448 = vmatprep.subr.bf16.mxu0 0
        %449 = vmatpush1.bf16.msra.mxu0 0
        %450 = vmatprep.subr.bf16.mxu0 0
        %451 = vmatpush1.bf16.msra.mxu0 0
        %452 = vmatprep.subr.bf16.mxu0 0
        %453 = vmatpush1.bf16.msra.mxu0 0
        %454 = vmatprep.subr.bf16.mxu0 0
        %455 = vmatpush1.bf16.msra.mxu0 0
        %456 = vmatprep.subr.bf16.mxu0 0
        %457 = vmatpush1.bf16.msra.mxu0 0
        %458 = vmatprep.subr.bf16.mxu0 0
        %459 = vmatpush1.bf16.msra.mxu0 0
        %460 = vmatprep.subr.bf16.mxu0 0
        %461 = vmatpush1.bf16.msra.mxu0 0
        %462 = vmatprep.mubr.bf16.mxu0 0
        %463 = vmatmul.mubr.bf16.gmra.mrb[0].mxu0 %v379
        %v464 = vpop.f32.mrb[0].mxu0
        %v465 = vadd.f32 0.0, %v464
        %v466 = vpop.f32.mrb[0].mxu0
        %v467 = vpop.f32.mrb[0].mxu0
        %v468 = vadd.f32 0.0, %v467
        %v469 = vpop.f32.mrb[0].mxu0
        %470 = vmatprep.mubr.bf16.mxu0 0
        %471 = vmatmul.mubr.bf16.gmra.mrb[0].mxu0 %v382
        %v472 = vpop.f32.mrb[0].mxu0
        %v473 = vadd.f32 0.0, %v472
        %v474 = vpop.f32.mrb[0].mxu0
        %v475 = vpop.f32.mrb[0].mxu0
        %v476 = vadd.f32 0.0, %v475
        %v477 = vpop.f32.mrb[0].mxu0
        %478 = vmatprep.mubr.bf16.mxu0 0
        %479 = vmatmul.mubr.bf16.gmra.mrb[0].mxu0 %v385
        %v480 = vpop.f32.mrb[0].mxu0
        %v481 = vadd.f32 0.0, %v480
        %v482 = vpop.f32.mrb[0].mxu0
        %v483 = vpop.f32.mrb[0].mxu0
        %v484 = vadd.f32 0.0, %v483
        %v485 = vpop.f32.mrb[0].mxu0
        %486 = vmatprep.mubr.bf16.mxu0 0
        %487 = vmatmul.mubr.bf16.gmra.mrb[0].mxu0 %v388
        %v488 = vpop.f32.mrb[0].mxu0
        %v489 = vadd.f32 0.0, %v488
        %v490 = vpop.f32.mrb[0].mxu0
        %v491 = vpop.f32.mrb[0].mxu0
        %v492 = vadd.f32 0.0, %v491
        %v493 = vpop.f32.mrb[0].mxu0
        %494 = vmatprep.mubr.bf16.mxu0 0
        %495 = vmatmul.mubr.bf16.gmra.mrb[0].mxu0 %v391
        %v496 = vpop.f32.mrb[0].mxu0
        %v497 = vadd.f32 0.0, %v496
        %v498 = vpop.f32.mrb[0].mxu0
        %v499 = vpop.f32.mrb[0].mxu0
        %v500 = vadd.f32 0.0, %v499
        %v501 = vpop.f32.mrb[0].mxu0
        %502 = vmatprep.mubr.bf16.mxu0 0
        %503 = vmatmul.mubr.bf16.gmra.mrb[0].mxu0 %v394
        %v504 = vpop.f32.mrb[0].mxu0
        %v505 = vadd.f32 0.0, %v504
        %v506 = vpop.f32.mrb[0].mxu0
        %v507 = vpop.f32.mrb[0].mxu0
        %v508 = vadd.f32 0.0, %v507
        %v509 = vpop.f32.mrb[0].mxu0
        %510 = vmatprep.mubr.bf16.mxu0 0
        %511 = vmatmul.mubr.bf16.gmra.mrb[0].mxu0 %v397
        %v512 = vpop.f32.mrb[0].mxu0
        %v513 = vadd.f32 0.0, %v512
        %v514 = vpop.f32.mrb[0].mxu0
        %v515 = vpop.f32.mrb[0].mxu0
        %v516 = vadd.f32 0.0, %v515
        %v517 = vpop.f32.mrb[0].mxu0
        %518 = vmatprep.mubr.bf16.mxu0 0
        %519 = vmatmul.mubr.bf16.gmra.mrb[0].mxu0 %v400
        %v520 = vpop.f32.mrb[0].mxu0
        %v521 = vadd.f32 0.0, %v520
        %v522 = vpop.f32.mrb[0].mxu0
        %v523 = vpop.f32.mrb[0].mxu0
        %v524 = vadd.f32 0.0, %v523
        %v525 = vpop.f32.mrb[0].mxu0
        %526 = vmatprep.mubr.bf16.mxu0 0
        %527 = vmatmul.mubr.bf16.gmra.mrb[0].mxu0 %v403
        %v528 = vpop.f32.mrb[0].mxu0
        %v529 = vadd.f32 0.0, %v528
        %v530 = vpop.f32.mrb[0].mxu0
        %v531 = vpop.f32.mrb[0].mxu0
        %v532 = vadd.f32 0.0, %v531
        %v533 = vpop.f32.mrb[0].mxu0
        %534 = vmatprep.mubr.bf16.mxu0 0
        %535 = vmatmul.mubr.bf16.gmra.mrb[0].mxu0 %v406
        %v536 = vpop.f32.mrb[0].mxu0
        %v537 = vadd.f32 0.0, %v536
        %v538 = vpop.f32.mrb[0].mxu0
        %v539 = vpop.f32.mrb[0].mxu0
        %v540 = vadd.f32 0.0, %v539
        %v541 = vpop.f32.mrb[0].mxu0
        %542 = vmatprep.mubr.bf16.mxu0 0
        %543 = vmatmul.mubr.bf16.gmra.mrb[0].mxu0 %v409
        %v544 = vpop.f32.mrb[0].mxu0
        %v545 = vadd.f32 0.0, %v544
        %v546 = vpop.f32.mrb[0].mxu0
        %v547 = vpop.f32.mrb[0].mxu0
        %v548 = vadd.f32 0.0, %v547
        %v549 = vpop.f32.mrb[0].mxu0
        %550 = vmatprep.mubr.bf16.mxu0 0
        %551 = vmatmul.mubr.bf16.gmra.mrb[0].mxu0 %v412
        %v552 = vpop.f32.mrb[0].mxu0
        %v553 = vadd.f32 0.0, %v552
        %v554 = vpop.f32.mrb[0].mxu0
        %v555 = vpop.f32.mrb[0].mxu0
        %v556 = vadd.f32 0.0, %v555
        %v557 = vpop.f32.mrb[0].mxu0
        %558 = vmatprep.mubr.bf16.mxu0 0
        %559 = vmatmul.mubr.bf16.gmra.mrb[0].mxu0 %v415
        %v560 = vpop.f32.mrb[0].mxu0
        %v561 = vadd.f32 0.0, %v560
        %v562 = vpop.f32.mrb[0].mxu0
        %v563 = vpop.f32.mrb[0].mxu0
        %v564 = vadd.f32 0.0, %v563
        %v565 = vpop.f32.mrb[0].mxu0
        %566 = vmatprep.mubr.bf16.mxu0 0
        %567 = vmatmul.mubr.bf16.gmra.mrb[0].mxu0 %v418
        %v568 = vpop.f32.mrb[0].mxu0
        %v569 = vadd.f32 0.0, %v568
        %v570 = vpop.f32.mrb[0].mxu0
        %v571 = vpop.f32.mrb[0].mxu0
        %v572 = vadd.f32 0.0, %v571
        %v573 = vpop.f32.mrb[0].mxu0
        %574 = vmatprep.mubr.bf16.mxu0 0
        %575 = vmatmul.mubr.bf16.gmra.mrb[0].mxu0 %v421
        %v576 = vpop.f32.mrb[0].mxu0
        %v577 = vadd.f32 0.0, %v576
        %v578 = vpop.f32.mrb[0].mxu0
        %v579 = vpop.f32.mrb[0].mxu0
        %v580 = vadd.f32 0.0, %v579
        %v581 = vpop.f32.mrb[0].mxu0
        %582 = vmatprep.mubr.bf16.mxu0 0
        %583 = vmatmul.mubr.bf16.gmra.mrb[0].mxu0 %v424
        %v584 = vpop.f32.mrb[0].mxu0
        %v585 = vadd.f32 0.0, %v584
        %v586 = vpop.f32.mrb[0].mxu0
        %v587 = vpop.f32.mrb[0].mxu0
        %v588 = vadd.f32 0.0, %v587
        %v589 = vpop.f32.mrb[0].mxu0
        %590 = vdwg.mxu0
        %v592 = vsel %vm377, %v310, 0
        %v595 = vsel %vm377, %v311, 0
        %v598 = vsel %vm377, %v312, 0
        %v601 = vsel %vm377, %v313, 0
        %v604 = vsel %vm377, %v314, 0
        %v607 = vsel %vm377, %v315, 0
        %v610 = vsel %vm377, %v316, 0
        %v613 = vsel %vm377, %v317, 0
        %v616 = vsel %vm377, %v318, 0
        %v619 = vsel %vm377, %v319, 0
        %v622 = vsel %vm377, %v320, 0
        %v625 = vsel %vm377, %v321, 0
        %v628 = vsel %vm377, %v322, 0
        %v631 = vsel %vm377, %v323, 0
        %v634 = vsel %vm377, %v324, 0
        %v637 = vsel %vm377, %v325, 0
        %v640 = vsel %vm426, %v326, 0
        %642 = vmatprep.subr.bf16.mxu0 0
        %643 = vmatpush1.bf16.msra.mxu0 %v640
        %644 = vmatprep.subr.bf16.mxu0 0
        %645 = vmatpush1.bf16.msra.mxu0 0
        %646 = vmatprep.subr.bf16.mxu0 0
        %647 = vmatpush1.bf16.msra.mxu0 0
        %648 = vmatprep.subr.bf16.mxu0 0
        %649 = vmatpush1.bf16.msra.mxu0 0
        %650 = vmatprep.subr.bf16.mxu0 0
        %651 = vmatpush1.bf16.msra.mxu0 0
        %652 = vmatprep.subr.bf16.mxu0 0
        %653 = vmatpush1.bf16.msra.mxu0 0
        %654 = vmatprep.subr.bf16.mxu0 0
        %655 = vmatpush1.bf16.msra.mxu0 0
        %656 = vmatprep.subr.bf16.mxu0 0
        %657 = vmatpush1.bf16.msra.mxu0 0
        %658 = vmatprep.subr.bf16.mxu0 0
        %659 = vmatpush1.bf16.msra.mxu0 0
        %660 = vmatprep.subr.bf16.mxu0 0
        %661 = vmatpush1.bf16.msra.mxu0 0
        %662 = vmatprep.subr.bf16.mxu0 0
        %663 = vmatpush1.bf16.msra.mxu0 0
        %664 = vmatprep.subr.bf16.mxu0 0
        %665 = vmatpush1.bf16.msra.mxu0 0
        %666 = vmatprep.subr.bf16.mxu0 0
        %667 = vmatpush1.bf16.msra.mxu0 0
        %668 = vmatprep.subr.bf16.mxu0 0
        %669 = vmatpush1.bf16.msra.mxu0 0
        %670 = vmatprep.subr.bf16.mxu0 0
        %671 = vmatpush1.bf16.msra.mxu0 0
        %672 = vmatprep.subr.bf16.mxu0 0
        %673 = vmatpush1.bf16.msra.mxu0 0
        %674 = vmatprep.mubr.bf16.mxu0 0
        %675 = vmatmul.mubr.bf16.gmra.mrb[0].mxu0 %v592
        %v676 = vpop.f32.mrb[0].mxu0
        %v677 = vadd.f32 %v465, %v676
        %v678 = vpop.f32.mrb[0].mxu0
        %v679 = vpop.f32.mrb[0].mxu0
        %v680 = vadd.f32 %v468, %v679
        %v681 = vpop.f32.mrb[0].mxu0
        %682 = vmatprep.mubr.bf16.mxu0 0
        %683 = vmatmul.mubr.bf16.gmra.mrb[0].mxu0 %v595
        %v684 = vpop.f32.mrb[0].mxu0
        %v685 = vadd.f32 %v473, %v684
        %v686 = vpop.f32.mrb[0].mxu0
        %v687 = vpop.f32.mrb[0].mxu0
        %v688 = vadd.f32 %v476, %v687
        %v689 = vpop.f32.mrb[0].mxu0
        %690 = vmatprep.mubr.bf16.mxu0 0
        %691 = vmatmul.mubr.bf16.gmra.mrb[0].mxu0 %v598
        %v692 = vpop.f32.mrb[0].mxu0
        %v693 = vadd.f32 %v481, %v692
        %v694 = vpop.f32.mrb[0].mxu0
        %v695 = vpop.f32.mrb[0].mxu0
        %v696 = vadd.f32 %v484, %v695
        %v697 = vpop.f32.mrb[0].mxu0
        %698 = vmatprep.mubr.bf16.mxu0 0
        %699 = vmatmul.mubr.bf16.gmra.mrb[0].mxu0 %v601
        %v700 = vpop.f32.mrb[0].mxu0
        %v701 = vadd.f32 %v489, %v700
        %v702 = vpop.f32.mrb[0].mxu0
        %v703 = vpop.f32.mrb[0].mxu0
        %v704 = vadd.f32 %v492, %v703
        %v705 = vpop.f32.mrb[0].mxu0
        %706 = vmatprep.mubr.bf16.mxu0 0
        %707 = vmatmul.mubr.bf16.gmra.mrb[0].mxu0 %v604
        %v708 = vpop.f32.mrb[0].mxu0
        %v709 = vadd.f32 %v497, %v708
        %v710 = vpop.f32.mrb[0].mxu0
        %v711 = vpop.f32.mrb[0].mxu0
        %v712 = vadd.f32 %v500, %v711
        %v713 = vpop.f32.mrb[0].mxu0
        %714 = vmatprep.mubr.bf16.mxu0 0
        %715 = vmatmul.mubr.bf16.gmra.mrb[0].mxu0 %v607
        %v716 = vpop.f32.mrb[0].mxu0
        %v717 = vadd.f32 %v505, %v716
        %v718 = vpop.f32.mrb[0].mxu0
        %v719 = vpop.f32.mrb[0].mxu0
        %v720 = vadd.f32 %v508, %v719
        %v721 = vpop.f32.mrb[0].mxu0
        %722 = vmatprep.mubr.bf16.mxu0 0
        %723 = vmatmul.mubr.bf16.gmra.mrb[0].mxu0 %v610
        %v724 = vpop.f32.mrb[0].mxu0
        %v725 = vadd.f32 %v513, %v724
        %v726 = vpop.f32.mrb[0].mxu0
        %v727 = vpop.f32.mrb[0].mxu0
        %v728 = vadd.f32 %v516, %v727
        %v729 = vpop.f32.mrb[0].mxu0
        %730 = vmatprep.mubr.bf16.mxu0 0
        %731 = vmatmul.mubr.bf16.gmra.mrb[0].mxu0 %v613
        %v732 = vpop.f32.mrb[0].mxu0
        %v733 = vadd.f32 %v521, %v732
        %v734 = vpop.f32.mrb[0].mxu0
        %v735 = vpop.f32.mrb[0].mxu0
        %v736 = vadd.f32 %v524, %v735
        %v737 = vpop.f32.mrb[0].mxu0
        %738 = vmatprep.mubr.bf16.mxu0 0
        %739 = vmatmul.mubr.bf16.gmra.mrb[0].mxu0 %v616
        %v740 = vpop.f32.mrb[0].mxu0
        %v741 = vadd.f32 %v529, %v740
        %v742 = vpop.f32.mrb[0].mxu0
        %v743 = vpop.f32.mrb[0].mxu0
        %v744 = vadd.f32 %v532, %v743
        %v745 = vpop.f32.mrb[0].mxu0
        %746 = vmatprep.mubr.bf16.mxu0 0
        %747 = vmatmul.mubr.bf16.gmra.mrb[0].mxu0 %v619
        %v748 = vpop.f32.mrb[0].mxu0
        %v749 = vadd.f32 %v537, %v748
        %v750 = vpop.f32.mrb[0].mxu0
        %v751 = vpop.f32.mrb[0].mxu0
        %v752 = vadd.f32 %v540, %v751
        %v753 = vpop.f32.mrb[0].mxu0
        %754 = vmatprep.mubr.bf16.mxu0 0
        %755 = vmatmul.mubr.bf16.gmra.mrb[0].mxu0 %v622
        %v756 = vpop.f32.mrb[0].mxu0
        %v757 = vadd.f32 %v545, %v756
        %v758 = vpop.f32.mrb[0].mxu0
        %v759 = vpop.f32.mrb[0].mxu0
        %v760 = vadd.f32 %v548, %v759
        %v761 = vpop.f32.mrb[0].mxu0
        %762 = vmatprep.mubr.bf16.mxu0 0
        %763 = vmatmul.mubr.bf16.gmra.mrb[0].mxu0 %v625
        %v764 = vpop.f32.mrb[0].mxu0
        %v765 = vadd.f32 %v553, %v764
        %v766 = vpop.f32.mrb[0].mxu0
        %v767 = vpop.f32.mrb[0].mxu0
        %v768 = vadd.f32 %v556, %v767
        %v769 = vpop.f32.mrb[0].mxu0
        %770 = vmatprep.mubr.bf16.mxu0 0
        %771 = vmatmul.mubr.bf16.gmra.mrb[0].mxu0 %v628
        %v772 = vpop.f32.mrb[0].mxu0
        %v773 = vadd.f32 %v561, %v772
        %v774 = vpop.f32.mrb[0].mxu0
        %v775 = vpop.f32.mrb[0].mxu0
        %v776 = vadd.f32 %v564, %v775
        %v777 = vpop.f32.mrb[0].mxu0
        %778 = vmatprep.mubr.bf16.mxu0 0
        %779 = vmatmul.mubr.bf16.gmra.mrb[0].mxu0 %v631
        %v780 = vpop.f32.mrb[0].mxu0
        %v781 = vadd.f32 %v569, %v780
        %v782 = vpop.f32.mrb[0].mxu0
        %v783 = vpop.f32.mrb[0].mxu0
        %v784 = vadd.f32 %v572, %v783
        %v785 = vpop.f32.mrb[0].mxu0
        %786 = vmatprep.mubr.bf16.mxu0 0
        %787 = vmatmul.mubr.bf16.gmra.mrb[0].mxu0 %v634
        %v788 = vpop.f32.mrb[0].mxu0
        %v789 = vadd.f32 %v577, %v788
        %v790 = vpop.f32.mrb[0].mxu0
        %v791 = vpop.f32.mrb[0].mxu0
        %v792 = vadd.f32 %v580, %v791
        %v793 = vpop.f32.mrb[0].mxu0
        %794 = vmatprep.mubr.bf16.mxu0 0
        %795 = vmatmul.mubr.bf16.gmra.mrb[0].mxu0 %v637
        %v796 = vpop.f32.mrb[0].mxu0
        %v797 = vadd.f32 %v585, %v796
        %v798 = vpop.f32.mrb[0].mxu0
        %v799 = vpop.f32.mrb[0].mxu0
        %v800 = vadd.f32 %v588, %v799
        %v801 = vpop.f32.mrb[0].mxu0
        %802 = vdwg.mxu0
        %v803 = vld [vmem:[%s276 + $0x2] sm:$0xff]
        %v804 = vld [vmem:[%s276 + $0xa] sm:$0xff]
        %v805 = vld [vmem:[%s276 + $0x1a] sm:$0xff]
        %v806 = vld [vmem:[%s276 + $0x22] sm:$0xff]
        %v807 = vld [vmem:[%s276 + $0x32] sm:$0xff]
        %v808 = vld [vmem:[%s276 + $0x3a] sm:$0xff]
        %v809 = vld [vmem:[%s276 + $0x4a] sm:$0xff]
        %v810 = vld [vmem:[%s276 + $0x52] sm:$0xff]
        %v811 = vld [vmem:[%s276 + $0x62] sm:$0xff]
        %v812 = vld [vmem:[%s276 + $0x6a] sm:$0xff]
        %v813 = vld [vmem:[%s276 + $0x7a] sm:$0xff]
        %v814 = vld [vmem:[%s276 + $0x82] sm:$0xff]
        %v815 = vld [vmem:[%s276 + $0x92] sm:$0xff]
        %v816 = vld [vmem:[%s276 + $0x9a] sm:$0xff]
        %v817 = vld [vmem:[%s276 + $0xaa] sm:$0xff]
        %v818 = vld [vmem:[%s276 + $0xb2] sm:$0xff]
        %v819 = vld [vmem:[%s276 + $0xc2] sm:$0xff]
        %v820 = vld [vmem:[%s276 + $0xca] sm:$0xff]
        %v821 = vld [vmem:[%s276 + $0xda] sm:$0xff]
        %v822 = vld [vmem:[%s276 + $0xe2] sm:$0xff]
        %v823 = vld [vmem:[%s276 + $0xf2] sm:$0xff]
        %v824 = vld [vmem:[%s276 + $0xfa] sm:$0xff]
        %v825 = vld [vmem:[%s276 + $0x10a] sm:$0xff]
        %v826 = vld [vmem:[%s276 + $0x112] sm:$0xff]
        %v827 = vld [vmem:[%s276 + $0x122] sm:$0xff]
        %v828 = vld [vmem:[%s276 + $0x12a] sm:$0xff]
        %v829 = vld [vmem:[%s276 + $0x13a] sm:$0xff]
        %v830 = vld [vmem:[%s276 + $0x142] sm:$0xff]
        %v831 = vld [vmem:[%s276 + $0x152] sm:$0xff]
        %v832 = vld [vmem:[%s276 + $0x15a] sm:$0xff]
        %v833 = vld [vmem:[%s276 + $0x16a] sm:$0xff]
        %v834 = vld [vmem:[%s276 + $0x172] sm:$0xff]
        %v835 = vpack.c.bf16 %v804, %v803
        %v836 = vpack.c.bf16 %v806, %v805
        %v837 = vpack.c.bf16 %v808, %v807
        %v838 = vpack.c.bf16 %v810, %v809
        %v839 = vpack.c.bf16 %v812, %v811
        %v840 = vpack.c.bf16 %v814, %v813
        %v841 = vpack.c.bf16 %v816, %v815
        %v842 = vpack.c.bf16 %v818, %v817
        %v843 = vpack.c.bf16 %v820, %v819
        %v844 = vpack.c.bf16 %v822, %v821
        %v845 = vpack.c.bf16 %v824, %v823
        %v846 = vpack.c.bf16 %v826, %v825
        %v847 = vpack.c.bf16 %v828, %v827
        %v848 = vpack.c.bf16 %v830, %v829
        %v849 = vpack.c.bf16 %v832, %v831
        %v850 = vpack.c.bf16 %v834, %v833
        %s851 = scalar_lea.vmem %s1, 4
        %v852 = vld [vmem:[%s851] sm:$0x3]
        %v854 = vsel %vm377, %v835, 0
        %v857 = vsel %vm377, %v836, 0
        %v860 = vsel %vm377, %v837, 0
        %v863 = vsel %vm377, %v838, 0
        %v866 = vsel %vm377, %v839, 0
        %v869 = vsel %vm377, %v840, 0
        %v872 = vsel %vm377, %v841, 0
        %v875 = vsel %vm377, %v842, 0
        %v878 = vsel %vm377, %v843, 0
        %v881 = vsel %vm377, %v844, 0
        %v884 = vsel %vm377, %v845, 0
        %v887 = vsel %vm377, %v846, 0
        %v890 = vsel %vm377, %v847, 0
        %v893 = vsel %vm377, %v848, 0
        %v896 = vsel %vm377, %v849, 0
        %v899 = vsel %vm377, %v850, 0
        %v902 = vsel %vm426, %v852, 0
        %904 = vmatprep.subr.bf16.mxu0 0
        %905 = vmatpush1.bf16.msra.mxu0 %v902
        %906 = vmatprep.subr.bf16.mxu0 0
        %907 = vmatpush1.bf16.msra.mxu0 0
        %908 = vmatprep.subr.bf16.mxu0 0
        %909 = vmatpush1.bf16.msra.mxu0 0
        %910 = vmatprep.subr.bf16.mxu0 0
        %911 = vmatpush1.bf16.msra.mxu0 0
        %912 = vmatprep.subr.bf16.mxu0 0
        %913 = vmatpush1.bf16.msra.mxu0 0
        %914 = vmatprep.subr.bf16.mxu0 0
        %915 = vmatpush1.bf16.msra.mxu0 0
        %916 = vmatprep.subr.bf16.mxu0 0
        %917 = vmatpush1.bf16.msra.mxu0 0
        %918 = vmatprep.subr.bf16.mxu0 0
        %919 = vmatpush1.bf16.msra.mxu0 0
        %920 = vmatprep.subr.bf16.mxu0 0
        %921 = vmatpush1.bf16.msra.mxu0 0
        %922 = vmatprep.subr.bf16.mxu0 0
        %923 = vmatpush1.bf16.msra.mxu0 0
        %924 = vmatprep.subr.bf16.mxu0 0
        %925 = vmatpush1.bf16.msra.mxu0 0
        %926 = vmatprep.subr.bf16.mxu0 0
        %927 = vmatpush1.bf16.msra.mxu0 0
        %928 = vmatprep.subr.bf16.mxu0 0
        %929 = vmatpush1.bf16.msra.mxu0 0
        %930 = vmatprep.subr.bf16.mxu0 0
        %931 = vmatpush1.bf16.msra.mxu0 0
        %932 = vmatprep.subr.bf16.mxu0 0
        %933 = vmatpush1.bf16.msra.mxu0 0
        %934 = vmatprep.subr.bf16.mxu0 0
        %935 = vmatpush1.bf16.msra.mxu0 0
        %936 = vmatprep.mubr.bf16.mxu0 0
        %937 = vmatmul.mubr.bf16.gmra.mrb[0].mxu0 %v854
        %v938 = vpop.f32.mrb[0].mxu0
        %v939 = vadd.f32 0.0, %v938
        %v940 = vpop.f32.mrb[0].mxu0
        %v941 = vpop.f32.mrb[0].mxu0
        %v942 = vadd.f32 0.0, %v941
        %v943 = vpop.f32.mrb[0].mxu0
        %944 = vmatprep.mubr.bf16.mxu0 0
        %945 = vmatmul.mubr.bf16.gmra.mrb[0].mxu0 %v857
        %v946 = vpop.f32.mrb[0].mxu0
        %v947 = vadd.f32 0.0, %v946
        %v948 = vpop.f32.mrb[0].mxu0
        %v949 = vpop.f32.mrb[0].mxu0
        %v950 = vadd.f32 0.0, %v949
        %v951 = vpop.f32.mrb[0].mxu0
        %952 = vmatprep.mubr.bf16.mxu0 0
        %953 = vmatmul.mubr.bf16.gmra.mrb[0].mxu0 %v860
        %v954 = vpop.f32.mrb[0].mxu0
        %v955 = vadd.f32 0.0, %v954
        %v956 = vpop.f32.mrb[0].mxu0
        %v957 = vpop.f32.mrb[0].mxu0
        %v958 = vadd.f32 0.0, %v957
        %v959 = vpop.f32.mrb[0].mxu0
        %960 = vmatprep.mubr.bf16.mxu0 0
        %961 = vmatmul.mubr.bf16.gmra.mrb[0].mxu0 %v863
        %v962 = vpop.f32.mrb[0].mxu0
        %v963 = vadd.f32 0.0, %v962
        %v964 = vpop.f32.mrb[0].mxu0
        %v965 = vpop.f32.mrb[0].mxu0
        %v966 = vadd.f32 0.0, %v965
        %v967 = vpop.f32.mrb[0].mxu0
        %968 = vmatprep.mubr.bf16.mxu0 0
        %969 = vmatmul.mubr.bf16.gmra.mrb[0].mxu0 %v866
        %v970 = vpop.f32.mrb[0].mxu0
        %v971 = vadd.f32 0.0, %v970
        %v972 = vpop.f32.mrb[0].mxu0
        %v973 = vpop.f32.mrb[0].mxu0
        %v974 = vadd.f32 0.0, %v973
        %v975 = vpop.f32.mrb[0].mxu0
        %976 = vmatprep.mubr.bf16.mxu0 0
        %977 = vmatmul.mubr.bf16.gmra.mrb[0].mxu0 %v869
        %v978 = vpop.f32.mrb[0].mxu0
        %v979 = vadd.f32 0.0, %v978
        %v980 = vpop.f32.mrb[0].mxu0
        %v981 = vpop.f32.mrb[0].mxu0
        %v982 = vadd.f32 0.0, %v981
        %v983 = vpop.f32.mrb[0].mxu0
        %984 = vmatprep.mubr.bf16.mxu0 0
        %985 = vmatmul.mubr.bf16.gmra.mrb[0].mxu0 %v872
        %v986 = vpop.f32.mrb[0].mxu0
        %v987 = vadd.f32 0.0, %v986
        %v988 = vpop.f32.mrb[0].mxu0
        %v989 = vpop.f32.mrb[0].mxu0
        %v990 = vadd.f32 0.0, %v989
        %v991 = vpop.f32.mrb[0].mxu0
        %992 = vmatprep.mubr.bf16.mxu0 0
        %993 = vmatmul.mubr.bf16.gmra.mrb[0].mxu0 %v875
        %v994 = vpop.f32.mrb[0].mxu0
        %v995 = vadd.f32 0.0, %v994
        %v996 = vpop.f32.mrb[0].mxu0
        %v997 = vpop.f32.mrb[0].mxu0
        %v998 = vadd.f32 0.0, %v997
        %v999 = vpop.f32.mrb[0].mxu0
        %1000 = vmatprep.mubr.bf16.mxu0 0
        %1001 = vmatmul.mubr.bf16.gmra.mrb[0].mxu0 %v878
        %v1002 = vpop.f32.mrb[0].mxu0
        %v1003 = vadd.f32 0.0, %v1002
        %v1004 = vpop.f32.mrb[0].mxu0
        %v1005 = vpop.f32.mrb[0].mxu0
        %v1006 = vadd.f32 0.0, %v1005
        %v1007 = vpop.f32.mrb[0].mxu0
        %1008 = vmatprep.mubr.bf16.mxu0 0
        %1009 = vmatmul.mubr.bf16.gmra.mrb[0].mxu0 %v881
        %v1010 = vpop.f32.mrb[0].mxu0
        %v1011 = vadd.f32 0.0, %v1010
        %v1012 = vpop.f32.mrb[0].mxu0
        %v1013 = vpop.f32.mrb[0].mxu0
        %v1014 = vadd.f32 0.0, %v1013
        %v1015 = vpop.f32.mrb[0].mxu0
        %1016 = vmatprep.mubr.bf16.mxu0 0
        %1017 = vmatmul.mubr.bf16.gmra.mrb[0].mxu0 %v884
        %v1018 = vpop.f32.mrb[0].mxu0
        %v1019 = vadd.f32 0.0, %v1018
        %v1020 = vpop.f32.mrb[0].mxu0
        %v1021 = vpop.f32.mrb[0].mxu0
        %v1022 = vadd.f32 0.0, %v1021
        %v1023 = vpop.f32.mrb[0].mxu0
        %1024 = vmatprep.mubr.bf16.mxu0 0
        %1025 = vmatmul.mubr.bf16.gmra.mrb[0].mxu0 %v887
        %v1026 = vpop.f32.mrb[0].mxu0
        %v1027 = vadd.f32 0.0, %v1026
        %v1028 = vpop.f32.mrb[0].mxu0
        %v1029 = vpop.f32.mrb[0].mxu0
        %v1030 = vadd.f32 0.0, %v1029
        %v1031 = vpop.f32.mrb[0].mxu0
        %1032 = vmatprep.mubr.bf16.mxu0 0
        %1033 = vmatmul.mubr.bf16.gmra.mrb[0].mxu0 %v890
        %v1034 = vpop.f32.mrb[0].mxu0
        %v1035 = vadd.f32 0.0, %v1034
        %v1036 = vpop.f32.mrb[0].mxu0
        %v1037 = vpop.f32.mrb[0].mxu0
        %v1038 = vadd.f32 0.0, %v1037
        %v1039 = vpop.f32.mrb[0].mxu0
        %1040 = vmatprep.mubr.bf16.mxu0 0
        %1041 = vmatmul.mubr.bf16.gmra.mrb[0].mxu0 %v893
        %v1042 = vpop.f32.mrb[0].mxu0
        %v1043 = vadd.f32 0.0, %v1042
        %v1044 = vpop.f32.mrb[0].mxu0
        %v1045 = vpop.f32.mrb[0].mxu0
        %v1046 = vadd.f32 0.0, %v1045
        %v1047 = vpop.f32.mrb[0].mxu0
        %1048 = vmatprep.mubr.bf16.mxu0 0
        %1049 = vmatmul.mubr.bf16.gmra.mrb[0].mxu0 %v896
        %v1050 = vpop.f32.mrb[0].mxu0
        %v1051 = vadd.f32 0.0, %v1050
        %v1052 = vpop.f32.mrb[0].mxu0
        %v1053 = vpop.f32.mrb[0].mxu0
        %v1054 = vadd.f32 0.0, %v1053
        %v1055 = vpop.f32.mrb[0].mxu0
        %1056 = vmatprep.mubr.bf16.mxu0 0
        %1057 = vmatmul.mubr.bf16.gmra.mrb[0].mxu0 %v899
        %v1058 = vpop.f32.mrb[0].mxu0
        %v1059 = vadd.f32 0.0, %v1058
        %v1060 = vpop.f32.mrb[0].mxu0
        %v1061 = vpop.f32.mrb[0].mxu0
        %v1062 = vadd.f32 0.0, %v1061
        %v1063 = vpop.f32.mrb[0].mxu0
        %1064 = vdwg.mxu0
        %v1065 = vadd.f32 %v677, %v939
        %v1066 = vadd.f32 %v680, %v942
        %v1067 = vadd.f32 %v685, %v947
        %v1068 = vadd.f32 %v688, %v950
        %v1069 = vadd.f32 %v693, %v955
        %v1070 = vadd.f32 %v696, %v958
        %v1071 = vadd.f32 %v701, %v963
        %v1072 = vadd.f32 %v704, %v966
        %v1073 = vadd.f32 %v709, %v971
        %v1074 = vadd.f32 %v712, %v974
        %v1075 = vadd.f32 %v717, %v979
        %v1076 = vadd.f32 %v720, %v982
        %v1077 = vadd.f32 %v725, %v987
        %v1078 = vadd.f32 %v728, %v990
        %v1079 = vadd.f32 %v733, %v995
        %v1080 = vadd.f32 %v736, %v998
        %v1081 = vadd.f32 %v741, %v1003
        %v1082 = vadd.f32 %v744, %v1006
        %v1083 = vadd.f32 %v749, %v1011
        %v1084 = vadd.f32 %v752, %v1014
        %v1085 = vadd.f32 %v757, %v1019
        %v1086 = vadd.f32 %v760, %v1022
        %v1087 = vadd.f32 %v765, %v1027
        %v1088 = vadd.f32 %v768, %v1030
        %v1089 = vadd.f32 %v773, %v1035
        %v1090 = vadd.f32 %v776, %v1038
        %v1091 = vadd.f32 %v781, %v1043
        %v1092 = vadd.f32 %v784, %v1046
        %v1093 = vadd.f32 %v789, %v1051
        %v1094 = vadd.f32 %v792, %v1054
        %v1095 = vadd.f32 %v797, %v1059
        %v1096 = vadd.f32 %v800, %v1062
        %s1097 = scalar_lea.vmem %s276, 24
        %v1098 = vld [vmem:[%s1097] sm:$0xff]
        %v1099 = vld [vmem:[%s1097 + $0x8] sm:$0xff]
        %v1100 = vld [vmem:[%s1097 + $0x18] sm:$0xff]
        %v1101 = vld [vmem:[%s1097 + $0x20] sm:$0xff]
        %v1102 = vld [vmem:[%s1097 + $0x30] sm:$0xff]
        %v1103 = vld [vmem:[%s1097 + $0x38] sm:$0xff]
        %v1104 = vld [vmem:[%s1097 + $0x48] sm:$0xff]
        %v1105 = vld [vmem:[%s1097 + $0x50] sm:$0xff]
        %v1106 = vld [vmem:[%s1097 + $0x60] sm:$0xff]
        %v1107 = vld [vmem:[%s1097 + $0x68] sm:$0xff]
        %v1108 = vld [vmem:[%s1097 + $0x78] sm:$0xff]
        %v1109 = vld [vmem:[%s1097 + $0x80] sm:$0xff]
        %v1110 = vld [vmem:[%s1097 + $0x90] sm:$0xff]
        %v1111 = vld [vmem:[%s1097 + $0x98] sm:$0xff]
        %v1112 = vld [vmem:[%s1097 + $0xa8] sm:$0xff]
        %v1113 = vld [vmem:[%s1097 + $0xb0] sm:$0xff]
        %v1114 = vld [vmem:[%s1097 + $0xc0] sm:$0xff]
        %v1115 = vld [vmem:[%s1097 + $0xc8] sm:$0xff]
        %v1116 = vld [vmem:[%s1097 + $0xd8] sm:$0xff]
        %v1117 = vld [vmem:[%s1097 + $0xe0] sm:$0xff]
        %v1118 = vld [vmem:[%s1097 + $0xf0] sm:$0xff]
        %v1119 = vld [vmem:[%s1097 + $0xf8] sm:$0xff]
        %v1120 = vld [vmem:[%s1097 + $0x108] sm:$0xff]
        %v1121 = vld [vmem:[%s1097 + $0x110] sm:$0xff]
        %v1122 = vld [vmem:[%s1097 + $0x120] sm:$0xff]
        %v1123 = vld [vmem:[%s1097 + $0x128] sm:$0xff]
        %v1124 = vld [vmem:[%s1097 + $0x138] sm:$0xff]
        %v1125 = vld [vmem:[%s1097 + $0x140] sm:$0xff]
        %v1126 = vld [vmem:[%s1097 + $0x150] sm:$0xff]
        %v1127 = vld [vmem:[%s1097 + $0x158] sm:$0xff]
        %v1128 = vld [vmem:[%s1097 + $0x168] sm:$0xff]
        %v1129 = vld [vmem:[%s1097 + $0x170] sm:$0xff]
        %v1130 = vpack.c.bf16 %v1099, %v1098
        %v1131 = vpack.c.bf16 %v1101, %v1100
        %v1132 = vpack.c.bf16 %v1103, %v1102
        %v1133 = vpack.c.bf16 %v1105, %v1104
        %v1134 = vpack.c.bf16 %v1107, %v1106
        %v1135 = vpack.c.bf16 %v1109, %v1108
        %v1136 = vpack.c.bf16 %v1111, %v1110
        %v1137 = vpack.c.bf16 %v1113, %v1112
        %v1138 = vpack.c.bf16 %v1115, %v1114
        %v1139 = vpack.c.bf16 %v1117, %v1116
        %v1140 = vpack.c.bf16 %v1119, %v1118
        %v1141 = vpack.c.bf16 %v1121, %v1120
        %v1142 = vpack.c.bf16 %v1123, %v1122
        %v1143 = vpack.c.bf16 %v1125, %v1124
        %v1144 = vpack.c.bf16 %v1127, %v1126
        %v1145 = vpack.c.bf16 %v1129, %v1128
        %s1146 = scalar_lea.vmem %s1, 6
        %v1147 = vld [vmem:[%s1146] sm:$0x3]
        %v1149 = vsel %vm377, %v1130, 0
        %v1152 = vsel %vm377, %v1131, 0
        %v1155 = vsel %vm377, %v1132, 0
        %v1158 = vsel %vm377, %v1133, 0
        %v1161 = vsel %vm377, %v1134, 0
        %v1164 = vsel %vm377, %v1135, 0
        %v1167 = vsel %vm377, %v1136, 0
        %v1170 = vsel %vm377, %v1137, 0
        %v1173 = vsel %vm377, %v1138, 0
        %v1176 = vsel %vm377, %v1139, 0
        %v1179 = vsel %vm377, %v1140, 0
        %v1182 = vsel %vm377, %v1141, 0
        %v1185 = vsel %vm377, %v1142, 0
        %v1188 = vsel %vm377, %v1143, 0
        %v1191 = vsel %vm377, %v1144, 0
        %v1194 = vsel %vm377, %v1145, 0
        %v1197 = vsel %vm426, %v1147, 0
        %1199 = vmatprep.subr.bf16.mxu0 0
        %1200 = vmatpush1.bf16.msra.mxu0 %v1197
        %1201 = vmatprep.subr.bf16.mxu0 0
        %1202 = vmatpush1.bf16.msra.mxu0 0
        %1203 = vmatprep.subr.bf16.mxu0 0
        %1204 = vmatpush1.bf16.msra.mxu0 0
        %1205 = vmatprep.subr.bf16.mxu0 0
        %1206 = vmatpush1.bf16.msra.mxu0 0
        %1207 = vmatprep.subr.bf16.mxu0 0
        %1208 = vmatpush1.bf16.msra.mxu0 0
        %1209 = vmatprep.subr.bf16.mxu0 0
        %1210 = vmatpush1.bf16.msra.mxu0 0
        %1211 = vmatprep.subr.bf16.mxu0 0
        %1212 = vmatpush1.bf16.msra.mxu0 0
        %1213 = vmatprep.subr.bf16.mxu0 0
        %1214 = vmatpush1.bf16.msra.mxu0 0
        %1215 = vmatprep.subr.bf16.mxu0 0
        %1216 = vmatpush1.bf16.msra.mxu0 0
        %1217 = vmatprep.subr.bf16.mxu0 0
        %1218 = vmatpush1.bf16.msra.mxu0 0
        %1219 = vmatprep.subr.bf16.mxu0 0
        %1220 = vmatpush1.bf16.msra.mxu0 0
        %1221 = vmatprep.subr.bf16.mxu0 0
        %1222 = vmatpush1.bf16.msra.mxu0 0
        %1223 = vmatprep.subr.bf16.mxu0 0
        %1224 = vmatpush1.bf16.msra.mxu0 0
        %1225 = vmatprep.subr.bf16.mxu0 0
        %1226 = vmatpush1.bf16.msra.mxu0 0
        %1227 = vmatprep.subr.bf16.mxu0 0
        %1228 = vmatpush1.bf16.msra.mxu0 0
        %1229 = vmatprep.subr.bf16.mxu0 0
        %1230 = vmatpush1.bf16.msra.mxu0 0
        %1231 = vmatprep.mubr.bf16.mxu0 0
        %1232 = vmatmul.mubr.bf16.gmra.mrb[0].mxu0 %v1149
        %v1233 = vpop.f32.mrb[0].mxu0
        %v1234 = vadd.f32 0.0, %v1233
        %v1235 = vpop.f32.mrb[0].mxu0
        %v1236 = vpop.f32.mrb[0].mxu0
        %v1237 = vadd.f32 0.0, %v1236
        %v1238 = vpop.f32.mrb[0].mxu0
        %1239 = vmatprep.mubr.bf16.mxu0 0
        %1240 = vmatmul.mubr.bf16.gmra.mrb[0].mxu0 %v1152
        %v1241 = vpop.f32.mrb[0].mxu0
        %v1242 = vadd.f32 0.0, %v1241
        %v1243 = vpop.f32.mrb[0].mxu0
        %v1244 = vpop.f32.mrb[0].mxu0
        %v1245 = vadd.f32 0.0, %v1244
        %v1246 = vpop.f32.mrb[0].mxu0
        %1247 = vmatprep.mubr.bf16.mxu0 0
        %1248 = vmatmul.mubr.bf16.gmra.mrb[0].mxu0 %v1155
        %v1249 = vpop.f32.mrb[0].mxu0
        %v1250 = vadd.f32 0.0, %v1249
        %v1251 = vpop.f32.mrb[0].mxu0
        %v1252 = vpop.f32.mrb[0].mxu0
        %v1253 = vadd.f32 0.0, %v1252
        %v1254 = vpop.f32.mrb[0].mxu0
        %1255 = vmatprep.mubr.bf16.mxu0 0
        %1256 = vmatmul.mubr.bf16.gmra.mrb[0].mxu0 %v1158
        %v1257 = vpop.f32.mrb[0].mxu0
        %v1258 = vadd.f32 0.0, %v1257
        %v1259 = vpop.f32.mrb[0].mxu0
        %v1260 = vpop.f32.mrb[0].mxu0
        %v1261 = vadd.f32 0.0, %v1260
        %v1262 = vpop.f32.mrb[0].mxu0
        %1263 = vmatprep.mubr.bf16.mxu0 0
        %1264 = vmatmul.mubr.bf16.gmra.mrb[0].mxu0 %v1161
        %v1265 = vpop.f32.mrb[0].mxu0
        %v1266 = vadd.f32 0.0, %v1265
        %v1267 = vpop.f32.mrb[0].mxu0
        %v1268 = vpop.f32.mrb[0].mxu0
        %v1269 = vadd.f32 0.0, %v1268
        %v1270 = vpop.f32.mrb[0].mxu0
        %1271 = vmatprep.mubr.bf16.mxu0 0
        %1272 = vmatmul.mubr.bf16.gmra.mrb[0].mxu0 %v1164
        %v1273 = vpop.f32.mrb[0].mxu0
        %v1274 = vadd.f32 0.0, %v1273
        %v1275 = vpop.f32.mrb[0].mxu0
        %v1276 = vpop.f32.mrb[0].mxu0
        %v1277 = vadd.f32 0.0, %v1276
        %v1278 = vpop.f32.mrb[0].mxu0
        %1279 = vmatprep.mubr.bf16.mxu0 0
        %1280 = vmatmul.mubr.bf16.gmra.mrb[0].mxu0 %v1167
        %v1281 = vpop.f32.mrb[0].mxu0
        %v1282 = vadd.f32 0.0, %v1281
        %v1283 = vpop.f32.mrb[0].mxu0
        %v1284 = vpop.f32.mrb[0].mxu0
        %v1285 = vadd.f32 0.0, %v1284
        %v1286 = vpop.f32.mrb[0].mxu0
        %1287 = vmatprep.mubr.bf16.mxu0 0
        %1288 = vmatmul.mubr.bf16.gmra.mrb[0].mxu0 %v1170
        %v1289 = vpop.f32.mrb[0].mxu0
        %v1290 = vadd.f32 0.0, %v1289
        %v1291 = vpop.f32.mrb[0].mxu0
        %v1292 = vpop.f32.mrb[0].mxu0
        %v1293 = vadd.f32 0.0, %v1292
        %v1294 = vpop.f32.mrb[0].mxu0
        %1295 = vmatprep.mubr.bf16.mxu0 0
        %1296 = vmatmul.mubr.bf16.gmra.mrb[0].mxu0 %v1173
        %v1297 = vpop.f32.mrb[0].mxu0
        %v1298 = vadd.f32 0.0, %v1297
        %v1299 = vpop.f32.mrb[0].mxu0
        %v1300 = vpop.f32.mrb[0].mxu0
        %v1301 = vadd.f32 0.0, %v1300
        %v1302 = vpop.f32.mrb[0].mxu0
        %1303 = vmatprep.mubr.bf16.mxu0 0
        %1304 = vmatmul.mubr.bf16.gmra.mrb[0].mxu0 %v1176
        %v1305 = vpop.f32.mrb[0].mxu0
        %v1306 = vadd.f32 0.0, %v1305
        %v1307 = vpop.f32.mrb[0].mxu0
        %v1308 = vpop.f32.mrb[0].mxu0
        %v1309 = vadd.f32 0.0, %v1308
        %v1310 = vpop.f32.mrb[0].mxu0
        %1311 = vmatprep.mubr.bf16.mxu0 0
        %1312 = vmatmul.mubr.bf16.gmra.mrb[0].mxu0 %v1179
        %v1313 = vpop.f32.mrb[0].mxu0
        %v1314 = vadd.f32 0.0, %v1313
        %v1315 = vpop.f32.mrb[0].mxu0
        %v1316 = vpop.f32.mrb[0].mxu0
        %v1317 = vadd.f32 0.0, %v1316
        %v1318 = vpop.f32.mrb[0].mxu0
        %1319 = vmatprep.mubr.bf16.mxu0 0
        %1320 = vmatmul.mubr.bf16.gmra.mrb[0].mxu0 %v1182
        %v1321 = vpop.f32.mrb[0].mxu0
        %v1322 = vadd.f32 0.0, %v1321
        %v1323 = vpop.f32.mrb[0].mxu0
        %v1324 = vpop.f32.mrb[0].mxu0
        %v1325 = vadd.f32 0.0, %v1324
        %v1326 = vpop.f32.mrb[0].mxu0
        %1327 = vmatprep.mubr.bf16.mxu0 0
        %1328 = vmatmul.mubr.bf16.gmra.mrb[0].mxu0 %v1185
        %v1329 = vpop.f32.mrb[0].mxu0
        %v1330 = vadd.f32 0.0, %v1329
        %v1331 = vpop.f32.mrb[0].mxu0
        %v1332 = vpop.f32.mrb[0].mxu0
        %v1333 = vadd.f32 0.0, %v1332
        %v1334 = vpop.f32.mrb[0].mxu0
        %1335 = vmatprep.mubr.bf16.mxu0 0
        %1336 = vmatmul.mubr.bf16.gmra.mrb[0].mxu0 %v1188
        %v1337 = vpop.f32.mrb[0].mxu0
        %v1338 = vadd.f32 0.0, %v1337
        %v1339 = vpop.f32.mrb[0].mxu0
        %v1340 = vpop.f32.mrb[0].mxu0
        %v1341 = vadd.f32 0.0, %v1340
        %v1342 = vpop.f32.mrb[0].mxu0
        %1343 = vmatprep.mubr.bf16.mxu0 0
        %1344 = vmatmul.mubr.bf16.gmra.mrb[0].mxu0 %v1191
        %v1345 = vpop.f32.mrb[0].mxu0
        %v1346 = vadd.f32 0.0, %v1345
        %v1347 = vpop.f32.mrb[0].mxu0
        %v1348 = vpop.f32.mrb[0].mxu0
        %v1349 = vadd.f32 0.0, %v1348
        %v1350 = vpop.f32.mrb[0].mxu0
        %1351 = vmatprep.mubr.bf16.mxu0 0
        %1352 = vmatmul.mubr.bf16.gmra.mrb[0].mxu0 %v1194
        %v1353 = vpop.f32.mrb[0].mxu0
        %v1354 = vadd.f32 0.0, %v1353
        %v1355 = vpop.f32.mrb[0].mxu0
        %v1356 = vpop.f32.mrb[0].mxu0
        %v1357 = vadd.f32 0.0, %v1356
        %v1358 = vpop.f32.mrb[0].mxu0
        %1359 = vdwg.mxu0
        %v1360 = vadd.f32 %v1065, %v1234
        %v1361 = vadd.f32 %v1066, %v1237
        %v1362 = vadd.f32 %v1067, %v1242
        %v1363 = vadd.f32 %v1068, %v1245
        %v1364 = vadd.f32 %v1069, %v1250
        %v1365 = vadd.f32 %v1070, %v1253
        %v1366 = vadd.f32 %v1071, %v1258
        %v1367 = vadd.f32 %v1072, %v1261
        %v1368 = vadd.f32 %v1073, %v1266
        %v1369 = vadd.f32 %v1074, %v1269
        %v1370 = vadd.f32 %v1075, %v1274
        %v1371 = vadd.f32 %v1076, %v1277
        %v1372 = vadd.f32 %v1077, %v1282
        %v1373 = vadd.f32 %v1078, %v1285
        %v1374 = vadd.f32 %v1079, %v1290
        %v1375 = vadd.f32 %v1080, %v1293
        %v1376 = vadd.f32 %v1081, %v1298
        %v1377 = vadd.f32 %v1082, %v1301
        %v1378 = vadd.f32 %v1083, %v1306
        %v1379 = vadd.f32 %v1084, %v1309
        %v1380 = vadd.f32 %v1085, %v1314
        %v1381 = vadd.f32 %v1086, %v1317
        %v1382 = vadd.f32 %v1087, %v1322
        %v1383 = vadd.f32 %v1088, %v1325
        %v1384 = vadd.f32 %v1089, %v1330
        %v1385 = vadd.f32 %v1090, %v1333
        %v1386 = vadd.f32 %v1091, %v1338
        %v1387 = vadd.f32 %v1092, %v1341
        %v1388 = vadd.f32 %v1093, %v1346
        %v1389 = vadd.f32 %v1094, %v1349
        %v1390 = vadd.f32 %v1095, %v1354
        %v1391 = vadd.f32 %v1096, %v1357
        %v1392 = vld [vmem:[%s1097 + $0x1] sm:$0xff]
        %v1393 = vld [vmem:[%s1097 + $0x9] sm:$0xff]
        %v1394 = vld [vmem:[%s1097 + $0x19] sm:$0xff]
        %v1395 = vld [vmem:[%s1097 + $0x21] sm:$0xff]
        %v1396 = vld [vmem:[%s1097 + $0x31] sm:$0xff]
        %v1397 = vld [vmem:[%s1097 + $0x39] sm:$0xff]
        %v1398 = vld [vmem:[%s1097 + $0x49] sm:$0xff]
        %v1399 = vld [vmem:[%s1097 + $0x51] sm:$0xff]
        %v1400 = vld [vmem:[%s1097 + $0x61] sm:$0xff]
        %v1401 = vld [vmem:[%s1097 + $0x69] sm:$0xff]
        %v1402 = vld [vmem:[%s1097 + $0x79] sm:$0xff]
        %v1403 = vld [vmem:[%s1097 + $0x81] sm:$0xff]
        %v1404 = vld [vmem:[%s1097 + $0x91] sm:$0xff]
        %v1405 = vld [vmem:[%s1097 + $0x99] sm:$0xff]
        %v1406 = vld [vmem:[%s1097 + $0xa9] sm:$0xff]
        %v1407 = vld [vmem:[%s1097 + $0xb1] sm:$0xff]
        %v1408 = vld [vmem:[%s1097 + $0xc1] sm:$0xff]
        %v1409 = vld [vmem:[%s1097 + $0xc9] sm:$0xff]
        %v1410 = vld [vmem:[%s1097 + $0xd9] sm:$0xff]
        %v1411 = vld [vmem:[%s1097 + $0xe1] sm:$0xff]
        %v1412 = vld [vmem:[%s1097 + $0xf1] sm:$0xff]
        %v1413 = vld [vmem:[%s1097 + $0xf9] sm:$0xff]
        %v1414 = vld [vmem:[%s1097 + $0x109] sm:$0xff]
        %v1415 = vld [vmem:[%s1097 + $0x111] sm:$0xff]
        %v1416 = vld [vmem:[%s1097 + $0x121] sm:$0xff]
        %v1417 = vld [vmem:[%s1097 + $0x129] sm:$0xff]
        %v1418 = vld [vmem:[%s1097 + $0x139] sm:$0xff]
        %v1419 = vld [vmem:[%s1097 + $0x141] sm:$0xff]
        %v1420 = vld [vmem:[%s1097 + $0x151] sm:$0xff]
        %v1421 = vld [vmem:[%s1097 + $0x159] sm:$0xff]
        %v1422 = vld [vmem:[%s1097 + $0x169] sm:$0xff]
        %v1423 = vld [vmem:[%s1097 + $0x171] sm:$0xff]
        %v1424 = vpack.c.bf16 %v1393, %v1392
        %v1425 = vpack.c.bf16 %v1395, %v1394
        %v1426 = vpack.c.bf16 %v1397, %v1396
        %v1427 = vpack.c.bf16 %v1399, %v1398
        %v1428 = vpack.c.bf16 %v1401, %v1400
        %v1429 = vpack.c.bf16 %v1403, %v1402
        %v1430 = vpack.c.bf16 %v1405, %v1404
        %v1431 = vpack.c.bf16 %v1407, %v1406
        %v1432 = vpack.c.bf16 %v1409, %v1408
        %v1433 = vpack.c.bf16 %v1411, %v1410
        %v1434 = vpack.c.bf16 %v1413, %v1412
        %v1435 = vpack.c.bf16 %v1415, %v1414
        %v1436 = vpack.c.bf16 %v1417, %v1416
        %v1437 = vpack.c.bf16 %v1419, %v1418
        %v1438 = vpack.c.bf16 %v1421, %v1420
        %v1439 = vpack.c.bf16 %v1423, %v1422
        %s1440 = scalar_lea.vmem %s1, 8
        %v1441 = vld [vmem:[%s1440] sm:$0x3]
        %v1443 = vsel %vm377, %v1424, 0
        %v1446 = vsel %vm377, %v1425, 0
        %v1449 = vsel %vm377, %v1426, 0
        %v1452 = vsel %vm377, %v1427, 0
        %v1455 = vsel %vm377, %v1428, 0
        %v1458 = vsel %vm377, %v1429, 0
        %v1461 = vsel %vm377, %v1430, 0
        %v1464 = vsel %vm377, %v1431, 0
        %v1467 = vsel %vm377, %v1432, 0
        %v1470 = vsel %vm377, %v1433, 0
        %v1473 = vsel %vm377, %v1434, 0
        %v1476 = vsel %vm377, %v1435, 0
        %v1479 = vsel %vm377, %v1436, 0
        %v1482 = vsel %vm377, %v1437, 0
        %v1485 = vsel %vm377, %v1438, 0
        %v1488 = vsel %vm377, %v1439, 0
        %v1491 = vsel %vm426, %v1441, 0
        %1493 = vmatprep.subr.bf16.mxu0 0
        %1494 = vmatpush1.bf16.msra.mxu0 %v1491
        %1495 = vmatprep.subr.bf16.mxu0 0
        %1496 = vmatpush1.bf16.msra.mxu0 0
        %1497 = vmatprep.subr.bf16.mxu0 0
        %1498 = vmatpush1.bf16.msra.mxu0 0
        %1499 = vmatprep.subr.bf16.mxu0 0
        %1500 = vmatpush1.bf16.msra.mxu0 0
        %1501 = vmatprep.subr.bf16.mxu0 0
        %1502 = vmatpush1.bf16.msra.mxu0 0
        %1503 = vmatprep.subr.bf16.mxu0 0
        %1504 = vmatpush1.bf16.msra.mxu0 0
        %1505 = vmatprep.subr.bf16.mxu0 0
        %1506 = vmatpush1.bf16.msra.mxu0 0
        %1507 = vmatprep.subr.bf16.mxu0 0
        %1508 = vmatpush1.bf16.msra.mxu0 0
        %1509 = vmatprep.subr.bf16.mxu0 0
        %1510 = vmatpush1.bf16.msra.mxu0 0
        %1511 = vmatprep.subr.bf16.mxu0 0
        %1512 = vmatpush1.bf16.msra.mxu0 0
        %1513 = vmatprep.subr.bf16.mxu0 0
        %1514 = vmatpush1.bf16.msra.mxu0 0
        %1515 = vmatprep.subr.bf16.mxu0 0
        %1516 = vmatpush1.bf16.msra.mxu0 0
        %1517 = vmatprep.subr.bf16.mxu0 0
        %1518 = vmatpush1.bf16.msra.mxu0 0
        %1519 = vmatprep.subr.bf16.mxu0 0
        %1520 = vmatpush1.bf16.msra.mxu0 0
        %1521 = vmatprep.subr.bf16.mxu0 0
        %1522 = vmatpush1.bf16.msra.mxu0 0
        %1523 = vmatprep.subr.bf16.mxu0 0
        %1524 = vmatpush1.bf16.msra.mxu0 0
        %1525 = vmatprep.mubr.bf16.mxu0 0
        %1526 = vmatmul.mubr.bf16.gmra.mrb[0].mxu0 %v1443
        %v1527 = vpop.f32.mrb[0].mxu0
        %v1528 = vadd.f32 0.0, %v1527
        %v1529 = vpop.f32.mrb[0].mxu0
        %v1530 = vpop.f32.mrb[0].mxu0
        %v1531 = vadd.f32 0.0, %v1530
        %v1532 = vpop.f32.mrb[0].mxu0
        %1533 = vmatprep.mubr.bf16.mxu0 0
        %1534 = vmatmul.mubr.bf16.gmra.mrb[0].mxu0 %v1446
        %v1535 = vpop.f32.mrb[0].mxu0
        %v1536 = vadd.f32 0.0, %v1535
        %v1537 = vpop.f32.mrb[0].mxu0
        %v1538 = vpop.f32.mrb[0].mxu0
        %v1539 = vadd.f32 0.0, %v1538
        %v1540 = vpop.f32.mrb[0].mxu0
        %1541 = vmatprep.mubr.bf16.mxu0 0
        %1542 = vmatmul.mubr.bf16.gmra.mrb[0].mxu0 %v1449
        %v1543 = vpop.f32.mrb[0].mxu0
        %v1544 = vadd.f32 0.0, %v1543
        %v1545 = vpop.f32.mrb[0].mxu0
        %v1546 = vpop.f32.mrb[0].mxu0
        %v1547 = vadd.f32 0.0, %v1546
        %v1548 = vpop.f32.mrb[0].mxu0
        %1549 = vmatprep.mubr.bf16.mxu0 0
        %1550 = vmatmul.mubr.bf16.gmra.mrb[0].mxu0 %v1452
        %v1551 = vpop.f32.mrb[0].mxu0
        %v1552 = vadd.f32 0.0, %v1551
        %v1553 = vpop.f32.mrb[0].mxu0
        %v1554 = vpop.f32.mrb[0].mxu0
        %v1555 = vadd.f32 0.0, %v1554
        %v1556 = vpop.f32.mrb[0].mxu0
        %1557 = vmatprep.mubr.bf16.mxu0 0
        %1558 = vmatmul.mubr.bf16.gmra.mrb[0].mxu0 %v1455
        %v1559 = vpop.f32.mrb[0].mxu0
        %v1560 = vadd.f32 0.0, %v1559
        %v1561 = vpop.f32.mrb[0].mxu0
        %v1562 = vpop.f32.mrb[0].mxu0
        %v1563 = vadd.f32 0.0, %v1562
        %v1564 = vpop.f32.mrb[0].mxu0
        %1565 = vmatprep.mubr.bf16.mxu0 0
        %1566 = vmatmul.mubr.bf16.gmra.mrb[0].mxu0 %v1458
        %v1567 = vpop.f32.mrb[0].mxu0
        %v1568 = vadd.f32 0.0, %v1567
        %v1569 = vpop.f32.mrb[0].mxu0
        %v1570 = vpop.f32.mrb[0].mxu0
        %v1571 = vadd.f32 0.0, %v1570
        %v1572 = vpop.f32.mrb[0].mxu0
        %1573 = vmatprep.mubr.bf16.mxu0 0
        %1574 = vmatmul.mubr.bf16.gmra.mrb[0].mxu0 %v1461
        %v1575 = vpop.f32.mrb[0].mxu0
        %v1576 = vadd.f32 0.0, %v1575
        %v1577 = vpop.f32.mrb[0].mxu0
        %v1578 = vpop.f32.mrb[0].mxu0
        %v1579 = vadd.f32 0.0, %v1578
        %v1580 = vpop.f32.mrb[0].mxu0
        %1581 = vmatprep.mubr.bf16.mxu0 0
        %1582 = vmatmul.mubr.bf16.gmra.mrb[0].mxu0 %v1464
        %v1583 = vpop.f32.mrb[0].mxu0
        %v1584 = vadd.f32 0.0, %v1583
        %v1585 = vpop.f32.mrb[0].mxu0
        %v1586 = vpop.f32.mrb[0].mxu0
        %v1587 = vadd.f32 0.0, %v1586
        %v1588 = vpop.f32.mrb[0].mxu0
        %1589 = vmatprep.mubr.bf16.mxu0 0
        %1590 = vmatmul.mubr.bf16.gmra.mrb[0].mxu0 %v1467
        %v1591 = vpop.f32.mrb[0].mxu0
        %v1592 = vadd.f32 0.0, %v1591
        %v1593 = vpop.f32.mrb[0].mxu0
        %v1594 = vpop.f32.mrb[0].mxu0
        %v1595 = vadd.f32 0.0, %v1594
        %v1596 = vpop.f32.mrb[0].mxu0
        %1597 = vmatprep.mubr.bf16.mxu0 0
        %1598 = vmatmul.mubr.bf16.gmra.mrb[0].mxu0 %v1470
        %v1599 = vpop.f32.mrb[0].mxu0
        %v1600 = vadd.f32 0.0, %v1599
        %v1601 = vpop.f32.mrb[0].mxu0
        %v1602 = vpop.f32.mrb[0].mxu0
        %v1603 = vadd.f32 0.0, %v1602
        %v1604 = vpop.f32.mrb[0].mxu0
        %1605 = vmatprep.mubr.bf16.mxu0 0
        %1606 = vmatmul.mubr.bf16.gmra.mrb[0].mxu0 %v1473
        %v1607 = vpop.f32.mrb[0].mxu0
        %v1608 = vadd.f32 0.0, %v1607
        %v1609 = vpop.f32.mrb[0].mxu0
        %v1610 = vpop.f32.mrb[0].mxu0
        %v1611 = vadd.f32 0.0, %v1610
        %v1612 = vpop.f32.mrb[0].mxu0
        %1613 = vmatprep.mubr.bf16.mxu0 0
        %1614 = vmatmul.mubr.bf16.gmra.mrb[0].mxu0 %v1476
        %v1615 = vpop.f32.mrb[0].mxu0
        %v1616 = vadd.f32 0.0, %v1615
        %v1617 = vpop.f32.mrb[0].mxu0
        %v1618 = vpop.f32.mrb[0].mxu0
        %v1619 = vadd.f32 0.0, %v1618
        %v1620 = vpop.f32.mrb[0].mxu0
        %1621 = vmatprep.mubr.bf16.mxu0 0
        %1622 = vmatmul.mubr.bf16.gmra.mrb[0].mxu0 %v1479
        %v1623 = vpop.f32.mrb[0].mxu0
        %v1624 = vadd.f32 0.0, %v1623
        %v1625 = vpop.f32.mrb[0].mxu0
        %v1626 = vpop.f32.mrb[0].mxu0
        %v1627 = vadd.f32 0.0, %v1626
        %v1628 = vpop.f32.mrb[0].mxu0
        %1629 = vmatprep.mubr.bf16.mxu0 0
        %1630 = vmatmul.mubr.bf16.gmra.mrb[0].mxu0 %v1482
        %v1631 = vpop.f32.mrb[0].mxu0
        %v1632 = vadd.f32 0.0, %v1631
        %v1633 = vpop.f32.mrb[0].mxu0
        %v1634 = vpop.f32.mrb[0].mxu0
        %v1635 = vadd.f32 0.0, %v1634
        %v1636 = vpop.f32.mrb[0].mxu0
        %1637 = vmatprep.mubr.bf16.mxu0 0
        %1638 = vmatmul.mubr.bf16.gmra.mrb[0].mxu0 %v1485
        %v1639 = vpop.f32.mrb[0].mxu0
        %v1640 = vadd.f32 0.0, %v1639
        %v1641 = vpop.f32.mrb[0].mxu0
        %v1642 = vpop.f32.mrb[0].mxu0
        %v1643 = vadd.f32 0.0, %v1642
        %v1644 = vpop.f32.mrb[0].mxu0
        %1645 = vmatprep.mubr.bf16.mxu0 0
        %1646 = vmatmul.mubr.bf16.gmra.mrb[0].mxu0 %v1488
        %v1647 = vpop.f32.mrb[0].mxu0
        %v1648 = vadd.f32 0.0, %v1647
        %v1649 = vpop.f32.mrb[0].mxu0
        %v1650 = vpop.f32.mrb[0].mxu0
        %v1651 = vadd.f32 0.0, %v1650
        %v1652 = vpop.f32.mrb[0].mxu0
        %1653 = vdwg.mxu0
        %v1654 = vadd.f32 %v1360, %v1528
        %v1655 = vadd.f32 %v1361, %v1531
        %v1656 = vadd.f32 %v1362, %v1536
        %v1657 = vadd.f32 %v1363, %v1539
        %v1658 = vadd.f32 %v1364, %v1544
        %v1659 = vadd.f32 %v1365, %v1547
        %v1660 = vadd.f32 %v1366, %v1552
        %v1661 = vadd.f32 %v1367, %v1555
        %v1662 = vadd.f32 %v1368, %v1560
        %v1663 = vadd.f32 %v1369, %v1563
        %v1664 = vadd.f32 %v1370, %v1568
        %v1665 = vadd.f32 %v1371, %v1571
        %v1666 = vadd.f32 %v1372, %v1576
        %v1667 = vadd.f32 %v1373, %v1579
        %v1668 = vadd.f32 %v1374, %v1584
        %v1669 = vadd.f32 %v1375, %v1587
        %v1670 = vadd.f32 %v1376, %v1592
        %v1671 = vadd.f32 %v1377, %v1595
        %v1672 = vadd.f32 %v1378, %v1600
        %v1673 = vadd.f32 %v1379, %v1603
        %v1674 = vadd.f32 %v1380, %v1608
        %v1675 = vadd.f32 %v1381, %v1611
        %v1676 = vadd.f32 %v1382, %v1616
        %v1677 = vadd.f32 %v1383, %v1619
        %v1678 = vadd.f32 %v1384, %v1624
        %v1679 = vadd.f32 %v1385, %v1627
        %v1680 = vadd.f32 %v1386, %v1632
        %v1681 = vadd.f32 %v1387, %v1635
        %v1682 = vadd.f32 %v1388, %v1640
        %v1683 = vadd.f32 %v1389, %v1643
        %v1684 = vadd.f32 %v1390, %v1648
        %v1685 = vadd.f32 %v1391, %v1651
        %v1686 = vld [vmem:[%s1097 + $0x2] sm:$0xff]
        %v1687 = vld [vmem:[%s1097 + $0xa] sm:$0xff]
        %v1688 = vld [vmem:[%s1097 + $0x1a] sm:$0xff]
        %v1689 = vld [vmem:[%s1097 + $0x22] sm:$0xff]
        %v1690 = vld [vmem:[%s1097 + $0x32] sm:$0xff]
        %v1691 = vld [vmem:[%s1097 + $0x3a] sm:$0xff]
        %v1692 = vld [vmem:[%s1097 + $0x4a] sm:$0xff]
        %v1693 = vld [vmem:[%s1097 + $0x52] sm:$0xff]
        %v1694 = vld [vmem:[%s1097 + $0x62] sm:$0xff]
        %v1695 = vld [vmem:[%s1097 + $0x6a] sm:$0xff]
        %v1696 = vld [vmem:[%s1097 + $0x7a] sm:$0xff]
        %v1697 = vld [vmem:[%s1097 + $0x82] sm:$0xff]
        %v1698 = vld [vmem:[%s1097 + $0x92] sm:$0xff]
        %v1699 = vld [vmem:[%s1097 + $0x9a] sm:$0xff]
        %v1700 = vld [vmem:[%s1097 + $0xaa] sm:$0xff]
        %v1701 = vld [vmem:[%s1097 + $0xb2] sm:$0xff]
        %v1702 = vld [vmem:[%s1097 + $0xc2] sm:$0xff]
        %v1703 = vld [vmem:[%s1097 + $0xca] sm:$0xff]
        %v1704 = vld [vmem:[%s1097 + $0xda] sm:$0xff]
        %v1705 = vld [vmem:[%s1097 + $0xe2] sm:$0xff]
        %v1706 = vld [vmem:[%s1097 + $0xf2] sm:$0xff]
        %v1707 = vld [vmem:[%s1097 + $0xfa] sm:$0xff]
        %v1708 = vld [vmem:[%s1097 + $0x10a] sm:$0xff]
        %v1709 = vld [vmem:[%s1097 + $0x112] sm:$0xff]
        %v1710 = vld [vmem:[%s1097 + $0x122] sm:$0xff]
        %v1711 = vld [vmem:[%s1097 + $0x12a] sm:$0xff]
        %v1712 = vld [vmem:[%s1097 + $0x13a] sm:$0xff]
        %v1713 = vld [vmem:[%s1097 + $0x142] sm:$0xff]
        %v1714 = vld [vmem:[%s1097 + $0x152] sm:$0xff]
        %v1715 = vld [vmem:[%s1097 + $0x15a] sm:$0xff]
        %v1716 = vld [vmem:[%s1097 + $0x16a] sm:$0xff]
        %v1717 = vld [vmem:[%s1097 + $0x172] sm:$0xff]
        %v1718 = vpack.c.bf16 %v1687, %v1686
        %v1719 = vpack.c.bf16 %v1689, %v1688
        %v1720 = vpack.c.bf16 %v1691, %v1690
        %v1721 = vpack.c.bf16 %v1693, %v1692
        %v1722 = vpack.c.bf16 %v1695, %v1694
        %v1723 = vpack.c.bf16 %v1697, %v1696
        %v1724 = vpack.c.bf16 %v1699, %v1698
        %v1725 = vpack.c.bf16 %v1701, %v1700
        %v1726 = vpack.c.bf16 %v1703, %v1702
        %v1727 = vpack.c.bf16 %v1705, %v1704
        %v1728 = vpack.c.bf16 %v1707, %v1706
        %v1729 = vpack.c.bf16 %v1709, %v1708
        %v1730 = vpack.c.bf16 %v1711, %v1710
        %v1731 = vpack.c.bf16 %v1713, %v1712
        %v1732 = vpack.c.bf16 %v1715, %v1714
        %v1733 = vpack.c.bf16 %v1717, %v1716
        %s1734 = scalar_lea.vmem %s1, 10
        %v1735 = vld [vmem:[%s1734] sm:$0x3]
        %v1737 = vsel %vm377, %v1718, 0
        %v1740 = vsel %vm377, %v1719, 0
        %v1743 = vsel %vm377, %v1720, 0
        %v1746 = vsel %vm377, %v1721, 0
        %v1749 = vsel %vm377, %v1722, 0
        %v1752 = vsel %vm377, %v1723, 0
        %v1755 = vsel %vm377, %v1724, 0
        %v1758 = vsel %vm377, %v1725, 0
        %v1761 = vsel %vm377, %v1726, 0
        %v1764 = vsel %vm377, %v1727, 0
        %v1767 = vsel %vm377, %v1728, 0
        %v1770 = vsel %vm377, %v1729, 0
        %v1773 = vsel %vm377, %v1730, 0
        %v1776 = vsel %vm377, %v1731, 0
        %v1779 = vsel %vm377, %v1732, 0
        %v1782 = vsel %vm377, %v1733, 0
        %v1785 = vsel %vm426, %v1735, 0
        %1787 = vmatprep.subr.bf16.mxu0 0
        %1788 = vmatpush1.bf16.msra.mxu0 %v1785
        %1789 = vmatprep.subr.bf16.mxu0 0
        %1790 = vmatpush1.bf16.msra.mxu0 0
        %1791 = vmatprep.subr.bf16.mxu0 0
        %1792 = vmatpush1.bf16.msra.mxu0 0
        %1793 = vmatprep.subr.bf16.mxu0 0
        %1794 = vmatpush1.bf16.msra.mxu0 0
        %1795 = vmatprep.subr.bf16.mxu0 0
        %1796 = vmatpush1.bf16.msra.mxu0 0
        %1797 = vmatprep.subr.bf16.mxu0 0
        %1798 = vmatpush1.bf16.msra.mxu0 0
        %1799 = vmatprep.subr.bf16.mxu0 0
        %1800 = vmatpush1.bf16.msra.mxu0 0
        %1801 = vmatprep.subr.bf16.mxu0 0
        %1802 = vmatpush1.bf16.msra.mxu0 0
        %1803 = vmatprep.subr.bf16.mxu0 0
        %1804 = vmatpush1.bf16.msra.mxu0 0
        %1805 = vmatprep.subr.bf16.mxu0 0
        %1806 = vmatpush1.bf16.msra.mxu0 0
        %1807 = vmatprep.subr.bf16.mxu0 0
        %1808 = vmatpush1.bf16.msra.mxu0 0
        %1809 = vmatprep.subr.bf16.mxu0 0
        %1810 = vmatpush1.bf16.msra.mxu0 0
        %1811 = vmatprep.subr.bf16.mxu0 0
        %1812 = vmatpush1.bf16.msra.mxu0 0
        %1813 = vmatprep.subr.bf16.mxu0 0
        %1814 = vmatpush1.bf16.msra.mxu0 0
        %1815 = vmatprep.subr.bf16.mxu0 0
        %1816 = vmatpush1.bf16.msra.mxu0 0
        %1817 = vmatprep.subr.bf16.mxu0 0
        %1818 = vmatpush1.bf16.msra.mxu0 0
        %1819 = vmatprep.mubr.bf16.mxu0 0
        %1820 = vmatmul.mubr.bf16.gmra.mrb[0].mxu0 %v1737
        %v1821 = vpop.f32.mrb[0].mxu0
        %v1822 = vadd.f32 0.0, %v1821
        %v1823 = vpop.f32.mrb[0].mxu0
        %v1824 = vpop.f32.mrb[0].mxu0
        %v1825 = vadd.f32 0.0, %v1824
        %v1826 = vpop.f32.mrb[0].mxu0
        %1827 = vmatprep.mubr.bf16.mxu0 0
        %1828 = vmatmul.mubr.bf16.gmra.mrb[0].mxu0 %v1740
        %v1829 = vpop.f32.mrb[0].mxu0
        %v1830 = vadd.f32 0.0, %v1829
        %v1831 = vpop.f32.mrb[0].mxu0
        %v1832 = vpop.f32.mrb[0].mxu0
        %v1833 = vadd.f32 0.0, %v1832
        %v1834 = vpop.f32.mrb[0].mxu0
        %1835 = vmatprep.mubr.bf16.mxu0 0
        %1836 = vmatmul.mubr.bf16.gmra.mrb[0].mxu0 %v1743
        %v1837 = vpop.f32.mrb[0].mxu0
        %v1838 = vadd.f32 0.0, %v1837
        %v1839 = vpop.f32.mrb[0].mxu0
        %v1840 = vpop.f32.mrb[0].mxu0
        %v1841 = vadd.f32 0.0, %v1840
        %v1842 = vpop.f32.mrb[0].mxu0
        %1843 = vmatprep.mubr.bf16.mxu0 0
        %1844 = vmatmul.mubr.bf16.gmra.mrb[0].mxu0 %v1746
        %v1845 = vpop.f32.mrb[0].mxu0
        %v1846 = vadd.f32 0.0, %v1845
        %v1847 = vpop.f32.mrb[0].mxu0
        %v1848 = vpop.f32.mrb[0].mxu0
        %v1849 = vadd.f32 0.0, %v1848
        %v1850 = vpop.f32.mrb[0].mxu0
        %1851 = vmatprep.mubr.bf16.mxu0 0
        %1852 = vmatmul.mubr.bf16.gmra.mrb[0].mxu0 %v1749
        %v1853 = vpop.f32.mrb[0].mxu0
        %v1854 = vadd.f32 0.0, %v1853
        %v1855 = vpop.f32.mrb[0].mxu0
        %v1856 = vpop.f32.mrb[0].mxu0
        %v1857 = vadd.f32 0.0, %v1856
        %v1858 = vpop.f32.mrb[0].mxu0
        %1859 = vmatprep.mubr.bf16.mxu0 0
        %1860 = vmatmul.mubr.bf16.gmra.mrb[0].mxu0 %v1752
        %v1861 = vpop.f32.mrb[0].mxu0
        %v1862 = vadd.f32 0.0, %v1861
        %v1863 = vpop.f32.mrb[0].mxu0
        %v1864 = vpop.f32.mrb[0].mxu0
        %v1865 = vadd.f32 0.0, %v1864
        %v1866 = vpop.f32.mrb[0].mxu0
        %1867 = vmatprep.mubr.bf16.mxu0 0
        %1868 = vmatmul.mubr.bf16.gmra.mrb[0].mxu0 %v1755
        %v1869 = vpop.f32.mrb[0].mxu0
        %v1870 = vadd.f32 0.0, %v1869
        %v1871 = vpop.f32.mrb[0].mxu0
        %v1872 = vpop.f32.mrb[0].mxu0
        %v1873 = vadd.f32 0.0, %v1872
        %v1874 = vpop.f32.mrb[0].mxu0
        %1875 = vmatprep.mubr.bf16.mxu0 0
        %1876 = vmatmul.mubr.bf16.gmra.mrb[0].mxu0 %v1758
        %v1877 = vpop.f32.mrb[0].mxu0
        %v1878 = vadd.f32 0.0, %v1877
        %v1879 = vpop.f32.mrb[0].mxu0
        %v1880 = vpop.f32.mrb[0].mxu0
        %v1881 = vadd.f32 0.0, %v1880
        %v1882 = vpop.f32.mrb[0].mxu0
        %1883 = vmatprep.mubr.bf16.mxu0 0
        %1884 = vmatmul.mubr.bf16.gmra.mrb[0].mxu0 %v1761
        %v1885 = vpop.f32.mrb[0].mxu0
        %v1886 = vadd.f32 0.0, %v1885
        %v1887 = vpop.f32.mrb[0].mxu0
        %v1888 = vpop.f32.mrb[0].mxu0
        %v1889 = vadd.f32 0.0, %v1888
        %v1890 = vpop.f32.mrb[0].mxu0
        %1891 = vmatprep.mubr.bf16.mxu0 0
        %1892 = vmatmul.mubr.bf16.gmra.mrb[0].mxu0 %v1764
        %v1893 = vpop.f32.mrb[0].mxu0
        %v1894 = vadd.f32 0.0, %v1893
        %v1895 = vpop.f32.mrb[0].mxu0
        %v1896 = vpop.f32.mrb[0].mxu0
        %v1897 = vadd.f32 0.0, %v1896
        %v1898 = vpop.f32.mrb[0].mxu0
        %1899 = vmatprep.mubr.bf16.mxu0 0
        %1900 = vmatmul.mubr.bf16.gmra.mrb[0].mxu0 %v1767
        %v1901 = vpop.f32.mrb[0].mxu0
        %v1902 = vadd.f32 0.0, %v1901
        %v1903 = vpop.f32.mrb[0].mxu0
        %v1904 = vpop.f32.mrb[0].mxu0
        %v1905 = vadd.f32 0.0, %v1904
        %v1906 = vpop.f32.mrb[0].mxu0
        %1907 = vmatprep.mubr.bf16.mxu0 0
        %1908 = vmatmul.mubr.bf16.gmra.mrb[0].mxu0 %v1770
        %v1909 = vpop.f32.mrb[0].mxu0
        %v1910 = vadd.f32 0.0, %v1909
        %v1911 = vpop.f32.mrb[0].mxu0
        %v1912 = vpop.f32.mrb[0].mxu0
        %v1913 = vadd.f32 0.0, %v1912
        %v1914 = vpop.f32.mrb[0].mxu0
        %1915 = vmatprep.mubr.bf16.mxu0 0
        %1916 = vmatmul.mubr.bf16.gmra.mrb[0].mxu0 %v1773
        %v1917 = vpop.f32.mrb[0].mxu0
        %v1918 = vadd.f32 0.0, %v1917
        %v1919 = vpop.f32.mrb[0].mxu0
        %v1920 = vpop.f32.mrb[0].mxu0
        %v1921 = vadd.f32 0.0, %v1920
        %v1922 = vpop.f32.mrb[0].mxu0
        %1923 = vmatprep.mubr.bf16.mxu0 0
        %1924 = vmatmul.mubr.bf16.gmra.mrb[0].mxu0 %v1776
        %v1925 = vpop.f32.mrb[0].mxu0
        %v1926 = vadd.f32 0.0, %v1925
        %v1927 = vpop.f32.mrb[0].mxu0
        %v1928 = vpop.f32.mrb[0].mxu0
        %v1929 = vadd.f32 0.0, %v1928
        %v1930 = vpop.f32.mrb[0].mxu0
        %1931 = vmatprep.mubr.bf16.mxu0 0
        %1932 = vmatmul.mubr.bf16.gmra.mrb[0].mxu0 %v1779
        %v1933 = vpop.f32.mrb[0].mxu0
        %v1934 = vadd.f32 0.0, %v1933
        %v1935 = vpop.f32.mrb[0].mxu0
        %v1936 = vpop.f32.mrb[0].mxu0
        %v1937 = vadd.f32 0.0, %v1936
        %v1938 = vpop.f32.mrb[0].mxu0
        %1939 = vmatprep.mubr.bf16.mxu0 0
        %1940 = vmatmul.mubr.bf16.gmra.mrb[0].mxu0 %v1782
        %v1941 = vpop.f32.mrb[0].mxu0
        %v1942 = vadd.f32 0.0, %v1941
        %v1943 = vpop.f32.mrb[0].mxu0
        %v1944 = vpop.f32.mrb[0].mxu0
        %v1945 = vadd.f32 0.0, %v1944
        %v1946 = vpop.f32.mrb[0].mxu0
        %1947 = vdwg.mxu0
        %v1948 = vadd.f32 %v1654, %v1822
        %v1949 = vadd.f32 %v1655, %v1825
        %v1950 = vadd.f32 %v1656, %v1830
        %v1951 = vadd.f32 %v1657, %v1833
        %v1952 = vadd.f32 %v1658, %v1838
        %v1953 = vadd.f32 %v1659, %v1841
        %v1954 = vadd.f32 %v1660, %v1846
        %v1955 = vadd.f32 %v1661, %v1849
        %v1956 = vadd.f32 %v1662, %v1854
        %v1957 = vadd.f32 %v1663, %v1857
        %v1958 = vadd.f32 %v1664, %v1862
        %v1959 = vadd.f32 %v1665, %v1865
        %v1960 = vadd.f32 %v1666, %v1870
        %v1961 = vadd.f32 %v1667, %v1873
        %v1962 = vadd.f32 %v1668, %v1878
        %v1963 = vadd.f32 %v1669, %v1881
        %v1964 = vadd.f32 %v1670, %v1886
        %v1965 = vadd.f32 %v1671, %v1889
        %v1966 = vadd.f32 %v1672, %v1894
        %v1967 = vadd.f32 %v1673, %v1897
        %v1968 = vadd.f32 %v1674, %v1902
        %v1969 = vadd.f32 %v1675, %v1905
        %v1970 = vadd.f32 %v1676, %v1910
        %v1971 = vadd.f32 %v1677, %v1913
        %v1972 = vadd.f32 %v1678, %v1918
        %v1973 = vadd.f32 %v1679, %v1921
        %v1974 = vadd.f32 %v1680, %v1926
        %v1975 = vadd.f32 %v1681, %v1929
        %v1976 = vadd.f32 %v1682, %v1934
        %v1977 = vadd.f32 %v1683, %v1937
        %v1978 = vadd.f32 %v1684, %v1942
        %v1979 = vadd.f32 %v1685, %v1945
        %s1980 = scalar_lea.vmem %s276, 48
        %v1981 = vld [vmem:[%s1980] sm:$0xff]
        %v1982 = vld [vmem:[%s1980 + $0x8] sm:$0xff]
        %v1983 = vld [vmem:[%s1980 + $0x18] sm:$0xff]
        %v1984 = vld [vmem:[%s1980 + $0x20] sm:$0xff]
        %v1985 = vld [vmem:[%s1980 + $0x30] sm:$0xff]
        %v1986 = vld [vmem:[%s1980 + $0x38] sm:$0xff]
        %v1987 = vld [vmem:[%s1980 + $0x48] sm:$0xff]
        %v1988 = vld [vmem:[%s1980 + $0x50] sm:$0xff]
        %v1989 = vld [vmem:[%s1980 + $0x60] sm:$0xff]
        %v1990 = vld [vmem:[%s1980 + $0x68] sm:$0xff]
        %v1991 = vld [vmem:[%s1980 + $0x78] sm:$0xff]
        %v1992 = vld [vmem:[%s1980 + $0x80] sm:$0xff]
        %v1993 = vld [vmem:[%s1980 + $0x90] sm:$0xff]
        %v1994 = vld [vmem:[%s1980 + $0x98] sm:$0xff]
        %v1995 = vld [vmem:[%s1980 + $0xa8] sm:$0xff]
        %v1996 = vld [vmem:[%s1980 + $0xb0] sm:$0xff]
        %v1997 = vld [vmem:[%s1980 + $0xc0] sm:$0xff]
        %v1998 = vld [vmem:[%s1980 + $0xc8] sm:$0xff]
        %v1999 = vld [vmem:[%s1980 + $0xd8] sm:$0xff]
        %v2000 = vld [vmem:[%s1980 + $0xe0] sm:$0xff]
        %v2001 = vld [vmem:[%s1980 + $0xf0] sm:$0xff]
        %v2002 = vld [vmem:[%s1980 + $0xf8] sm:$0xff]
        %v2003 = vld [vmem:[%s1980 + $0x108] sm:$0xff]
        %v2004 = vld [vmem:[%s1980 + $0x110] sm:$0xff]
        %v2005 = vld [vmem:[%s1980 + $0x120] sm:$0xff]
        %v2006 = vld [vmem:[%s1980 + $0x128] sm:$0xff]
        %v2007 = vld [vmem:[%s1980 + $0x138] sm:$0xff]
        %v2008 = vld [vmem:[%s1980 + $0x140] sm:$0xff]
        %v2009 = vld [vmem:[%s1980 + $0x150] sm:$0xff]
        %v2010 = vld [vmem:[%s1980 + $0x158] sm:$0xff]
        %v2011 = vld [vmem:[%s1980 + $0x168] sm:$0xff]
        %v2012 = vld [vmem:[%s1980 + $0x170] sm:$0xff]
        %v2013 = vpack.c.bf16 %v1982, %v1981
        %v2014 = vpack.c.bf16 %v1984, %v1983
        %v2015 = vpack.c.bf16 %v1986, %v1985
        %v2016 = vpack.c.bf16 %v1988, %v1987
        %v2017 = vpack.c.bf16 %v1990, %v1989
        %v2018 = vpack.c.bf16 %v1992, %v1991
        %v2019 = vpack.c.bf16 %v1994, %v1993
        %v2020 = vpack.c.bf16 %v1996, %v1995
        %v2021 = vpack.c.bf16 %v1998, %v1997
        %v2022 = vpack.c.bf16 %v2000, %v1999
        %v2023 = vpack.c.bf16 %v2002, %v2001
        %v2024 = vpack.c.bf16 %v2004, %v2003
        %v2025 = vpack.c.bf16 %v2006, %v2005
        %v2026 = vpack.c.bf16 %v2008, %v2007
        %v2027 = vpack.c.bf16 %v2010, %v2009
        %v2028 = vpack.c.bf16 %v2012, %v2011
        %s2029 = scalar_lea.vmem %s1, 12
        %v2030 = vld [vmem:[%s2029] sm:$0x3]
        %v2032 = vsel %vm377, %v2013, 0
        %v2035 = vsel %vm377, %v2014, 0
        %v2038 = vsel %vm377, %v2015, 0
        %v2041 = vsel %vm377, %v2016, 0
        %v2044 = vsel %vm377, %v2017, 0
        %v2047 = vsel %vm377, %v2018, 0
        %v2050 = vsel %vm377, %v2019, 0
        %v2053 = vsel %vm377, %v2020, 0
        %v2056 = vsel %vm377, %v2021, 0
        %v2059 = vsel %vm377, %v2022, 0
        %v2062 = vsel %vm377, %v2023, 0
        %v2065 = vsel %vm377, %v2024, 0
        %v2068 = vsel %vm377, %v2025, 0
        %v2071 = vsel %vm377, %v2026, 0
        %v2074 = vsel %vm377, %v2027, 0
        %v2077 = vsel %vm377, %v2028, 0
        %v2080 = vsel %vm426, %v2030, 0
        %2082 = vmatprep.subr.bf16.mxu0 0
        %2083 = vmatpush1.bf16.msra.mxu0 %v2080
        %2084 = vmatprep.subr.bf16.mxu0 0
        %2085 = vmatpush1.bf16.msra.mxu0 0
        %2086 = vmatprep.subr.bf16.mxu0 0
        %2087 = vmatpush1.bf16.msra.mxu0 0
        %2088 = vmatprep.subr.bf16.mxu0 0
        %2089 = vmatpush1.bf16.msra.mxu0 0
        %2090 = vmatprep.subr.bf16.mxu0 0
        %2091 = vmatpush1.bf16.msra.mxu0 0
        %2092 = vmatprep.subr.bf16.mxu0 0
        %2093 = vmatpush1.bf16.msra.mxu0 0
        %2094 = vmatprep.subr.bf16.mxu0 0
        %2095 = vmatpush1.bf16.msra.mxu0 0
        %2096 = vmatprep.subr.bf16.mxu0 0
        %2097 = vmatpush1.bf16.msra.mxu0 0
        %2098 = vmatprep.subr.bf16.mxu0 0
        %2099 = vmatpush1.bf16.msra.mxu0 0
        %2100 = vmatprep.subr.bf16.mxu0 0
        %2101 = vmatpush1.bf16.msra.mxu0 0
        %2102 = vmatprep.subr.bf16.mxu0 0
        %2103 = vmatpush1.bf16.msra.mxu0 0
        %2104 = vmatprep.subr.bf16.mxu0 0
        %2105 = vmatpush1.bf16.msra.mxu0 0
        %2106 = vmatprep.subr.bf16.mxu0 0
        %2107 = vmatpush1.bf16.msra.mxu0 0
        %2108 = vmatprep.subr.bf16.mxu0 0
        %2109 = vmatpush1.bf16.msra.mxu0 0
        %2110 = vmatprep.subr.bf16.mxu0 0
        %2111 = vmatpush1.bf16.msra.mxu0 0
        %2112 = vmatprep.subr.bf16.mxu0 0
        %2113 = vmatpush1.bf16.msra.mxu0 0
        %2114 = vmatprep.mubr.bf16.mxu0 0
        %2115 = vmatmul.mubr.bf16.gmra.mrb[0].mxu0 %v2032
        %v2116 = vpop.f32.mrb[0].mxu0
        %v2117 = vadd.f32 0.0, %v2116
        %v2118 = vpop.f32.mrb[0].mxu0
        %v2119 = vpop.f32.mrb[0].mxu0
        %v2120 = vadd.f32 0.0, %v2119
        %v2121 = vpop.f32.mrb[0].mxu0
        %2122 = vmatprep.mubr.bf16.mxu0 0
        %2123 = vmatmul.mubr.bf16.gmra.mrb[0].mxu0 %v2035
        %v2124 = vpop.f32.mrb[0].mxu0
        %v2125 = vadd.f32 0.0, %v2124
        %v2126 = vpop.f32.mrb[0].mxu0
        %v2127 = vpop.f32.mrb[0].mxu0
        %v2128 = vadd.f32 0.0, %v2127
        %v2129 = vpop.f32.mrb[0].mxu0
        %2130 = vmatprep.mubr.bf16.mxu0 0
        %2131 = vmatmul.mubr.bf16.gmra.mrb[0].mxu0 %v2038
        %v2132 = vpop.f32.mrb[0].mxu0
        %v2133 = vadd.f32 0.0, %v2132
        %v2134 = vpop.f32.mrb[0].mxu0
        %v2135 = vpop.f32.mrb[0].mxu0
        %v2136 = vadd.f32 0.0, %v2135
        %v2137 = vpop.f32.mrb[0].mxu0
        %2138 = vmatprep.mubr.bf16.mxu0 0
        %2139 = vmatmul.mubr.bf16.gmra.mrb[0].mxu0 %v2041
        %v2140 = vpop.f32.mrb[0].mxu0
        %v2141 = vadd.f32 0.0, %v2140
        %v2142 = vpop.f32.mrb[0].mxu0
        %v2143 = vpop.f32.mrb[0].mxu0
        %v2144 = vadd.f32 0.0, %v2143
        %v2145 = vpop.f32.mrb[0].mxu0
        %2146 = vmatprep.mubr.bf16.mxu0 0
        %2147 = vmatmul.mubr.bf16.gmra.mrb[0].mxu0 %v2044
        %v2148 = vpop.f32.mrb[0].mxu0
        %v2149 = vadd.f32 0.0, %v2148
        %v2150 = vpop.f32.mrb[0].mxu0
        %v2151 = vpop.f32.mrb[0].mxu0
        %v2152 = vadd.f32 0.0, %v2151
        %v2153 = vpop.f32.mrb[0].mxu0
        %2154 = vmatprep.mubr.bf16.mxu0 0
        %2155 = vmatmul.mubr.bf16.gmra.mrb[0].mxu0 %v2047
        %v2156 = vpop.f32.mrb[0].mxu0
        %v2157 = vadd.f32 0.0, %v2156
        %v2158 = vpop.f32.mrb[0].mxu0
        %v2159 = vpop.f32.mrb[0].mxu0
        %v2160 = vadd.f32 0.0, %v2159
        %v2161 = vpop.f32.mrb[0].mxu0
        %2162 = vmatprep.mubr.bf16.mxu0 0
        %2163 = vmatmul.mubr.bf16.gmra.mrb[0].mxu0 %v2050
        %v2164 = vpop.f32.mrb[0].mxu0
        %v2165 = vadd.f32 0.0, %v2164
        %v2166 = vpop.f32.mrb[0].mxu0
        %v2167 = vpop.f32.mrb[0].mxu0
        %v2168 = vadd.f32 0.0, %v2167
        %v2169 = vpop.f32.mrb[0].mxu0
        %2170 = vmatprep.mubr.bf16.mxu0 0
        %2171 = vmatmul.mubr.bf16.gmra.mrb[0].mxu0 %v2053
        %v2172 = vpop.f32.mrb[0].mxu0
        %v2173 = vadd.f32 0.0, %v2172
        %v2174 = vpop.f32.mrb[0].mxu0
        %v2175 = vpop.f32.mrb[0].mxu0
        %v2176 = vadd.f32 0.0, %v2175
        %v2177 = vpop.f32.mrb[0].mxu0
        %2178 = vmatprep.mubr.bf16.mxu0 0
        %2179 = vmatmul.mubr.bf16.gmra.mrb[0].mxu0 %v2056
        %v2180 = vpop.f32.mrb[0].mxu0
        %v2181 = vadd.f32 0.0, %v2180
        %v2182 = vpop.f32.mrb[0].mxu0
        %v2183 = vpop.f32.mrb[0].mxu0
        %v2184 = vadd.f32 0.0, %v2183
        %v2185 = vpop.f32.mrb[0].mxu0
        %2186 = vmatprep.mubr.bf16.mxu0 0
        %2187 = vmatmul.mubr.bf16.gmra.mrb[0].mxu0 %v2059
        %v2188 = vpop.f32.mrb[0].mxu0
        %v2189 = vadd.f32 0.0, %v2188
        %v2190 = vpop.f32.mrb[0].mxu0
        %v2191 = vpop.f32.mrb[0].mxu0
        %v2192 = vadd.f32 0.0, %v2191
        %v2193 = vpop.f32.mrb[0].mxu0
        %2194 = vmatprep.mubr.bf16.mxu0 0
        %2195 = vmatmul.mubr.bf16.gmra.mrb[0].mxu0 %v2062
        %v2196 = vpop.f32.mrb[0].mxu0
        %v2197 = vadd.f32 0.0, %v2196
        %v2198 = vpop.f32.mrb[0].mxu0
        %v2199 = vpop.f32.mrb[0].mxu0
        %v2200 = vadd.f32 0.0, %v2199
        %v2201 = vpop.f32.mrb[0].mxu0
        %2202 = vmatprep.mubr.bf16.mxu0 0
        %2203 = vmatmul.mubr.bf16.gmra.mrb[0].mxu0 %v2065
        %v2204 = vpop.f32.mrb[0].mxu0
        %v2205 = vadd.f32 0.0, %v2204
        %v2206 = vpop.f32.mrb[0].mxu0
        %v2207 = vpop.f32.mrb[0].mxu0
        %v2208 = vadd.f32 0.0, %v2207
        %v2209 = vpop.f32.mrb[0].mxu0
        %2210 = vmatprep.mubr.bf16.mxu0 0
        %2211 = vmatmul.mubr.bf16.gmra.mrb[0].mxu0 %v2068
        %v2212 = vpop.f32.mrb[0].mxu0
        %v2213 = vadd.f32 0.0, %v2212
        %v2214 = vpop.f32.mrb[0].mxu0
        %v2215 = vpop.f32.mrb[0].mxu0
        %v2216 = vadd.f32 0.0, %v2215
        %v2217 = vpop.f32.mrb[0].mxu0
        %2218 = vmatprep.mubr.bf16.mxu0 0
        %2219 = vmatmul.mubr.bf16.gmra.mrb[0].mxu0 %v2071
        %v2220 = vpop.f32.mrb[0].mxu0
        %v2221 = vadd.f32 0.0, %v2220
        %v2222 = vpop.f32.mrb[0].mxu0
        %v2223 = vpop.f32.mrb[0].mxu0
        %v2224 = vadd.f32 0.0, %v2223
        %v2225 = vpop.f32.mrb[0].mxu0
        %2226 = vmatprep.mubr.bf16.mxu0 0
        %2227 = vmatmul.mubr.bf16.gmra.mrb[0].mxu0 %v2074
        %v2228 = vpop.f32.mrb[0].mxu0
        %v2229 = vadd.f32 0.0, %v2228
        %v2230 = vpop.f32.mrb[0].mxu0
        %v2231 = vpop.f32.mrb[0].mxu0
        %v2232 = vadd.f32 0.0, %v2231
        %v2233 = vpop.f32.mrb[0].mxu0
        %2234 = vmatprep.mubr.bf16.mxu0 0
        %2235 = vmatmul.mubr.bf16.gmra.mrb[0].mxu0 %v2077
        %v2236 = vpop.f32.mrb[0].mxu0
        %v2237 = vadd.f32 0.0, %v2236
        %v2238 = vpop.f32.mrb[0].mxu0
        %v2239 = vpop.f32.mrb[0].mxu0
        %v2240 = vadd.f32 0.0, %v2239
        %v2241 = vpop.f32.mrb[0].mxu0
        %2242 = vdwg.mxu0
        %v2243 = vadd.f32 %v1948, %v2117
        %v2244 = vadd.f32 %v1949, %v2120
        %v2245 = vadd.f32 %v1950, %v2125
        %v2246 = vadd.f32 %v1951, %v2128
        %v2247 = vadd.f32 %v1952, %v2133
        %v2248 = vadd.f32 %v1953, %v2136
        %v2249 = vadd.f32 %v1954, %v2141
        %v2250 = vadd.f32 %v1955, %v2144
        %v2251 = vadd.f32 %v1956, %v2149
        %v2252 = vadd.f32 %v1957, %v2152
        %v2253 = vadd.f32 %v1958, %v2157
        %v2254 = vadd.f32 %v1959, %v2160
        %v2255 = vadd.f32 %v1960, %v2165
        %v2256 = vadd.f32 %v1961, %v2168
        %v2257 = vadd.f32 %v1962, %v2173
        %v2258 = vadd.f32 %v1963, %v2176
        %v2259 = vadd.f32 %v1964, %v2181
        %v2260 = vadd.f32 %v1965, %v2184
        %v2261 = vadd.f32 %v1966, %v2189
        %v2262 = vadd.f32 %v1967, %v2192
        %v2263 = vadd.f32 %v1968, %v2197
        %v2264 = vadd.f32 %v1969, %v2200
        %v2265 = vadd.f32 %v1970, %v2205
        %v2266 = vadd.f32 %v1971, %v2208
        %v2267 = vadd.f32 %v1972, %v2213
        %v2268 = vadd.f32 %v1973, %v2216
        %v2269 = vadd.f32 %v1974, %v2221
        %v2270 = vadd.f32 %v1975, %v2224
        %v2271 = vadd.f32 %v1976, %v2229
        %v2272 = vadd.f32 %v1977, %v2232
        %v2273 = vadd.f32 %v1978, %v2237
        %v2274 = vadd.f32 %v1979, %v2240
        %v2275 = vld [vmem:[%s1980 + $0x1] sm:$0xff]
        %v2276 = vld [vmem:[%s1980 + $0x9] sm:$0xff]
        %v2277 = vld [vmem:[%s1980 + $0x19] sm:$0xff]
        %v2278 = vld [vmem:[%s1980 + $0x21] sm:$0xff]
        %v2279 = vld [vmem:[%s1980 + $0x31] sm:$0xff]
        %v2280 = vld [vmem:[%s1980 + $0x39] sm:$0xff]
        %v2281 = vld [vmem:[%s1980 + $0x49] sm:$0xff]
        %v2282 = vld [vmem:[%s1980 + $0x51] sm:$0xff]
        %v2283 = vld [vmem:[%s1980 + $0x61] sm:$0xff]
        %v2284 = vld [vmem:[%s1980 + $0x69] sm:$0xff]
        %v2285 = vld [vmem:[%s1980 + $0x79] sm:$0xff]
        %v2286 = vld [vmem:[%s1980 + $0x81] sm:$0xff]
        %v2287 = vld [vmem:[%s1980 + $0x91] sm:$0xff]
        %v2288 = vld [vmem:[%s1980 + $0x99] sm:$0xff]
        %v2289 = vld [vmem:[%s1980 + $0xa9] sm:$0xff]
        %v2290 = vld [vmem:[%s1980 + $0xb1] sm:$0xff]
        %v2291 = vld [vmem:[%s1980 + $0xc1] sm:$0xff]
        %v2292 = vld [vmem:[%s1980 + $0xc9] sm:$0xff]
        %v2293 = vld [vmem:[%s1980 + $0xd9] sm:$0xff]
        %v2294 = vld [vmem:[%s1980 + $0xe1] sm:$0xff]
        %v2295 = vld [vmem:[%s1980 + $0xf1] sm:$0xff]
        %v2296 = vld [vmem:[%s1980 + $0xf9] sm:$0xff]
        %v2297 = vld [vmem:[%s1980 + $0x109] sm:$0xff]
        %v2298 = vld [vmem:[%s1980 + $0x111] sm:$0xff]
        %v2299 = vld [vmem:[%s1980 + $0x121] sm:$0xff]
        %v2300 = vld [vmem:[%s1980 + $0x129] sm:$0xff]
        %v2301 = vld [vmem:[%s1980 + $0x139] sm:$0xff]
        %v2302 = vld [vmem:[%s1980 + $0x141] sm:$0xff]
        %v2303 = vld [vmem:[%s1980 + $0x151] sm:$0xff]
        %v2304 = vld [vmem:[%s1980 + $0x159] sm:$0xff]
        %v2305 = vld [vmem:[%s1980 + $0x169] sm:$0xff]
        %v2306 = vld [vmem:[%s1980 + $0x171] sm:$0xff]
        %v2307 = vpack.c.bf16 %v2276, %v2275
        %v2308 = vpack.c.bf16 %v2278, %v2277
        %v2309 = vpack.c.bf16 %v2280, %v2279
        %v2310 = vpack.c.bf16 %v2282, %v2281
        %v2311 = vpack.c.bf16 %v2284, %v2283
        %v2312 = vpack.c.bf16 %v2286, %v2285
        %v2313 = vpack.c.bf16 %v2288, %v2287
        %v2314 = vpack.c.bf16 %v2290, %v2289
        %v2315 = vpack.c.bf16 %v2292, %v2291
        %v2316 = vpack.c.bf16 %v2294, %v2293
        %v2317 = vpack.c.bf16 %v2296, %v2295
        %v2318 = vpack.c.bf16 %v2298, %v2297
        %v2319 = vpack.c.bf16 %v2300, %v2299
        %v2320 = vpack.c.bf16 %v2302, %v2301
        %v2321 = vpack.c.bf16 %v2304, %v2303
        %v2322 = vpack.c.bf16 %v2306, %v2305
        %s2323 = scalar_lea.vmem %s1, 14
        %v2324 = vld [vmem:[%s2323] sm:$0x3]
        %v2326 = vsel %vm377, %v2307, 0
        %v2329 = vsel %vm377, %v2308, 0
        %v2332 = vsel %vm377, %v2309, 0
        %v2335 = vsel %vm377, %v2310, 0
        %v2338 = vsel %vm377, %v2311, 0
        %v2341 = vsel %vm377, %v2312, 0
        %v2344 = vsel %vm377, %v2313, 0
        %v2347 = vsel %vm377, %v2314, 0
        %v2350 = vsel %vm377, %v2315, 0
        %v2353 = vsel %vm377, %v2316, 0
        %v2356 = vsel %vm377, %v2317, 0
        %v2359 = vsel %vm377, %v2318, 0
        %v2362 = vsel %vm377, %v2319, 0
        %v2365 = vsel %vm377, %v2320, 0
        %v2368 = vsel %vm377, %v2321, 0
        %v2371 = vsel %vm377, %v2322, 0
        %v2374 = vsel %vm426, %v2324, 0
        %2376 = vmatprep.subr.bf16.mxu0 0
        %2377 = vmatpush1.bf16.msra.mxu0 %v2374
        %2378 = vmatprep.subr.bf16.mxu0 0
        %2379 = vmatpush1.bf16.msra.mxu0 0
        %2380 = vmatprep.subr.bf16.mxu0 0
        %2381 = vmatpush1.bf16.msra.mxu0 0
        %2382 = vmatprep.subr.bf16.mxu0 0
        %2383 = vmatpush1.bf16.msra.mxu0 0
        %2384 = vmatprep.subr.bf16.mxu0 0
        %2385 = vmatpush1.bf16.msra.mxu0 0
        %2386 = vmatprep.subr.bf16.mxu0 0
        %2387 = vmatpush1.bf16.msra.mxu0 0
        %2388 = vmatprep.subr.bf16.mxu0 0
        %2389 = vmatpush1.bf16.msra.mxu0 0
        %2390 = vmatprep.subr.bf16.mxu0 0
        %2391 = vmatpush1.bf16.msra.mxu0 0
        %2392 = vmatprep.subr.bf16.mxu0 0
        %2393 = vmatpush1.bf16.msra.mxu0 0
        %2394 = vmatprep.subr.bf16.mxu0 0
        %2395 = vmatpush1.bf16.msra.mxu0 0
        %2396 = vmatprep.subr.bf16.mxu0 0
        %2397 = vmatpush1.bf16.msra.mxu0 0
        %2398 = vmatprep.subr.bf16.mxu0 0
        %2399 = vmatpush1.bf16.msra.mxu0 0
        %2400 = vmatprep.subr.bf16.mxu0 0
        %2401 = vmatpush1.bf16.msra.mxu0 0
        %2402 = vmatprep.subr.bf16.mxu0 0
        %2403 = vmatpush1.bf16.msra.mxu0 0
        %2404 = vmatprep.subr.bf16.mxu0 0
        %2405 = vmatpush1.bf16.msra.mxu0 0
        %2406 = vmatprep.subr.bf16.mxu0 0
        %2407 = vmatpush1.bf16.msra.mxu0 0
        %2408 = vmatprep.mubr.bf16.mxu0 0
        %2409 = vmatmul.mubr.bf16.gmra.mrb[0].mxu0 %v2326
        %v2410 = vpop.f32.mrb[0].mxu0
        %v2411 = vadd.f32 0.0, %v2410
        %v2412 = vpop.f32.mrb[0].mxu0
        %v2413 = vpop.f32.mrb[0].mxu0
        %v2414 = vadd.f32 0.0, %v2413
        %v2415 = vpop.f32.mrb[0].mxu0
        %2416 = vmatprep.mubr.bf16.mxu0 0
        %2417 = vmatmul.mubr.bf16.gmra.mrb[0].mxu0 %v2329
        %v2418 = vpop.f32.mrb[0].mxu0
        %v2419 = vadd.f32 0.0, %v2418
        %v2420 = vpop.f32.mrb[0].mxu0
        %v2421 = vpop.f32.mrb[0].mxu0
        %v2422 = vadd.f32 0.0, %v2421
        %v2423 = vpop.f32.mrb[0].mxu0
        %2424 = vmatprep.mubr.bf16.mxu0 0
        %2425 = vmatmul.mubr.bf16.gmra.mrb[0].mxu0 %v2332
        %v2426 = vpop.f32.mrb[0].mxu0
        %v2427 = vadd.f32 0.0, %v2426
        %v2428 = vpop.f32.mrb[0].mxu0
        %v2429 = vpop.f32.mrb[0].mxu0
        %v2430 = vadd.f32 0.0, %v2429
        %v2431 = vpop.f32.mrb[0].mxu0
        %2432 = vmatprep.mubr.bf16.mxu0 0
        %2433 = vmatmul.mubr.bf16.gmra.mrb[0].mxu0 %v2335
        %v2434 = vpop.f32.mrb[0].mxu0
        %v2435 = vadd.f32 0.0, %v2434
        %v2436 = vpop.f32.mrb[0].mxu0
        %v2437 = vpop.f32.mrb[0].mxu0
        %v2438 = vadd.f32 0.0, %v2437
        %v2439 = vpop.f32.mrb[0].mxu0
        %2440 = vmatprep.mubr.bf16.mxu0 0
        %2441 = vmatmul.mubr.bf16.gmra.mrb[0].mxu0 %v2338
        %v2442 = vpop.f32.mrb[0].mxu0
        %v2443 = vadd.f32 0.0, %v2442
        %v2444 = vpop.f32.mrb[0].mxu0
        %v2445 = vpop.f32.mrb[0].mxu0
        %v2446 = vadd.f32 0.0, %v2445
        %v2447 = vpop.f32.mrb[0].mxu0
        %2448 = vmatprep.mubr.bf16.mxu0 0
        %2449 = vmatmul.mubr.bf16.gmra.mrb[0].mxu0 %v2341
        %v2450 = vpop.f32.mrb[0].mxu0
        %v2451 = vadd.f32 0.0, %v2450
        %v2452 = vpop.f32.mrb[0].mxu0
        %v2453 = vpop.f32.mrb[0].mxu0
        %v2454 = vadd.f32 0.0, %v2453
        %v2455 = vpop.f32.mrb[0].mxu0
        %2456 = vmatprep.mubr.bf16.mxu0 0
        %2457 = vmatmul.mubr.bf16.gmra.mrb[0].mxu0 %v2344
        %v2458 = vpop.f32.mrb[0].mxu0
        %v2459 = vadd.f32 0.0, %v2458
        %v2460 = vpop.f32.mrb[0].mxu0
        %v2461 = vpop.f32.mrb[0].mxu0
        %v2462 = vadd.f32 0.0, %v2461
        %v2463 = vpop.f32.mrb[0].mxu0
        %2464 = vmatprep.mubr.bf16.mxu0 0
        %2465 = vmatmul.mubr.bf16.gmra.mrb[0].mxu0 %v2347
        %v2466 = vpop.f32.mrb[0].mxu0
        %v2467 = vadd.f32 0.0, %v2466
        %v2468 = vpop.f32.mrb[0].mxu0
        %v2469 = vpop.f32.mrb[0].mxu0
        %v2470 = vadd.f32 0.0, %v2469
        %v2471 = vpop.f32.mrb[0].mxu0
        %2472 = vmatprep.mubr.bf16.mxu0 0
        %2473 = vmatmul.mubr.bf16.gmra.mrb[0].mxu0 %v2350
        %v2474 = vpop.f32.mrb[0].mxu0
        %v2475 = vadd.f32 0.0, %v2474
        %v2476 = vpop.f32.mrb[0].mxu0
        %v2477 = vpop.f32.mrb[0].mxu0
        %v2478 = vadd.f32 0.0, %v2477
        %v2479 = vpop.f32.mrb[0].mxu0
        %2480 = vmatprep.mubr.bf16.mxu0 0
        %2481 = vmatmul.mubr.bf16.gmra.mrb[0].mxu0 %v2353
        %v2482 = vpop.f32.mrb[0].mxu0
        %v2483 = vadd.f32 0.0, %v2482
        %v2484 = vpop.f32.mrb[0].mxu0
        %v2485 = vpop.f32.mrb[0].mxu0
        %v2486 = vadd.f32 0.0, %v2485
        %v2487 = vpop.f32.mrb[0].mxu0
        %2488 = vmatprep.mubr.bf16.mxu0 0
        %2489 = vmatmul.mubr.bf16.gmra.mrb[0].mxu0 %v2356
        %v2490 = vpop.f32.mrb[0].mxu0
        %v2491 = vadd.f32 0.0, %v2490
        %v2492 = vpop.f32.mrb[0].mxu0
        %v2493 = vpop.f32.mrb[0].mxu0
        %v2494 = vadd.f32 0.0, %v2493
        %v2495 = vpop.f32.mrb[0].mxu0
        %2496 = vmatprep.mubr.bf16.mxu0 0
        %2497 = vmatmul.mubr.bf16.gmra.mrb[0].mxu0 %v2359
        %v2498 = vpop.f32.mrb[0].mxu0
        %v2499 = vadd.f32 0.0, %v2498
        %v2500 = vpop.f32.mrb[0].mxu0
        %v2501 = vpop.f32.mrb[0].mxu0
        %v2502 = vadd.f32 0.0, %v2501
        %v2503 = vpop.f32.mrb[0].mxu0
        %2504 = vmatprep.mubr.bf16.mxu0 0
        %2505 = vmatmul.mubr.bf16.gmra.mrb[0].mxu0 %v2362
        %v2506 = vpop.f32.mrb[0].mxu0
        %v2507 = vadd.f32 0.0, %v2506
        %v2508 = vpop.f32.mrb[0].mxu0
        %v2509 = vpop.f32.mrb[0].mxu0
        %v2510 = vadd.f32 0.0, %v2509
        %v2511 = vpop.f32.mrb[0].mxu0
        %2512 = vmatprep.mubr.bf16.mxu0 0
        %2513 = vmatmul.mubr.bf16.gmra.mrb[0].mxu0 %v2365
        %v2514 = vpop.f32.mrb[0].mxu0
        %v2515 = vadd.f32 0.0, %v2514
        %v2516 = vpop.f32.mrb[0].mxu0
        %v2517 = vpop.f32.mrb[0].mxu0
        %v2518 = vadd.f32 0.0, %v2517
        %v2519 = vpop.f32.mrb[0].mxu0
        %2520 = vmatprep.mubr.bf16.mxu0 0
        %2521 = vmatmul.mubr.bf16.gmra.mrb[0].mxu0 %v2368
        %v2522 = vpop.f32.mrb[0].mxu0
        %v2523 = vadd.f32 0.0, %v2522
        %v2524 = vpop.f32.mrb[0].mxu0
        %v2525 = vpop.f32.mrb[0].mxu0
        %v2526 = vadd.f32 0.0, %v2525
        %v2527 = vpop.f32.mrb[0].mxu0
        %2528 = vmatprep.mubr.bf16.mxu0 0
        %2529 = vmatmul.mubr.bf16.gmra.mrb[0].mxu0 %v2371
        %v2530 = vpop.f32.mrb[0].mxu0
        %v2531 = vadd.f32 0.0, %v2530
        %v2532 = vpop.f32.mrb[0].mxu0
        %v2533 = vpop.f32.mrb[0].mxu0
        %v2534 = vadd.f32 0.0, %v2533
        %v2535 = vpop.f32.mrb[0].mxu0
        %2536 = vdwg.mxu0
        %v2537 = vadd.f32 %v2243, %v2411
        %v2538 = vadd.f32 %v2244, %v2414
        %v2539 = vadd.f32 %v2245, %v2419
        %v2540 = vadd.f32 %v2246, %v2422
        %v2541 = vadd.f32 %v2247, %v2427
        %v2542 = vadd.f32 %v2248, %v2430
        %v2543 = vadd.f32 %v2249, %v2435
        %v2544 = vadd.f32 %v2250, %v2438
        %v2545 = vadd.f32 %v2251, %v2443
        %v2546 = vadd.f32 %v2252, %v2446
        %v2547 = vadd.f32 %v2253, %v2451
        %v2548 = vadd.f32 %v2254, %v2454
        %v2549 = vadd.f32 %v2255, %v2459
        %v2550 = vadd.f32 %v2256, %v2462
        %v2551 = vadd.f32 %v2257, %v2467
        %v2552 = vadd.f32 %v2258, %v2470
        %v2553 = vadd.f32 %v2259, %v2475
        %v2554 = vadd.f32 %v2260, %v2478
        %v2555 = vadd.f32 %v2261, %v2483
        %v2556 = vadd.f32 %v2262, %v2486
        %v2557 = vadd.f32 %v2263, %v2491
        %v2558 = vadd.f32 %v2264, %v2494
        %v2559 = vadd.f32 %v2265, %v2499
        %v2560 = vadd.f32 %v2266, %v2502
        %v2561 = vadd.f32 %v2267, %v2507
        %v2562 = vadd.f32 %v2268, %v2510
        %v2563 = vadd.f32 %v2269, %v2515
        %v2564 = vadd.f32 %v2270, %v2518
        %v2565 = vadd.f32 %v2271, %v2523
        %v2566 = vadd.f32 %v2272, %v2526
        %v2567 = vadd.f32 %v2273, %v2531
        %v2568 = vadd.f32 %v2274, %v2534
        %v2569 = vld [vmem:[%s1980 + $0x2] sm:$0xff]
        %v2570 = vld [vmem:[%s1980 + $0xa] sm:$0xff]
        %v2571 = vld [vmem:[%s1980 + $0x1a] sm:$0xff]
        %v2572 = vld [vmem:[%s1980 + $0x22] sm:$0xff]
        %v2573 = vld [vmem:[%s1980 + $0x32] sm:$0xff]
        %v2574 = vld [vmem:[%s1980 + $0x3a] sm:$0xff]
        %v2575 = vld [vmem:[%s1980 + $0x4a] sm:$0xff]
        %v2576 = vld [vmem:[%s1980 + $0x52] sm:$0xff]
        %v2577 = vld [vmem:[%s1980 + $0x62] sm:$0xff]
        %v2578 = vld [vmem:[%s1980 + $0x6a] sm:$0xff]
        %v2579 = vld [vmem:[%s1980 + $0x7a] sm:$0xff]
        %v2580 = vld [vmem:[%s1980 + $0x82] sm:$0xff]
        %v2581 = vld [vmem:[%s1980 + $0x92] sm:$0xff]
        %v2582 = vld [vmem:[%s1980 + $0x9a] sm:$0xff]
        %v2583 = vld [vmem:[%s1980 + $0xaa] sm:$0xff]
        %v2584 = vld [vmem:[%s1980 + $0xb2] sm:$0xff]
        %v2585 = vld [vmem:[%s1980 + $0xc2] sm:$0xff]
        %v2586 = vld [vmem:[%s1980 + $0xca] sm:$0xff]
        %v2587 = vld [vmem:[%s1980 + $0xda] sm:$0xff]
        %v2588 = vld [vmem:[%s1980 + $0xe2] sm:$0xff]
        %v2589 = vld [vmem:[%s1980 + $0xf2] sm:$0xff]
        %v2590 = vld [vmem:[%s1980 + $0xfa] sm:$0xff]
        %v2591 = vld [vmem:[%s1980 + $0x10a] sm:$0xff]
        %v2592 = vld [vmem:[%s1980 + $0x112] sm:$0xff]
        %v2593 = vld [vmem:[%s1980 + $0x122] sm:$0xff]
        %v2594 = vld [vmem:[%s1980 + $0x12a] sm:$0xff]
        %v2595 = vld [vmem:[%s1980 + $0x13a] sm:$0xff]
        %v2596 = vld [vmem:[%s1980 + $0x142] sm:$0xff]
        %v2597 = vld [vmem:[%s1980 + $0x152] sm:$0xff]
        %v2598 = vld [vmem:[%s1980 + $0x15a] sm:$0xff]
        %v2599 = vld [vmem:[%s1980 + $0x16a] sm:$0xff]
        %v2600 = vld [vmem:[%s1980 + $0x172] sm:$0xff]
        %v2601 = vpack.c.bf16 %v2570, %v2569
        %v2602 = vpack.c.bf16 %v2572, %v2571
        %v2603 = vpack.c.bf16 %v2574, %v2573
        %v2604 = vpack.c.bf16 %v2576, %v2575
        %v2605 = vpack.c.bf16 %v2578, %v2577
        %v2606 = vpack.c.bf16 %v2580, %v2579
        %v2607 = vpack.c.bf16 %v2582, %v2581
        %v2608 = vpack.c.bf16 %v2584, %v2583
        %v2609 = vpack.c.bf16 %v2586, %v2585
        %v2610 = vpack.c.bf16 %v2588, %v2587
        %v2611 = vpack.c.bf16 %v2590, %v2589
        %v2612 = vpack.c.bf16 %v2592, %v2591
        %v2613 = vpack.c.bf16 %v2594, %v2593
        %v2614 = vpack.c.bf16 %v2596, %v2595
        %v2615 = vpack.c.bf16 %v2598, %v2597
        %v2616 = vpack.c.bf16 %v2600, %v2599
        %s2617 = scalar_lea.vmem %s1, 16
        %v2618 = vld [vmem:[%s2617] sm:$0x3]
        %v2620 = vsel %vm377, %v2601, 0
        %v2623 = vsel %vm377, %v2602, 0
        %v2626 = vsel %vm377, %v2603, 0
        %v2629 = vsel %vm377, %v2604, 0
        %v2632 = vsel %vm377, %v2605, 0
        %v2635 = vsel %vm377, %v2606, 0
        %v2638 = vsel %vm377, %v2607, 0
        %v2641 = vsel %vm377, %v2608, 0
        %v2644 = vsel %vm377, %v2609, 0
        %v2647 = vsel %vm377, %v2610, 0
        %v2650 = vsel %vm377, %v2611, 0
        %v2653 = vsel %vm377, %v2612, 0
        %v2656 = vsel %vm377, %v2613, 0
        %v2659 = vsel %vm377, %v2614, 0
        %v2662 = vsel %vm377, %v2615, 0
        %v2665 = vsel %vm377, %v2616, 0
        %v2668 = vsel %vm426, %v2618, 0
        %2670 = vmatprep.subr.bf16.mxu0 0
        %2671 = vmatpush1.bf16.msra.mxu0 %v2668
        %2672 = vmatprep.subr.bf16.mxu0 0
        %2673 = vmatpush1.bf16.msra.mxu0 0
        %2674 = vmatprep.subr.bf16.mxu0 0
        %2675 = vmatpush1.bf16.msra.mxu0 0
        %2676 = vmatprep.subr.bf16.mxu0 0
        %2677 = vmatpush1.bf16.msra.mxu0 0
        %2678 = vmatprep.subr.bf16.mxu0 0
        %2679 = vmatpush1.bf16.msra.mxu0 0
        %2680 = vmatprep.subr.bf16.mxu0 0
        %2681 = vmatpush1.bf16.msra.mxu0 0
        %2682 = vmatprep.subr.bf16.mxu0 0
        %2683 = vmatpush1.bf16.msra.mxu0 0
        %2684 = vmatprep.subr.bf16.mxu0 0
        %2685 = vmatpush1.bf16.msra.mxu0 0
        %2686 = vmatprep.subr.bf16.mxu0 0
        %2687 = vmatpush1.bf16.msra.mxu0 0
        %2688 = vmatprep.subr.bf16.mxu0 0
        %2689 = vmatpush1.bf16.msra.mxu0 0
        %2690 = vmatprep.subr.bf16.mxu0 0
        %2691 = vmatpush1.bf16.msra.mxu0 0
        %2692 = vmatprep.subr.bf16.mxu0 0
        %2693 = vmatpush1.bf16.msra.mxu0 0
        %2694 = vmatprep.subr.bf16.mxu0 0
        %2695 = vmatpush1.bf16.msra.mxu0 0
        %2696 = vmatprep.subr.bf16.mxu0 0
        %2697 = vmatpush1.bf16.msra.mxu0 0
        %2698 = vmatprep.subr.bf16.mxu0 0
        %2699 = vmatpush1.bf16.msra.mxu0 0
        %2700 = vmatprep.subr.bf16.mxu0 0
        %2701 = vmatpush1.bf16.msra.mxu0 0
        %2702 = vmatprep.mubr.bf16.mxu0 0
        %2703 = vmatmul.mubr.bf16.gmra.mrb[0].mxu0 %v2620
        %v2704 = vpop.f32.mrb[0].mxu0
        %v2705 = vadd.f32 0.0, %v2704
        %v2706 = vpop.f32.mrb[0].mxu0
        %v2707 = vpop.f32.mrb[0].mxu0
        %v2708 = vadd.f32 0.0, %v2707
        %v2709 = vpop.f32.mrb[0].mxu0
        %2710 = vmatprep.mubr.bf16.mxu0 0
        %2711 = vmatmul.mubr.bf16.gmra.mrb[0].mxu0 %v2623
        %v2712 = vpop.f32.mrb[0].mxu0
        %v2713 = vadd.f32 0.0, %v2712
        %v2714 = vpop.f32.mrb[0].mxu0
        %v2715 = vpop.f32.mrb[0].mxu0
        %v2716 = vadd.f32 0.0, %v2715
        %v2717 = vpop.f32.mrb[0].mxu0
        %2718 = vmatprep.mubr.bf16.mxu0 0
        %2719 = vmatmul.mubr.bf16.gmra.mrb[0].mxu0 %v2626
        %v2720 = vpop.f32.mrb[0].mxu0
        %v2721 = vadd.f32 0.0, %v2720
        %v2722 = vpop.f32.mrb[0].mxu0
        %v2723 = vpop.f32.mrb[0].mxu0
        %v2724 = vadd.f32 0.0, %v2723
        %v2725 = vpop.f32.mrb[0].mxu0
        %2726 = vmatprep.mubr.bf16.mxu0 0
        %2727 = vmatmul.mubr.bf16.gmra.mrb[0].mxu0 %v2629
        %v2728 = vpop.f32.mrb[0].mxu0
        %v2729 = vadd.f32 0.0, %v2728
        %v2730 = vpop.f32.mrb[0].mxu0
        %v2731 = vpop.f32.mrb[0].mxu0
        %v2732 = vadd.f32 0.0, %v2731
        %v2733 = vpop.f32.mrb[0].mxu0
        %2734 = vmatprep.mubr.bf16.mxu0 0
        %2735 = vmatmul.mubr.bf16.gmra.mrb[0].mxu0 %v2632
        %v2736 = vpop.f32.mrb[0].mxu0
        %v2737 = vadd.f32 0.0, %v2736
        %v2738 = vpop.f32.mrb[0].mxu0
        %v2739 = vpop.f32.mrb[0].mxu0
        %v2740 = vadd.f32 0.0, %v2739
        %v2741 = vpop.f32.mrb[0].mxu0
        %2742 = vmatprep.mubr.bf16.mxu0 0
        %2743 = vmatmul.mubr.bf16.gmra.mrb[0].mxu0 %v2635
        %v2744 = vpop.f32.mrb[0].mxu0
        %v2745 = vadd.f32 0.0, %v2744
        %v2746 = vpop.f32.mrb[0].mxu0
        %v2747 = vpop.f32.mrb[0].mxu0
        %v2748 = vadd.f32 0.0, %v2747
        %v2749 = vpop.f32.mrb[0].mxu0
        %2750 = vmatprep.mubr.bf16.mxu0 0
        %2751 = vmatmul.mubr.bf16.gmra.mrb[0].mxu0 %v2638
        %v2752 = vpop.f32.mrb[0].mxu0
        %v2753 = vadd.f32 0.0, %v2752
        %v2754 = vpop.f32.mrb[0].mxu0
        %v2755 = vpop.f32.mrb[0].mxu0
        %v2756 = vadd.f32 0.0, %v2755
        %v2757 = vpop.f32.mrb[0].mxu0
        %2758 = vmatprep.mubr.bf16.mxu0 0
        %2759 = vmatmul.mubr.bf16.gmra.mrb[0].mxu0 %v2641
        %v2760 = vpop.f32.mrb[0].mxu0
        %v2761 = vadd.f32 0.0, %v2760
        %v2762 = vpop.f32.mrb[0].mxu0
        %v2763 = vpop.f32.mrb[0].mxu0
        %v2764 = vadd.f32 0.0, %v2763
        %v2765 = vpop.f32.mrb[0].mxu0
        %2766 = vmatprep.mubr.bf16.mxu0 0
        %2767 = vmatmul.mubr.bf16.gmra.mrb[0].mxu0 %v2644
        %v2768 = vpop.f32.mrb[0].mxu0
        %v2769 = vadd.f32 0.0, %v2768
        %v2770 = vpop.f32.mrb[0].mxu0
        %v2771 = vpop.f32.mrb[0].mxu0
        %v2772 = vadd.f32 0.0, %v2771
        %v2773 = vpop.f32.mrb[0].mxu0
        %2774 = vmatprep.mubr.bf16.mxu0 0
        %2775 = vmatmul.mubr.bf16.gmra.mrb[0].mxu0 %v2647
        %v2776 = vpop.f32.mrb[0].mxu0
        %v2777 = vadd.f32 0.0, %v2776
        %v2778 = vpop.f32.mrb[0].mxu0
        %v2779 = vpop.f32.mrb[0].mxu0
        %v2780 = vadd.f32 0.0, %v2779
        %v2781 = vpop.f32.mrb[0].mxu0
        %2782 = vmatprep.mubr.bf16.mxu0 0
        %2783 = vmatmul.mubr.bf16.gmra.mrb[0].mxu0 %v2650
        %v2784 = vpop.f32.mrb[0].mxu0
        %v2785 = vadd.f32 0.0, %v2784
        %v2786 = vpop.f32.mrb[0].mxu0
        %v2787 = vpop.f32.mrb[0].mxu0
        %v2788 = vadd.f32 0.0, %v2787
        %v2789 = vpop.f32.mrb[0].mxu0
        %2790 = vmatprep.mubr.bf16.mxu0 0
        %2791 = vmatmul.mubr.bf16.gmra.mrb[0].mxu0 %v2653
        %v2792 = vpop.f32.mrb[0].mxu0
        %v2793 = vadd.f32 0.0, %v2792
        %v2794 = vpop.f32.mrb[0].mxu0
        %v2795 = vpop.f32.mrb[0].mxu0
        %v2796 = vadd.f32 0.0, %v2795
        %v2797 = vpop.f32.mrb[0].mxu0
        %2798 = vmatprep.mubr.bf16.mxu0 0
        %2799 = vmatmul.mubr.bf16.gmra.mrb[0].mxu0 %v2656
        %v2800 = vpop.f32.mrb[0].mxu0
        %v2801 = vadd.f32 0.0, %v2800
        %v2802 = vpop.f32.mrb[0].mxu0
        %v2803 = vpop.f32.mrb[0].mxu0
        %v2804 = vadd.f32 0.0, %v2803
        %v2805 = vpop.f32.mrb[0].mxu0
        %2806 = vmatprep.mubr.bf16.mxu0 0
        %2807 = vmatmul.mubr.bf16.gmra.mrb[0].mxu0 %v2659
        %v2808 = vpop.f32.mrb[0].mxu0
        %v2809 = vadd.f32 0.0, %v2808
        %v2810 = vpop.f32.mrb[0].mxu0
        %v2811 = vpop.f32.mrb[0].mxu0
        %v2812 = vadd.f32 0.0, %v2811
        %v2813 = vpop.f32.mrb[0].mxu0
        %2814 = vmatprep.mubr.bf16.mxu0 0
        %2815 = vmatmul.mubr.bf16.gmra.mrb[0].mxu0 %v2662
        %v2816 = vpop.f32.mrb[0].mxu0
        %v2817 = vadd.f32 0.0, %v2816
        %v2818 = vpop.f32.mrb[0].mxu0
        %v2819 = vpop.f32.mrb[0].mxu0
        %v2820 = vadd.f32 0.0, %v2819
        %v2821 = vpop.f32.mrb[0].mxu0
        %2822 = vmatprep.mubr.bf16.mxu0 0
        %2823 = vmatmul.mubr.bf16.gmra.mrb[0].mxu0 %v2665
        %v2824 = vpop.f32.mrb[0].mxu0
        %v2825 = vadd.f32 0.0, %v2824
        %v2826 = vpop.f32.mrb[0].mxu0
        %v2827 = vpop.f32.mrb[0].mxu0
        %v2828 = vadd.f32 0.0, %v2827
        %v2829 = vpop.f32.mrb[0].mxu0
        %2830 = vdwg.mxu0
        %v2831 = vadd.f32 %v2537, %v2705
        %v2832 = vadd.f32 %v2538, %v2708
        %v2833 = vadd.f32 %v2539, %v2713
        %v2834 = vadd.f32 %v2540, %v2716
        %v2835 = vadd.f32 %v2541, %v2721
        %v2836 = vadd.f32 %v2542, %v2724
        %v2837 = vadd.f32 %v2543, %v2729
        %v2838 = vadd.f32 %v2544, %v2732
        %v2839 = vadd.f32 %v2545, %v2737
        %v2840 = vadd.f32 %v2546, %v2740
        %v2841 = vadd.f32 %v2547, %v2745
        %v2842 = vadd.f32 %v2548, %v2748
        %v2843 = vadd.f32 %v2549, %v2753
        %v2844 = vadd.f32 %v2550, %v2756
        %v2845 = vadd.f32 %v2551, %v2761
        %v2846 = vadd.f32 %v2552, %v2764
        %v2847 = vadd.f32 %v2553, %v2769
        %v2848 = vadd.f32 %v2554, %v2772
        %v2849 = vadd.f32 %v2555, %v2777
        %v2850 = vadd.f32 %v2556, %v2780
        %v2851 = vadd.f32 %v2557, %v2785
        %v2852 = vadd.f32 %v2558, %v2788
        %v2853 = vadd.f32 %v2559, %v2793
        %v2854 = vadd.f32 %v2560, %v2796
        %v2855 = vadd.f32 %v2561, %v2801
        %v2856 = vadd.f32 %v2562, %v2804
        %v2857 = vadd.f32 %v2563, %v2809
        %v2858 = vadd.f32 %v2564, %v2812
        %v2859 = vadd.f32 %v2565, %v2817
        %v2860 = vadd.f32 %v2566, %v2820
        %v2861 = vadd.f32 %v2567, %v2825
        %v2862 = vadd.f32 %v2568, %v2828
        %v2863 = vld [vmem:[%s2] sm:$0x1]
        %v2865 = vlaneseq
        %v2866 = vshrl.u32 %v2865, 7
        %v2867 = vsub.s32 0, %v2866
        %v2868 = vrot.slane %v2863, %v2867
        %v2870 = vadd.f32 %v2831, %v2868
        %v2871 = vadd.f32 %v2832, %v2868
        %v2872 = vadd.f32 %v2833, %v2868
        %v2873 = vadd.f32 %v2834, %v2868
        %v2874 = vadd.f32 %v2835, %v2868
        %v2875 = vadd.f32 %v2836, %v2868
        %v2876 = vadd.f32 %v2837, %v2868
        %v2877 = vadd.f32 %v2838, %v2868
        %v2878 = vadd.f32 %v2839, %v2868
        %v2879 = vadd.f32 %v2840, %v2868
        %v2880 = vadd.f32 %v2841, %v2868
        %v2881 = vadd.f32 %v2842, %v2868
        %v2882 = vadd.f32 %v2843, %v2868
        %v2883 = vadd.f32 %v2844, %v2868
        %v2884 = vadd.f32 %v2845, %v2868
        %v2885 = vadd.f32 %v2846, %v2868
        %v2886 = vadd.f32 %v2847, %v2868
        %v2887 = vadd.f32 %v2848, %v2868
        %v2888 = vadd.f32 %v2849, %v2868
        %v2889 = vadd.f32 %v2850, %v2868
        %v2890 = vadd.f32 %v2851, %v2868
        %v2891 = vadd.f32 %v2852, %v2868
        %v2892 = vadd.f32 %v2853, %v2868
        %v2893 = vadd.f32 %v2854, %v2868
        %v2894 = vadd.f32 %v2855, %v2868
        %v2895 = vadd.f32 %v2856, %v2868
        %v2896 = vadd.f32 %v2857, %v2868
        %v2897 = vadd.f32 %v2858, %v2868
        %v2898 = vadd.f32 %v2859, %v2868
        %v2899 = vadd.f32 %v2860, %v2868
        %v2900 = vadd.f32 %v2861, %v2868
        %v2901 = vadd.f32 %v2862, %v2868
        %v2902 = vmax.f32 %v2870, 0.0
        %v2903 = vmax.f32 %v2871, 0.0
        %v2904 = vmax.f32 %v2872, 0.0
        %v2905 = vmax.f32 %v2873, 0.0
        %v2906 = vmax.f32 %v2874, 0.0
        %v2907 = vmax.f32 %v2875, 0.0
        %v2908 = vmax.f32 %v2876, 0.0
        %v2909 = vmax.f32 %v2877, 0.0
        %v2910 = vmax.f32 %v2878, 0.0
        %v2911 = vmax.f32 %v2879, 0.0
        %v2912 = vmax.f32 %v2880, 0.0
        %v2913 = vmax.f32 %v2881, 0.0
        %v2914 = vmax.f32 %v2882, 0.0
        %v2915 = vmax.f32 %v2883, 0.0
        %v2916 = vmax.f32 %v2884, 0.0
        %v2917 = vmax.f32 %v2885, 0.0
        %v2918 = vmax.f32 %v2886, 0.0
        %v2919 = vmax.f32 %v2887, 0.0
        %v2920 = vmax.f32 %v2888, 0.0
        %v2921 = vmax.f32 %v2889, 0.0
        %v2922 = vmax.f32 %v2890, 0.0
        %v2923 = vmax.f32 %v2891, 0.0
        %v2924 = vmax.f32 %v2892, 0.0
        %v2925 = vmax.f32 %v2893, 0.0
        %v2926 = vmax.f32 %v2894, 0.0
        %v2927 = vmax.f32 %v2895, 0.0
        %v2928 = vmax.f32 %v2896, 0.0
        %v2929 = vmax.f32 %v2897, 0.0
        %v2930 = vmax.f32 %v2898, 0.0
        %v2931 = vmax.f32 %v2899, 0.0
        %v2932 = vmax.f32 %v2900, 0.0
        %v2933 = vmax.f32 %v2901, 0.0
        %vm2934 = vcmask 64512
        %2935 = vst.msk [vmem:[#allocation2] sm:$0xff] %vm2934, 0.0
        %2936 = vst.msk [vmem:[#allocation2 + $0x8] sm:$0xff] %vm2934, 0.0
        %2937 = vst.msk [vmem:[#allocation2 + $0x10] sm:$0xff] %vm2934, 0.0
        %vm2938 = vcmask 57344
        %2939 = vst.msk [vmem:[#allocation2 + $0x18] sm:$0x1] %vm2938, 0.0
        %2940 = vst.msk [vmem:[#allocation2 + $0x20] sm:$0xff] %vm2934, 0.0
        %2941 = vst.msk [vmem:[#allocation2 + $0x28] sm:$0xff] %vm2934, 0.0
        %2942 = vst.msk [vmem:[#allocation2 + $0x30] sm:$0xff] %vm2934, 0.0
        %2943 = vst.msk [vmem:[#allocation2 + $0x38] sm:$0x1] %vm2938, 0.0
        %2944 = vst.msk [vmem:[#allocation2 + $0x40] sm:$0xff] %vm2934, 0.0
        %2945 = vst.msk [vmem:[#allocation2 + $0x48] sm:$0xff] %vm2934, 0.0
        %2946 = vst.msk [vmem:[#allocation2 + $0x50] sm:$0xff] %vm2934, 0.0
        %2947 = vst.msk [vmem:[#allocation2 + $0x58] sm:$0x1] %vm2938, 0.0
        %2948 = vst.msk [vmem:[#allocation2 + $0x60] sm:$0xff] %vm2934, 0.0
        %2949 = vst.msk [vmem:[#allocation2 + $0x68] sm:$0xff] %vm2934, 0.0
        %2950 = vst.msk [vmem:[#allocation2 + $0x70] sm:$0xff] %vm2934, 0.0
        %2951 = vst.msk [vmem:[#allocation2 + $0x78] sm:$0x1] %vm2938, 0.0
        %2952 = vst.msk [vmem:[#allocation2 + $0x80] sm:$0xff] %vm2934, 0.0
        %2953 = vst.msk [vmem:[#allocation2 + $0x88] sm:$0xff] %vm2934, 0.0
        %2954 = vst.msk [vmem:[#allocation2 + $0x90] sm:$0xff] %vm2934, 0.0
        %2955 = vst.msk [vmem:[#allocation2 + $0x98] sm:$0x1] %vm2938, 0.0
        %2956 = vst.msk [vmem:[#allocation2 + $0xa0] sm:$0xff] %vm2934, 0.0
        %2957 = vst.msk [vmem:[#allocation2 + $0xa8] sm:$0xff] %vm2934, 0.0
        %2958 = vst.msk [vmem:[#allocation2 + $0xb0] sm:$0xff] %vm2934, 0.0
        %2959 = vst.msk [vmem:[#allocation2 + $0xb8] sm:$0x1] %vm2938, 0.0
        %2960 = vst.msk [vmem:[#allocation2 + $0xc0] sm:$0xff] %vm2934, 0.0
        %2961 = vst.msk [vmem:[#allocation2 + $0xc8] sm:$0xff] %vm2934, 0.0
        %2962 = vst.msk [vmem:[#allocation2 + $0xd0] sm:$0xff] %vm2934, 0.0
        %2963 = vst.msk [vmem:[#allocation2 + $0xd8] sm:$0x1] %vm2938, 0.0
        %2964 = vst.msk [vmem:[#allocation2 + $0xe0] sm:$0xff] %vm2934, 0.0
        %2965 = vst.msk [vmem:[#allocation2 + $0xe8] sm:$0xff] %vm2934, 0.0
        %2966 = vst.msk [vmem:[#allocation2 + $0xf0] sm:$0xff] %vm2934, 0.0
        %2967 = vst.msk [vmem:[#allocation2 + $0xf8] sm:$0x1] %vm2938, 0.0
        %2968 = vst.msk [vmem:[#allocation2 + $0x100] sm:$0xff] %vm2934, 0.0
        %2969 = vst.msk [vmem:[#allocation2 + $0x108] sm:$0xff] %vm2934, 0.0
        %2970 = vst.msk [vmem:[#allocation2 + $0x110] sm:$0xff] %vm2934, 0.0
        %2971 = vst.msk [vmem:[#allocation2 + $0x118] sm:$0x1] %vm2938, 0.0
        %2972 = vst.msk [vmem:[#allocation2 + $0x120] sm:$0xff] %vm2934, 0.0
        %2973 = vst.msk [vmem:[#allocation2 + $0x128] sm:$0xff] %vm2934, 0.0
        %2974 = vst.msk [vmem:[#allocation2 + $0x130] sm:$0xff] %vm2934, 0.0
        %2975 = vst.msk [vmem:[#allocation2 + $0x138] sm:$0x1] %vm2938, 0.0
        %2976 = vst.msk [vmem:[#allocation2 + $0x140] sm:$0xff] %vm2934, 0.0
        %2977 = vst.msk [vmem:[#allocation2 + $0x148] sm:$0xff] %vm2934, 0.0
        %2978 = vst.msk [vmem:[#allocation2 + $0x150] sm:$0xff] %vm2934, 0.0
        %2979 = vst.msk [vmem:[#allocation2 + $0x158] sm:$0x1] %vm2938, 0.0
        %2980 = vst.msk [vmem:[#allocation2 + $0x160] sm:$0xff] %vm2934, 0.0
        %2981 = vst.msk [vmem:[#allocation2 + $0x168] sm:$0xff] %vm2934, 0.0
        %2982 = vst.msk [vmem:[#allocation2 + $0x170] sm:$0xff] %vm2934, 0.0
        %2983 = vst.msk [vmem:[#allocation2 + $0x178] sm:$0x1] %vm2938, 0.0
        %2984 = vst.msk [vmem:[#allocation2 + $0x180] sm:$0xff] %vm2934, 0.0
        %2985 = vst.msk [vmem:[#allocation2 + $0x188] sm:$0xff] %vm2934, 0.0
        %2986 = vst.msk [vmem:[#allocation2 + $0x190] sm:$0xff] %vm2934, 0.0
        %2987 = vst.msk [vmem:[#allocation2 + $0x198] sm:$0x1] %vm2938, 0.0
        %2988 = vst.msk [vmem:[#allocation2 + $0x1a0] sm:$0xff] %vm2934, 0.0
        %2989 = vst.msk [vmem:[#allocation2 + $0x1a8] sm:$0xff] %vm2934, 0.0
        %2990 = vst.msk [vmem:[#allocation2 + $0x1b0] sm:$0xff] %vm2934, 0.0
        %2991 = vst.msk [vmem:[#allocation2 + $0x1b8] sm:$0x1] %vm2938, 0.0
        %2992 = vst.msk [vmem:[#allocation2 + $0x1c0] sm:$0xff] %vm2934, 0.0
        %2993 = vst.msk [vmem:[#allocation2 + $0x1c8] sm:$0xff] %vm2934, 0.0
        %2994 = vst.msk [vmem:[#allocation2 + $0x1d0] sm:$0xff] %vm2934, 0.0
        %2995 = vst.msk [vmem:[#allocation2 + $0x1d8] sm:$0x1] %vm2938, 0.0
        %2996 = vst.msk [vmem:[#allocation2 + $0x1e0] sm:$0xff] %vm2934, 0.0
        %2997 = vst.msk [vmem:[#allocation2 + $0x1e8] sm:$0xff] %vm2934, 0.0
        %2998 = vst.msk [vmem:[#allocation2 + $0x1f0] sm:$0xff] %vm2934, 0.0
        %2999 = vst.msk [vmem:[#allocation2 + $0x1f8] sm:$0x1] %vm2938, 0.0
        %3000 = vst.msk [vmem:[#allocation2 + $0x200] sm:$0xff] %vm2934, 0.0
        %3001 = vst.msk [vmem:[#allocation2 + $0x208] sm:$0xff] %vm2934, 0.0
        %3002 = vst.msk [vmem:[#allocation2 + $0x210] sm:$0xff] %vm2934, 0.0
        %3003 = vst.msk [vmem:[#allocation2 + $0x218] sm:$0x1] %vm2938, 0.0
        %3004 = vst.msk [vmem:[#allocation2 + $0x220] sm:$0xff] %vm2934, 0.0
        %3005 = vst.msk [vmem:[#allocation2 + $0x228] sm:$0xff] %vm2934, 0.0
        %3006 = vst.msk [vmem:[#allocation2 + $0x230] sm:$0xff] %vm2934, 0.0
        %3007 = vst.msk [vmem:[#allocation2 + $0x238] sm:$0x1] %vm2938, 0.0
        %s3008 = scalar_lea.vmem [#allocation2], 32
        %3009 = vst.msk [vmem:[%s3008 + $0x8] sm:$0xff] %vm2934, %v2902
        %3010 = vst.msk [vmem:[%s3008 + $0x10] sm:$0xff] %vm2934, %v2903
        %3011 = vst.msk [vmem:[%s3008 + $0x28] sm:$0xff] %vm2934, %v2904
        %3012 = vst.msk [vmem:[%s3008 + $0x30] sm:$0xff] %vm2934, %v2905
        %3013 = vst.msk [vmem:[%s3008 + $0x48] sm:$0xff] %vm2934, %v2906
        %3014 = vst.msk [vmem:[%s3008 + $0x50] sm:$0xff] %vm2934, %v2907
        %3015 = vst.msk [vmem:[%s3008 + $0x68] sm:$0xff] %vm2934, %v2908
        %3016 = vst.msk [vmem:[%s3008 + $0x70] sm:$0xff] %vm2934, %v2909
        %3017 = vst.msk [vmem:[%s3008 + $0x88] sm:$0xff] %vm2934, %v2910
        %3018 = vst.msk [vmem:[%s3008 + $0x90] sm:$0xff] %vm2934, %v2911
        %3019 = vst.msk [vmem:[%s3008 + $0xa8] sm:$0xff] %vm2934, %v2912
        %3020 = vst.msk [vmem:[%s3008 + $0xb0] sm:$0xff] %vm2934, %v2913
        %3021 = vst.msk [vmem:[%s3008 + $0xc8] sm:$0xff] %vm2934, %v2914
        %3022 = vst.msk [vmem:[%s3008 + $0xd0] sm:$0xff] %vm2934, %v2915
        %3023 = vst.msk [vmem:[%s3008 + $0xe8] sm:$0xff] %vm2934, %v2916
        %3024 = vst.msk [vmem:[%s3008 + $0xf0] sm:$0xff] %vm2934, %v2917
        %3025 = vst.msk [vmem:[%s3008 + $0x108] sm:$0xff] %vm2934, %v2918
        %3026 = vst.msk [vmem:[%s3008 + $0x110] sm:$0xff] %vm2934, %v2919
        %3027 = vst.msk [vmem:[%s3008 + $0x128] sm:$0xff] %vm2934, %v2920
        %3028 = vst.msk [vmem:[%s3008 + $0x130] sm:$0xff] %vm2934, %v2921
        %3029 = vst.msk [vmem:[%s3008 + $0x148] sm:$0xff] %vm2934, %v2922
        %3030 = vst.msk [vmem:[%s3008 + $0x150] sm:$0xff] %vm2934, %v2923
        %3031 = vst.msk [vmem:[%s3008 + $0x168] sm:$0xff] %vm2934, %v2924
        %3032 = vst.msk [vmem:[%s3008 + $0x170] sm:$0xff] %vm2934, %v2925
        %3033 = vst.msk [vmem:[%s3008 + $0x188] sm:$0xff] %vm2934, %v2926
        %3034 = vst.msk [vmem:[%s3008 + $0x190] sm:$0xff] %vm2934, %v2927
        %3035 = vst.msk [vmem:[%s3008 + $0x1a8] sm:$0xff] %vm2934, %v2928
        %3036 = vst.msk [vmem:[%s3008 + $0x1b0] sm:$0xff] %vm2934, %v2929
        %3037 = vst.msk [vmem:[%s3008 + $0x1c8] sm:$0xff] %vm2934, %v2930
        %3038 = vst.msk [vmem:[%s3008 + $0x1d0] sm:$0xff] %vm2934, %v2931
        %3039 = vst.msk [vmem:[%s3008 + $0x1e8] sm:$0xff] %vm2934, %v2932
        %3040 = vst.msk [vmem:[%s3008 + $0x1f0] sm:$0xff] %vm2934, %v2933
        %v3041 = vld [vmem:[#allocation2 + $0x7] sm:$0xff]
        %v3042 = vld [vmem:[#allocation2 + $0xf] sm:$0xff]
        %v3043 = vld [vmem:[#allocation2 + $0x27] sm:$0xff]
        %v3044 = vld [vmem:[#allocation2 + $0x2f] sm:$0xff]
        %v3045 = vld [vmem:[#allocation2 + $0x47] sm:$0xff]
        %v3046 = vld [vmem:[#allocation2 + $0x4f] sm:$0xff]
        %v3047 = vld [vmem:[#allocation2 + $0x67] sm:$0xff]
        %v3048 = vld [vmem:[#allocation2 + $0x6f] sm:$0xff]
        %v3049 = vld [vmem:[#allocation2 + $0x87] sm:$0xff]
        %v3050 = vld [vmem:[#allocation2 + $0x8f] sm:$0xff]
        %v3051 = vld [vmem:[#allocation2 + $0xa7] sm:$0xff]
        %v3052 = vld [vmem:[#allocation2 + $0xaf] sm:$0xff]
        %v3053 = vld [vmem:[#allocation2 + $0xc7] sm:$0xff]
        %v3054 = vld [vmem:[#allocation2 + $0xcf] sm:$0xff]
        %v3055 = vld [vmem:[#allocation2 + $0xe7] sm:$0xff]
        %v3056 = vld [vmem:[#allocation2 + $0xef] sm:$0xff]
        %v3057 = vld [vmem:[#allocation2 + $0x107] sm:$0xff]
        %v3058 = vld [vmem:[#allocation2 + $0x10f] sm:$0xff]
        %v3059 = vld [vmem:[#allocation2 + $0x127] sm:$0xff]
        %v3060 = vld [vmem:[#allocation2 + $0x12f] sm:$0xff]
        %v3061 = vld [vmem:[#allocation2 + $0x147] sm:$0xff]
        %v3062 = vld [vmem:[#allocation2 + $0x14f] sm:$0xff]
        %v3063 = vld [vmem:[#allocation2 + $0x167] sm:$0xff]
        %v3064 = vld [vmem:[#allocation2 + $0x16f] sm:$0xff]
        %v3065 = vld [vmem:[#allocation2 + $0x187] sm:$0xff]
        %v3066 = vld [vmem:[#allocation2 + $0x18f] sm:$0xff]
        %v3067 = vld [vmem:[#allocation2 + $0x1a7] sm:$0xff]
        %v3068 = vld [vmem:[#allocation2 + $0x1af] sm:$0xff]
        %v3069 = vld [vmem:[#allocation2 + $0x1c7] sm:$0xff]
        %v3070 = vld [vmem:[#allocation2 + $0x1cf] sm:$0xff]
        %v3071 = vld [vmem:[#allocation2 + $0x1e7] sm:$0xff]
        %v3072 = vld [vmem:[#allocation2 + $0x1ef] sm:$0xff]
        %v3073 = vpack.c.bf16 %v3042, %v3041
        %v3074 = vpack.c.bf16 %v3044, %v3043
        %v3075 = vpack.c.bf16 %v3046, %v3045
        %v3076 = vpack.c.bf16 %v3048, %v3047
        %v3077 = vpack.c.bf16 %v3050, %v3049
        %v3078 = vpack.c.bf16 %v3052, %v3051
        %v3079 = vpack.c.bf16 %v3054, %v3053
        %v3080 = vpack.c.bf16 %v3056, %v3055
        %v3081 = vpack.c.bf16 %v3058, %v3057
        %v3082 = vpack.c.bf16 %v3060, %v3059
        %v3083 = vpack.c.bf16 %v3062, %v3061
        %v3084 = vpack.c.bf16 %v3064, %v3063
        %v3085 = vpack.c.bf16 %v3066, %v3065
        %v3086 = vpack.c.bf16 %v3068, %v3067
        %v3087 = vpack.c.bf16 %v3070, %v3069
        %v3088 = vpack.c.bf16 %v3072, %v3071
        %v3089 = vld [vmem:[%s3] sm:$0xf]
        %v3090 = vld [vmem:[#allocation2 + $0x8] sm:$0xff]
        %v3091 = vld [vmem:[#allocation2 + $0x10] sm:$0xff]
        %v3092 = vld [vmem:[#allocation2 + $0x28] sm:$0xff]
        %v3093 = vld [vmem:[#allocation2 + $0x30] sm:$0xff]
        %v3094 = vld [vmem:[#allocation2 + $0x48] sm:$0xff]
        %v3095 = vld [vmem:[#allocation2 + $0x50] sm:$0xff]
        %v3096 = vld [vmem:[#allocation2 + $0x68] sm:$0xff]
        %v3097 = vld [vmem:[#allocation2 + $0x70] sm:$0xff]
        %v3098 = vld [vmem:[#allocation2 + $0x88] sm:$0xff]
        %v3099 = vld [vmem:[#allocation2 + $0x90] sm:$0xff]
        %v3100 = vld [vmem:[#allocation2 + $0xa8] sm:$0xff]
        %v3101 = vld [vmem:[#allocation2 + $0xb0] sm:$0xff]
        %v3102 = vld [vmem:[#allocation2 + $0xc8] sm:$0xff]
        %v3103 = vld [vmem:[#allocation2 + $0xd0] sm:$0xff]
        %v3104 = vld [vmem:[#allocation2 + $0xe8] sm:$0xff]
        %v3105 = vld [vmem:[#allocation2 + $0xf0] sm:$0xff]
        %v3106 = vld [vmem:[#allocation2 + $0x108] sm:$0xff]
        %v3107 = vld [vmem:[#allocation2 + $0x110] sm:$0xff]
        %v3108 = vld [vmem:[#allocation2 + $0x128] sm:$0xff]
        %v3109 = vld [vmem:[#allocation2 + $0x130] sm:$0xff]
        %v3110 = vld [vmem:[#allocation2 + $0x148] sm:$0xff]
        %v3111 = vld [vmem:[#allocation2 + $0x150] sm:$0xff]
        %v3112 = vld [vmem:[#allocation2 + $0x168] sm:$0xff]
        %v3113 = vld [vmem:[#allocation2 + $0x170] sm:$0xff]
        %v3114 = vld [vmem:[#allocation2 + $0x188] sm:$0xff]
        %v3115 = vld [vmem:[#allocation2 + $0x190] sm:$0xff]
        %v3116 = vld [vmem:[#allocation2 + $0x1a8] sm:$0xff]
        %v3117 = vld [vmem:[#allocation2 + $0x1b0] sm:$0xff]
        %v3118 = vld [vmem:[#allocation2 + $0x1c8] sm:$0xff]
        %v3119 = vld [vmem:[#allocation2 + $0x1d0] sm:$0xff]
        %v3120 = vld [vmem:[#allocation2 + $0x1e8] sm:$0xff]
        %v3121 = vld [vmem:[#allocation2 + $0x1f0] sm:$0xff]
        %v3122 = vpack.c.bf16 %v3091, %v3090
        %v3123 = vpack.c.bf16 %v3093, %v3092
        %v3124 = vpack.c.bf16 %v3095, %v3094
        %v3125 = vpack.c.bf16 %v3097, %v3096
        %v3126 = vpack.c.bf16 %v3099, %v3098
        %v3127 = vpack.c.bf16 %v3101, %v3100
        %v3128 = vpack.c.bf16 %v3103, %v3102
        %v3129 = vpack.c.bf16 %v3105, %v3104
        %v3130 = vpack.c.bf16 %v3107, %v3106
        %v3131 = vpack.c.bf16 %v3109, %v3108
        %v3132 = vpack.c.bf16 %v3111, %v3110
        %v3133 = vpack.c.bf16 %v3113, %v3112
        %v3134 = vpack.c.bf16 %v3115, %v3114
        %v3135 = vpack.c.bf16 %v3117, %v3116
        %v3136 = vpack.c.bf16 %v3119, %v3118
        %v3137 = vpack.c.bf16 %v3121, %v3120
        %s3138 = scalar_lea.vmem %s3, 4
        %v3139 = vld [vmem:[%s3138] sm:$0xf]
        %v3141 = vsel %vm2934, %v3122, 0
        %v3144 = vsel %vm2934, %v3123, 0
        %v3147 = vsel %vm2934, %v3124, 0
        %v3150 = vsel %vm2934, %v3125, 0
        %v3153 = vsel %vm2934, %v3126, 0
        %v3156 = vsel %vm2934, %v3127, 0
        %v3159 = vsel %vm2934, %v3128, 0
        %v3162 = vsel %vm2934, %v3129, 0
        %v3165 = vsel %vm2934, %v3130, 0
        %v3168 = vsel %vm2934, %v3131, 0
        %v3171 = vsel %vm2934, %v3132, 0
        %v3174 = vsel %vm2934, %v3133, 0
        %v3177 = vsel %vm2934, %v3134, 0
        %v3180 = vsel %vm2934, %v3135, 0
        %v3183 = vsel %vm2934, %v3136, 0
        %v3186 = vsel %vm2934, %v3137, 0
        %vm3188 = vcmask 1043456
        %v3190 = vsel %vm3188, %v3139, 0
        %3192 = vmatprep.subr.bf16.mxu0 0
        %3193 = vmatpush1.bf16.msra.mxu0 %v3190
        %3194 = vmatprep.subr.bf16.mxu0 0
        %3195 = vmatpush1.bf16.msra.mxu0 0
        %3196 = vmatprep.subr.bf16.mxu0 0
        %3197 = vmatpush1.bf16.msra.mxu0 0
        %3198 = vmatprep.subr.bf16.mxu0 0
        %3199 = vmatpush1.bf16.msra.mxu0 0
        %3200 = vmatprep.subr.bf16.mxu0 0
        %3201 = vmatpush1.bf16.msra.mxu0 0
        %3202 = vmatprep.subr.bf16.mxu0 0
        %3203 = vmatpush1.bf16.msra.mxu0 0
        %3204 = vmatprep.subr.bf16.mxu0 0
        %3205 = vmatpush1.bf16.msra.mxu0 0
        %3206 = vmatprep.subr.bf16.mxu0 0
        %3207 = vmatpush1.bf16.msra.mxu0 0
        %3208 = vmatprep.subr.bf16.mxu0 0
        %3209 = vmatpush1.bf16.msra.mxu0 0
        %3210 = vmatprep.subr.bf16.mxu0 0
        %3211 = vmatpush1.bf16.msra.mxu0 0
        %3212 = vmatprep.subr.bf16.mxu0 0
        %3213 = vmatpush1.bf16.msra.mxu0 0
        %3214 = vmatprep.subr.bf16.mxu0 0
        %3215 = vmatpush1.bf16.msra.mxu0 0
        %3216 = vmatprep.subr.bf16.mxu0 0
        %3217 = vmatpush1.bf16.msra.mxu0 0
        %3218 = vmatprep.subr.bf16.mxu0 0
        %3219 = vmatpush1.bf16.msra.mxu0 0
        %3220 = vmatprep.subr.bf16.mxu0 0
        %3221 = vmatpush1.bf16.msra.mxu0 0
        %3222 = vmatprep.subr.bf16.mxu0 0
        %3223 = vmatpush1.bf16.msra.mxu0 0
        %3224 = vmatprep.mubr.bf16.mxu0 0
        %3225 = vmatmul.mubr.bf16.gmra.mrb[0].mxu0 %v3141
        %v3226 = vpop.f32.mrb[0].mxu0
        %v3227 = vadd.f32 0.0, %v3226
        %v3228 = vpop.f32.mrb[0].mxu0
        %v3229 = vpop.f32.mrb[0].mxu0
        %v3230 = vadd.f32 0.0, %v3229
        %v3231 = vpop.f32.mrb[0].mxu0
        %3232 = vmatprep.mubr.bf16.mxu0 0
        %3233 = vmatmul.mubr.bf16.gmra.mrb[0].mxu0 %v3144
        %v3234 = vpop.f32.mrb[0].mxu0
        %v3235 = vadd.f32 0.0, %v3234
        %v3236 = vpop.f32.mrb[0].mxu0
        %v3237 = vpop.f32.mrb[0].mxu0
        %v3238 = vadd.f32 0.0, %v3237
        %v3239 = vpop.f32.mrb[0].mxu0
        %3240 = vmatprep.mubr.bf16.mxu0 0
        %3241 = vmatmul.mubr.bf16.gmra.mrb[0].mxu0 %v3147
        %v3242 = vpop.f32.mrb[0].mxu0
        %v3243 = vadd.f32 0.0, %v3242
        %v3244 = vpop.f32.mrb[0].mxu0
        %v3245 = vpop.f32.mrb[0].mxu0
        %v3246 = vadd.f32 0.0, %v3245
        %v3247 = vpop.f32.mrb[0].mxu0
        %3248 = vmatprep.mubr.bf16.mxu0 0
        %3249 = vmatmul.mubr.bf16.gmra.mrb[0].mxu0 %v3150
        %v3250 = vpop.f32.mrb[0].mxu0
        %v3251 = vadd.f32 0.0, %v3250
        %v3252 = vpop.f32.mrb[0].mxu0
        %v3253 = vpop.f32.mrb[0].mxu0
        %v3254 = vadd.f32 0.0, %v3253
        %v3255 = vpop.f32.mrb[0].mxu0
        %3256 = vmatprep.mubr.bf16.mxu0 0
        %3257 = vmatmul.mubr.bf16.gmra.mrb[0].mxu0 %v3153
        %v3258 = vpop.f32.mrb[0].mxu0
        %v3259 = vadd.f32 0.0, %v3258
        %v3260 = vpop.f32.mrb[0].mxu0
        %v3261 = vpop.f32.mrb[0].mxu0
        %v3262 = vadd.f32 0.0, %v3261
        %v3263 = vpop.f32.mrb[0].mxu0
        %3264 = vmatprep.mubr.bf16.mxu0 0
        %3265 = vmatmul.mubr.bf16.gmra.mrb[0].mxu0 %v3156
        %v3266 = vpop.f32.mrb[0].mxu0
        %v3267 = vadd.f32 0.0, %v3266
        %v3268 = vpop.f32.mrb[0].mxu0
        %v3269 = vpop.f32.mrb[0].mxu0
        %v3270 = vadd.f32 0.0, %v3269
        %v3271 = vpop.f32.mrb[0].mxu0
        %3272 = vmatprep.mubr.bf16.mxu0 0
        %3273 = vmatmul.mubr.bf16.gmra.mrb[0].mxu0 %v3159
        %v3274 = vpop.f32.mrb[0].mxu0
        %v3275 = vadd.f32 0.0, %v3274
        %v3276 = vpop.f32.mrb[0].mxu0
        %v3277 = vpop.f32.mrb[0].mxu0
        %v3278 = vadd.f32 0.0, %v3277
        %v3279 = vpop.f32.mrb[0].mxu0
        %3280 = vmatprep.mubr.bf16.mxu0 0
        %3281 = vmatmul.mubr.bf16.gmra.mrb[0].mxu0 %v3162
        %v3282 = vpop.f32.mrb[0].mxu0
        %v3283 = vadd.f32 0.0, %v3282
        %v3284 = vpop.f32.mrb[0].mxu0
        %v3285 = vpop.f32.mrb[0].mxu0
        %v3286 = vadd.f32 0.0, %v3285
        %v3287 = vpop.f32.mrb[0].mxu0
        %3288 = vmatprep.mubr.bf16.mxu0 0
        %3289 = vmatmul.mubr.bf16.gmra.mrb[0].mxu0 %v3165
        %v3290 = vpop.f32.mrb[0].mxu0
        %v3291 = vadd.f32 0.0, %v3290
        %v3292 = vpop.f32.mrb[0].mxu0
        %v3293 = vpop.f32.mrb[0].mxu0
        %v3294 = vadd.f32 0.0, %v3293
        %v3295 = vpop.f32.mrb[0].mxu0
        %3296 = vmatprep.mubr.bf16.mxu0 0
        %3297 = vmatmul.mubr.bf16.gmra.mrb[0].mxu0 %v3168
        %v3298 = vpop.f32.mrb[0].mxu0
        %v3299 = vadd.f32 0.0, %v3298
        %v3300 = vpop.f32.mrb[0].mxu0
        %v3301 = vpop.f32.mrb[0].mxu0
        %v3302 = vadd.f32 0.0, %v3301
        %v3303 = vpop.f32.mrb[0].mxu0
        %3304 = vmatprep.mubr.bf16.mxu0 0
        %3305 = vmatmul.mubr.bf16.gmra.mrb[0].mxu0 %v3171
        %v3306 = vpop.f32.mrb[0].mxu0
        %v3307 = vadd.f32 0.0, %v3306
        %v3308 = vpop.f32.mrb[0].mxu0
        %v3309 = vpop.f32.mrb[0].mxu0
        %v3310 = vadd.f32 0.0, %v3309
        %v3311 = vpop.f32.mrb[0].mxu0
        %3312 = vmatprep.mubr.bf16.mxu0 0
        %3313 = vmatmul.mubr.bf16.gmra.mrb[0].mxu0 %v3174
        %v3314 = vpop.f32.mrb[0].mxu0
        %v3315 = vadd.f32 0.0, %v3314
        %v3316 = vpop.f32.mrb[0].mxu0
        %v3317 = vpop.f32.mrb[0].mxu0
        %v3318 = vadd.f32 0.0, %v3317
        %v3319 = vpop.f32.mrb[0].mxu0
        %3320 = vmatprep.mubr.bf16.mxu0 0
        %3321 = vmatmul.mubr.bf16.gmra.mrb[0].mxu0 %v3177
        %v3322 = vpop.f32.mrb[0].mxu0
        %v3323 = vadd.f32 0.0, %v3322
        %v3324 = vpop.f32.mrb[0].mxu0
        %v3325 = vpop.f32.mrb[0].mxu0
        %v3326 = vadd.f32 0.0, %v3325
        %v3327 = vpop.f32.mrb[0].mxu0
        %3328 = vmatprep.mubr.bf16.mxu0 0
        %3329 = vmatmul.mubr.bf16.gmra.mrb[0].mxu0 %v3180
        %v3330 = vpop.f32.mrb[0].mxu0
        %v3331 = vadd.f32 0.0, %v3330
        %v3332 = vpop.f32.mrb[0].mxu0
        %v3333 = vpop.f32.mrb[0].mxu0
        %v3334 = vadd.f32 0.0, %v3333
        %v3335 = vpop.f32.mrb[0].mxu0
        %3336 = vmatprep.mubr.bf16.mxu0 0
        %3337 = vmatmul.mubr.bf16.gmra.mrb[0].mxu0 %v3183
        %v3338 = vpop.f32.mrb[0].mxu0
        %v3339 = vadd.f32 0.0, %v3338
        %v3340 = vpop.f32.mrb[0].mxu0
        %v3341 = vpop.f32.mrb[0].mxu0
        %v3342 = vadd.f32 0.0, %v3341
        %v3343 = vpop.f32.mrb[0].mxu0
        %3344 = vmatprep.mubr.bf16.mxu0 0
        %3345 = vmatmul.mubr.bf16.gmra.mrb[0].mxu0 %v3186
        %v3346 = vpop.f32.mrb[0].mxu0
        %v3347 = vadd.f32 0.0, %v3346
        %v3348 = vpop.f32.mrb[0].mxu0
        %v3349 = vpop.f32.mrb[0].mxu0
        %v3350 = vadd.f32 0.0, %v3349
        %v3351 = vpop.f32.mrb[0].mxu0
        %3352 = vdwg.mxu0
        %v3354 = vsel %vm2934, %v3073, 0
        %v3357 = vsel %vm2934, %v3074, 0
        %v3360 = vsel %vm2934, %v3075, 0
        %v3363 = vsel %vm2934, %v3076, 0
        %v3366 = vsel %vm2934, %v3077, 0
        %v3369 = vsel %vm2934, %v3078, 0
        %v3372 = vsel %vm2934, %v3079, 0
        %v3375 = vsel %vm2934, %v3080, 0
        %v3378 = vsel %vm2934, %v3081, 0
        %v3381 = vsel %vm2934, %v3082, 0
        %v3384 = vsel %vm2934, %v3083, 0
        %v3387 = vsel %vm2934, %v3084, 0
        %v3390 = vsel %vm2934, %v3085, 0
        %v3393 = vsel %vm2934, %v3086, 0
        %v3396 = vsel %vm2934, %v3087, 0
        %v3399 = vsel %vm2934, %v3088, 0
        %v3402 = vsel %vm3188, %v3089, 0
        %3404 = vmatprep.subr.bf16.mxu0 0
        %3405 = vmatpush1.bf16.msra.mxu0 %v3402
        %3406 = vmatprep.subr.bf16.mxu0 0
        %3407 = vmatpush1.bf16.msra.mxu0 0
        %3408 = vmatprep.subr.bf16.mxu0 0
        %3409 = vmatpush1.bf16.msra.mxu0 0
        %3410 = vmatprep.subr.bf16.mxu0 0
        %3411 = vmatpush1.bf16.msra.mxu0 0
        %3412 = vmatprep.subr.bf16.mxu0 0
        %3413 = vmatpush1.bf16.msra.mxu0 0
        %3414 = vmatprep.subr.bf16.mxu0 0
        %3415 = vmatpush1.bf16.msra.mxu0 0
        %3416 = vmatprep.subr.bf16.mxu0 0
        %3417 = vmatpush1.bf16.msra.mxu0 0
        %3418 = vmatprep.subr.bf16.mxu0 0
        %3419 = vmatpush1.bf16.msra.mxu0 0
        %3420 = vmatprep.subr.bf16.mxu0 0
        %3421 = vmatpush1.bf16.msra.mxu0 0
        %3422 = vmatprep.subr.bf16.mxu0 0
        %3423 = vmatpush1.bf16.msra.mxu0 0
        %3424 = vmatprep.subr.bf16.mxu0 0
        %3425 = vmatpush1.bf16.msra.mxu0 0
        %3426 = vmatprep.subr.bf16.mxu0 0
        %3427 = vmatpush1.bf16.msra.mxu0 0
        %3428 = vmatprep.subr.bf16.mxu0 0
        %3429 = vmatpush1.bf16.msra.mxu0 0
        %3430 = vmatprep.subr.bf16.mxu0 0
        %3431 = vmatpush1.bf16.msra.mxu0 0
        %3432 = vmatprep.subr.bf16.mxu0 0
        %3433 = vmatpush1.bf16.msra.mxu0 0
        %3434 = vmatprep.subr.bf16.mxu0 0
        %3435 = vmatpush1.bf16.msra.mxu0 0
        %3436 = vmatprep.mubr.bf16.mxu0 0
        %3437 = vmatmul.mubr.bf16.gmra.mrb[0].mxu0 %v3354
        %v3438 = vpop.f32.mrb[0].mxu0
        %v3439 = vadd.f32 %v3227, %v3438
        %v3440 = vpop.f32.mrb[0].mxu0
        %v3441 = vpop.f32.mrb[0].mxu0
        %v3442 = vadd.f32 %v3230, %v3441
        %v3443 = vpop.f32.mrb[0].mxu0
        %3444 = vmatprep.mubr.bf16.mxu0 0
        %3445 = vmatmul.mubr.bf16.gmra.mrb[0].mxu0 %v3357
        %v3446 = vpop.f32.mrb[0].mxu0
        %v3447 = vadd.f32 %v3235, %v3446
        %v3448 = vpop.f32.mrb[0].mxu0
        %v3449 = vpop.f32.mrb[0].mxu0
        %v3450 = vadd.f32 %v3238, %v3449
        %v3451 = vpop.f32.mrb[0].mxu0
        %3452 = vmatprep.mubr.bf16.mxu0 0
        %3453 = vmatmul.mubr.bf16.gmra.mrb[0].mxu0 %v3360
        %v3454 = vpop.f32.mrb[0].mxu0
        %v3455 = vadd.f32 %v3243, %v3454
        %v3456 = vpop.f32.mrb[0].mxu0
        %v3457 = vpop.f32.mrb[0].mxu0
        %v3458 = vadd.f32 %v3246, %v3457
        %v3459 = vpop.f32.mrb[0].mxu0
        %3460 = vmatprep.mubr.bf16.mxu0 0
        %3461 = vmatmul.mubr.bf16.gmra.mrb[0].mxu0 %v3363
        %v3462 = vpop.f32.mrb[0].mxu0
        %v3463 = vadd.f32 %v3251, %v3462
        %v3464 = vpop.f32.mrb[0].mxu0
        %v3465 = vpop.f32.mrb[0].mxu0
        %v3466 = vadd.f32 %v3254, %v3465
        %v3467 = vpop.f32.mrb[0].mxu0
        %3468 = vmatprep.mubr.bf16.mxu0 0
        %3469 = vmatmul.mubr.bf16.gmra.mrb[0].mxu0 %v3366
        %v3470 = vpop.f32.mrb[0].mxu0
        %v3471 = vadd.f32 %v3259, %v3470
        %v3472 = vpop.f32.mrb[0].mxu0
        %v3473 = vpop.f32.mrb[0].mxu0
        %v3474 = vadd.f32 %v3262, %v3473
        %v3475 = vpop.f32.mrb[0].mxu0
        %3476 = vmatprep.mubr.bf16.mxu0 0
        %3477 = vmatmul.mubr.bf16.gmra.mrb[0].mxu0 %v3369
        %v3478 = vpop.f32.mrb[0].mxu0
        %v3479 = vadd.f32 %v3267, %v3478
        %v3480 = vpop.f32.mrb[0].mxu0
        %v3481 = vpop.f32.mrb[0].mxu0
        %v3482 = vadd.f32 %v3270, %v3481
        %v3483 = vpop.f32.mrb[0].mxu0
        %3484 = vmatprep.mubr.bf16.mxu0 0
        %3485 = vmatmul.mubr.bf16.gmra.mrb[0].mxu0 %v3372
        %v3486 = vpop.f32.mrb[0].mxu0
        %v3487 = vadd.f32 %v3275, %v3486
        %v3488 = vpop.f32.mrb[0].mxu0
        %v3489 = vpop.f32.mrb[0].mxu0
        %v3490 = vadd.f32 %v3278, %v3489
        %v3491 = vpop.f32.mrb[0].mxu0
        %3492 = vmatprep.mubr.bf16.mxu0 0
        %3493 = vmatmul.mubr.bf16.gmra.mrb[0].mxu0 %v3375
        %v3494 = vpop.f32.mrb[0].mxu0
        %v3495 = vadd.f32 %v3283, %v3494
        %v3496 = vpop.f32.mrb[0].mxu0
        %v3497 = vpop.f32.mrb[0].mxu0
        %v3498 = vadd.f32 %v3286, %v3497
        %v3499 = vpop.f32.mrb[0].mxu0
        %3500 = vmatprep.mubr.bf16.mxu0 0
        %3501 = vmatmul.mubr.bf16.gmra.mrb[0].mxu0 %v3378
        %v3502 = vpop.f32.mrb[0].mxu0
        %v3503 = vadd.f32 %v3291, %v3502
        %v3504 = vpop.f32.mrb[0].mxu0
        %v3505 = vpop.f32.mrb[0].mxu0
        %v3506 = vadd.f32 %v3294, %v3505
        %v3507 = vpop.f32.mrb[0].mxu0
        %3508 = vmatprep.mubr.bf16.mxu0 0
        %3509 = vmatmul.mubr.bf16.gmra.mrb[0].mxu0 %v3381
        %v3510 = vpop.f32.mrb[0].mxu0
        %v3511 = vadd.f32 %v3299, %v3510
        %v3512 = vpop.f32.mrb[0].mxu0
        %v3513 = vpop.f32.mrb[0].mxu0
        %v3514 = vadd.f32 %v3302, %v3513
        %v3515 = vpop.f32.mrb[0].mxu0
        %3516 = vmatprep.mubr.bf16.mxu0 0
        %3517 = vmatmul.mubr.bf16.gmra.mrb[0].mxu0 %v3384
        %v3518 = vpop.f32.mrb[0].mxu0
        %v3519 = vadd.f32 %v3307, %v3518
        %v3520 = vpop.f32.mrb[0].mxu0
        %v3521 = vpop.f32.mrb[0].mxu0
        %v3522 = vadd.f32 %v3310, %v3521
        %v3523 = vpop.f32.mrb[0].mxu0
        %3524 = vmatprep.mubr.bf16.mxu0 0
        %3525 = vmatmul.mubr.bf16.gmra.mrb[0].mxu0 %v3387
        %v3526 = vpop.f32.mrb[0].mxu0
        %v3527 = vadd.f32 %v3315, %v3526
        %v3528 = vpop.f32.mrb[0].mxu0
        %v3529 = vpop.f32.mrb[0].mxu0
        %v3530 = vadd.f32 %v3318, %v3529
        %v3531 = vpop.f32.mrb[0].mxu0
        %3532 = vmatprep.mubr.bf16.mxu0 0
        %3533 = vmatmul.mubr.bf16.gmra.mrb[0].mxu0 %v3390
        %v3534 = vpop.f32.mrb[0].mxu0
        %v3535 = vadd.f32 %v3323, %v3534
        %v3536 = vpop.f32.mrb[0].mxu0
        %v3537 = vpop.f32.mrb[0].mxu0
        %v3538 = vadd.f32 %v3326, %v3537
        %v3539 = vpop.f32.mrb[0].mxu0
        %3540 = vmatprep.mubr.bf16.mxu0 0
        %3541 = vmatmul.mubr.bf16.gmra.mrb[0].mxu0 %v3393
        %v3542 = vpop.f32.mrb[0].mxu0
        %v3543 = vadd.f32 %v3331, %v3542
        %v3544 = vpop.f32.mrb[0].mxu0
        %v3545 = vpop.f32.mrb[0].mxu0
        %v3546 = vadd.f32 %v3334, %v3545
        %v3547 = vpop.f32.mrb[0].mxu0
        %3548 = vmatprep.mubr.bf16.mxu0 0
        %3549 = vmatmul.mubr.bf16.gmra.mrb[0].mxu0 %v3396
        %v3550 = vpop.f32.mrb[0].mxu0
        %v3551 = vadd.f32 %v3339, %v3550
        %v3552 = vpop.f32.mrb[0].mxu0
        %v3553 = vpop.f32.mrb[0].mxu0
        %v3554 = vadd.f32 %v3342, %v3553
        %v3555 = vpop.f32.mrb[0].mxu0
        %3556 = vmatprep.mubr.bf16.mxu0 0
        %3557 = vmatmul.mubr.bf16.gmra.mrb[0].mxu0 %v3399
        %v3558 = vpop.f32.mrb[0].mxu0
        %v3559 = vadd.f32 %v3347, %v3558
        %v3560 = vpop.f32.mrb[0].mxu0
        %v3561 = vpop.f32.mrb[0].mxu0
        %v3562 = vadd.f32 %v3350, %v3561
        %v3563 = vpop.f32.mrb[0].mxu0
        %3564 = vdwg.mxu0
        %v3565 = vld [vmem:[#allocation2 + $0x9] sm:$0xff]
        %v3566 = vld [vmem:[#allocation2 + $0x11] sm:$0xff]
        %v3567 = vld [vmem:[#allocation2 + $0x29] sm:$0xff]
        %v3568 = vld [vmem:[#allocation2 + $0x31] sm:$0xff]
        %v3569 = vld [vmem:[#allocation2 + $0x49] sm:$0xff]
        %v3570 = vld [vmem:[#allocation2 + $0x51] sm:$0xff]
        %v3571 = vld [vmem:[#allocation2 + $0x69] sm:$0xff]
        %v3572 = vld [vmem:[#allocation2 + $0x71] sm:$0xff]
        %v3573 = vld [vmem:[#allocation2 + $0x89] sm:$0xff]
        %v3574 = vld [vmem:[#allocation2 + $0x91] sm:$0xff]
        %v3575 = vld [vmem:[#allocation2 + $0xa9] sm:$0xff]
        %v3576 = vld [vmem:[#allocation2 + $0xb1] sm:$0xff]
        %v3577 = vld [vmem:[#allocation2 + $0xc9] sm:$0xff]
        %v3578 = vld [vmem:[#allocation2 + $0xd1] sm:$0xff]
        %v3579 = vld [vmem:[#allocation2 + $0xe9] sm:$0xff]
        %v3580 = vld [vmem:[#allocation2 + $0xf1] sm:$0xff]
        %v3581 = vld [vmem:[#allocation2 + $0x109] sm:$0xff]
        %v3582 = vld [vmem:[#allocation2 + $0x111] sm:$0xff]
        %v3583 = vld [vmem:[#allocation2 + $0x129] sm:$0xff]
        %v3584 = vld [vmem:[#allocation2 + $0x131] sm:$0xff]
        %v3585 = vld [vmem:[#allocation2 + $0x149] sm:$0xff]
        %v3586 = vld [vmem:[#allocation2 + $0x151] sm:$0xff]
        %v3587 = vld [vmem:[#allocation2 + $0x169] sm:$0xff]
        %v3588 = vld [vmem:[#allocation2 + $0x171] sm:$0xff]
        %v3589 = vld [vmem:[#allocation2 + $0x189] sm:$0xff]
        %v3590 = vld [vmem:[#allocation2 + $0x191] sm:$0xff]
        %v3591 = vld [vmem:[#allocation2 + $0x1a9] sm:$0xff]
        %v3592 = vld [vmem:[#allocation2 + $0x1b1] sm:$0xff]
        %v3593 = vld [vmem:[#allocation2 + $0x1c9] sm:$0xff]
        %v3594 = vld [vmem:[#allocation2 + $0x1d1] sm:$0xff]
        %v3595 = vld [vmem:[#allocation2 + $0x1e9] sm:$0xff]
        %v3596 = vld [vmem:[#allocation2 + $0x1f1] sm:$0xff]
        %v3597 = vpack.c.bf16 %v3566, %v3565
        %v3598 = vpack.c.bf16 %v3568, %v3567
        %v3599 = vpack.c.bf16 %v3570, %v3569
        %v3600 = vpack.c.bf16 %v3572, %v3571
        %v3601 = vpack.c.bf16 %v3574, %v3573
        %v3602 = vpack.c.bf16 %v3576, %v3575
        %v3603 = vpack.c.bf16 %v3578, %v3577
        %v3604 = vpack.c.bf16 %v3580, %v3579
        %v3605 = vpack.c.bf16 %v3582, %v3581
        %v3606 = vpack.c.bf16 %v3584, %v3583
        %v3607 = vpack.c.bf16 %v3586, %v3585
        %v3608 = vpack.c.bf16 %v3588, %v3587
        %v3609 = vpack.c.bf16 %v3590, %v3589
        %v3610 = vpack.c.bf16 %v3592, %v3591
        %v3611 = vpack.c.bf16 %v3594, %v3593
        %v3612 = vpack.c.bf16 %v3596, %v3595
        %s3613 = scalar_lea.vmem %s3, 8
        %v3614 = vld [vmem:[%s3613] sm:$0xf]
        %v3616 = vsel %vm2934, %v3597, 0
        %v3619 = vsel %vm2934, %v3598, 0
        %v3622 = vsel %vm2934, %v3599, 0
        %v3625 = vsel %vm2934, %v3600, 0
        %v3628 = vsel %vm2934, %v3601, 0
        %v3631 = vsel %vm2934, %v3602, 0
        %v3634 = vsel %vm2934, %v3603, 0
        %v3637 = vsel %vm2934, %v3604, 0
        %v3640 = vsel %vm2934, %v3605, 0
        %v3643 = vsel %vm2934, %v3606, 0
        %v3646 = vsel %vm2934, %v3607, 0
        %v3649 = vsel %vm2934, %v3608, 0
        %v3652 = vsel %vm2934, %v3609, 0
        %v3655 = vsel %vm2934, %v3610, 0
        %v3658 = vsel %vm2934, %v3611, 0
        %v3661 = vsel %vm2934, %v3612, 0
        %v3664 = vsel %vm3188, %v3614, 0
        %3666 = vmatprep.subr.bf16.mxu0 0
        %3667 = vmatpush1.bf16.msra.mxu0 %v3664
        %3668 = vmatprep.subr.bf16.mxu0 0
        %3669 = vmatpush1.bf16.msra.mxu0 0
        %3670 = vmatprep.subr.bf16.mxu0 0
        %3671 = vmatpush1.bf16.msra.mxu0 0
        %3672 = vmatprep.subr.bf16.mxu0 0
        %3673 = vmatpush1.bf16.msra.mxu0 0
        %3674 = vmatprep.subr.bf16.mxu0 0
        %3675 = vmatpush1.bf16.msra.mxu0 0
        %3676 = vmatprep.subr.bf16.mxu0 0
        %3677 = vmatpush1.bf16.msra.mxu0 0
        %3678 = vmatprep.subr.bf16.mxu0 0
        %3679 = vmatpush1.bf16.msra.mxu0 0
        %3680 = vmatprep.subr.bf16.mxu0 0
        %3681 = vmatpush1.bf16.msra.mxu0 0
        %3682 = vmatprep.subr.bf16.mxu0 0
        %3683 = vmatpush1.bf16.msra.mxu0 0
        %3684 = vmatprep.subr.bf16.mxu0 0
        %3685 = vmatpush1.bf16.msra.mxu0 0
        %3686 = vmatprep.subr.bf16.mxu0 0
        %3687 = vmatpush1.bf16.msra.mxu0 0
        %3688 = vmatprep.subr.bf16.mxu0 0
        %3689 = vmatpush1.bf16.msra.mxu0 0
        %3690 = vmatprep.subr.bf16.mxu0 0
        %3691 = vmatpush1.bf16.msra.mxu0 0
        %3692 = vmatprep.subr.bf16.mxu0 0
        %3693 = vmatpush1.bf16.msra.mxu0 0
        %3694 = vmatprep.subr.bf16.mxu0 0
        %3695 = vmatpush1.bf16.msra.mxu0 0
        %3696 = vmatprep.subr.bf16.mxu0 0
        %3697 = vmatpush1.bf16.msra.mxu0 0
        %3698 = vmatprep.mubr.bf16.mxu0 0
        %3699 = vmatmul.mubr.bf16.gmra.mrb[0].mxu0 %v3616
        %v3700 = vpop.f32.mrb[0].mxu0
        %v3701 = vadd.f32 0.0, %v3700
        %v3702 = vpop.f32.mrb[0].mxu0
        %v3703 = vpop.f32.mrb[0].mxu0
        %v3704 = vadd.f32 0.0, %v3703
        %v3705 = vpop.f32.mrb[0].mxu0
        %3706 = vmatprep.mubr.bf16.mxu0 0
        %3707 = vmatmul.mubr.bf16.gmra.mrb[0].mxu0 %v3619
        %v3708 = vpop.f32.mrb[0].mxu0
        %v3709 = vadd.f32 0.0, %v3708
        %v3710 = vpop.f32.mrb[0].mxu0
        %v3711 = vpop.f32.mrb[0].mxu0
        %v3712 = vadd.f32 0.0, %v3711
        %v3713 = vpop.f32.mrb[0].mxu0
        %3714 = vmatprep.mubr.bf16.mxu0 0
        %3715 = vmatmul.mubr.bf16.gmra.mrb[0].mxu0 %v3622
        %v3716 = vpop.f32.mrb[0].mxu0
        %v3717 = vadd.f32 0.0, %v3716
        %v3718 = vpop.f32.mrb[0].mxu0
        %v3719 = vpop.f32.mrb[0].mxu0
        %v3720 = vadd.f32 0.0, %v3719
        %v3721 = vpop.f32.mrb[0].mxu0
        %3722 = vmatprep.mubr.bf16.mxu0 0
        %3723 = vmatmul.mubr.bf16.gmra.mrb[0].mxu0 %v3625
        %v3724 = vpop.f32.mrb[0].mxu0
        %v3725 = vadd.f32 0.0, %v3724
        %v3726 = vpop.f32.mrb[0].mxu0
        %v3727 = vpop.f32.mrb[0].mxu0
        %v3728 = vadd.f32 0.0, %v3727
        %v3729 = vpop.f32.mrb[0].mxu0
        %3730 = vmatprep.mubr.bf16.mxu0 0
        %3731 = vmatmul.mubr.bf16.gmra.mrb[0].mxu0 %v3628
        %v3732 = vpop.f32.mrb[0].mxu0
        %v3733 = vadd.f32 0.0, %v3732
        %v3734 = vpop.f32.mrb[0].mxu0
        %v3735 = vpop.f32.mrb[0].mxu0
        %v3736 = vadd.f32 0.0, %v3735
        %v3737 = vpop.f32.mrb[0].mxu0
        %3738 = vmatprep.mubr.bf16.mxu0 0
        %3739 = vmatmul.mubr.bf16.gmra.mrb[0].mxu0 %v3631
        %v3740 = vpop.f32.mrb[0].mxu0
        %v3741 = vadd.f32 0.0, %v3740
        %v3742 = vpop.f32.mrb[0].mxu0
        %v3743 = vpop.f32.mrb[0].mxu0
        %v3744 = vadd.f32 0.0, %v3743
        %v3745 = vpop.f32.mrb[0].mxu0
        %3746 = vmatprep.mubr.bf16.mxu0 0
        %3747 = vmatmul.mubr.bf16.gmra.mrb[0].mxu0 %v3634
        %v3748 = vpop.f32.mrb[0].mxu0
        %v3749 = vadd.f32 0.0, %v3748
        %v3750 = vpop.f32.mrb[0].mxu0
        %v3751 = vpop.f32.mrb[0].mxu0
        %v3752 = vadd.f32 0.0, %v3751
        %v3753 = vpop.f32.mrb[0].mxu0
        %3754 = vmatprep.mubr.bf16.mxu0 0
        %3755 = vmatmul.mubr.bf16.gmra.mrb[0].mxu0 %v3637
        %v3756 = vpop.f32.mrb[0].mxu0
        %v3757 = vadd.f32 0.0, %v3756
        %v3758 = vpop.f32.mrb[0].mxu0
        %v3759 = vpop.f32.mrb[0].mxu0
        %v3760 = vadd.f32 0.0, %v3759
        %v3761 = vpop.f32.mrb[0].mxu0
        %3762 = vmatprep.mubr.bf16.mxu0 0
        %3763 = vmatmul.mubr.bf16.gmra.mrb[0].mxu0 %v3640
        %v3764 = vpop.f32.mrb[0].mxu0
        %v3765 = vadd.f32 0.0, %v3764
        %v3766 = vpop.f32.mrb[0].mxu0
        %v3767 = vpop.f32.mrb[0].mxu0
        %v3768 = vadd.f32 0.0, %v3767
        %v3769 = vpop.f32.mrb[0].mxu0
        %3770 = vmatprep.mubr.bf16.mxu0 0
        %3771 = vmatmul.mubr.bf16.gmra.mrb[0].mxu0 %v3643
        %v3772 = vpop.f32.mrb[0].mxu0
        %v3773 = vadd.f32 0.0, %v3772
        %v3774 = vpop.f32.mrb[0].mxu0
        %v3775 = vpop.f32.mrb[0].mxu0
        %v3776 = vadd.f32 0.0, %v3775
        %v3777 = vpop.f32.mrb[0].mxu0
        %3778 = vmatprep.mubr.bf16.mxu0 0
        %3779 = vmatmul.mubr.bf16.gmra.mrb[0].mxu0 %v3646
        %v3780 = vpop.f32.mrb[0].mxu0
        %v3781 = vadd.f32 0.0, %v3780
        %v3782 = vpop.f32.mrb[0].mxu0
        %v3783 = vpop.f32.mrb[0].mxu0
        %v3784 = vadd.f32 0.0, %v3783
        %v3785 = vpop.f32.mrb[0].mxu0
        %3786 = vmatprep.mubr.bf16.mxu0 0
        %3787 = vmatmul.mubr.bf16.gmra.mrb[0].mxu0 %v3649
        %v3788 = vpop.f32.mrb[0].mxu0
        %v3789 = vadd.f32 0.0, %v3788
        %v3790 = vpop.f32.mrb[0].mxu0
        %v3791 = vpop.f32.mrb[0].mxu0
        %v3792 = vadd.f32 0.0, %v3791
        %v3793 = vpop.f32.mrb[0].mxu0
        %3794 = vmatprep.mubr.bf16.mxu0 0
        %3795 = vmatmul.mubr.bf16.gmra.mrb[0].mxu0 %v3652
        %v3796 = vpop.f32.mrb[0].mxu0
        %v3797 = vadd.f32 0.0, %v3796
        %v3798 = vpop.f32.mrb[0].mxu0
        %v3799 = vpop.f32.mrb[0].mxu0
        %v3800 = vadd.f32 0.0, %v3799
        %v3801 = vpop.f32.mrb[0].mxu0
        %3802 = vmatprep.mubr.bf16.mxu0 0
        %3803 = vmatmul.mubr.bf16.gmra.mrb[0].mxu0 %v3655
        %v3804 = vpop.f32.mrb[0].mxu0
        %v3805 = vadd.f32 0.0, %v3804
        %v3806 = vpop.f32.mrb[0].mxu0
        %v3807 = vpop.f32.mrb[0].mxu0
        %v3808 = vadd.f32 0.0, %v3807
        %v3809 = vpop.f32.mrb[0].mxu0
        %3810 = vmatprep.mubr.bf16.mxu0 0
        %3811 = vmatmul.mubr.bf16.gmra.mrb[0].mxu0 %v3658
        %v3812 = vpop.f32.mrb[0].mxu0
        %v3813 = vadd.f32 0.0, %v3812
        %v3814 = vpop.f32.mrb[0].mxu0
        %v3815 = vpop.f32.mrb[0].mxu0
        %v3816 = vadd.f32 0.0, %v3815
        %v3817 = vpop.f32.mrb[0].mxu0
        %3818 = vmatprep.mubr.bf16.mxu0 0
        %3819 = vmatmul.mubr.bf16.gmra.mrb[0].mxu0 %v3661
        %v3820 = vpop.f32.mrb[0].mxu0
        %v3821 = vadd.f32 0.0, %v3820
        %v3822 = vpop.f32.mrb[0].mxu0
        %v3823 = vpop.f32.mrb[0].mxu0
        %v3824 = vadd.f32 0.0, %v3823
        %v3825 = vpop.f32.mrb[0].mxu0
        %3826 = vdwg.mxu0
        %v3827 = vadd.f32 %v3439, %v3701
        %v3828 = vadd.f32 %v3442, %v3704
        %v3829 = vadd.f32 %v3447, %v3709
        %v3830 = vadd.f32 %v3450, %v3712
        %v3831 = vadd.f32 %v3455, %v3717
        %v3832 = vadd.f32 %v3458, %v3720
        %v3833 = vadd.f32 %v3463, %v3725
        %v3834 = vadd.f32 %v3466, %v3728
        %v3835 = vadd.f32 %v3471, %v3733
        %v3836 = vadd.f32 %v3474, %v3736
        %v3837 = vadd.f32 %v3479, %v3741
        %v3838 = vadd.f32 %v3482, %v3744
        %v3839 = vadd.f32 %v3487, %v3749
        %v3840 = vadd.f32 %v3490, %v3752
        %v3841 = vadd.f32 %v3495, %v3757
        %v3842 = vadd.f32 %v3498, %v3760
        %v3843 = vadd.f32 %v3503, %v3765
        %v3844 = vadd.f32 %v3506, %v3768
        %v3845 = vadd.f32 %v3511, %v3773
        %v3846 = vadd.f32 %v3514, %v3776
        %v3847 = vadd.f32 %v3519, %v3781
        %v3848 = vadd.f32 %v3522, %v3784
        %v3849 = vadd.f32 %v3527, %v3789
        %v3850 = vadd.f32 %v3530, %v3792
        %v3851 = vadd.f32 %v3535, %v3797
        %v3852 = vadd.f32 %v3538, %v3800
        %v3853 = vadd.f32 %v3543, %v3805
        %v3854 = vadd.f32 %v3546, %v3808
        %v3855 = vadd.f32 %v3551, %v3813
        %v3856 = vadd.f32 %v3554, %v3816
        %v3857 = vadd.f32 %v3559, %v3821
        %v3858 = vadd.f32 %v3562, %v3824
        %v3859 = vld [vmem:[%s3008 + $0x7] sm:$0xff]
        %v3860 = vld [vmem:[%s3008 + $0xf] sm:$0xff]
        %v3861 = vld [vmem:[%s3008 + $0x27] sm:$0xff]
        %v3862 = vld [vmem:[%s3008 + $0x2f] sm:$0xff]
        %v3863 = vld [vmem:[%s3008 + $0x47] sm:$0xff]
        %v3864 = vld [vmem:[%s3008 + $0x4f] sm:$0xff]
        %v3865 = vld [vmem:[%s3008 + $0x67] sm:$0xff]
        %v3866 = vld [vmem:[%s3008 + $0x6f] sm:$0xff]
        %v3867 = vld [vmem:[%s3008 + $0x87] sm:$0xff]
        %v3868 = vld [vmem:[%s3008 + $0x8f] sm:$0xff]
        %v3869 = vld [vmem:[%s3008 + $0xa7] sm:$0xff]
        %v3870 = vld [vmem:[%s3008 + $0xaf] sm:$0xff]
        %v3871 = vld [vmem:[%s3008 + $0xc7] sm:$0xff]
        %v3872 = vld [vmem:[%s3008 + $0xcf] sm:$0xff]
        %v3873 = vld [vmem:[%s3008 + $0xe7] sm:$0xff]
        %v3874 = vld [vmem:[%s3008 + $0xef] sm:$0xff]
        %v3875 = vld [vmem:[%s3008 + $0x107] sm:$0xff]
        %v3876 = vld [vmem:[%s3008 + $0x10f] sm:$0xff]
        %v3877 = vld [vmem:[%s3008 + $0x127] sm:$0xff]
        %v3878 = vld [vmem:[%s3008 + $0x12f] sm:$0xff]
        %v3879 = vld [vmem:[%s3008 + $0x147] sm:$0xff]
        %v3880 = vld [vmem:[%s3008 + $0x14f] sm:$0xff]
        %v3881 = vld [vmem:[%s3008 + $0x167] sm:$0xff]
        %v3882 = vld [vmem:[%s3008 + $0x16f] sm:$0xff]
        %v3883 = vld [vmem:[%s3008 + $0x187] sm:$0xff]
        %v3884 = vld [vmem:[%s3008 + $0x18f] sm:$0xff]
        %v3885 = vld [vmem:[%s3008 + $0x1a7] sm:$0xff]
        %v3886 = vld [vmem:[%s3008 + $0x1af] sm:$0xff]
        %v3887 = vld [vmem:[%s3008 + $0x1c7] sm:$0xff]
        %v3888 = vld [vmem:[%s3008 + $0x1cf] sm:$0xff]
        %v3889 = vld [vmem:[%s3008 + $0x1e7] sm:$0xff]
        %v3890 = vld [vmem:[%s3008 + $0x1ef] sm:$0xff]
        %v3891 = vpack.c.bf16 %v3860, %v3859
        %v3892 = vpack.c.bf16 %v3862, %v3861
        %v3893 = vpack.c.bf16 %v3864, %v3863
        %v3894 = vpack.c.bf16 %v3866, %v3865
        %v3895 = vpack.c.bf16 %v3868, %v3867
        %v3896 = vpack.c.bf16 %v3870, %v3869
        %v3897 = vpack.c.bf16 %v3872, %v3871
        %v3898 = vpack.c.bf16 %v3874, %v3873
        %v3899 = vpack.c.bf16 %v3876, %v3875
        %v3900 = vpack.c.bf16 %v3878, %v3877
        %v3901 = vpack.c.bf16 %v3880, %v3879
        %v3902 = vpack.c.bf16 %v3882, %v3881
        %v3903 = vpack.c.bf16 %v3884, %v3883
        %v3904 = vpack.c.bf16 %v3886, %v3885
        %v3905 = vpack.c.bf16 %v3888, %v3887
        %v3906 = vpack.c.bf16 %v3890, %v3889
        %s3907 = scalar_lea.vmem %s3, 12
        %v3908 = vld [vmem:[%s3907] sm:$0xf]
        %v3910 = vsel %vm2934, %v3891, 0
        %v3913 = vsel %vm2934, %v3892, 0
        %v3916 = vsel %vm2934, %v3893, 0
        %v3919 = vsel %vm2934, %v3894, 0
        %v3922 = vsel %vm2934, %v3895, 0
        %v3925 = vsel %vm2934, %v3896, 0
        %v3928 = vsel %vm2934, %v3897, 0
        %v3931 = vsel %vm2934, %v3898, 0
        %v3934 = vsel %vm2934, %v3899, 0
        %v3937 = vsel %vm2934, %v3900, 0
        %v3940 = vsel %vm2934, %v3901, 0
        %v3943 = vsel %vm2934, %v3902, 0
        %v3946 = vsel %vm2934, %v3903, 0
        %v3949 = vsel %vm2934, %v3904, 0
        %v3952 = vsel %vm2934, %v3905, 0
        %v3955 = vsel %vm2934, %v3906, 0
        %v3958 = vsel %vm3188, %v3908, 0
        %3960 = vmatprep.subr.bf16.mxu0 0
        %3961 = vmatpush1.bf16.msra.mxu0 %v3958
        %3962 = vmatprep.subr.bf16.mxu0 0
        %3963 = vmatpush1.bf16.msra.mxu0 0
        %3964 = vmatprep.subr.bf16.mxu0 0
        %3965 = vmatpush1.bf16.msra.mxu0 0
        %3966 = vmatprep.subr.bf16.mxu0 0
        %3967 = vmatpush1.bf16.msra.mxu0 0
        %3968 = vmatprep.subr.bf16.mxu0 0
        %3969 = vmatpush1.bf16.msra.mxu0 0
        %3970 = vmatprep.subr.bf16.mxu0 0
        %3971 = vmatpush1.bf16.msra.mxu0 0
        %3972 = vmatprep.subr.bf16.mxu0 0
        %3973 = vmatpush1.bf16.msra.mxu0 0
        %3974 = vmatprep.subr.bf16.mxu0 0
        %3975 = vmatpush1.bf16.msra.mxu0 0
        %3976 = vmatprep.subr.bf16.mxu0 0
        %3977 = vmatpush1.bf16.msra.mxu0 0
        %3978 = vmatprep.subr.bf16.mxu0 0
        %3979 = vmatpush1.bf16.msra.mxu0 0
        %3980 = vmatprep.subr.bf16.mxu0 0
        %3981 = vmatpush1.bf16.msra.mxu0 0
        %3982 = vmatprep.subr.bf16.mxu0 0
        %3983 = vmatpush1.bf16.msra.mxu0 0
        %3984 = vmatprep.subr.bf16.mxu0 0
        %3985 = vmatpush1.bf16.msra.mxu0 0
        %3986 = vmatprep.subr.bf16.mxu0 0
        %3987 = vmatpush1.bf16.msra.mxu0 0
        %3988 = vmatprep.subr.bf16.mxu0 0
        %3989 = vmatpush1.bf16.msra.mxu0 0
        %3990 = vmatprep.subr.bf16.mxu0 0
        %3991 = vmatpush1.bf16.msra.mxu0 0
        %3992 = vmatprep.mubr.bf16.mxu0 0
        %3993 = vmatmul.mubr.bf16.gmra.mrb[0].mxu0 %v3910
        %v3994 = vpop.f32.mrb[0].mxu0
        %v3995 = vadd.f32 0.0, %v3994
        %v3996 = vpop.f32.mrb[0].mxu0
        %v3997 = vpop.f32.mrb[0].mxu0
        %v3998 = vadd.f32 0.0, %v3997
        %v3999 = vpop.f32.mrb[0].mxu0
        %4000 = vmatprep.mubr.bf16.mxu0 0
        %4001 = vmatmul.mubr.bf16.gmra.mrb[0].mxu0 %v3913
        %v4002 = vpop.f32.mrb[0].mxu0
        %v4003 = vadd.f32 0.0, %v4002
        %v4004 = vpop.f32.mrb[0].mxu0
        %v4005 = vpop.f32.mrb[0].mxu0
        %v4006 = vadd.f32 0.0, %v4005
        %v4007 = vpop.f32.mrb[0].mxu0
        %4008 = vmatprep.mubr.bf16.mxu0 0
        %4009 = vmatmul.mubr.bf16.gmra.mrb[0].mxu0 %v3916
        %v4010 = vpop.f32.mrb[0].mxu0
        %v4011 = vadd.f32 0.0, %v4010
        %v4012 = vpop.f32.mrb[0].mxu0
        %v4013 = vpop.f32.mrb[0].mxu0
        %v4014 = vadd.f32 0.0, %v4013
        %v4015 = vpop.f32.mrb[0].mxu0
        %4016 = vmatprep.mubr.bf16.mxu0 0
        %4017 = vmatmul.mubr.bf16.gmra.mrb[0].mxu0 %v3919
        %v4018 = vpop.f32.mrb[0].mxu0
        %v4019 = vadd.f32 0.0, %v4018
        %v4020 = vpop.f32.mrb[0].mxu0
        %v4021 = vpop.f32.mrb[0].mxu0
        %v4022 = vadd.f32 0.0, %v4021
        %v4023 = vpop.f32.mrb[0].mxu0
        %4024 = vmatprep.mubr.bf16.mxu0 0
        %4025 = vmatmul.mubr.bf16.gmra.mrb[0].mxu0 %v3922
        %v4026 = vpop.f32.mrb[0].mxu0
        %v4027 = vadd.f32 0.0, %v4026
        %v4028 = vpop.f32.mrb[0].mxu0
        %v4029 = vpop.f32.mrb[0].mxu0
        %v4030 = vadd.f32 0.0, %v4029
        %v4031 = vpop.f32.mrb[0].mxu0
        %4032 = vmatprep.mubr.bf16.mxu0 0
        %4033 = vmatmul.mubr.bf16.gmra.mrb[0].mxu0 %v3925
        %v4034 = vpop.f32.mrb[0].mxu0
        %v4035 = vadd.f32 0.0, %v4034
        %v4036 = vpop.f32.mrb[0].mxu0
        %v4037 = vpop.f32.mrb[0].mxu0
        %v4038 = vadd.f32 0.0, %v4037
        %v4039 = vpop.f32.mrb[0].mxu0
        %4040 = vmatprep.mubr.bf16.mxu0 0
        %4041 = vmatmul.mubr.bf16.gmra.mrb[0].mxu0 %v3928
        %v4042 = vpop.f32.mrb[0].mxu0
        %v4043 = vadd.f32 0.0, %v4042
        %v4044 = vpop.f32.mrb[0].mxu0
        %v4045 = vpop.f32.mrb[0].mxu0
        %v4046 = vadd.f32 0.0, %v4045
        %v4047 = vpop.f32.mrb[0].mxu0
        %4048 = vmatprep.mubr.bf16.mxu0 0
        %4049 = vmatmul.mubr.bf16.gmra.mrb[0].mxu0 %v3931
        %v4050 = vpop.f32.mrb[0].mxu0
        %v4051 = vadd.f32 0.0, %v4050
        %v4052 = vpop.f32.mrb[0].mxu0
        %v4053 = vpop.f32.mrb[0].mxu0
        %v4054 = vadd.f32 0.0, %v4053
        %v4055 = vpop.f32.mrb[0].mxu0
        %4056 = vmatprep.mubr.bf16.mxu0 0
        %4057 = vmatmul.mubr.bf16.gmra.mrb[0].mxu0 %v3934
        %v4058 = vpop.f32.mrb[0].mxu0
        %v4059 = vadd.f32 0.0, %v4058
        %v4060 = vpop.f32.mrb[0].mxu0
        %v4061 = vpop.f32.mrb[0].mxu0
        %v4062 = vadd.f32 0.0, %v4061
        %v4063 = vpop.f32.mrb[0].mxu0
        %4064 = vmatprep.mubr.bf16.mxu0 0
        %4065 = vmatmul.mubr.bf16.gmra.mrb[0].mxu0 %v3937
        %v4066 = vpop.f32.mrb[0].mxu0
        %v4067 = vadd.f32 0.0, %v4066
        %v4068 = vpop.f32.mrb[0].mxu0
        %v4069 = vpop.f32.mrb[0].mxu0
        %v4070 = vadd.f32 0.0, %v4069
        %v4071 = vpop.f32.mrb[0].mxu0
        %4072 = vmatprep.mubr.bf16.mxu0 0
        %4073 = vmatmul.mubr.bf16.gmra.mrb[0].mxu0 %v3940
        %v4074 = vpop.f32.mrb[0].mxu0
        %v4075 = vadd.f32 0.0, %v4074
        %v4076 = vpop.f32.mrb[0].mxu0
        %v4077 = vpop.f32.mrb[0].mxu0
        %v4078 = vadd.f32 0.0, %v4077
        %v4079 = vpop.f32.mrb[0].mxu0
        %4080 = vmatprep.mubr.bf16.mxu0 0
        %4081 = vmatmul.mubr.bf16.gmra.mrb[0].mxu0 %v3943
        %v4082 = vpop.f32.mrb[0].mxu0
        %v4083 = vadd.f32 0.0, %v4082
        %v4084 = vpop.f32.mrb[0].mxu0
        %v4085 = vpop.f32.mrb[0].mxu0
        %v4086 = vadd.f32 0.0, %v4085
        %v4087 = vpop.f32.mrb[0].mxu0
        %4088 = vmatprep.mubr.bf16.mxu0 0
        %4089 = vmatmul.mubr.bf16.gmra.mrb[0].mxu0 %v3946
        %v4090 = vpop.f32.mrb[0].mxu0
        %v4091 = vadd.f32 0.0, %v4090
        %v4092 = vpop.f32.mrb[0].mxu0
        %v4093 = vpop.f32.mrb[0].mxu0
        %v4094 = vadd.f32 0.0, %v4093
        %v4095 = vpop.f32.mrb[0].mxu0
        %4096 = vmatprep.mubr.bf16.mxu0 0
        %4097 = vmatmul.mubr.bf16.gmra.mrb[0].mxu0 %v3949
        %v4098 = vpop.f32.mrb[0].mxu0
        %v4099 = vadd.f32 0.0, %v4098
        %v4100 = vpop.f32.mrb[0].mxu0
        %v4101 = vpop.f32.mrb[0].mxu0
        %v4102 = vadd.f32 0.0, %v4101
        %v4103 = vpop.f32.mrb[0].mxu0
        %4104 = vmatprep.mubr.bf16.mxu0 0
        %4105 = vmatmul.mubr.bf16.gmra.mrb[0].mxu0 %v3952
        %v4106 = vpop.f32.mrb[0].mxu0
        %v4107 = vadd.f32 0.0, %v4106
        %v4108 = vpop.f32.mrb[0].mxu0
        %v4109 = vpop.f32.mrb[0].mxu0
        %v4110 = vadd.f32 0.0, %v4109
        %v4111 = vpop.f32.mrb[0].mxu0
        %4112 = vmatprep.mubr.bf16.mxu0 0
        %4113 = vmatmul.mubr.bf16.gmra.mrb[0].mxu0 %v3955
        %v4114 = vpop.f32.mrb[0].mxu0
        %v4115 = vadd.f32 0.0, %v4114
        %v4116 = vpop.f32.mrb[0].mxu0
        %v4117 = vpop.f32.mrb[0].mxu0
        %v4118 = vadd.f32 0.0, %v4117
        %v4119 = vpop.f32.mrb[0].mxu0
        %4120 = vdwg.mxu0
        %v4121 = vadd.f32 %v3827, %v3995
        %v4122 = vadd.f32 %v3828, %v3998
        %v4123 = vadd.f32 %v3829, %v4003
        %v4124 = vadd.f32 %v3830, %v4006
        %v4125 = vadd.f32 %v3831, %v4011
        %v4126 = vadd.f32 %v3832, %v4014
        %v4127 = vadd.f32 %v3833, %v4019
        %v4128 = vadd.f32 %v3834, %v4022
        %v4129 = vadd.f32 %v3835, %v4027
        %v4130 = vadd.f32 %v3836, %v4030
        %v4131 = vadd.f32 %v3837, %v4035
        %v4132 = vadd.f32 %v3838, %v4038
        %v4133 = vadd.f32 %v3839, %v4043
        %v4134 = vadd.f32 %v3840, %v4046
        %v4135 = vadd.f32 %v3841, %v4051
        %v4136 = vadd.f32 %v3842, %v4054
        %v4137 = vadd.f32 %v3843, %v4059
        %v4138 = vadd.f32 %v3844, %v4062
        %v4139 = vadd.f32 %v3845, %v4067
        %v4140 = vadd.f32 %v3846, %v4070
        %v4141 = vadd.f32 %v3847, %v4075
        %v4142 = vadd.f32 %v3848, %v4078
        %v4143 = vadd.f32 %v3849, %v4083
        %v4144 = vadd.f32 %v3850, %v4086
        %v4145 = vadd.f32 %v3851, %v4091
        %v4146 = vadd.f32 %v3852, %v4094
        %v4147 = vadd.f32 %v3853, %v4099
        %v4148 = vadd.f32 %v3854, %v4102
        %v4149 = vadd.f32 %v3855, %v4107
        %v4150 = vadd.f32 %v3856, %v4110
        %v4151 = vadd.f32 %v3857, %v4115
        %v4152 = vadd.f32 %v3858, %v4118
        %v4153 = vld [vmem:[%s3008 + $0x8] sm:$0xff]
        %v4154 = vld [vmem:[%s3008 + $0x10] sm:$0xff]
        %v4155 = vld [vmem:[%s3008 + $0x28] sm:$0xff]
        %v4156 = vld [vmem:[%s3008 + $0x30] sm:$0xff]
        %v4157 = vld [vmem:[%s3008 + $0x48] sm:$0xff]
        %v4158 = vld [vmem:[%s3008 + $0x50] sm:$0xff]
        %v4159 = vld [vmem:[%s3008 + $0x68] sm:$0xff]
        %v4160 = vld [vmem:[%s3008 + $0x70] sm:$0xff]
        %v4161 = vld [vmem:[%s3008 + $0x88] sm:$0xff]
        %v4162 = vld [vmem:[%s3008 + $0x90] sm:$0xff]
        %v4163 = vld [vmem:[%s3008 + $0xa8] sm:$0xff]
        %v4164 = vld [vmem:[%s3008 + $0xb0] sm:$0xff]
        %v4165 = vld [vmem:[%s3008 + $0xc8] sm:$0xff]
        %v4166 = vld [vmem:[%s3008 + $0xd0] sm:$0xff]
        %v4167 = vld [vmem:[%s3008 + $0xe8] sm:$0xff]
        %v4168 = vld [vmem:[%s3008 + $0xf0] sm:$0xff]
        %v4169 = vld [vmem:[%s3008 + $0x108] sm:$0xff]
        %v4170 = vld [vmem:[%s3008 + $0x110] sm:$0xff]
        %v4171 = vld [vmem:[%s3008 + $0x128] sm:$0xff]
        %v4172 = vld [vmem:[%s3008 + $0x130] sm:$0xff]
        %v4173 = vld [vmem:[%s3008 + $0x148] sm:$0xff]
        %v4174 = vld [vmem:[%s3008 + $0x150] sm:$0xff]
        %v4175 = vld [vmem:[%s3008 + $0x168] sm:$0xff]
        %v4176 = vld [vmem:[%s3008 + $0x170] sm:$0xff]
        %v4177 = vld [vmem:[%s3008 + $0x188] sm:$0xff]
        %v4178 = vld [vmem:[%s3008 + $0x190] sm:$0xff]
        %v4179 = vld [vmem:[%s3008 + $0x1a8] sm:$0xff]
        %v4180 = vld [vmem:[%s3008 + $0x1b0] sm:$0xff]
        %v4181 = vld [vmem:[%s3008 + $0x1c8] sm:$0xff]
        %v4182 = vld [vmem:[%s3008 + $0x1d0] sm:$0xff]
        %v4183 = vld [vmem:[%s3008 + $0x1e8] sm:$0xff]
        %v4184 = vld [vmem:[%s3008 + $0x1f0] sm:$0xff]
        %v4185 = vpack.c.bf16 %v4154, %v4153
        %v4186 = vpack.c.bf16 %v4156, %v4155
        %v4187 = vpack.c.bf16 %v4158, %v4157
        %v4188 = vpack.c.bf16 %v4160, %v4159
        %v4189 = vpack.c.bf16 %v4162, %v4161
        %v4190 = vpack.c.bf16 %v4164, %v4163
        %v4191 = vpack.c.bf16 %v4166, %v4165
        %v4192 = vpack.c.bf16 %v4168, %v4167
        %v4193 = vpack.c.bf16 %v4170, %v4169
        %v4194 = vpack.c.bf16 %v4172, %v4171
        %v4195 = vpack.c.bf16 %v4174, %v4173
        %v4196 = vpack.c.bf16 %v4176, %v4175
        %v4197 = vpack.c.bf16 %v4178, %v4177
        %v4198 = vpack.c.bf16 %v4180, %v4179
        %v4199 = vpack.c.bf16 %v4182, %v4181
        %v4200 = vpack.c.bf16 %v4184, %v4183
        %s4201 = scalar_lea.vmem %s3, 16
        %v4202 = vld [vmem:[%s4201] sm:$0xf]
        %v4204 = vsel %vm2934, %v4185, 0
        %v4207 = vsel %vm2934, %v4186, 0
        %v4210 = vsel %vm2934, %v4187, 0
        %v4213 = vsel %vm2934, %v4188, 0
        %v4216 = vsel %vm2934, %v4189, 0
        %v4219 = vsel %vm2934, %v4190, 0
        %v4222 = vsel %vm2934, %v4191, 0
        %v4225 = vsel %vm2934, %v4192, 0
        %v4228 = vsel %vm2934, %v4193, 0
        %v4231 = vsel %vm2934, %v4194, 0
        %v4234 = vsel %vm2934, %v4195, 0
        %v4237 = vsel %vm2934, %v4196, 0
        %v4240 = vsel %vm2934, %v4197, 0
        %v4243 = vsel %vm2934, %v4198, 0
        %v4246 = vsel %vm2934, %v4199, 0
        %v4249 = vsel %vm2934, %v4200, 0
        %v4252 = vsel %vm3188, %v4202, 0
        %4254 = vmatprep.subr.bf16.mxu0 0
        %4255 = vmatpush1.bf16.msra.mxu0 %v4252
        %4256 = vmatprep.subr.bf16.mxu0 0
        %4257 = vmatpush1.bf16.msra.mxu0 0
        %4258 = vmatprep.subr.bf16.mxu0 0
        %4259 = vmatpush1.bf16.msra.mxu0 0
        %4260 = vmatprep.subr.bf16.mxu0 0
        %4261 = vmatpush1.bf16.msra.mxu0 0
        %4262 = vmatprep.subr.bf16.mxu0 0
        %4263 = vmatpush1.bf16.msra.mxu0 0
        %4264 = vmatprep.subr.bf16.mxu0 0
        %4265 = vmatpush1.bf16.msra.mxu0 0
        %4266 = vmatprep.subr.bf16.mxu0 0
        %4267 = vmatpush1.bf16.msra.mxu0 0
        %4268 = vmatprep.subr.bf16.mxu0 0
        %4269 = vmatpush1.bf16.msra.mxu0 0
        %4270 = vmatprep.subr.bf16.mxu0 0
        %4271 = vmatpush1.bf16.msra.mxu0 0
        %4272 = vmatprep.subr.bf16.mxu0 0
        %4273 = vmatpush1.bf16.msra.mxu0 0
        %4274 = vmatprep.subr.bf16.mxu0 0
        %4275 = vmatpush1.bf16.msra.mxu0 0
        %4276 = vmatprep.subr.bf16.mxu0 0
        %4277 = vmatpush1.bf16.msra.mxu0 0
        %4278 = vmatprep.subr.bf16.mxu0 0
        %4279 = vmatpush1.bf16.msra.mxu0 0
        %4280 = vmatprep.subr.bf16.mxu0 0
        %4281 = vmatpush1.bf16.msra.mxu0 0
        %4282 = vmatprep.subr.bf16.mxu0 0
        %4283 = vmatpush1.bf16.msra.mxu0 0
        %4284 = vmatprep.subr.bf16.mxu0 0
        %4285 = vmatpush1.bf16.msra.mxu0 0
        %4286 = vmatprep.mubr.bf16.mxu0 0
        %4287 = vmatmul.mubr.bf16.gmra.mrb[0].mxu0 %v4204
        %v4288 = vpop.f32.mrb[0].mxu0
        %v4289 = vadd.f32 0.0, %v4288
        %v4290 = vpop.f32.mrb[0].mxu0
        %v4291 = vpop.f32.mrb[0].mxu0
        %v4292 = vadd.f32 0.0, %v4291
        %v4293 = vpop.f32.mrb[0].mxu0
        %4294 = vmatprep.mubr.bf16.mxu0 0
        %4295 = vmatmul.mubr.bf16.gmra.mrb[0].mxu0 %v4207
        %v4296 = vpop.f32.mrb[0].mxu0
        %v4297 = vadd.f32 0.0, %v4296
        %v4298 = vpop.f32.mrb[0].mxu0
        %v4299 = vpop.f32.mrb[0].mxu0
        %v4300 = vadd.f32 0.0, %v4299
        %v4301 = vpop.f32.mrb[0].mxu0
        %4302 = vmatprep.mubr.bf16.mxu0 0
        %4303 = vmatmul.mubr.bf16.gmra.mrb[0].mxu0 %v4210
        %v4304 = vpop.f32.mrb[0].mxu0
        %v4305 = vadd.f32 0.0, %v4304
        %v4306 = vpop.f32.mrb[0].mxu0
        %v4307 = vpop.f32.mrb[0].mxu0
        %v4308 = vadd.f32 0.0, %v4307
        %v4309 = vpop.f32.mrb[0].mxu0
        %4310 = vmatprep.mubr.bf16.mxu0 0
        %4311 = vmatmul.mubr.bf16.gmra.mrb[0].mxu0 %v4213
        %v4312 = vpop.f32.mrb[0].mxu0
        %v4313 = vadd.f32 0.0, %v4312
        %v4314 = vpop.f32.mrb[0].mxu0
        %v4315 = vpop.f32.mrb[0].mxu0
        %v4316 = vadd.f32 0.0, %v4315
        %v4317 = vpop.f32.mrb[0].mxu0
        %4318 = vmatprep.mubr.bf16.mxu0 0
        %4319 = vmatmul.mubr.bf16.gmra.mrb[0].mxu0 %v4216
        %v4320 = vpop.f32.mrb[0].mxu0
        %v4321 = vadd.f32 0.0, %v4320
        %v4322 = vpop.f32.mrb[0].mxu0
        %v4323 = vpop.f32.mrb[0].mxu0
        %v4324 = vadd.f32 0.0, %v4323
        %v4325 = vpop.f32.mrb[0].mxu0
        %4326 = vmatprep.mubr.bf16.mxu0 0
        %4327 = vmatmul.mubr.bf16.gmra.mrb[0].mxu0 %v4219
        %v4328 = vpop.f32.mrb[0].mxu0
        %v4329 = vadd.f32 0.0, %v4328
        %v4330 = vpop.f32.mrb[0].mxu0
        %v4331 = vpop.f32.mrb[0].mxu0
        %v4332 = vadd.f32 0.0, %v4331
        %v4333 = vpop.f32.mrb[0].mxu0
        %4334 = vmatprep.mubr.bf16.mxu0 0
        %4335 = vmatmul.mubr.bf16.gmra.mrb[0].mxu0 %v4222
        %v4336 = vpop.f32.mrb[0].mxu0
        %v4337 = vadd.f32 0.0, %v4336
        %v4338 = vpop.f32.mrb[0].mxu0
        %v4339 = vpop.f32.mrb[0].mxu0
        %v4340 = vadd.f32 0.0, %v4339
        %v4341 = vpop.f32.mrb[0].mxu0
        %4342 = vmatprep.mubr.bf16.mxu0 0
        %4343 = vmatmul.mubr.bf16.gmra.mrb[0].mxu0 %v4225
        %v4344 = vpop.f32.mrb[0].mxu0
        %v4345 = vadd.f32 0.0, %v4344
        %v4346 = vpop.f32.mrb[0].mxu0
        %v4347 = vpop.f32.mrb[0].mxu0
        %v4348 = vadd.f32 0.0, %v4347
        %v4349 = vpop.f32.mrb[0].mxu0
        %4350 = vmatprep.mubr.bf16.mxu0 0
        %4351 = vmatmul.mubr.bf16.gmra.mrb[0].mxu0 %v4228
        %v4352 = vpop.f32.mrb[0].mxu0
        %v4353 = vadd.f32 0.0, %v4352
        %v4354 = vpop.f32.mrb[0].mxu0
        %v4355 = vpop.f32.mrb[0].mxu0
        %v4356 = vadd.f32 0.0, %v4355
        %v4357 = vpop.f32.mrb[0].mxu0
        %4358 = vmatprep.mubr.bf16.mxu0 0
        %4359 = vmatmul.mubr.bf16.gmra.mrb[0].mxu0 %v4231
        %v4360 = vpop.f32.mrb[0].mxu0
        %v4361 = vadd.f32 0.0, %v4360
        %v4362 = vpop.f32.mrb[0].mxu0
        %v4363 = vpop.f32.mrb[0].mxu0
        %v4364 = vadd.f32 0.0, %v4363
        %v4365 = vpop.f32.mrb[0].mxu0
        %4366 = vmatprep.mubr.bf16.mxu0 0
        %4367 = vmatmul.mubr.bf16.gmra.mrb[0].mxu0 %v4234
        %v4368 = vpop.f32.mrb[0].mxu0
        %v4369 = vadd.f32 0.0, %v4368
        %v4370 = vpop.f32.mrb[0].mxu0
        %v4371 = vpop.f32.mrb[0].mxu0
        %v4372 = vadd.f32 0.0, %v4371
        %v4373 = vpop.f32.mrb[0].mxu0
        %4374 = vmatprep.mubr.bf16.mxu0 0
        %4375 = vmatmul.mubr.bf16.gmra.mrb[0].mxu0 %v4237
        %v4376 = vpop.f32.mrb[0].mxu0
        %v4377 = vadd.f32 0.0, %v4376
        %v4378 = vpop.f32.mrb[0].mxu0
        %v4379 = vpop.f32.mrb[0].mxu0
        %v4380 = vadd.f32 0.0, %v4379
        %v4381 = vpop.f32.mrb[0].mxu0
        %4382 = vmatprep.mubr.bf16.mxu0 0
        %4383 = vmatmul.mubr.bf16.gmra.mrb[0].mxu0 %v4240
        %v4384 = vpop.f32.mrb[0].mxu0
        %v4385 = vadd.f32 0.0, %v4384
        %v4386 = vpop.f32.mrb[0].mxu0
        %v4387 = vpop.f32.mrb[0].mxu0
        %v4388 = vadd.f32 0.0, %v4387
        %v4389 = vpop.f32.mrb[0].mxu0
        %4390 = vmatprep.mubr.bf16.mxu0 0
        %4391 = vmatmul.mubr.bf16.gmra.mrb[0].mxu0 %v4243
        %v4392 = vpop.f32.mrb[0].mxu0
        %v4393 = vadd.f32 0.0, %v4392
        %v4394 = vpop.f32.mrb[0].mxu0
        %v4395 = vpop.f32.mrb[0].mxu0
        %v4396 = vadd.f32 0.0, %v4395
        %v4397 = vpop.f32.mrb[0].mxu0
        %4398 = vmatprep.mubr.bf16.mxu0 0
        %4399 = vmatmul.mubr.bf16.gmra.mrb[0].mxu0 %v4246
        %v4400 = vpop.f32.mrb[0].mxu0
        %v4401 = vadd.f32 0.0, %v4400
        %v4402 = vpop.f32.mrb[0].mxu0
        %v4403 = vpop.f32.mrb[0].mxu0
        %v4404 = vadd.f32 0.0, %v4403
        %v4405 = vpop.f32.mrb[0].mxu0
        %4406 = vmatprep.mubr.bf16.mxu0 0
        %4407 = vmatmul.mubr.bf16.gmra.mrb[0].mxu0 %v4249
        %v4408 = vpop.f32.mrb[0].mxu0
        %v4409 = vadd.f32 0.0, %v4408
        %v4410 = vpop.f32.mrb[0].mxu0
        %v4411 = vpop.f32.mrb[0].mxu0
        %v4412 = vadd.f32 0.0, %v4411
        %v4413 = vpop.f32.mrb[0].mxu0
        %4414 = vdwg.mxu0
        %v4415 = vadd.f32 %v4121, %v4289
        %v4416 = vadd.f32 %v4122, %v4292
        %v4417 = vadd.f32 %v4123, %v4297
        %v4418 = vadd.f32 %v4124, %v4300
        %v4419 = vadd.f32 %v4125, %v4305
        %v4420 = vadd.f32 %v4126, %v4308
        %v4421 = vadd.f32 %v4127, %v4313
        %v4422 = vadd.f32 %v4128, %v4316
        %v4423 = vadd.f32 %v4129, %v4321
        %v4424 = vadd.f32 %v4130, %v4324
        %v4425 = vadd.f32 %v4131, %v4329
        %v4426 = vadd.f32 %v4132, %v4332
        %v4427 = vadd.f32 %v4133, %v4337
        %v4428 = vadd.f32 %v4134, %v4340
        %v4429 = vadd.f32 %v4135, %v4345
        %v4430 = vadd.f32 %v4136, %v4348
        %v4431 = vadd.f32 %v4137, %v4353
        %v4432 = vadd.f32 %v4138, %v4356
        %v4433 = vadd.f32 %v4139, %v4361
        %v4434 = vadd.f32 %v4140, %v4364
        %v4435 = vadd.f32 %v4141, %v4369
        %v4436 = vadd.f32 %v4142, %v4372
        %v4437 = vadd.f32 %v4143, %v4377
        %v4438 = vadd.f32 %v4144, %v4380
        %v4439 = vadd.f32 %v4145, %v4385
        %v4440 = vadd.f32 %v4146, %v4388
        %v4441 = vadd.f32 %v4147, %v4393
        %v4442 = vadd.f32 %v4148, %v4396
        %v4443 = vadd.f32 %v4149, %v4401
        %v4444 = vadd.f32 %v4150, %v4404
        %v4445 = vadd.f32 %v4151, %v4409
        %v4446 = vadd.f32 %v4152, %v4412
        %v4447 = vld [vmem:[%s3008 + $0x9] sm:$0xff]
        %v4448 = vld [vmem:[%s3008 + $0x11] sm:$0xff]
        %v4449 = vld [vmem:[%s3008 + $0x29] sm:$0xff]
        %v4450 = vld [vmem:[%s3008 + $0x31] sm:$0xff]
        %v4451 = vld [vmem:[%s3008 + $0x49] sm:$0xff]
        %v4452 = vld [vmem:[%s3008 + $0x51] sm:$0xff]
        %v4453 = vld [vmem:[%s3008 + $0x69] sm:$0xff]
        %v4454 = vld [vmem:[%s3008 + $0x71] sm:$0xff]
        %v4455 = vld [vmem:[%s3008 + $0x89] sm:$0xff]
        %v4456 = vld [vmem:[%s3008 + $0x91] sm:$0xff]
        %v4457 = vld [vmem:[%s3008 + $0xa9] sm:$0xff]
        %v4458 = vld [vmem:[%s3008 + $0xb1] sm:$0xff]
        %v4459 = vld [vmem:[%s3008 + $0xc9] sm:$0xff]
        %v4460 = vld [vmem:[%s3008 + $0xd1] sm:$0xff]
        %v4461 = vld [vmem:[%s3008 + $0xe9] sm:$0xff]
        %v4462 = vld [vmem:[%s3008 + $0xf1] sm:$0xff]
        %v4463 = vld [vmem:[%s3008 + $0x109] sm:$0xff]
        %v4464 = vld [vmem:[%s3008 + $0x111] sm:$0xff]
        %v4465 = vld [vmem:[%s3008 + $0x129] sm:$0xff]
        %v4466 = vld [vmem:[%s3008 + $0x131] sm:$0xff]
        %v4467 = vld [vmem:[%s3008 + $0x149] sm:$0xff]
        %v4468 = vld [vmem:[%s3008 + $0x151] sm:$0xff]
        %v4469 = vld [vmem:[%s3008 + $0x169] sm:$0xff]
        %v4470 = vld [vmem:[%s3008 + $0x171] sm:$0xff]
        %v4471 = vld [vmem:[%s3008 + $0x189] sm:$0xff]
        %v4472 = vld [vmem:[%s3008 + $0x191] sm:$0xff]
        %v4473 = vld [vmem:[%s3008 + $0x1a9] sm:$0xff]
        %v4474 = vld [vmem:[%s3008 + $0x1b1] sm:$0xff]
        %v4475 = vld [vmem:[%s3008 + $0x1c9] sm:$0xff]
        %v4476 = vld [vmem:[%s3008 + $0x1d1] sm:$0xff]
        %v4477 = vld [vmem:[%s3008 + $0x1e9] sm:$0xff]
        %v4478 = vld [vmem:[%s3008 + $0x1f1] sm:$0xff]
        %v4479 = vpack.c.bf16 %v4448, %v4447
        %v4480 = vpack.c.bf16 %v4450, %v4449
        %v4481 = vpack.c.bf16 %v4452, %v4451
        %v4482 = vpack.c.bf16 %v4454, %v4453
        %v4483 = vpack.c.bf16 %v4456, %v4455
        %v4484 = vpack.c.bf16 %v4458, %v4457
        %v4485 = vpack.c.bf16 %v4460, %v4459
        %v4486 = vpack.c.bf16 %v4462, %v4461
        %v4487 = vpack.c.bf16 %v4464, %v4463
        %v4488 = vpack.c.bf16 %v4466, %v4465
        %v4489 = vpack.c.bf16 %v4468, %v4467
        %v4490 = vpack.c.bf16 %v4470, %v4469
        %v4491 = vpack.c.bf16 %v4472, %v4471
        %v4492 = vpack.c.bf16 %v4474, %v4473
        %v4493 = vpack.c.bf16 %v4476, %v4475
        %v4494 = vpack.c.bf16 %v4478, %v4477
        %s4495 = scalar_lea.vmem %s3, 20
        %v4496 = vld [vmem:[%s4495] sm:$0xf]
        %v4498 = vsel %vm2934, %v4479, 0
        %v4501 = vsel %vm2934, %v4480, 0
        %v4504 = vsel %vm2934, %v4481, 0
        %v4507 = vsel %vm2934, %v4482, 0
        %v4510 = vsel %vm2934, %v4483, 0
        %v4513 = vsel %vm2934, %v4484, 0
        %v4516 = vsel %vm2934, %v4485, 0
        %v4519 = vsel %vm2934, %v4486, 0
        %v4522 = vsel %vm2934, %v4487, 0
        %v4525 = vsel %vm2934, %v4488, 0
        %v4528 = vsel %vm2934, %v4489, 0
        %v4531 = vsel %vm2934, %v4490, 0
        %v4534 = vsel %vm2934, %v4491, 0
        %v4537 = vsel %vm2934, %v4492, 0
        %v4540 = vsel %vm2934, %v4493, 0
        %v4543 = vsel %vm2934, %v4494, 0
        %v4546 = vsel %vm3188, %v4496, 0
        %4548 = vmatprep.subr.bf16.mxu0 0
        %4549 = vmatpush1.bf16.msra.mxu0 %v4546
        %4550 = vmatprep.subr.bf16.mxu0 0
        %4551 = vmatpush1.bf16.msra.mxu0 0
        %4552 = vmatprep.subr.bf16.mxu0 0
        %4553 = vmatpush1.bf16.msra.mxu0 0
        %4554 = vmatprep.subr.bf16.mxu0 0
        %4555 = vmatpush1.bf16.msra.mxu0 0
        %4556 = vmatprep.subr.bf16.mxu0 0
        %4557 = vmatpush1.bf16.msra.mxu0 0
        %4558 = vmatprep.subr.bf16.mxu0 0
        %4559 = vmatpush1.bf16.msra.mxu0 0
        %4560 = vmatprep.subr.bf16.mxu0 0
        %4561 = vmatpush1.bf16.msra.mxu0 0
        %4562 = vmatprep.subr.bf16.mxu0 0
        %4563 = vmatpush1.bf16.msra.mxu0 0
        %4564 = vmatprep.subr.bf16.mxu0 0
        %4565 = vmatpush1.bf16.msra.mxu0 0
        %4566 = vmatprep.subr.bf16.mxu0 0
        %4567 = vmatpush1.bf16.msra.mxu0 0
        %4568 = vmatprep.subr.bf16.mxu0 0
        %4569 = vmatpush1.bf16.msra.mxu0 0
        %4570 = vmatprep.subr.bf16.mxu0 0
        %4571 = vmatpush1.bf16.msra.mxu0 0
        %4572 = vmatprep.subr.bf16.mxu0 0
        %4573 = vmatpush1.bf16.msra.mxu0 0
        %4574 = vmatprep.subr.bf16.mxu0 0
        %4575 = vmatpush1.bf16.msra.mxu0 0
        %4576 = vmatprep.subr.bf16.mxu0 0
        %4577 = vmatpush1.bf16.msra.mxu0 0
        %4578 = vmatprep.subr.bf16.mxu0 0
        %4579 = vmatpush1.bf16.msra.mxu0 0
        %4580 = vmatprep.mubr.bf16.mxu0 0
        %4581 = vmatmul.mubr.bf16.gmra.mrb[0].mxu0 %v4498
        %v4582 = vpop.f32.mrb[0].mxu0
        %v4583 = vadd.f32 0.0, %v4582
        %v4584 = vpop.f32.mrb[0].mxu0
        %v4585 = vpop.f32.mrb[0].mxu0
        %v4586 = vadd.f32 0.0, %v4585
        %v4587 = vpop.f32.mrb[0].mxu0
        %4588 = vmatprep.mubr.bf16.mxu0 0
        %4589 = vmatmul.mubr.bf16.gmra.mrb[0].mxu0 %v4501
        %v4590 = vpop.f32.mrb[0].mxu0
        %v4591 = vadd.f32 0.0, %v4590
        %v4592 = vpop.f32.mrb[0].mxu0
        %v4593 = vpop.f32.mrb[0].mxu0
        %v4594 = vadd.f32 0.0, %v4593
        %v4595 = vpop.f32.mrb[0].mxu0
        %4596 = vmatprep.mubr.bf16.mxu0 0
        %4597 = vmatmul.mubr.bf16.gmra.mrb[0].mxu0 %v4504
        %v4598 = vpop.f32.mrb[0].mxu0
        %v4599 = vadd.f32 0.0, %v4598
        %v4600 = vpop.f32.mrb[0].mxu0
        %v4601 = vpop.f32.mrb[0].mxu0
        %v4602 = vadd.f32 0.0, %v4601
        %v4603 = vpop.f32.mrb[0].mxu0
        %4604 = vmatprep.mubr.bf16.mxu0 0
        %4605 = vmatmul.mubr.bf16.gmra.mrb[0].mxu0 %v4507
        %v4606 = vpop.f32.mrb[0].mxu0
        %v4607 = vadd.f32 0.0, %v4606
        %v4608 = vpop.f32.mrb[0].mxu0
        %v4609 = vpop.f32.mrb[0].mxu0
        %v4610 = vadd.f32 0.0, %v4609
        %v4611 = vpop.f32.mrb[0].mxu0
        %4612 = vmatprep.mubr.bf16.mxu0 0
        %4613 = vmatmul.mubr.bf16.gmra.mrb[0].mxu0 %v4510
        %v4614 = vpop.f32.mrb[0].mxu0
        %v4615 = vadd.f32 0.0, %v4614
        %v4616 = vpop.f32.mrb[0].mxu0
        %v4617 = vpop.f32.mrb[0].mxu0
        %v4618 = vadd.f32 0.0, %v4617
        %v4619 = vpop.f32.mrb[0].mxu0
        %4620 = vmatprep.mubr.bf16.mxu0 0
        %4621 = vmatmul.mubr.bf16.gmra.mrb[0].mxu0 %v4513
        %v4622 = vpop.f32.mrb[0].mxu0
        %v4623 = vadd.f32 0.0, %v4622
        %v4624 = vpop.f32.mrb[0].mxu0
        %v4625 = vpop.f32.mrb[0].mxu0
        %v4626 = vadd.f32 0.0, %v4625
        %v4627 = vpop.f32.mrb[0].mxu0
        %4628 = vmatprep.mubr.bf16.mxu0 0
        %4629 = vmatmul.mubr.bf16.gmra.mrb[0].mxu0 %v4516
        %v4630 = vpop.f32.mrb[0].mxu0
        %v4631 = vadd.f32 0.0, %v4630
        %v4632 = vpop.f32.mrb[0].mxu0
        %v4633 = vpop.f32.mrb[0].mxu0
        %v4634 = vadd.f32 0.0, %v4633
        %v4635 = vpop.f32.mrb[0].mxu0
        %4636 = vmatprep.mubr.bf16.mxu0 0
        %4637 = vmatmul.mubr.bf16.gmra.mrb[0].mxu0 %v4519
        %v4638 = vpop.f32.mrb[0].mxu0
        %v4639 = vadd.f32 0.0, %v4638
        %v4640 = vpop.f32.mrb[0].mxu0
        %v4641 = vpop.f32.mrb[0].mxu0
        %v4642 = vadd.f32 0.0, %v4641
        %v4643 = vpop.f32.mrb[0].mxu0
        %4644 = vmatprep.mubr.bf16.mxu0 0
        %4645 = vmatmul.mubr.bf16.gmra.mrb[0].mxu0 %v4522
        %v4646 = vpop.f32.mrb[0].mxu0
        %v4647 = vadd.f32 0.0, %v4646
        %v4648 = vpop.f32.mrb[0].mxu0
        %v4649 = vpop.f32.mrb[0].mxu0
        %v4650 = vadd.f32 0.0, %v4649
        %v4651 = vpop.f32.mrb[0].mxu0
        %4652 = vmatprep.mubr.bf16.mxu0 0
        %4653 = vmatmul.mubr.bf16.gmra.mrb[0].mxu0 %v4525
        %v4654 = vpop.f32.mrb[0].mxu0
        %v4655 = vadd.f32 0.0, %v4654
        %v4656 = vpop.f32.mrb[0].mxu0
        %v4657 = vpop.f32.mrb[0].mxu0
        %v4658 = vadd.f32 0.0, %v4657
        %v4659 = vpop.f32.mrb[0].mxu0
        %4660 = vmatprep.mubr.bf16.mxu0 0
        %4661 = vmatmul.mubr.bf16.gmra.mrb[0].mxu0 %v4528
        %v4662 = vpop.f32.mrb[0].mxu0
        %v4663 = vadd.f32 0.0, %v4662
        %v4664 = vpop.f32.mrb[0].mxu0
        %v4665 = vpop.f32.mrb[0].mxu0
        %v4666 = vadd.f32 0.0, %v4665
        %v4667 = vpop.f32.mrb[0].mxu0
        %4668 = vmatprep.mubr.bf16.mxu0 0
        %4669 = vmatmul.mubr.bf16.gmra.mrb[0].mxu0 %v4531
        %v4670 = vpop.f32.mrb[0].mxu0
        %v4671 = vadd.f32 0.0, %v4670
        %v4672 = vpop.f32.mrb[0].mxu0
        %v4673 = vpop.f32.mrb[0].mxu0
        %v4674 = vadd.f32 0.0, %v4673
        %v4675 = vpop.f32.mrb[0].mxu0
        %4676 = vmatprep.mubr.bf16.mxu0 0
        %4677 = vmatmul.mubr.bf16.gmra.mrb[0].mxu0 %v4534
        %v4678 = vpop.f32.mrb[0].mxu0
        %v4679 = vadd.f32 0.0, %v4678
        %v4680 = vpop.f32.mrb[0].mxu0
        %v4681 = vpop.f32.mrb[0].mxu0
        %v4682 = vadd.f32 0.0, %v4681
        %v4683 = vpop.f32.mrb[0].mxu0
        %4684 = vmatprep.mubr.bf16.mxu0 0
        %4685 = vmatmul.mubr.bf16.gmra.mrb[0].mxu0 %v4537
        %v4686 = vpop.f32.mrb[0].mxu0
        %v4687 = vadd.f32 0.0, %v4686
        %v4688 = vpop.f32.mrb[0].mxu0
        %v4689 = vpop.f32.mrb[0].mxu0
        %v4690 = vadd.f32 0.0, %v4689
        %v4691 = vpop.f32.mrb[0].mxu0
        %4692 = vmatprep.mubr.bf16.mxu0 0
        %4693 = vmatmul.mubr.bf16.gmra.mrb[0].mxu0 %v4540
        %v4694 = vpop.f32.mrb[0].mxu0
        %v4695 = vadd.f32 0.0, %v4694
        %v4696 = vpop.f32.mrb[0].mxu0
        %v4697 = vpop.f32.mrb[0].mxu0
        %v4698 = vadd.f32 0.0, %v4697
        %v4699 = vpop.f32.mrb[0].mxu0
        %4700 = vmatprep.mubr.bf16.mxu0 0
        %4701 = vmatmul.mubr.bf16.gmra.mrb[0].mxu0 %v4543
        %v4702 = vpop.f32.mrb[0].mxu0
        %v4703 = vadd.f32 0.0, %v4702
        %v4704 = vpop.f32.mrb[0].mxu0
        %v4705 = vpop.f32.mrb[0].mxu0
        %v4706 = vadd.f32 0.0, %v4705
        %v4707 = vpop.f32.mrb[0].mxu0
        %4708 = vdwg.mxu0
        %v4709 = vadd.f32 %v4415, %v4583
        %v4710 = vadd.f32 %v4416, %v4586
        %v4711 = vadd.f32 %v4417, %v4591
        %v4712 = vadd.f32 %v4418, %v4594
        %v4713 = vadd.f32 %v4419, %v4599
        %v4714 = vadd.f32 %v4420, %v4602
        %v4715 = vadd.f32 %v4421, %v4607
        %v4716 = vadd.f32 %v4422, %v4610
        %v4717 = vadd.f32 %v4423, %v4615
        %v4718 = vadd.f32 %v4424, %v4618
        %v4719 = vadd.f32 %v4425, %v4623
        %v4720 = vadd.f32 %v4426, %v4626
        %v4721 = vadd.f32 %v4427, %v4631
        %v4722 = vadd.f32 %v4428, %v4634
        %v4723 = vadd.f32 %v4429, %v4639
        %v4724 = vadd.f32 %v4430, %v4642
        %v4725 = vadd.f32 %v4431, %v4647
        %v4726 = vadd.f32 %v4432, %v4650
        %v4727 = vadd.f32 %v4433, %v4655
        %v4728 = vadd.f32 %v4434, %v4658
        %v4729 = vadd.f32 %v4435, %v4663
        %v4730 = vadd.f32 %v4436, %v4666
        %v4731 = vadd.f32 %v4437, %v4671
        %v4732 = vadd.f32 %v4438, %v4674
        %v4733 = vadd.f32 %v4439, %v4679
        %v4734 = vadd.f32 %v4440, %v4682
        %v4735 = vadd.f32 %v4441, %v4687
        %v4736 = vadd.f32 %v4442, %v4690
        %v4737 = vadd.f32 %v4443, %v4695
        %v4738 = vadd.f32 %v4444, %v4698
        %v4739 = vadd.f32 %v4445, %v4703
        %v4740 = vadd.f32 %v4446, %v4706
        %s4741 = scalar_lea.vmem [#allocation2], 64
        %v4742 = vld [vmem:[%s4741 + $0x7] sm:$0xff]
        %v4743 = vld [vmem:[%s4741 + $0xf] sm:$0xff]
        %v4744 = vld [vmem:[%s4741 + $0x27] sm:$0xff]
        %v4745 = vld [vmem:[%s4741 + $0x2f] sm:$0xff]
        %v4746 = vld [vmem:[%s4741 + $0x47] sm:$0xff]
        %v4747 = vld [vmem:[%s4741 + $0x4f] sm:$0xff]
        %v4748 = vld [vmem:[%s4741 + $0x67] sm:$0xff]
        %v4749 = vld [vmem:[%s4741 + $0x6f] sm:$0xff]
        %v4750 = vld [vmem:[%s4741 + $0x87] sm:$0xff]
        %v4751 = vld [vmem:[%s4741 + $0x8f] sm:$0xff]
        %v4752 = vld [vmem:[%s4741 + $0xa7] sm:$0xff]
        %v4753 = vld [vmem:[%s4741 + $0xaf] sm:$0xff]
        %v4754 = vld [vmem:[%s4741 + $0xc7] sm:$0xff]
        %v4755 = vld [vmem:[%s4741 + $0xcf] sm:$0xff]
        %v4756 = vld [vmem:[%s4741 + $0xe7] sm:$0xff]
        %v4757 = vld [vmem:[%s4741 + $0xef] sm:$0xff]
        %v4758 = vld [vmem:[%s4741 + $0x107] sm:$0xff]
        %v4759 = vld [vmem:[%s4741 + $0x10f] sm:$0xff]
        %v4760 = vld [vmem:[%s4741 + $0x127] sm:$0xff]
        %v4761 = vld [vmem:[%s4741 + $0x12f] sm:$0xff]
        %v4762 = vld [vmem:[%s4741 + $0x147] sm:$0xff]
        %v4763 = vld [vmem:[%s4741 + $0x14f] sm:$0xff]
        %v4764 = vld [vmem:[%s4741 + $0x167] sm:$0xff]
        %v4765 = vld [vmem:[%s4741 + $0x16f] sm:$0xff]
        %v4766 = vld [vmem:[%s4741 + $0x187] sm:$0xff]
        %v4767 = vld [vmem:[%s4741 + $0x18f] sm:$0xff]
        %v4768 = vld [vmem:[%s4741 + $0x1a7] sm:$0xff]
        %v4769 = vld [vmem:[%s4741 + $0x1af] sm:$0xff]
        %v4770 = vld [vmem:[%s4741 + $0x1c7] sm:$0xff]
        %v4771 = vld [vmem:[%s4741 + $0x1cf] sm:$0xff]
        %v4772 = vld [vmem:[%s4741 + $0x1e7] sm:$0xff]
        %v4773 = vld [vmem:[%s4741 + $0x1ef] sm:$0xff]
        %v4774 = vpack.c.bf16 %v4743, %v4742
        %v4775 = vpack.c.bf16 %v4745, %v4744
        %v4776 = vpack.c.bf16 %v4747, %v4746
        %v4777 = vpack.c.bf16 %v4749, %v4748
        %v4778 = vpack.c.bf16 %v4751, %v4750
        %v4779 = vpack.c.bf16 %v4753, %v4752
        %v4780 = vpack.c.bf16 %v4755, %v4754
        %v4781 = vpack.c.bf16 %v4757, %v4756
        %v4782 = vpack.c.bf16 %v4759, %v4758
        %v4783 = vpack.c.bf16 %v4761, %v4760
        %v4784 = vpack.c.bf16 %v4763, %v4762
        %v4785 = vpack.c.bf16 %v4765, %v4764
        %v4786 = vpack.c.bf16 %v4767, %v4766
        %v4787 = vpack.c.bf16 %v4769, %v4768
        %v4788 = vpack.c.bf16 %v4771, %v4770
        %v4789 = vpack.c.bf16 %v4773, %v4772
        %s4790 = scalar_lea.vmem %s3, 24
        %v4791 = vld [vmem:[%s4790] sm:$0xf]
        %v4793 = vsel %vm2934, %v4774, 0
        %v4796 = vsel %vm2934, %v4775, 0
        %v4799 = vsel %vm2934, %v4776, 0
        %v4802 = vsel %vm2934, %v4777, 0
        %v4805 = vsel %vm2934, %v4778, 0
        %v4808 = vsel %vm2934, %v4779, 0
        %v4811 = vsel %vm2934, %v4780, 0
        %v4814 = vsel %vm2934, %v4781, 0
        %v4817 = vsel %vm2934, %v4782, 0
        %v4820 = vsel %vm2934, %v4783, 0
        %v4823 = vsel %vm2934, %v4784, 0
        %v4826 = vsel %vm2934, %v4785, 0
        %v4829 = vsel %vm2934, %v4786, 0
        %v4832 = vsel %vm2934, %v4787, 0
        %v4835 = vsel %vm2934, %v4788, 0
        %v4838 = vsel %vm2934, %v4789, 0
        %v4841 = vsel %vm3188, %v4791, 0
        %4843 = vmatprep.subr.bf16.mxu0 0
        %4844 = vmatpush1.bf16.msra.mxu0 %v4841
        %4845 = vmatprep.subr.bf16.mxu0 0
        %4846 = vmatpush1.bf16.msra.mxu0 0
        %4847 = vmatprep.subr.bf16.mxu0 0
        %4848 = vmatpush1.bf16.msra.mxu0 0
        %4849 = vmatprep.subr.bf16.mxu0 0
        %4850 = vmatpush1.bf16.msra.mxu0 0
        %4851 = vmatprep.subr.bf16.mxu0 0
        %4852 = vmatpush1.bf16.msra.mxu0 0
        %4853 = vmatprep.subr.bf16.mxu0 0
        %4854 = vmatpush1.bf16.msra.mxu0 0
        %4855 = vmatprep.subr.bf16.mxu0 0
        %4856 = vmatpush1.bf16.msra.mxu0 0
        %4857 = vmatprep.subr.bf16.mxu0 0
        %4858 = vmatpush1.bf16.msra.mxu0 0
        %4859 = vmatprep.subr.bf16.mxu0 0
        %4860 = vmatpush1.bf16.msra.mxu0 0
        %4861 = vmatprep.subr.bf16.mxu0 0
        %4862 = vmatpush1.bf16.msra.mxu0 0
        %4863 = vmatprep.subr.bf16.mxu0 0
        %4864 = vmatpush1.bf16.msra.mxu0 0
        %4865 = vmatprep.subr.bf16.mxu0 0
        %4866 = vmatpush1.bf16.msra.mxu0 0
        %4867 = vmatprep.subr.bf16.mxu0 0
        %4868 = vmatpush1.bf16.msra.mxu0 0
        %4869 = vmatprep.subr.bf16.mxu0 0
        %4870 = vmatpush1.bf16.msra.mxu0 0
        %4871 = vmatprep.subr.bf16.mxu0 0
        %4872 = vmatpush1.bf16.msra.mxu0 0
        %4873 = vmatprep.subr.bf16.mxu0 0
        %4874 = vmatpush1.bf16.msra.mxu0 0
        %4875 = vmatprep.mubr.bf16.mxu0 0
        %4876 = vmatmul.mubr.bf16.gmra.mrb[0].mxu0 %v4793
        %v4877 = vpop.f32.mrb[0].mxu0
        %v4878 = vadd.f32 0.0, %v4877
        %v4879 = vpop.f32.mrb[0].mxu0
        %v4880 = vpop.f32.mrb[0].mxu0
        %v4881 = vadd.f32 0.0, %v4880
        %v4882 = vpop.f32.mrb[0].mxu0
        %4883 = vmatprep.mubr.bf16.mxu0 0
        %4884 = vmatmul.mubr.bf16.gmra.mrb[0].mxu0 %v4796
        %v4885 = vpop.f32.mrb[0].mxu0
        %v4886 = vadd.f32 0.0, %v4885
        %v4887 = vpop.f32.mrb[0].mxu0
        %v4888 = vpop.f32.mrb[0].mxu0
        %v4889 = vadd.f32 0.0, %v4888
        %v4890 = vpop.f32.mrb[0].mxu0
        %4891 = vmatprep.mubr.bf16.mxu0 0
        %4892 = vmatmul.mubr.bf16.gmra.mrb[0].mxu0 %v4799
        %v4893 = vpop.f32.mrb[0].mxu0
        %v4894 = vadd.f32 0.0, %v4893
        %v4895 = vpop.f32.mrb[0].mxu0
        %v4896 = vpop.f32.mrb[0].mxu0
        %v4897 = vadd.f32 0.0, %v4896
        %v4898 = vpop.f32.mrb[0].mxu0
        %4899 = vmatprep.mubr.bf16.mxu0 0
        %4900 = vmatmul.mubr.bf16.gmra.mrb[0].mxu0 %v4802
        %v4901 = vpop.f32.mrb[0].mxu0
        %v4902 = vadd.f32 0.0, %v4901
        %v4903 = vpop.f32.mrb[0].mxu0
        %v4904 = vpop.f32.mrb[0].mxu0
        %v4905 = vadd.f32 0.0, %v4904
        %v4906 = vpop.f32.mrb[0].mxu0
        %4907 = vmatprep.mubr.bf16.mxu0 0
        %4908 = vmatmul.mubr.bf16.gmra.mrb[0].mxu0 %v4805
        %v4909 = vpop.f32.mrb[0].mxu0
        %v4910 = vadd.f32 0.0, %v4909
        %v4911 = vpop.f32.mrb[0].mxu0
        %v4912 = vpop.f32.mrb[0].mxu0
        %v4913 = vadd.f32 0.0, %v4912
        %v4914 = vpop.f32.mrb[0].mxu0
        %4915 = vmatprep.mubr.bf16.mxu0 0
        %4916 = vmatmul.mubr.bf16.gmra.mrb[0].mxu0 %v4808
        %v4917 = vpop.f32.mrb[0].mxu0
        %v4918 = vadd.f32 0.0, %v4917
        %v4919 = vpop.f32.mrb[0].mxu0
        %v4920 = vpop.f32.mrb[0].mxu0
        %v4921 = vadd.f32 0.0, %v4920
        %v4922 = vpop.f32.mrb[0].mxu0
        %4923 = vmatprep.mubr.bf16.mxu0 0
        %4924 = vmatmul.mubr.bf16.gmra.mrb[0].mxu0 %v4811
        %v4925 = vpop.f32.mrb[0].mxu0
        %v4926 = vadd.f32 0.0, %v4925
        %v4927 = vpop.f32.mrb[0].mxu0
        %v4928 = vpop.f32.mrb[0].mxu0
        %v4929 = vadd.f32 0.0, %v4928
        %v4930 = vpop.f32.mrb[0].mxu0
        %4931 = vmatprep.mubr.bf16.mxu0 0
        %4932 = vmatmul.mubr.bf16.gmra.mrb[0].mxu0 %v4814
        %v4933 = vpop.f32.mrb[0].mxu0
        %v4934 = vadd.f32 0.0, %v4933
        %v4935 = vpop.f32.mrb[0].mxu0
        %v4936 = vpop.f32.mrb[0].mxu0
        %v4937 = vadd.f32 0.0, %v4936
        %v4938 = vpop.f32.mrb[0].mxu0
        %4939 = vmatprep.mubr.bf16.mxu0 0
        %4940 = vmatmul.mubr.bf16.gmra.mrb[0].mxu0 %v4817
        %v4941 = vpop.f32.mrb[0].mxu0
        %v4942 = vadd.f32 0.0, %v4941
        %v4943 = vpop.f32.mrb[0].mxu0
        %v4944 = vpop.f32.mrb[0].mxu0
        %v4945 = vadd.f32 0.0, %v4944
        %v4946 = vpop.f32.mrb[0].mxu0
        %4947 = vmatprep.mubr.bf16.mxu0 0
        %4948 = vmatmul.mubr.bf16.gmra.mrb[0].mxu0 %v4820
        %v4949 = vpop.f32.mrb[0].mxu0
        %v4950 = vadd.f32 0.0, %v4949
        %v4951 = vpop.f32.mrb[0].mxu0
        %v4952 = vpop.f32.mrb[0].mxu0
        %v4953 = vadd.f32 0.0, %v4952
        %v4954 = vpop.f32.mrb[0].mxu0
        %4955 = vmatprep.mubr.bf16.mxu0 0
        %4956 = vmatmul.mubr.bf16.gmra.mrb[0].mxu0 %v4823
        %v4957 = vpop.f32.mrb[0].mxu0
        %v4958 = vadd.f32 0.0, %v4957
        %v4959 = vpop.f32.mrb[0].mxu0
        %v4960 = vpop.f32.mrb[0].mxu0
        %v4961 = vadd.f32 0.0, %v4960
        %v4962 = vpop.f32.mrb[0].mxu0
        %4963 = vmatprep.mubr.bf16.mxu0 0
        %4964 = vmatmul.mubr.bf16.gmra.mrb[0].mxu0 %v4826
        %v4965 = vpop.f32.mrb[0].mxu0
        %v4966 = vadd.f32 0.0, %v4965
        %v4967 = vpop.f32.mrb[0].mxu0
        %v4968 = vpop.f32.mrb[0].mxu0
        %v4969 = vadd.f32 0.0, %v4968
        %v4970 = vpop.f32.mrb[0].mxu0
        %4971 = vmatprep.mubr.bf16.mxu0 0
        %4972 = vmatmul.mubr.bf16.gmra.mrb[0].mxu0 %v4829
        %v4973 = vpop.f32.mrb[0].mxu0
        %v4974 = vadd.f32 0.0, %v4973
        %v4975 = vpop.f32.mrb[0].mxu0
        %v4976 = vpop.f32.mrb[0].mxu0
        %v4977 = vadd.f32 0.0, %v4976
        %v4978 = vpop.f32.mrb[0].mxu0
        %4979 = vmatprep.mubr.bf16.mxu0 0
        %4980 = vmatmul.mubr.bf16.gmra.mrb[0].mxu0 %v4832
        %v4981 = vpop.f32.mrb[0].mxu0
        %v4982 = vadd.f32 0.0, %v4981
        %v4983 = vpop.f32.mrb[0].mxu0
        %v4984 = vpop.f32.mrb[0].mxu0
        %v4985 = vadd.f32 0.0, %v4984
        %v4986 = vpop.f32.mrb[0].mxu0
        %4987 = vmatprep.mubr.bf16.mxu0 0
        %4988 = vmatmul.mubr.bf16.gmra.mrb[0].mxu0 %v4835
        %v4989 = vpop.f32.mrb[0].mxu0
        %v4990 = vadd.f32 0.0, %v4989
        %v4991 = vpop.f32.mrb[0].mxu0
        %v4992 = vpop.f32.mrb[0].mxu0
        %v4993 = vadd.f32 0.0, %v4992
        %v4994 = vpop.f32.mrb[0].mxu0
        %4995 = vmatprep.mubr.bf16.mxu0 0
        %4996 = vmatmul.mubr.bf16.gmra.mrb[0].mxu0 %v4838
        %v4997 = vpop.f32.mrb[0].mxu0
        %v4998 = vadd.f32 0.0, %v4997
        %v4999 = vpop.f32.mrb[0].mxu0
        %v5000 = vpop.f32.mrb[0].mxu0
        %v5001 = vadd.f32 0.0, %v5000
        %v5002 = vpop.f32.mrb[0].mxu0
        %5003 = vdwg.mxu0
        %v5004 = vadd.f32 %v4709, %v4878
        %v5005 = vadd.f32 %v4710, %v4881
        %v5006 = vadd.f32 %v4711, %v4886
        %v5007 = vadd.f32 %v4712, %v4889
        %v5008 = vadd.f32 %v4713, %v4894
        %v5009 = vadd.f32 %v4714, %v4897
        %v5010 = vadd.f32 %v4715, %v4902
        %v5011 = vadd.f32 %v4716, %v4905
        %v5012 = vadd.f32 %v4717, %v4910
        %v5013 = vadd.f32 %v4718, %v4913
        %v5014 = vadd.f32 %v4719, %v4918
        %v5015 = vadd.f32 %v4720, %v4921
        %v5016 = vadd.f32 %v4721, %v4926
        %v5017 = vadd.f32 %v4722, %v4929
        %v5018 = vadd.f32 %v4723, %v4934
        %v5019 = vadd.f32 %v4724, %v4937
        %v5020 = vadd.f32 %v4725, %v4942
        %v5021 = vadd.f32 %v4726, %v4945
        %v5022 = vadd.f32 %v4727, %v4950
        %v5023 = vadd.f32 %v4728, %v4953
        %v5024 = vadd.f32 %v4729, %v4958
        %v5025 = vadd.f32 %v4730, %v4961
        %v5026 = vadd.f32 %v4731, %v4966
        %v5027 = vadd.f32 %v4732, %v4969
        %v5028 = vadd.f32 %v4733, %v4974
        %v5029 = vadd.f32 %v4734, %v4977
        %v5030 = vadd.f32 %v4735, %v4982
        %v5031 = vadd.f32 %v4736, %v4985
        %v5032 = vadd.f32 %v4737, %v4990
        %v5033 = vadd.f32 %v4738, %v4993
        %v5034 = vadd.f32 %v4739, %v4998
        %v5035 = vadd.f32 %v4740, %v5001
        %v5036 = vld [vmem:[%s4741 + $0x8] sm:$0xff]
        %v5037 = vld [vmem:[%s4741 + $0x10] sm:$0xff]
        %v5038 = vld [vmem:[%s4741 + $0x28] sm:$0xff]
        %v5039 = vld [vmem:[%s4741 + $0x30] sm:$0xff]
        %v5040 = vld [vmem:[%s4741 + $0x48] sm:$0xff]
        %v5041 = vld [vmem:[%s4741 + $0x50] sm:$0xff]
        %v5042 = vld [vmem:[%s4741 + $0x68] sm:$0xff]
        %v5043 = vld [vmem:[%s4741 + $0x70] sm:$0xff]
        %v5044 = vld [vmem:[%s4741 + $0x88] sm:$0xff]
        %v5045 = vld [vmem:[%s4741 + $0x90] sm:$0xff]
        %v5046 = vld [vmem:[%s4741 + $0xa8] sm:$0xff]
        %v5047 = vld [vmem:[%s4741 + $0xb0] sm:$0xff]
        %v5048 = vld [vmem:[%s4741 + $0xc8] sm:$0xff]
        %v5049 = vld [vmem:[%s4741 + $0xd0] sm:$0xff]
        %v5050 = vld [vmem:[%s4741 + $0xe8] sm:$0xff]
        %v5051 = vld [vmem:[%s4741 + $0xf0] sm:$0xff]
        %v5052 = vld [vmem:[%s4741 + $0x108] sm:$0xff]
        %v5053 = vld [vmem:[%s4741 + $0x110] sm:$0xff]
        %v5054 = vld [vmem:[%s4741 + $0x128] sm:$0xff]
        %v5055 = vld [vmem:[%s4741 + $0x130] sm:$0xff]
        %v5056 = vld [vmem:[%s4741 + $0x148] sm:$0xff]
        %v5057 = vld [vmem:[%s4741 + $0x150] sm:$0xff]
        %v5058 = vld [vmem:[%s4741 + $0x168] sm:$0xff]
        %v5059 = vld [vmem:[%s4741 + $0x170] sm:$0xff]
        %v5060 = vld [vmem:[%s4741 + $0x188] sm:$0xff]
        %v5061 = vld [vmem:[%s4741 + $0x190] sm:$0xff]
        %v5062 = vld [vmem:[%s4741 + $0x1a8] sm:$0xff]
        %v5063 = vld [vmem:[%s4741 + $0x1b0] sm:$0xff]
        %v5064 = vld [vmem:[%s4741 + $0x1c8] sm:$0xff]
        %v5065 = vld [vmem:[%s4741 + $0x1d0] sm:$0xff]
        %v5066 = vld [vmem:[%s4741 + $0x1e8] sm:$0xff]
        %v5067 = vld [vmem:[%s4741 + $0x1f0] sm:$0xff]
        %v5068 = vpack.c.bf16 %v5037, %v5036
        %v5069 = vpack.c.bf16 %v5039, %v5038
        %v5070 = vpack.c.bf16 %v5041, %v5040
        %v5071 = vpack.c.bf16 %v5043, %v5042
        %v5072 = vpack.c.bf16 %v5045, %v5044
        %v5073 = vpack.c.bf16 %v5047, %v5046
        %v5074 = vpack.c.bf16 %v5049, %v5048
        %v5075 = vpack.c.bf16 %v5051, %v5050
        %v5076 = vpack.c.bf16 %v5053, %v5052
        %v5077 = vpack.c.bf16 %v5055, %v5054
        %v5078 = vpack.c.bf16 %v5057, %v5056
        %v5079 = vpack.c.bf16 %v5059, %v5058
        %v5080 = vpack.c.bf16 %v5061, %v5060
        %v5081 = vpack.c.bf16 %v5063, %v5062
        %v5082 = vpack.c.bf16 %v5065, %v5064
        %v5083 = vpack.c.bf16 %v5067, %v5066
        %s5084 = scalar_lea.vmem %s3, 28
        %v5085 = vld [vmem:[%s5084] sm:$0xf]
        %v5087 = vsel %vm2934, %v5068, 0
        %v5090 = vsel %vm2934, %v5069, 0
        %v5093 = vsel %vm2934, %v5070, 0
        %v5096 = vsel %vm2934, %v5071, 0
        %v5099 = vsel %vm2934, %v5072, 0
        %v5102 = vsel %vm2934, %v5073, 0
        %v5105 = vsel %vm2934, %v5074, 0
        %v5108 = vsel %vm2934, %v5075, 0
        %v5111 = vsel %vm2934, %v5076, 0
        %v5114 = vsel %vm2934, %v5077, 0
        %v5117 = vsel %vm2934, %v5078, 0
        %v5120 = vsel %vm2934, %v5079, 0
        %v5123 = vsel %vm2934, %v5080, 0
        %v5126 = vsel %vm2934, %v5081, 0
        %v5129 = vsel %vm2934, %v5082, 0
        %v5132 = vsel %vm2934, %v5083, 0
        %v5135 = vsel %vm3188, %v5085, 0
        %5137 = vmatprep.subr.bf16.mxu0 0
        %5138 = vmatpush1.bf16.msra.mxu0 %v5135
        %5139 = vmatprep.subr.bf16.mxu0 0
        %5140 = vmatpush1.bf16.msra.mxu0 0
        %5141 = vmatprep.subr.bf16.mxu0 0
        %5142 = vmatpush1.bf16.msra.mxu0 0
        %5143 = vmatprep.subr.bf16.mxu0 0
        %5144 = vmatpush1.bf16.msra.mxu0 0
        %5145 = vmatprep.subr.bf16.mxu0 0
        %5146 = vmatpush1.bf16.msra.mxu0 0
        %5147 = vmatprep.subr.bf16.mxu0 0
        %5148 = vmatpush1.bf16.msra.mxu0 0
        %5149 = vmatprep.subr.bf16.mxu0 0
        %5150 = vmatpush1.bf16.msra.mxu0 0
        %5151 = vmatprep.subr.bf16.mxu0 0
        %5152 = vmatpush1.bf16.msra.mxu0 0
        %5153 = vmatprep.subr.bf16.mxu0 0
        %5154 = vmatpush1.bf16.msra.mxu0 0
        %5155 = vmatprep.subr.bf16.mxu0 0
        %5156 = vmatpush1.bf16.msra.mxu0 0
        %5157 = vmatprep.subr.bf16.mxu0 0
        %5158 = vmatpush1.bf16.msra.mxu0 0
        %5159 = vmatprep.subr.bf16.mxu0 0
        %5160 = vmatpush1.bf16.msra.mxu0 0
        %5161 = vmatprep.subr.bf16.mxu0 0
        %5162 = vmatpush1.bf16.msra.mxu0 0
        %5163 = vmatprep.subr.bf16.mxu0 0
        %5164 = vmatpush1.bf16.msra.mxu0 0
        %5165 = vmatprep.subr.bf16.mxu0 0
        %5166 = vmatpush1.bf16.msra.mxu0 0
        %5167 = vmatprep.subr.bf16.mxu0 0
        %5168 = vmatpush1.bf16.msra.mxu0 0
        %5169 = vmatprep.mubr.bf16.mxu0 0
        %5170 = vmatmul.mubr.bf16.gmra.mrb[0].mxu0 %v5087
        %v5171 = vpop.f32.mrb[0].mxu0
        %v5172 = vadd.f32 0.0, %v5171
        %v5173 = vpop.f32.mrb[0].mxu0
        %v5174 = vpop.f32.mrb[0].mxu0
        %v5175 = vadd.f32 0.0, %v5174
        %v5176 = vpop.f32.mrb[0].mxu0
        %5177 = vmatprep.mubr.bf16.mxu0 0
        %5178 = vmatmul.mubr.bf16.gmra.mrb[0].mxu0 %v5090
        %v5179 = vpop.f32.mrb[0].mxu0
        %v5180 = vadd.f32 0.0, %v5179
        %v5181 = vpop.f32.mrb[0].mxu0
        %v5182 = vpop.f32.mrb[0].mxu0
        %v5183 = vadd.f32 0.0, %v5182
        %v5184 = vpop.f32.mrb[0].mxu0
        %5185 = vmatprep.mubr.bf16.mxu0 0
        %5186 = vmatmul.mubr.bf16.gmra.mrb[0].mxu0 %v5093
        %v5187 = vpop.f32.mrb[0].mxu0
        %v5188 = vadd.f32 0.0, %v5187
        %v5189 = vpop.f32.mrb[0].mxu0
        %v5190 = vpop.f32.mrb[0].mxu0
        %v5191 = vadd.f32 0.0, %v5190
        %v5192 = vpop.f32.mrb[0].mxu0
        %5193 = vmatprep.mubr.bf16.mxu0 0
        %5194 = vmatmul.mubr.bf16.gmra.mrb[0].mxu0 %v5096
        %v5195 = vpop.f32.mrb[0].mxu0
        %v5196 = vadd.f32 0.0, %v5195
        %v5197 = vpop.f32.mrb[0].mxu0
        %v5198 = vpop.f32.mrb[0].mxu0
        %v5199 = vadd.f32 0.0, %v5198
        %v5200 = vpop.f32.mrb[0].mxu0
        %5201 = vmatprep.mubr.bf16.mxu0 0
        %5202 = vmatmul.mubr.bf16.gmra.mrb[0].mxu0 %v5099
        %v5203 = vpop.f32.mrb[0].mxu0
        %v5204 = vadd.f32 0.0, %v5203
        %v5205 = vpop.f32.mrb[0].mxu0
        %v5206 = vpop.f32.mrb[0].mxu0
        %v5207 = vadd.f32 0.0, %v5206
        %v5208 = vpop.f32.mrb[0].mxu0
        %5209 = vmatprep.mubr.bf16.mxu0 0
        %5210 = vmatmul.mubr.bf16.gmra.mrb[0].mxu0 %v5102
        %v5211 = vpop.f32.mrb[0].mxu0
        %v5212 = vadd.f32 0.0, %v5211
        %v5213 = vpop.f32.mrb[0].mxu0
        %v5214 = vpop.f32.mrb[0].mxu0
        %v5215 = vadd.f32 0.0, %v5214
        %v5216 = vpop.f32.mrb[0].mxu0
        %5217 = vmatprep.mubr.bf16.mxu0 0
        %5218 = vmatmul.mubr.bf16.gmra.mrb[0].mxu0 %v5105
        %v5219 = vpop.f32.mrb[0].mxu0
        %v5220 = vadd.f32 0.0, %v5219
        %v5221 = vpop.f32.mrb[0].mxu0
        %v5222 = vpop.f32.mrb[0].mxu0
        %v5223 = vadd.f32 0.0, %v5222
        %v5224 = vpop.f32.mrb[0].mxu0
        %5225 = vmatprep.mubr.bf16.mxu0 0
        %5226 = vmatmul.mubr.bf16.gmra.mrb[0].mxu0 %v5108
        %v5227 = vpop.f32.mrb[0].mxu0
        %v5228 = vadd.f32 0.0, %v5227
        %v5229 = vpop.f32.mrb[0].mxu0
        %v5230 = vpop.f32.mrb[0].mxu0
        %v5231 = vadd.f32 0.0, %v5230
        %v5232 = vpop.f32.mrb[0].mxu0
        %5233 = vmatprep.mubr.bf16.mxu0 0
        %5234 = vmatmul.mubr.bf16.gmra.mrb[0].mxu0 %v5111
        %v5235 = vpop.f32.mrb[0].mxu0
        %v5236 = vadd.f32 0.0, %v5235
        %v5237 = vpop.f32.mrb[0].mxu0
        %v5238 = vpop.f32.mrb[0].mxu0
        %v5239 = vadd.f32 0.0, %v5238
        %v5240 = vpop.f32.mrb[0].mxu0
        %5241 = vmatprep.mubr.bf16.mxu0 0
        %5242 = vmatmul.mubr.bf16.gmra.mrb[0].mxu0 %v5114
        %v5243 = vpop.f32.mrb[0].mxu0
        %v5244 = vadd.f32 0.0, %v5243
        %v5245 = vpop.f32.mrb[0].mxu0
        %v5246 = vpop.f32.mrb[0].mxu0
        %v5247 = vadd.f32 0.0, %v5246
        %v5248 = vpop.f32.mrb[0].mxu0
        %5249 = vmatprep.mubr.bf16.mxu0 0
        %5250 = vmatmul.mubr.bf16.gmra.mrb[0].mxu0 %v5117
        %v5251 = vpop.f32.mrb[0].mxu0
        %v5252 = vadd.f32 0.0, %v5251
        %v5253 = vpop.f32.mrb[0].mxu0
        %v5254 = vpop.f32.mrb[0].mxu0
        %v5255 = vadd.f32 0.0, %v5254
        %v5256 = vpop.f32.mrb[0].mxu0
        %5257 = vmatprep.mubr.bf16.mxu0 0
        %5258 = vmatmul.mubr.bf16.gmra.mrb[0].mxu0 %v5120
        %v5259 = vpop.f32.mrb[0].mxu0
        %v5260 = vadd.f32 0.0, %v5259
        %v5261 = vpop.f32.mrb[0].mxu0
        %v5262 = vpop.f32.mrb[0].mxu0
        %v5263 = vadd.f32 0.0, %v5262
        %v5264 = vpop.f32.mrb[0].mxu0
        %5265 = vmatprep.mubr.bf16.mxu0 0
        %5266 = vmatmul.mubr.bf16.gmra.mrb[0].mxu0 %v5123
        %v5267 = vpop.f32.mrb[0].mxu0
        %v5268 = vadd.f32 0.0, %v5267
        %v5269 = vpop.f32.mrb[0].mxu0
        %v5270 = vpop.f32.mrb[0].mxu0
        %v5271 = vadd.f32 0.0, %v5270
        %v5272 = vpop.f32.mrb[0].mxu0
        %5273 = vmatprep.mubr.bf16.mxu0 0
        %5274 = vmatmul.mubr.bf16.gmra.mrb[0].mxu0 %v5126
        %v5275 = vpop.f32.mrb[0].mxu0
        %v5276 = vadd.f32 0.0, %v5275
        %v5277 = vpop.f32.mrb[0].mxu0
        %v5278 = vpop.f32.mrb[0].mxu0
        %v5279 = vadd.f32 0.0, %v5278
        %v5280 = vpop.f32.mrb[0].mxu0
        %5281 = vmatprep.mubr.bf16.mxu0 0
        %5282 = vmatmul.mubr.bf16.gmra.mrb[0].mxu0 %v5129
        %v5283 = vpop.f32.mrb[0].mxu0
        %v5284 = vadd.f32 0.0, %v5283
        %v5285 = vpop.f32.mrb[0].mxu0
        %v5286 = vpop.f32.mrb[0].mxu0
        %v5287 = vadd.f32 0.0, %v5286
        %v5288 = vpop.f32.mrb[0].mxu0
        %5289 = vmatprep.mubr.bf16.mxu0 0
        %5290 = vmatmul.mubr.bf16.gmra.mrb[0].mxu0 %v5132
        %v5291 = vpop.f32.mrb[0].mxu0
        %v5292 = vadd.f32 0.0, %v5291
        %v5293 = vpop.f32.mrb[0].mxu0
        %v5294 = vpop.f32.mrb[0].mxu0
        %v5295 = vadd.f32 0.0, %v5294
        %v5296 = vpop.f32.mrb[0].mxu0
        %5297 = vdwg.mxu0
        %v5298 = vadd.f32 %v5004, %v5172
        %v5299 = vadd.f32 %v5005, %v5175
        %v5300 = vadd.f32 %v5006, %v5180
        %v5301 = vadd.f32 %v5007, %v5183
        %v5302 = vadd.f32 %v5008, %v5188
        %v5303 = vadd.f32 %v5009, %v5191
        %v5304 = vadd.f32 %v5010, %v5196
        %v5305 = vadd.f32 %v5011, %v5199
        %v5306 = vadd.f32 %v5012, %v5204
        %v5307 = vadd.f32 %v5013, %v5207
        %v5308 = vadd.f32 %v5014, %v5212
        %v5309 = vadd.f32 %v5015, %v5215
        %v5310 = vadd.f32 %v5016, %v5220
        %v5311 = vadd.f32 %v5017, %v5223
        %v5312 = vadd.f32 %v5018, %v5228
        %v5313 = vadd.f32 %v5019, %v5231
        %v5314 = vadd.f32 %v5020, %v5236
        %v5315 = vadd.f32 %v5021, %v5239
        %v5316 = vadd.f32 %v5022, %v5244
        %v5317 = vadd.f32 %v5023, %v5247
        %v5318 = vadd.f32 %v5024, %v5252
        %v5319 = vadd.f32 %v5025, %v5255
        %v5320 = vadd.f32 %v5026, %v5260
        %v5321 = vadd.f32 %v5027, %v5263
        %v5322 = vadd.f32 %v5028, %v5268
        %v5323 = vadd.f32 %v5029, %v5271
        %v5324 = vadd.f32 %v5030, %v5276
        %v5325 = vadd.f32 %v5031, %v5279
        %v5326 = vadd.f32 %v5032, %v5284
        %v5327 = vadd.f32 %v5033, %v5287
        %v5328 = vadd.f32 %v5034, %v5292
        %v5329 = vadd.f32 %v5035, %v5295
        %v5330 = vld [vmem:[%s4741 + $0x9] sm:$0xff]
        %v5331 = vld [vmem:[%s4741 + $0x11] sm:$0xff]
        %v5332 = vld [vmem:[%s4741 + $0x29] sm:$0xff]
        %v5333 = vld [vmem:[%s4741 + $0x31] sm:$0xff]
        %v5334 = vld [vmem:[%s4741 + $0x49] sm:$0xff]
        %v5335 = vld [vmem:[%s4741 + $0x51] sm:$0xff]
        %v5336 = vld [vmem:[%s4741 + $0x69] sm:$0xff]
        %v5337 = vld [vmem:[%s4741 + $0x71] sm:$0xff]
        %v5338 = vld [vmem:[%s4741 + $0x89] sm:$0xff]
        %v5339 = vld [vmem:[%s4741 + $0x91] sm:$0xff]
        %v5340 = vld [vmem:[%s4741 + $0xa9] sm:$0xff]
        %v5341 = vld [vmem:[%s4741 + $0xb1] sm:$0xff]
        %v5342 = vld [vmem:[%s4741 + $0xc9] sm:$0xff]
        %v5343 = vld [vmem:[%s4741 + $0xd1] sm:$0xff]
        %v5344 = vld [vmem:[%s4741 + $0xe9] sm:$0xff]
        %v5345 = vld [vmem:[%s4741 + $0xf1] sm:$0xff]
        %v5346 = vld [vmem:[%s4741 + $0x109] sm:$0xff]
        %v5347 = vld [vmem:[%s4741 + $0x111] sm:$0xff]
        %v5348 = vld [vmem:[%s4741 + $0x129] sm:$0xff]
        %v5349 = vld [vmem:[%s4741 + $0x131] sm:$0xff]
        %v5350 = vld [vmem:[%s4741 + $0x149] sm:$0xff]
        %v5351 = vld [vmem:[%s4741 + $0x151] sm:$0xff]
        %v5352 = vld [vmem:[%s4741 + $0x169] sm:$0xff]
        %v5353 = vld [vmem:[%s4741 + $0x171] sm:$0xff]
        %v5354 = vld [vmem:[%s4741 + $0x189] sm:$0xff]
        %v5355 = vld [vmem:[%s4741 + $0x191] sm:$0xff]
        %v5356 = vld [vmem:[%s4741 + $0x1a9] sm:$0xff]
        %v5357 = vld [vmem:[%s4741 + $0x1b1] sm:$0xff]
        %v5358 = vld [vmem:[%s4741 + $0x1c9] sm:$0xff]
        %v5359 = vld [vmem:[%s4741 + $0x1d1] sm:$0xff]
        %v5360 = vld [vmem:[%s4741 + $0x1e9] sm:$0xff]
        %v5361 = vld [vmem:[%s4741 + $0x1f1] sm:$0xff]
        %v5362 = vpack.c.bf16 %v5331, %v5330
        %v5363 = vpack.c.bf16 %v5333, %v5332
        %v5364 = vpack.c.bf16 %v5335, %v5334
        %v5365 = vpack.c.bf16 %v5337, %v5336
        %v5366 = vpack.c.bf16 %v5339, %v5338
        %v5367 = vpack.c.bf16 %v5341, %v5340
        %v5368 = vpack.c.bf16 %v5343, %v5342
        %v5369 = vpack.c.bf16 %v5345, %v5344
        %v5370 = vpack.c.bf16 %v5347, %v5346
        %v5371 = vpack.c.bf16 %v5349, %v5348
        %v5372 = vpack.c.bf16 %v5351, %v5350
        %v5373 = vpack.c.bf16 %v5353, %v5352
        %v5374 = vpack.c.bf16 %v5355, %v5354
        %v5375 = vpack.c.bf16 %v5357, %v5356
        %v5376 = vpack.c.bf16 %v5359, %v5358
        %v5377 = vpack.c.bf16 %v5361, %v5360
        %s5378 = scalar_lea.vmem %s3, 32
        %v5379 = vld [vmem:[%s5378] sm:$0xf]
        %v5381 = vsel %vm2934, %v5362, 0
        %v5384 = vsel %vm2934, %v5363, 0
        %v5387 = vsel %vm2934, %v5364, 0
        %v5390 = vsel %vm2934, %v5365, 0
        %v5393 = vsel %vm2934, %v5366, 0
        %v5396 = vsel %vm2934, %v5367, 0
        %v5399 = vsel %vm2934, %v5368, 0
        %v5402 = vsel %vm2934, %v5369, 0
        %v5405 = vsel %vm2934, %v5370, 0
        %v5408 = vsel %vm2934, %v5371, 0
        %v5411 = vsel %vm2934, %v5372, 0
        %v5414 = vsel %vm2934, %v5373, 0
        %v5417 = vsel %vm2934, %v5374, 0
        %v5420 = vsel %vm2934, %v5375, 0
        %v5423 = vsel %vm2934, %v5376, 0
        %v5426 = vsel %vm2934, %v5377, 0
        %v5429 = vsel %vm3188, %v5379, 0
        %5431 = vmatprep.subr.bf16.mxu0 0
        %5432 = vmatpush1.bf16.msra.mxu0 %v5429
        %5433 = vmatprep.subr.bf16.mxu0 0
        %5434 = vmatpush1.bf16.msra.mxu0 0
        %5435 = vmatprep.subr.bf16.mxu0 0
        %5436 = vmatpush1.bf16.msra.mxu0 0
        %5437 = vmatprep.subr.bf16.mxu0 0
        %5438 = vmatpush1.bf16.msra.mxu0 0
        %5439 = vmatprep.subr.bf16.mxu0 0
        %5440 = vmatpush1.bf16.msra.mxu0 0
        %5441 = vmatprep.subr.bf16.mxu0 0
        %5442 = vmatpush1.bf16.msra.mxu0 0
        %5443 = vmatprep.subr.bf16.mxu0 0
        %5444 = vmatpush1.bf16.msra.mxu0 0
        %5445 = vmatprep.subr.bf16.mxu0 0
        %5446 = vmatpush1.bf16.msra.mxu0 0
        %5447 = vmatprep.subr.bf16.mxu0 0
        %5448 = vmatpush1.bf16.msra.mxu0 0
        %5449 = vmatprep.subr.bf16.mxu0 0
        %5450 = vmatpush1.bf16.msra.mxu0 0
        %5451 = vmatprep.subr.bf16.mxu0 0
        %5452 = vmatpush1.bf16.msra.mxu0 0
        %5453 = vmatprep.subr.bf16.mxu0 0
        %5454 = vmatpush1.bf16.msra.mxu0 0
        %5455 = vmatprep.subr.bf16.mxu0 0
        %5456 = vmatpush1.bf16.msra.mxu0 0
        %5457 = vmatprep.subr.bf16.mxu0 0
        %5458 = vmatpush1.bf16.msra.mxu0 0
        %5459 = vmatprep.subr.bf16.mxu0 0
        %5460 = vmatpush1.bf16.msra.mxu0 0
        %5461 = vmatprep.subr.bf16.mxu0 0
        %5462 = vmatpush1.bf16.msra.mxu0 0
        %5463 = vmatprep.mubr.bf16.mxu0 0
        %5464 = vmatmul.mubr.bf16.gmra.mrb[0].mxu0 %v5381
        %v5465 = vpop.f32.mrb[0].mxu0
        %v5466 = vadd.f32 0.0, %v5465
        %v5467 = vpop.f32.mrb[0].mxu0
        %v5468 = vpop.f32.mrb[0].mxu0
        %v5469 = vadd.f32 0.0, %v5468
        %v5470 = vpop.f32.mrb[0].mxu0
        %5471 = vmatprep.mubr.bf16.mxu0 0
        %5472 = vmatmul.mubr.bf16.gmra.mrb[0].mxu0 %v5384
        %v5473 = vpop.f32.mrb[0].mxu0
        %v5474 = vadd.f32 0.0, %v5473
        %v5475 = vpop.f32.mrb[0].mxu0
        %v5476 = vpop.f32.mrb[0].mxu0
        %v5477 = vadd.f32 0.0, %v5476
        %v5478 = vpop.f32.mrb[0].mxu0
        %5479 = vmatprep.mubr.bf16.mxu0 0
        %5480 = vmatmul.mubr.bf16.gmra.mrb[0].mxu0 %v5387
        %v5481 = vpop.f32.mrb[0].mxu0
        %v5482 = vadd.f32 0.0, %v5481
        %v5483 = vpop.f32.mrb[0].mxu0
        %v5484 = vpop.f32.mrb[0].mxu0
        %v5485 = vadd.f32 0.0, %v5484
        %v5486 = vpop.f32.mrb[0].mxu0
        %5487 = vmatprep.mubr.bf16.mxu0 0
        %5488 = vmatmul.mubr.bf16.gmra.mrb[0].mxu0 %v5390
        %v5489 = vpop.f32.mrb[0].mxu0
        %v5490 = vadd.f32 0.0, %v5489
        %v5491 = vpop.f32.mrb[0].mxu0
        %v5492 = vpop.f32.mrb[0].mxu0
        %v5493 = vadd.f32 0.0, %v5492
        %v5494 = vpop.f32.mrb[0].mxu0
        %5495 = vmatprep.mubr.bf16.mxu0 0
        %5496 = vmatmul.mubr.bf16.gmra.mrb[0].mxu0 %v5393
        %v5497 = vpop.f32.mrb[0].mxu0
        %v5498 = vadd.f32 0.0, %v5497
        %v5499 = vpop.f32.mrb[0].mxu0
        %v5500 = vpop.f32.mrb[0].mxu0
        %v5501 = vadd.f32 0.0, %v5500
        %v5502 = vpop.f32.mrb[0].mxu0
        %5503 = vmatprep.mubr.bf16.mxu0 0
        %5504 = vmatmul.mubr.bf16.gmra.mrb[0].mxu0 %v5396
        %v5505 = vpop.f32.mrb[0].mxu0
        %v5506 = vadd.f32 0.0, %v5505
        %v5507 = vpop.f32.mrb[0].mxu0
        %v5508 = vpop.f32.mrb[0].mxu0
        %v5509 = vadd.f32 0.0, %v5508
        %v5510 = vpop.f32.mrb[0].mxu0
        %5511 = vmatprep.mubr.bf16.mxu0 0
        %5512 = vmatmul.mubr.bf16.gmra.mrb[0].mxu0 %v5399
        %v5513 = vpop.f32.mrb[0].mxu0
        %v5514 = vadd.f32 0.0, %v5513
        %v5515 = vpop.f32.mrb[0].mxu0
        %v5516 = vpop.f32.mrb[0].mxu0
        %v5517 = vadd.f32 0.0, %v5516
        %v5518 = vpop.f32.mrb[0].mxu0
        %5519 = vmatprep.mubr.bf16.mxu0 0
        %5520 = vmatmul.mubr.bf16.gmra.mrb[0].mxu0 %v5402
        %v5521 = vpop.f32.mrb[0].mxu0
        %v5522 = vadd.f32 0.0, %v5521
        %v5523 = vpop.f32.mrb[0].mxu0
        %v5524 = vpop.f32.mrb[0].mxu0
        %v5525 = vadd.f32 0.0, %v5524
        %v5526 = vpop.f32.mrb[0].mxu0
        %5527 = vmatprep.mubr.bf16.mxu0 0
        %5528 = vmatmul.mubr.bf16.gmra.mrb[0].mxu0 %v5405
        %v5529 = vpop.f32.mrb[0].mxu0
        %v5530 = vadd.f32 0.0, %v5529
        %v5531 = vpop.f32.mrb[0].mxu0
        %v5532 = vpop.f32.mrb[0].mxu0
        %v5533 = vadd.f32 0.0, %v5532
        %v5534 = vpop.f32.mrb[0].mxu0
        %5535 = vmatprep.mubr.bf16.mxu0 0
        %5536 = vmatmul.mubr.bf16.gmra.mrb[0].mxu0 %v5408
        %v5537 = vpop.f32.mrb[0].mxu0
        %v5538 = vadd.f32 0.0, %v5537
        %v5539 = vpop.f32.mrb[0].mxu0
        %v5540 = vpop.f32.mrb[0].mxu0
        %v5541 = vadd.f32 0.0, %v5540
        %v5542 = vpop.f32.mrb[0].mxu0
        %5543 = vmatprep.mubr.bf16.mxu0 0
        %5544 = vmatmul.mubr.bf16.gmra.mrb[0].mxu0 %v5411
        %v5545 = vpop.f32.mrb[0].mxu0
        %v5546 = vadd.f32 0.0, %v5545
        %v5547 = vpop.f32.mrb[0].mxu0
        %v5548 = vpop.f32.mrb[0].mxu0
        %v5549 = vadd.f32 0.0, %v5548
        %v5550 = vpop.f32.mrb[0].mxu0
        %5551 = vmatprep.mubr.bf16.mxu0 0
        %5552 = vmatmul.mubr.bf16.gmra.mrb[0].mxu0 %v5414
        %v5553 = vpop.f32.mrb[0].mxu0
        %v5554 = vadd.f32 0.0, %v5553
        %v5555 = vpop.f32.mrb[0].mxu0
        %v5556 = vpop.f32.mrb[0].mxu0
        %v5557 = vadd.f32 0.0, %v5556
        %v5558 = vpop.f32.mrb[0].mxu0
        %5559 = vmatprep.mubr.bf16.mxu0 0
        %5560 = vmatmul.mubr.bf16.gmra.mrb[0].mxu0 %v5417
        %v5561 = vpop.f32.mrb[0].mxu0
        %v5562 = vadd.f32 0.0, %v5561
        %v5563 = vpop.f32.mrb[0].mxu0
        %v5564 = vpop.f32.mrb[0].mxu0
        %v5565 = vadd.f32 0.0, %v5564
        %v5566 = vpop.f32.mrb[0].mxu0
        %5567 = vmatprep.mubr.bf16.mxu0 0
        %5568 = vmatmul.mubr.bf16.gmra.mrb[0].mxu0 %v5420
        %v5569 = vpop.f32.mrb[0].mxu0
        %v5570 = vadd.f32 0.0, %v5569
        %v5571 = vpop.f32.mrb[0].mxu0
        %v5572 = vpop.f32.mrb[0].mxu0
        %v5573 = vadd.f32 0.0, %v5572
        %v5574 = vpop.f32.mrb[0].mxu0
        %5575 = vmatprep.mubr.bf16.mxu0 0
        %5576 = vmatmul.mubr.bf16.gmra.mrb[0].mxu0 %v5423
        %v5577 = vpop.f32.mrb[0].mxu0
        %v5578 = vadd.f32 0.0, %v5577
        %v5579 = vpop.f32.mrb[0].mxu0
        %v5580 = vpop.f32.mrb[0].mxu0
        %v5581 = vadd.f32 0.0, %v5580
        %v5582 = vpop.f32.mrb[0].mxu0
        %5583 = vmatprep.mubr.bf16.mxu0 0
        %5584 = vmatmul.mubr.bf16.gmra.mrb[0].mxu0 %v5426
        %v5585 = vpop.f32.mrb[0].mxu0
        %v5586 = vadd.f32 0.0, %v5585
        %v5587 = vpop.f32.mrb[0].mxu0
        %v5588 = vpop.f32.mrb[0].mxu0
        %v5589 = vadd.f32 0.0, %v5588
        %v5590 = vpop.f32.mrb[0].mxu0
        %5591 = vdwg.mxu0
        %v5592 = vadd.f32 %v5298, %v5466
        %v5593 = vadd.f32 %v5299, %v5469
        %v5594 = vadd.f32 %v5300, %v5474
        %v5595 = vadd.f32 %v5301, %v5477
        %v5596 = vadd.f32 %v5302, %v5482
        %v5597 = vadd.f32 %v5303, %v5485
        %v5598 = vadd.f32 %v5304, %v5490
        %v5599 = vadd.f32 %v5305, %v5493
        %v5600 = vadd.f32 %v5306, %v5498
        %v5601 = vadd.f32 %v5307, %v5501
        %v5602 = vadd.f32 %v5308, %v5506
        %v5603 = vadd.f32 %v5309, %v5509
        %v5604 = vadd.f32 %v5310, %v5514
        %v5605 = vadd.f32 %v5311, %v5517
        %v5606 = vadd.f32 %v5312, %v5522
        %v5607 = vadd.f32 %v5313, %v5525
        %v5608 = vadd.f32 %v5314, %v5530
        %v5609 = vadd.f32 %v5315, %v5533
        %v5610 = vadd.f32 %v5316, %v5538
        %v5611 = vadd.f32 %v5317, %v5541
        %v5612 = vadd.f32 %v5318, %v5546
        %v5613 = vadd.f32 %v5319, %v5549
        %v5614 = vadd.f32 %v5320, %v5554
        %v5615 = vadd.f32 %v5321, %v5557
        %v5616 = vadd.f32 %v5322, %v5562
        %v5617 = vadd.f32 %v5323, %v5565
        %v5618 = vadd.f32 %v5324, %v5570
        %v5619 = vadd.f32 %v5325, %v5573
        %v5620 = vadd.f32 %v5326, %v5578
        %v5621 = vadd.f32 %v5327, %v5581
        %v5622 = vadd.f32 %v5328, %v5586
        %v5623 = vadd.f32 %v5329, %v5589
        %v5624 = vld [vmem:[%s4] sm:$0x1]
        %v5626 = vlaneseq
        %v5627 = vshrl.u32 %v5626, 7
        %v5628 = vsub.s32 0, %v5627
        %v5629 = vrot.slane %v5624, %v5628
        %v5631 = vadd.f32 %v5592, %v5629
        %v5632 = vadd.f32 %v5593, %v5629
        %v5633 = vadd.f32 %v5594, %v5629
        %v5634 = vadd.f32 %v5595, %v5629
        %v5635 = vadd.f32 %v5596, %v5629
        %v5636 = vadd.f32 %v5597, %v5629
        %v5637 = vadd.f32 %v5598, %v5629
        %v5638 = vadd.f32 %v5599, %v5629
        %v5639 = vadd.f32 %v5600, %v5629
        %v5640 = vadd.f32 %v5601, %v5629
        %v5641 = vadd.f32 %v5602, %v5629
        %v5642 = vadd.f32 %v5603, %v5629
        %v5643 = vadd.f32 %v5604, %v5629
        %v5644 = vadd.f32 %v5605, %v5629
        %v5645 = vadd.f32 %v5606, %v5629
        %v5646 = vadd.f32 %v5607, %v5629
        %v5647 = vadd.f32 %v5608, %v5629
        %v5648 = vadd.f32 %v5609, %v5629
        %v5649 = vadd.f32 %v5610, %v5629
        %v5650 = vadd.f32 %v5611, %v5629
        %v5651 = vadd.f32 %v5612, %v5629
        %v5652 = vadd.f32 %v5613, %v5629
        %v5653 = vadd.f32 %v5614, %v5629
        %v5654 = vadd.f32 %v5615, %v5629
        %v5655 = vadd.f32 %v5616, %v5629
        %v5656 = vadd.f32 %v5617, %v5629
        %v5657 = vadd.f32 %v5618, %v5629
        %v5658 = vadd.f32 %v5619, %v5629
        %v5659 = vadd.f32 %v5620, %v5629
        %v5660 = vadd.f32 %v5621, %v5629
        %v5661 = vadd.f32 %v5622, %v5629
        %v5662 = vadd.f32 %v5623, %v5629
        %v5663 = vld [vmem:[%s1097 + $0x1] sm:$0xff]
        %v5664 = vld [vmem:[%s1097 + $0x9] sm:$0xff]
        %v5665 = vld [vmem:[%s1097 + $0x19] sm:$0xff]
        %v5666 = vld [vmem:[%s1097 + $0x21] sm:$0xff]
        %v5667 = vld [vmem:[%s1097 + $0x31] sm:$0xff]
        %v5668 = vld [vmem:[%s1097 + $0x39] sm:$0xff]
        %v5669 = vld [vmem:[%s1097 + $0x49] sm:$0xff]
        %v5670 = vld [vmem:[%s1097 + $0x51] sm:$0xff]
        %v5671 = vld [vmem:[%s1097 + $0x61] sm:$0xff]
        %v5672 = vld [vmem:[%s1097 + $0x69] sm:$0xff]
        %v5673 = vld [vmem:[%s1097 + $0x79] sm:$0xff]
        %v5674 = vld [vmem:[%s1097 + $0x81] sm:$0xff]
        %v5675 = vld [vmem:[%s1097 + $0x91] sm:$0xff]
        %v5676 = vld [vmem:[%s1097 + $0x99] sm:$0xff]
        %v5677 = vld [vmem:[%s1097 + $0xa9] sm:$0xff]
        %v5678 = vld [vmem:[%s1097 + $0xb1] sm:$0xff]
        %v5679 = vld [vmem:[%s1097 + $0xc1] sm:$0xff]
        %v5680 = vld [vmem:[%s1097 + $0xc9] sm:$0xff]
        %v5681 = vld [vmem:[%s1097 + $0xd9] sm:$0xff]
        %v5682 = vld [vmem:[%s1097 + $0xe1] sm:$0xff]
        %v5683 = vld [vmem:[%s1097 + $0xf1] sm:$0xff]
        %v5684 = vld [vmem:[%s1097 + $0xf9] sm:$0xff]
        %v5685 = vld [vmem:[%s1097 + $0x109] sm:$0xff]
        %v5686 = vld [vmem:[%s1097 + $0x111] sm:$0xff]
        %v5687 = vld [vmem:[%s1097 + $0x121] sm:$0xff]
        %v5688 = vld [vmem:[%s1097 + $0x129] sm:$0xff]
        %v5689 = vld [vmem:[%s1097 + $0x139] sm:$0xff]
        %v5690 = vld [vmem:[%s1097 + $0x141] sm:$0xff]
        %v5691 = vld [vmem:[%s1097 + $0x151] sm:$0xff]
        %v5692 = vld [vmem:[%s1097 + $0x159] sm:$0xff]
        %v5693 = vld [vmem:[%s1097 + $0x169] sm:$0xff]
        %v5694 = vld [vmem:[%s1097 + $0x171] sm:$0xff]
        %v5695 = vpack.c.bf16 %v5664, %v5663
        %v5696 = vpack.c.bf16 %v5666, %v5665
        %v5697 = vpack.c.bf16 %v5668, %v5667
        %v5698 = vpack.c.bf16 %v5670, %v5669
        %v5699 = vpack.c.bf16 %v5672, %v5671
        %v5700 = vpack.c.bf16 %v5674, %v5673
        %v5701 = vpack.c.bf16 %v5676, %v5675
        %v5702 = vpack.c.bf16 %v5678, %v5677
        %v5703 = vpack.c.bf16 %v5680, %v5679
        %v5704 = vpack.c.bf16 %v5682, %v5681
        %v5705 = vpack.c.bf16 %v5684, %v5683
        %v5706 = vpack.c.bf16 %v5686, %v5685
        %v5707 = vpack.c.bf16 %v5688, %v5687
        %v5708 = vpack.c.bf16 %v5690, %v5689
        %v5709 = vpack.c.bf16 %v5692, %v5691
        %v5710 = vpack.c.bf16 %v5694, %v5693
        %v5711 = vld [vmem:[%s5] sm:$0x3]
        %v5712 = vld [vmem:[%s6] sm:$0x1]
        %v5714 = vlaneseq
        %v5715 = vshrl.u32 %v5714, 7
        %v5716 = vsub.s32 0, %v5715
        %v5717 = vrot.slane %v5712, %v5716
        %v5720 = vsel %vm377, %v5695, 0
        %v5723 = vsel %vm377, %v5696, 0
        %v5726 = vsel %vm377, %v5697, 0
        %v5729 = vsel %vm377, %v5698, 0
        %v5732 = vsel %vm377, %v5699, 0
        %v5735 = vsel %vm377, %v5700, 0
        %v5738 = vsel %vm377, %v5701, 0
        %v5741 = vsel %vm377, %v5702, 0
        %v5744 = vsel %vm377, %v5703, 0
        %v5747 = vsel %vm377, %v5704, 0
        %v5750 = vsel %vm377, %v5705, 0
        %v5753 = vsel %vm377, %v5706, 0
        %v5756 = vsel %vm377, %v5707, 0
        %v5759 = vsel %vm377, %v5708, 0
        %v5762 = vsel %vm377, %v5709, 0
        %v5765 = vsel %vm377, %v5710, 0
        %v5768 = vsel %vm426, %v5711, 0
        %5770 = vmatprep.subr.bf16.mxu0 0
        %5771 = vmatpush1.bf16.msra.mxu0 %v5768
        %5772 = vmatprep.subr.bf16.mxu0 0
        %5773 = vmatpush1.bf16.msra.mxu0 0
        %5774 = vmatprep.subr.bf16.mxu0 0
        %5775 = vmatpush1.bf16.msra.mxu0 0
        %5776 = vmatprep.subr.bf16.mxu0 0
        %5777 = vmatpush1.bf16.msra.mxu0 0
        %5778 = vmatprep.subr.bf16.mxu0 0
        %5779 = vmatpush1.bf16.msra.mxu0 0
        %5780 = vmatprep.subr.bf16.mxu0 0
        %5781 = vmatpush1.bf16.msra.mxu0 0
        %5782 = vmatprep.subr.bf16.mxu0 0
        %5783 = vmatpush1.bf16.msra.mxu0 0
        %5784 = vmatprep.subr.bf16.mxu0 0
        %5785 = vmatpush1.bf16.msra.mxu0 0
        %5786 = vmatprep.subr.bf16.mxu0 0
        %5787 = vmatpush1.bf16.msra.mxu0 0
        %5788 = vmatprep.subr.bf16.mxu0 0
        %5789 = vmatpush1.bf16.msra.mxu0 0
        %5790 = vmatprep.subr.bf16.mxu0 0
        %5791 = vmatpush1.bf16.msra.mxu0 0
        %5792 = vmatprep.subr.bf16.mxu0 0
        %5793 = vmatpush1.bf16.msra.mxu0 0
        %5794 = vmatprep.subr.bf16.mxu0 0
        %5795 = vmatpush1.bf16.msra.mxu0 0
        %5796 = vmatprep.subr.bf16.mxu0 0
        %5797 = vmatpush1.bf16.msra.mxu0 0
        %5798 = vmatprep.subr.bf16.mxu0 0
        %5799 = vmatpush1.bf16.msra.mxu0 0
        %5800 = vmatprep.subr.bf16.mxu0 0
        %5801 = vmatpush1.bf16.msra.mxu0 0
        %5802 = vmatprep.mubr.bf16.mxu0 0
        %5803 = vmatmul.mubr.bf16.gmra.mrb[0].mxu0 %v5720
        %v5804 = vpop.f32.mrb[0].mxu0
        %v5805 = vadd.f32 %v5717, %v5804
        %v5806 = vpop.f32.mrb[0].mxu0
        %v5807 = vpop.f32.mrb[0].mxu0
        %v5808 = vadd.f32 %v5717, %v5807
        %v5809 = vpop.f32.mrb[0].mxu0
        %5810 = vmatprep.mubr.bf16.mxu0 0
        %5811 = vmatmul.mubr.bf16.gmra.mrb[0].mxu0 %v5723
        %v5812 = vpop.f32.mrb[0].mxu0
        %v5813 = vadd.f32 %v5717, %v5812
        %v5814 = vpop.f32.mrb[0].mxu0
        %v5815 = vpop.f32.mrb[0].mxu0
        %v5816 = vadd.f32 %v5717, %v5815
        %v5817 = vpop.f32.mrb[0].mxu0
        %5818 = vmatprep.mubr.bf16.mxu0 0
        %5819 = vmatmul.mubr.bf16.gmra.mrb[0].mxu0 %v5726
        %v5820 = vpop.f32.mrb[0].mxu0
        %v5821 = vadd.f32 %v5717, %v5820
        %v5822 = vpop.f32.mrb[0].mxu0
        %v5823 = vpop.f32.mrb[0].mxu0
        %v5824 = vadd.f32 %v5717, %v5823
        %v5825 = vpop.f32.mrb[0].mxu0
        %5826 = vmatprep.mubr.bf16.mxu0 0
        %5827 = vmatmul.mubr.bf16.gmra.mrb[0].mxu0 %v5729
        %v5828 = vpop.f32.mrb[0].mxu0
        %v5829 = vadd.f32 %v5717, %v5828
        %v5830 = vpop.f32.mrb[0].mxu0
        %v5831 = vpop.f32.mrb[0].mxu0
        %v5832 = vadd.f32 %v5717, %v5831
        %v5833 = vpop.f32.mrb[0].mxu0
        %5834 = vmatprep.mubr.bf16.mxu0 0
        %5835 = vmatmul.mubr.bf16.gmra.mrb[0].mxu0 %v5732
        %v5836 = vpop.f32.mrb[0].mxu0
        %v5837 = vadd.f32 %v5717, %v5836
        %v5838 = vpop.f32.mrb[0].mxu0
        %v5839 = vpop.f32.mrb[0].mxu0
        %v5840 = vadd.f32 %v5717, %v5839
        %v5841 = vpop.f32.mrb[0].mxu0
        %5842 = vmatprep.mubr.bf16.mxu0 0
        %5843 = vmatmul.mubr.bf16.gmra.mrb[0].mxu0 %v5735
        %v5844 = vpop.f32.mrb[0].mxu0
        %v5845 = vadd.f32 %v5717, %v5844
        %v5846 = vpop.f32.mrb[0].mxu0
        %v5847 = vpop.f32.mrb[0].mxu0
        %v5848 = vadd.f32 %v5717, %v5847
        %v5849 = vpop.f32.mrb[0].mxu0
        %5850 = vmatprep.mubr.bf16.mxu0 0
        %5851 = vmatmul.mubr.bf16.gmra.mrb[0].mxu0 %v5738
        %v5852 = vpop.f32.mrb[0].mxu0
        %v5853 = vadd.f32 %v5717, %v5852
        %v5854 = vpop.f32.mrb[0].mxu0
        %v5855 = vpop.f32.mrb[0].mxu0
        %v5856 = vadd.f32 %v5717, %v5855
        %v5857 = vpop.f32.mrb[0].mxu0
        %5858 = vmatprep.mubr.bf16.mxu0 0
        %5859 = vmatmul.mubr.bf16.gmra.mrb[0].mxu0 %v5741
        %v5860 = vpop.f32.mrb[0].mxu0
        %v5861 = vadd.f32 %v5717, %v5860
        %v5862 = vpop.f32.mrb[0].mxu0
        %v5863 = vpop.f32.mrb[0].mxu0
        %v5864 = vadd.f32 %v5717, %v5863
        %v5865 = vpop.f32.mrb[0].mxu0
        %5866 = vmatprep.mubr.bf16.mxu0 0
        %5867 = vmatmul.mubr.bf16.gmra.mrb[0].mxu0 %v5744
        %v5868 = vpop.f32.mrb[0].mxu0
        %v5869 = vadd.f32 %v5717, %v5868
        %v5870 = vpop.f32.mrb[0].mxu0
        %v5871 = vpop.f32.mrb[0].mxu0
        %v5872 = vadd.f32 %v5717, %v5871
        %v5873 = vpop.f32.mrb[0].mxu0
        %5874 = vmatprep.mubr.bf16.mxu0 0
        %5875 = vmatmul.mubr.bf16.gmra.mrb[0].mxu0 %v5747
        %v5876 = vpop.f32.mrb[0].mxu0
        %v5877 = vadd.f32 %v5717, %v5876
        %v5878 = vpop.f32.mrb[0].mxu0
        %v5879 = vpop.f32.mrb[0].mxu0
        %v5880 = vadd.f32 %v5717, %v5879
        %v5881 = vpop.f32.mrb[0].mxu0
        %5882 = vmatprep.mubr.bf16.mxu0 0
        %5883 = vmatmul.mubr.bf16.gmra.mrb[0].mxu0 %v5750
        %v5884 = vpop.f32.mrb[0].mxu0
        %v5885 = vadd.f32 %v5717, %v5884
        %v5886 = vpop.f32.mrb[0].mxu0
        %v5887 = vpop.f32.mrb[0].mxu0
        %v5888 = vadd.f32 %v5717, %v5887
        %v5889 = vpop.f32.mrb[0].mxu0
        %5890 = vmatprep.mubr.bf16.mxu0 0
        %5891 = vmatmul.mubr.bf16.gmra.mrb[0].mxu0 %v5753
        %v5892 = vpop.f32.mrb[0].mxu0
        %v5893 = vadd.f32 %v5717, %v5892
        %v5894 = vpop.f32.mrb[0].mxu0
        %v5895 = vpop.f32.mrb[0].mxu0
        %v5896 = vadd.f32 %v5717, %v5895
        %v5897 = vpop.f32.mrb[0].mxu0
        %5898 = vmatprep.mubr.bf16.mxu0 0
        %5899 = vmatmul.mubr.bf16.gmra.mrb[0].mxu0 %v5756
        %v5900 = vpop.f32.mrb[0].mxu0
        %v5901 = vadd.f32 %v5717, %v5900
        %v5902 = vpop.f32.mrb[0].mxu0
        %v5903 = vpop.f32.mrb[0].mxu0
        %v5904 = vadd.f32 %v5717, %v5903
        %v5905 = vpop.f32.mrb[0].mxu0
        %5906 = vmatprep.mubr.bf16.mxu0 0
        %5907 = vmatmul.mubr.bf16.gmra.mrb[0].mxu0 %v5759
        %v5908 = vpop.f32.mrb[0].mxu0
        %v5909 = vadd.f32 %v5717, %v5908
        %v5910 = vpop.f32.mrb[0].mxu0
        %v5911 = vpop.f32.mrb[0].mxu0
        %v5912 = vadd.f32 %v5717, %v5911
        %v5913 = vpop.f32.mrb[0].mxu0
        %5914 = vmatprep.mubr.bf16.mxu0 0
        %5915 = vmatmul.mubr.bf16.gmra.mrb[0].mxu0 %v5762
        %v5916 = vpop.f32.mrb[0].mxu0
        %v5917 = vadd.f32 %v5717, %v5916
        %v5918 = vpop.f32.mrb[0].mxu0
        %v5919 = vpop.f32.mrb[0].mxu0
        %v5920 = vadd.f32 %v5717, %v5919
        %v5921 = vpop.f32.mrb[0].mxu0
        %5922 = vmatprep.mubr.bf16.mxu0 0
        %5923 = vmatmul.mubr.bf16.gmra.mrb[0].mxu0 %v5765
        %v5924 = vpop.f32.mrb[0].mxu0
        %v5925 = vadd.f32 %v5717, %v5924
        %v5926 = vpop.f32.mrb[0].mxu0
        %v5927 = vpop.f32.mrb[0].mxu0
        %v5928 = vadd.f32 %v5717, %v5927
        %v5929 = vpop.f32.mrb[0].mxu0
        %5930 = vdwg.mxu0
        %v5931 = vadd.f32 %v5631, %v5805
        %v5932 = vadd.f32 %v5632, %v5808
        %v5933 = vadd.f32 %v5633, %v5813
        %v5934 = vadd.f32 %v5634, %v5816
        %v5935 = vadd.f32 %v5635, %v5821
        %v5936 = vadd.f32 %v5636, %v5824
        %v5937 = vadd.f32 %v5637, %v5829
        %v5938 = vadd.f32 %v5638, %v5832
        %v5939 = vadd.f32 %v5639, %v5837
        %v5940 = vadd.f32 %v5640, %v5840
        %v5941 = vadd.f32 %v5641, %v5845
        %v5942 = vadd.f32 %v5642, %v5848
        %v5943 = vadd.f32 %v5643, %v5853
        %v5944 = vadd.f32 %v5644, %v5856
        %v5945 = vadd.f32 %v5645, %v5861
        %v5946 = vadd.f32 %v5646, %v5864
        %v5947 = vadd.f32 %v5647, %v5869
        %v5948 = vadd.f32 %v5648, %v5872
        %v5949 = vadd.f32 %v5649, %v5877
        %v5950 = vadd.f32 %v5650, %v5880
        %v5951 = vadd.f32 %v5651, %v5885
        %v5952 = vadd.f32 %v5652, %v5888
        %v5953 = vadd.f32 %v5653, %v5893
        %v5954 = vadd.f32 %v5654, %v5896
        %v5955 = vadd.f32 %v5655, %v5901
        %v5956 = vadd.f32 %v5656, %v5904
        %v5957 = vadd.f32 %v5657, %v5909
        %v5958 = vadd.f32 %v5658, %v5912
        %v5959 = vadd.f32 %v5659, %v5917
        %v5960 = vadd.f32 %v5660, %v5920
        %v5961 = vadd.f32 %v5661, %v5925
        %v5962 = vadd.f32 %v5662, %v5928
        %v5963 = vmax.f32 %v5931, 0.0
        %v5964 = vmax.f32 %v5932, 0.0
        %v5965 = vmax.f32 %v5933, 0.0
        %v5966 = vmax.f32 %v5934, 0.0
        %v5967 = vmax.f32 %v5935, 0.0
        %v5968 = vmax.f32 %v5936, 0.0
        %v5969 = vmax.f32 %v5937, 0.0
        %v5970 = vmax.f32 %v5938, 0.0
        %v5971 = vmax.f32 %v5939, 0.0
        %v5972 = vmax.f32 %v5940, 0.0
        %v5973 = vmax.f32 %v5941, 0.0
        %v5974 = vmax.f32 %v5942, 0.0
        %v5975 = vmax.f32 %v5943, 0.0
        %v5976 = vmax.f32 %v5944, 0.0
        %v5977 = vmax.f32 %v5945, 0.0
        %v5978 = vmax.f32 %v5946, 0.0
        %v5979 = vmax.f32 %v5947, 0.0
        %v5980 = vmax.f32 %v5948, 0.0
        %v5981 = vmax.f32 %v5949, 0.0
        %v5982 = vmax.f32 %v5950, 0.0
        %v5983 = vmax.f32 %v5951, 0.0
        %v5984 = vmax.f32 %v5952, 0.0
        %v5985 = vmax.f32 %v5953, 0.0
        %v5986 = vmax.f32 %v5954, 0.0
        %v5987 = vmax.f32 %v5955, 0.0
        %v5988 = vmax.f32 %v5956, 0.0
        %v5989 = vmax.f32 %v5957, 0.0
        %v5990 = vmax.f32 %v5958, 0.0
        %v5991 = vmax.f32 %v5959, 0.0
        %v5992 = vmax.f32 %v5960, 0.0
        %v5993 = vmax.f32 %v5961, 0.0
        %v5994 = vmax.f32 %v5962, 0.0
        %5995 = vxpose.xlu0.b32.start [1/16] %v5963, 128
        %5996 = vxpose.xlu0.b32.cont [2/16] %v5964, 128
        %5997 = vxpose.xlu0.b32.cont [3/16] %v5965, 128
        %5998 = vxpose.xlu0.b32.cont [4/16] %v5966, 128
        %5999 = vxpose.xlu0.b32.cont [5/16] %v5967, 128
        %6000 = vxpose.xlu0.b32.cont [6/16] %v5968, 128
        %6001 = vxpose.xlu0.b32.cont [7/16] %v5969, 128
        %6002 = vxpose.xlu0.b32.cont [8/16] %v5970, 128
        %6003 = vxpose.xlu0.b32.cont [9/16] %v5971, 128
        %6004 = vxpose.xlu0.b32.cont [10/16] %v5972, 128
        %6005 = vxpose.xlu0.b32.cont [11/16] %v5973, 128
        %6006 = vxpose.xlu0.b32.cont [12/16] %v5974, 128
        %6007 = vxpose.xlu0.b32.cont [13/16] %v5975, 128
        %6008 = vxpose.xlu0.b32.cont [14/16] %v5976, 128
        %6009 = vxpose.xlu0.b32.cont [15/16] %v5977, 128
        %6010 = vxpose.xlu0.b32.end [16/16] %v5978, 128
        %v6011 = vpop.trf.xlu0
        %v6012 = vpop.trf.xlu0
        %v6013 = vpop.trf.xlu0
        %v6014 = vpop.trf.xlu0
        %v6015 = vpop.trf.xlu0
        %v6016 = vpop.trf.xlu0
        %v6017 = vpop.trf.xlu0
        %v6018 = vpop.trf.xlu0
        %v6019 = vpop.trf.xlu0
        %v6020 = vpop.trf.xlu0
        %v6021 = vpop.trf.xlu0
        %v6022 = vpop.trf.xlu0
        %v6023 = vpop.trf.xlu0
        %v6024 = vpop.trf.xlu0
        %v6025 = vpop.trf.xlu0
        %v6026 = vpop.trf.xlu0
        %6027 = vxpose.xlu0.b32.start [1/16] %v5979, 128
        %6028 = vxpose.xlu0.b32.cont [2/16] %v5980, 128
        %6029 = vxpose.xlu0.b32.cont [3/16] %v5981, 128
        %6030 = vxpose.xlu0.b32.cont [4/16] %v5982, 128
        %6031 = vxpose.xlu0.b32.cont [5/16] %v5983, 128
        %6032 = vxpose.xlu0.b32.cont [6/16] %v5984, 128
        %6033 = vxpose.xlu0.b32.cont [7/16] %v5985, 128
        %6034 = vxpose.xlu0.b32.cont [8/16] %v5986, 128
        %6035 = vxpose.xlu0.b32.cont [9/16] %v5987, 128
        %6036 = vxpose.xlu0.b32.cont [10/16] %v5988, 128
        %6037 = vxpose.xlu0.b32.cont [11/16] %v5989, 128
        %6038 = vxpose.xlu0.b32.cont [12/16] %v5990, 128
        %6039 = vxpose.xlu0.b32.cont [13/16] %v5991, 128
        %6040 = vxpose.xlu0.b32.cont [14/16] %v5992, 128
        %6041 = vxpose.xlu0.b32.cont [15/16] %v5993, 128
        %6042 = vxpose.xlu0.b32.end [16/16] %v5994, 128
        %v6043 = vpop.trf.xlu0
        %v6044 = vpop.trf.xlu0
        %v6045 = vpop.trf.xlu0
        %v6046 = vpop.trf.xlu0
        %v6047 = vpop.trf.xlu0
        %v6048 = vpop.trf.xlu0
        %v6049 = vpop.trf.xlu0
        %v6050 = vpop.trf.xlu0
        %v6051 = vpop.trf.xlu0
        %v6052 = vpop.trf.xlu0
        %v6053 = vpop.trf.xlu0
        %v6054 = vpop.trf.xlu0
        %v6055 = vpop.trf.xlu0
        %v6056 = vpop.trf.xlu0
        %v6057 = vpop.trf.xlu0
        %v6058 = vpop.trf.xlu0
        %6059 = vst [vmem:[%s271] sm:$0xff] %v6011
        %6060 = vst [vmem:[%s271 + $0x8] sm:$0xff] %v6043
        %s6061 = sand.u32 %s181, 1
        %s6062 = scalar_lea.sflag [#allocation4], %s6061
        %s6063 = sand.u32 %s181, 1
        %s6064 = smul.addr %s6063, 16
        %s6065 = scalar_lea.vmem [#allocation3], %s6064
        // Predicated region
        $region49: #{tpu_custom_call.1} parent=47 // pred_check
          %p6066 = pneg %p191
        $region50: #{tpu_custom_call.1} parent=47 // pred_check_branch
          %6068 = sbr.rel (%p6066) target = $region52
        $region51: #{tpu_custom_call.1} parent=47 // pred_region
          %s6070 = ssub.s32 256, 256
          %6071 = vsyncadd %s6062, %s6070
          %s6072 = smul.addr %s21, 2
          %s6073 = smul.addr %s6072, 128
          %s6074 = scalar_lea.hbm %s7, %s6073
          %s6076 = sshll.u32 %s6065, 4
          %s6077 = int_to_ptr.vmem [resolvable:$true] %s6076
          %6079 = dma.vmem_to_hbm [thread:$0]  %s6077, 256, %s6074, %s6062
        $region52: #{tpu_custom_call.1} parent=47 // pred_fallthru
          _
      $region48: #{tpu_custom_call.1} parent=5 // pred_fallthru
        _
      %p6080 = scmp.le.s32.totalorder 2, %s16
      // Predicated region
      $region53: #{tpu_custom_call.1} parent=5 // pred_check
        %p6081 = pneg %p6080
      $region54: #{tpu_custom_call.1} parent=5 // pred_check_branch
        %6083 = sbr.rel (%p6081) target = $region56
      $region55: #{tpu_custom_call.1} parent=5 // pred_region
        %s6084 = ssub.s32 %s16, 2
        // Predicated region
        $region57: #{tpu_custom_call.1} parent=55 // pred_check
          %p6085 = pneg %p197
        $region58: #{tpu_custom_call.1} parent=55 // pred_check_branch
          %6087 = sbr.rel (%p6085) target = $region60
        $region59: #{tpu_custom_call.1} parent=55 // pred_region
          %s6088 = sand.u32 %s182, 1
          %s6089 = scalar_lea.sflag [#allocation4], %s6088
          %s6090 = sand.u32 %s182, 1
          %s6091 = smul.addr %s6090, 16
          %s6092 = scalar_lea.vmem [#allocation3], %s6091
          %6093 = dma.done %s6089, 256
        $region60: #{tpu_custom_call.1} parent=55 // pred_fallthru
          _
      $region56: #{tpu_custom_call.1} parent=5 // pred_fallthru
        _
    $region6: #{tpu_custom_call.1} parent=1 // loop_footer
      %s20 = sadd.s32 1, %s16
    $region7: #{tpu_custom_call.1} parent=1 // loop_footer_branch
      %15 = sbr.rel target = $region3
    $region8: #{tpu_custom_call.1} parent=1 // loop_exit
      _
    %6094 = vsyncpa [#allocation4], 1
    %s6095 = scalar_lea.sflag [#allocation4], 1
    %6096 = vsyncpa %s6095, 1

</llo_original>
